<compile_context>
chip_gen: v5e
topology: v5e:2x2
jax: 0.10.0
libtpu: 0.0.40
codegen_flags: <defaults>
</compile_context>

<pallas_src>
import functools

import jax
import jax.numpy as jnp
from jax.experimental import pallas as pl
from jax.experimental.pallas import tpu as pltpu


def _round_up(x, m):
    return (x + m - 1) // m * m


def basic_block_kernel(x_ref, w1_ref, b1_ref, w2_ref, b2_ref, out_ref, mid_ref,
                       *, W, TH, pad_top, pad_bot):
    # x_ref   : (S, Cp)      bf16  pre-overlapped, spatially padded input slab for this row tile
    # w*_ref  : (9, Cp, Cp)  bf16  per-tap weights (HWIO taps), BN scale folded in
    # b*_ref  : (1, Cp)      f32   folded BN bias
    # out_ref : (M2, Cp)     bf16  TH output rows in (row, Wp)-flattened, lane-dense layout
    # mid_ref : (R_mid, Cp)  bf16  persistent scratch holding the conv1 activation (+ zero halo)
    Wp = W + 2
    M1 = (TH + 2) * Wp          # conv1 rows computed for this tile (incl. +/-1 row halo)
    M2 = TH * Wp                # conv2 / output rows for this tile
    Cp = out_ref.shape[-1]

    # Zero only the tiny pad rows of the persistent scratch.  Done every step (a few KiB of
    # stores) so the kernel stays correct no matter how megacore splits the parallel grid.
    mid_ref[pl.ds(0, pad_top), :] = jnp.zeros((pad_top, Cp), mid_ref.dtype)
    mid_ref[pl.ds(pad_top + M1, pad_bot), :] = jnp.zeros((pad_bot, Cp), mid_ref.dtype)

    # ---- conv1: 9 accumulating MXU matmuls (K = Cp each), f32 accumulation ----
    acc1 = None
    for t in range(9):
        ky, kx = divmod(t, 3)
        part = jnp.dot(x_ref[pl.ds(ky * Wp + kx, M1), :], w1_ref[t],
                       preferred_element_type=jnp.float32)
        acc1 = part if acc1 is None else acc1 + part
    a1 = jnp.maximum(acc1 + b1_ref[...], 0.0)                 # BN1 scale folded into w1
    mid_ref[pl.ds(pad_top, M1), :] = a1.astype(mid_ref.dtype)

    # Kill the width-wrap garbage columns (activation cols W, W+1 of every row) so that
    # conv2's flattened taps see proper zero padding at col -1 / col W.  Static offsets.
    zero2 = jnp.zeros((2, Cp), mid_ref.dtype)
    for yl in range(TH + 2):
        mid_ref[pl.ds(pad_top + yl * Wp + W, 2), :] = zero2

    # Kill the +/-1 halo activation rows at the global image boundary (conv2's top/bottom
    # zero padding).  For interior tiles the halo rows are real, recomputed activations.
    h_id = pl.program_id(1)
    zrow = jnp.zeros((Wp, Cp), mid_ref.dtype)

    @pl.when(h_id == 0)
    def _():
        mid_ref[pl.ds(pad_top, Wp), :] = zrow

    @pl.when(h_id == pl.num_programs(1) - 1)
    def _():
        mid_ref[pl.ds(pad_top + (TH + 1) * Wp, Wp), :] = zrow

    # ---- conv2: 9 accumulating MXU matmuls over the just-written activation (+ zero halo) ----
    acc2 = None
    for t in range(9):
        ky, kx = divmod(t, 3)
        part = jnp.dot(mid_ref[pl.ds(pad_top + ky * Wp + kx - 1, M2), :], w2_ref[t],
                       preferred_element_type=jnp.float32)
        acc2 = part if acc2 is None else acc2 + part
    a2 = acc2 + b2_ref[...]                                   # BN2 scale folded into w2

    # ---- residual add + final ReLU (f32 math, lane-dense bf16 full-slab store) ----
    res = x_ref[pl.ds(2 * Wp + 1, M2), :].astype(jnp.float32)
    out_ref[...] = jnp.maximum(a2 + res, 0.0).astype(out_ref.dtype)


def basic_block_forward(x_nchw, w1, g1, be1, m1, v1, w2, g2, be2, m2, v2, eps=1e-5):
    """x_nchw: (N, C, H, W) float32. Conv weights in PyTorch OIHW. BN in eval mode."""
    N, C, H, W = x_nchw.shape
    Cout = w1.shape[0]
    assert Cout == C, "BasicBlock with downsample=None requires inplanes == planes"

    LANES = 128
    Cp = _round_up(max(C, LANES), LANES)
    Wp = W + 2

    # Row-tile height: whole image unless it is large, else the largest divisor of H that
    # keeps ~<=2048 output rows per grid step (amortizes per-step overhead, big matmul M).
    TH = H
    if H * Wp > 4096:
        for d in range(H - 1, 0, -1):
            if H % d == 0 and d * Wp <= 2048:
                TH = d
                break
    NH = H // TH
    M1 = (TH + 2) * Wp
    M2 = TH * Wp
    S = (TH + 5) * Wp                 # TH+4 halo rows + 1 spare zero row (covers kx tap overrun)
    pad_top = pad_bot = 8
    R_mid = pad_top + M1 + pad_bot

    # ---- glue: NCHW->NHWC, bf16, ONE pad (2 top / 3 bottom rows, 1 col each side, lanes->Cp) ----
    x_nhwc = jnp.transpose(x_nchw, (0, 2, 3, 1)).astype(jnp.bfloat16)
    x_pad = jnp.pad(x_nhwc, ((0, 0), (2, 3), (1, 1), (0, Cp - C)))
    x_flat = x_pad.reshape(N, (H + 5) * Wp, Cp)
    if NH == 1:
        x_slabs = x_flat[:, None, :, :]                       # (N, 1, S, Cp), no duplication
    else:
        x_slabs = jnp.stack(
            [x_flat[:, h * TH * Wp: h * TH * Wp + S, :] for h in range(NH)], axis=1)

    # ---- fold BN (eval) into conv weights / bias ----
    s1 = g1 / jnp.sqrt(v1 + eps)
    s2 = g2 / jnp.sqrt(v2 + eps)
    b1 = be1 - m1 * s1
    b2 = be2 - m2 * s2

    def pack_w(w_oihw, scale):
        # OIHW -> (tap, I, O), fold BN scale into output channels, pad channels to Cp.
        w = jnp.transpose(w_oihw, (2, 3, 1, 0)).astype(jnp.float32) * scale[None, None, None, :]
        w = jnp.pad(w, ((0, 0), (0, 0), (0, Cp - C), (0, Cp - C)))
        return w.reshape(9, Cp, Cp).astype(jnp.bfloat16)

    w1p = pack_w(w1, s1)
    w2p = pack_w(w2, s2)
    b1p = jnp.pad(b1, (0, Cp - C)).reshape(1, Cp).astype(jnp.float32)
    b2p = jnp.pad(b2, (0, Cp - C)).reshape(1, Cp).astype(jnp.float32)

    out_flat = pl.pallas_call(
        functools.partial(basic_block_kernel, W=W, TH=TH,
                          pad_top=pad_top, pad_bot=pad_bot),
        out_shape=jax.ShapeDtypeStruct((N, NH, M2, Cp), jnp.bfloat16),
        grid_spec=pltpu.PrefetchScalarGridSpec(
            num_scalar_prefetch=0,
            grid=(N, NH),
            in_specs=[
                pl.BlockSpec((None, None, S, Cp), lambda n, h: (n, h, 0, 0)),
                pl.BlockSpec((9, Cp, Cp), lambda n, h: (0, 0, 0)),
                pl.BlockSpec((1, Cp), lambda n, h: (0, 0)),
                pl.BlockSpec((9, Cp, Cp), lambda n, h: (0, 0, 0)),
                pl.BlockSpec((1, Cp), lambda n, h: (0, 0)),
            ],
            out_specs=pl.BlockSpec((None, None, M2, Cp), lambda n, h: (n, h, 0, 0)),
            scratch_shapes=[pltpu.VMEM((R_mid, Cp), jnp.bfloat16)],
        ),
        compiler_params=pltpu.CompilerParams(
            dimension_semantics=("parallel", "parallel"),
            vmem_limit_bytes=32 * 1024 * 1024),
    )(x_slabs, w1p, b1p, w2p, b2p)

    # strip the lane/width padding and go back to NCHW f32
    out = out_flat.reshape(N, H, Wp, Cp)[:, :, :W, :C]
    return jnp.transpose(out, (0, 3, 1, 2)).astype(jnp.float32)


def _reference(x, w1, g1, be1, m1, v1, w2, g2, be2, m2, v2, eps=1e-5):
    # pure-JAX reference (eval-mode BN), NCHW, f32
    def conv(x, w):
        return jax.lax.conv_general_dilated(
            x, w, window_strides=(1, 1), padding=((1, 1), (1, 1)),
            dimension_numbers=("NCHW", "OIHW", "NCHW"))

    def bn(x, g, b, m, v):
        sh = (1, -1, 1, 1)
        return (x - m.reshape(sh)) / jnp.sqrt(v.reshape(sh) + eps) * \
            g.reshape(sh) + b.reshape(sh)

    out = jax.nn.relu(bn(conv(x, w1), g1, be1, m1, v1))
    out = bn(conv(out, w2), g2, be2, m2, v2)
    return jax.nn.relu(out + x)


if __name__ == "__main__":
    N, C, H, W = 2, 4, 16, 16   # inplanes == planes == 4, stride=1, no downsample
    key = jax.random.PRNGKey(0)
    ks = jax.random.split(key, 8)

    x = jax.random.normal(ks[0], (N, C, H, W), jnp.float32)
    w1 = 0.1 * jax.random.normal(ks[1], (C, C, 3, 3), jnp.float32)   # OIHW
    w2 = 0.1 * jax.random.normal(ks[2], (C, C, 3, 3), jnp.float32)
    g1 = 1.0 + 0.1 * jax.random.normal(ks[3], (C,), jnp.float32)
    be1 = 0.1 * jax.random.normal(ks[4], (C,), jnp.float32)
    m1 = 0.05 * jax.random.normal(ks[5], (C,), jnp.float32)
    v1 = 1.0 + 0.1 * jax.random.uniform(ks[6], (C,), jnp.float32)
    g2 = jnp.ones((C,), jnp.float32)
    be2 = jnp.zeros((C,), jnp.float32)
    m2 = 0.05 * jax.random.normal(ks[7], (C,), jnp.float32)
    v2 = jnp.ones((C,), jnp.float32)

    out = basic_block_forward(x, w1, g1, be1, m1, v1, w2, g2, be2, m2, v2)
    out = jax.block_until_ready(out)

    ref = _reference(x, w1, g1, be1, m1, v1, w2, g2, be2, m2, v2)
    assert out.shape == (N, C, H, W)
    err = jnp.max(jnp.abs(out - ref))
    # bf16 matmuls / activations / output -> looser tolerance than a pure-f32 version
    assert jnp.allclose(out, ref, atol=2e-2, rtol=2e-2), f"max err {err}"
    print("KERNEL_OK")
</pallas_src>

<mosaic_0001>
module attributes {stable_mosaic.version = 11 : i64} {
  func.func @basic_block_kernel(%arg0: i32, %arg1: i32, %arg2: memref<1x1x378x128xbf16, #tpu.memory_space<vmem>>, %arg3: memref<9x128x128xbf16, #tpu.memory_space<vmem>>, %arg4: memref<1x128xf32, #tpu.memory_space<vmem>>, %arg5: memref<9x128x128xbf16, #tpu.memory_space<vmem>>, %arg6: memref<1x128xf32, #tpu.memory_space<vmem>>, %arg7: memref<1x1x288x128xbf16, #tpu.memory_space<vmem>>, %arg8: memref<340x128xbf16, #tpu.memory_space<vmem>>) attributes {dimension_semantics = [#tpu.dimension_semantics<parallel>, #tpu.dimension_semantics<parallel>], iteration_bounds = array<i64: 2, 1>, scalar_prefetch = 0 : i64, scratch_operands = 1 : i64, tpu.core_type = #tpu.core_type<tc>, window_params = [{transform_indices = @transform_0, window_bounds = array<i64: 1, 1, 378, 128>}, {pipeline_mode = #tpu.pipeline_mode<synchronous>, transform_indices = @transform_1, window_bounds = array<i64: 9, 128, 128>}, {pipeline_mode = #tpu.pipeline_mode<synchronous>, transform_indices = @transform_2, window_bounds = array<i64: 1, 128>}, {pipeline_mode = #tpu.pipeline_mode<synchronous>, transform_indices = @transform_3, window_bounds = array<i64: 9, 128, 128>}, {pipeline_mode = #tpu.pipeline_mode<synchronous>, transform_indices = @transform_4, window_bounds = array<i64: 1, 128>}, {transform_indices = @transform_5, window_bounds = array<i64: 1, 1, 288, 128>}]} {
    %cst = arith.constant 0.000000e+00 : bf16
    %0 = vector.broadcast %cst : bf16 to vector<8x128xbf16>
    %c0 = arith.constant 0 : index
    %c0_0 = arith.constant 0 : index
    %1 = vector.load %arg8[%c0, %c0_0] : memref<340x128xbf16, #tpu.memory_space<vmem>>, vector<8x128xbf16>
    tpu.vector_store %arg8[%c0, %c0_0], %0 {strides = array<i32>} : memref<340x128xbf16, #tpu.memory_space<vmem>>, vector<8x128xbf16>,
    %cst_1 = arith.constant 0.000000e+00 : bf16
    %2 = vector.broadcast %cst_1 : bf16 to vector<8x128xbf16>
    %c332 = arith.constant 332 : index
    %c0_2 = arith.constant 0 : index
    %3 = vector.load %arg8[%c332, %c0_2] : memref<340x128xbf16, #tpu.memory_space<vmem>>, vector<8x128xbf16>
    tpu.vector_store %arg8[%c332, %c0_2], %2 {strides = array<i32>} : memref<340x128xbf16, #tpu.memory_space<vmem>>, vector<8x128xbf16>,
    %c0_3 = arith.constant 0 : index
    %c0_4 = arith.constant 0 : index
    %c0_5 = arith.constant 0 : index
    %c0_6 = arith.constant 0 : index
    %4 = vector.load %arg2[%c0_3, %c0_4, %c0_5, %c0_6] : memref<1x1x378x128xbf16, #tpu.memory_space<vmem>>, vector<1x1x324x128xbf16>
    %5 = vector.shape_cast %4 : vector<1x1x324x128xbf16> to vector<324x128xbf16>
    %c0_7 = arith.constant 0 : index
    %c0_8 = arith.constant 0 : index
    %c0_9 = arith.constant 0 : index
    %6 = vector.load %arg3[%c0_7, %c0_8, %c0_9] : memref<9x128x128xbf16, #tpu.memory_space<vmem>>, vector<1x128x128xbf16>
    %7 = vector.shape_cast %6 : vector<1x128x128xbf16> to vector<128x128xbf16>
    %cst_10 = arith.constant dense<0.000000e+00> : vector<324x128xf32>
    %8 = tpu.matmul %5, %7, %cst_10 {dimension_numbers = #tpu.dot_dimension_numbers<[1], [0], [0], [1], [0, 0, 1, 1], [], []>} : vector<324x128xbf16>, vector<128x128xbf16>, vector<324x128xf32> -> vector<324x128xf32>
    %c0_11 = arith.constant 0 : index
    %c0_12 = arith.constant 0 : index
    %c1 = arith.constant 1 : index
    %c0_13 = arith.constant 0 : index
    %9 = vector.load %arg2[%c0_11, %c0_12, %c1, %c0_13] : memref<1x1x378x128xbf16, #tpu.memory_space<vmem>>, vector<1x1x324x128xbf16>
    %10 = vector.shape_cast %9 : vector<1x1x324x128xbf16> to vector<324x128xbf16>
    %c1_14 = arith.constant 1 : index
    %c0_15 = arith.constant 0 : index
    %c0_16 = arith.constant 0 : index
    %11 = vector.load %arg3[%c1_14, %c0_15, %c0_16] : memref<9x128x128xbf16, #tpu.memory_space<vmem>>, vector<1x128x128xbf16>
    %12 = vector.shape_cast %11 : vector<1x128x128xbf16> to vector<128x128xbf16>
    %cst_17 = arith.constant dense<0.000000e+00> : vector<324x128xf32>
    %13 = tpu.matmul %10, %12, %cst_17 {dimension_numbers = #tpu.dot_dimension_numbers<[1], [0], [0], [1], [0, 0, 1, 1], [], []>} : vector<324x128xbf16>, vector<128x128xbf16>, vector<324x128xf32> -> vector<324x128xf32>
    %14 = arith.addf %8, %13 : vector<324x128xf32>
    %c0_18 = arith.constant 0 : index
    %c0_19 = arith.constant 0 : index
    %c2 = arith.constant 2 : index
    %c0_20 = arith.constant 0 : index
    %15 = vector.load %arg2[%c0_18, %c0_19, %c2, %c0_20] : memref<1x1x378x128xbf16, #tpu.memory_space<vmem>>, vector<1x1x324x128xbf16>
    %16 = vector.shape_cast %15 : vector<1x1x324x128xbf16> to vector<324x128xbf16>
    %c2_21 = arith.constant 2 : index
    %c0_22 = arith.constant 0 : index
    %c0_23 = arith.constant 0 : index
    %17 = vector.load %arg3[%c2_21, %c0_22, %c0_23] : memref<9x128x128xbf16, #tpu.memory_space<vmem>>, vector<1x128x128xbf16>
    %18 = vector.shape_cast %17 : vector<1x128x128xbf16> to vector<128x128xbf16>
    %cst_24 = arith.constant dense<0.000000e+00> : vector<324x128xf32>
    %19 = tpu.matmul %16, %18, %cst_24 {dimension_numbers = #tpu.dot_dimension_numbers<[1], [0], [0], [1], [0, 0, 1, 1], [], []>} : vector<324x128xbf16>, vector<128x128xbf16>, vector<324x128xf32> -> vector<324x128xf32>
    %20 = arith.addf %14, %19 : vector<324x128xf32>
    %c0_25 = arith.constant 0 : index
    %c0_26 = arith.constant 0 : index
    %c18 = arith.constant 18 : index
    %c0_27 = arith.constant 0 : index
    %21 = vector.load %arg2[%c0_25, %c0_26, %c18, %c0_27] : memref<1x1x378x128xbf16, #tpu.memory_space<vmem>>, vector<1x1x324x128xbf16>
    %22 = vector.shape_cast %21 : vector<1x1x324x128xbf16> to vector<324x128xbf16>
    %c3 = arith.constant 3 : index
    %c0_28 = arith.constant 0 : index
    %c0_29 = arith.constant 0 : index
    %23 = vector.load %arg3[%c3, %c0_28, %c0_29] : memref<9x128x128xbf16, #tpu.memory_space<vmem>>, vector<1x128x128xbf16>
    %24 = vector.shape_cast %23 : vector<1x128x128xbf16> to vector<128x128xbf16>
    %cst_30 = arith.constant dense<0.000000e+00> : vector<324x128xf32>
    %25 = tpu.matmul %22, %24, %cst_30 {dimension_numbers = #tpu.dot_dimension_numbers<[1], [0], [0], [1], [0, 0, 1, 1], [], []>} : vector<324x128xbf16>, vector<128x128xbf16>, vector<324x128xf32> -> vector<324x128xf32>
    %26 = arith.addf %20, %25 : vector<324x128xf32>
    %c0_31 = arith.constant 0 : index
    %c0_32 = arith.constant 0 : index
    %c19 = arith.constant 19 : index
    %c0_33 = arith.constant 0 : index
    %27 = vector.load %arg2[%c0_31, %c0_32, %c19, %c0_33] : memref<1x1x378x128xbf16, #tpu.memory_space<vmem>>, vector<1x1x324x128xbf16>
    %28 = vector.shape_cast %27 : vector<1x1x324x128xbf16> to vector<324x128xbf16>
    %c4 = arith.constant 4 : index
    %c0_34 = arith.constant 0 : index
    %c0_35 = arith.constant 0 : index
    %29 = vector.load %arg3[%c4, %c0_34, %c0_35] : memref<9x128x128xbf16, #tpu.memory_space<vmem>>, vector<1x128x128xbf16>
    %30 = vector.shape_cast %29 : vector<1x128x128xbf16> to vector<128x128xbf16>
    %cst_36 = arith.constant dense<0.000000e+00> : vector<324x128xf32>
    %31 = tpu.matmul %28, %30, %cst_36 {dimension_numbers = #tpu.dot_dimension_numbers<[1], [0], [0], [1], [0, 0, 1, 1], [], []>} : vector<324x128xbf16>, vector<128x128xbf16>, vector<324x128xf32> -> vector<324x128xf32>
    %32 = arith.addf %26, %31 : vector<324x128xf32>
    %c0_37 = arith.constant 0 : index
    %c0_38 = arith.constant 0 : index
    %c20 = arith.constant 20 : index
    %c0_39 = arith.constant 0 : index
    %33 = vector.load %arg2[%c0_37, %c0_38, %c20, %c0_39] : memref<1x1x378x128xbf16, #tpu.memory_space<vmem>>, vector<1x1x324x128xbf16>
    %34 = vector.shape_cast %33 : vector<1x1x324x128xbf16> to vector<324x128xbf16>
    %c5 = arith.constant 5 : index
    %c0_40 = arith.constant 0 : index
    %c0_41 = arith.constant 0 : index
    %35 = vector.load %arg3[%c5, %c0_40, %c0_41] : memref<9x128x128xbf16, #tpu.memory_space<vmem>>, vector<1x128x128xbf16>
    %36 = vector.shape_cast %35 : vector<1x128x128xbf16> to vector<128x128xbf16>
    %cst_42 = arith.constant dense<0.000000e+00> : vector<324x128xf32>
    %37 = tpu.matmul %34, %36, %cst_42 {dimension_numbers = #tpu.dot_dimension_numbers<[1], [0], [0], [1], [0, 0, 1, 1], [], []>} : vector<324x128xbf16>, vector<128x128xbf16>, vector<324x128xf32> -> vector<324x128xf32>
    %38 = arith.addf %32, %37 : vector<324x128xf32>
    %c0_43 = arith.constant 0 : index
    %c0_44 = arith.constant 0 : index
    %c36 = arith.constant 36 : index
    %c0_45 = arith.constant 0 : index
    %39 = vector.load %arg2[%c0_43, %c0_44, %c36, %c0_45] : memref<1x1x378x128xbf16, #tpu.memory_space<vmem>>, vector<1x1x324x128xbf16>
    %40 = vector.shape_cast %39 : vector<1x1x324x128xbf16> to vector<324x128xbf16>
    %c6 = arith.constant 6 : index
    %c0_46 = arith.constant 0 : index
    %c0_47 = arith.constant 0 : index
    %41 = vector.load %arg3[%c6, %c0_46, %c0_47] : memref<9x128x128xbf16, #tpu.memory_space<vmem>>, vector<1x128x128xbf16>
    %42 = vector.shape_cast %41 : vector<1x128x128xbf16> to vector<128x128xbf16>
    %cst_48 = arith.constant dense<0.000000e+00> : vector<324x128xf32>
    %43 = tpu.matmul %40, %42, %cst_48 {dimension_numbers = #tpu.dot_dimension_numbers<[1], [0], [0], [1], [0, 0, 1, 1], [], []>} : vector<324x128xbf16>, vector<128x128xbf16>, vector<324x128xf32> -> vector<324x128xf32>
    %44 = arith.addf %38, %43 : vector<324x128xf32>
    %c0_49 = arith.constant 0 : index
    %c0_50 = arith.constant 0 : index
    %c37 = arith.constant 37 : index
    %c0_51 = arith.constant 0 : index
    %45 = vector.load %arg2[%c0_49, %c0_50, %c37, %c0_51] : memref<1x1x378x128xbf16, #tpu.memory_space<vmem>>, vector<1x1x324x128xbf16>
    %46 = vector.shape_cast %45 : vector<1x1x324x128xbf16> to vector<324x128xbf16>
    %c7 = arith.constant 7 : index
    %c0_52 = arith.constant 0 : index
    %c0_53 = arith.constant 0 : index
    %47 = vector.load %arg3[%c7, %c0_52, %c0_53] : memref<9x128x128xbf16, #tpu.memory_space<vmem>>, vector<1x128x128xbf16>
    %48 = vector.shape_cast %47 : vector<1x128x128xbf16> to vector<128x128xbf16>
    %cst_54 = arith.constant dense<0.000000e+00> : vector<324x128xf32>
    %49 = tpu.matmul %46, %48, %cst_54 {dimension_numbers = #tpu.dot_dimension_numbers<[1], [0], [0], [1], [0, 0, 1, 1], [], []>} : vector<324x128xbf16>, vector<128x128xbf16>, vector<324x128xf32> -> vector<324x128xf32>
    %50 = arith.addf %44, %49 : vector<324x128xf32>
    %c0_55 = arith.constant 0 : index
    %c0_56 = arith.constant 0 : index
    %c38 = arith.constant 38 : index
    %c0_57 = arith.constant 0 : index
    %51 = vector.load %arg2[%c0_55, %c0_56, %c38, %c0_57] : memref<1x1x378x128xbf16, #tpu.memory_space<vmem>>, vector<1x1x324x128xbf16>
    %52 = vector.shape_cast %51 : vector<1x1x324x128xbf16> to vector<324x128xbf16>
    %c8 = arith.constant 8 : index
    %c0_58 = arith.constant 0 : index
    %c0_59 = arith.constant 0 : index
    %53 = vector.load %arg3[%c8, %c0_58, %c0_59] : memref<9x128x128xbf16, #tpu.memory_space<vmem>>, vector<1x128x128xbf16>
    %54 = vector.shape_cast %53 : vector<1x128x128xbf16> to vector<128x128xbf16>
    %cst_60 = arith.constant dense<0.000000e+00> : vector<324x128xf32>
    %55 = tpu.matmul %52, %54, %cst_60 {dimension_numbers = #tpu.dot_dimension_numbers<[1], [0], [0], [1], [0, 0, 1, 1], [], []>} : vector<324x128xbf16>, vector<128x128xbf16>, vector<324x128xf32> -> vector<324x128xf32>
    %56 = arith.addf %50, %55 : vector<324x128xf32>
    %c0_61 = arith.constant 0 : index
    %c0_62 = arith.constant 0 : index
    %57 = vector.load %arg4[%c0_61, %c0_62] : memref<1x128xf32, #tpu.memory_space<vmem>>, vector<1x128xf32>
    %58 = vector.broadcast %57 : vector<1x128xf32> to vector<324x128xf32>
    %59 = arith.addf %56, %58 : vector<324x128xf32>
    %cst_63 = arith.constant 0.000000e+00 : f32
    %60 = vector.broadcast %cst_63 : f32 to vector<324x128xf32>
    %61 = arith.maximumf %59, %60 : vector<324x128xf32>
    %62 = arith.truncf %61 : vector<324x128xf32> to vector<324x128xbf16>
    %c8_64 = arith.constant 8 : index
    %c0_65 = arith.constant 0 : index
    %63 = vector.load %arg8[%c8_64, %c0_65] : memref<340x128xbf16, #tpu.memory_space<vmem>>, vector<324x128xbf16>
    tpu.vector_store %arg8[%c8_64, %c0_65], %62 {strides = array<i32>} : memref<340x128xbf16, #tpu.memory_space<vmem>>, vector<324x128xbf16>,
    %cst_66 = arith.constant 0.000000e+00 : bf16
    %64 = vector.broadcast %cst_66 : bf16 to vector<2x128xbf16>
    %c24 = arith.constant 24 : index
    %c0_67 = arith.constant 0 : index
    %65 = vector.load %arg8[%c24, %c0_67] : memref<340x128xbf16, #tpu.memory_space<vmem>>, vector<2x128xbf16>
    tpu.vector_store %arg8[%c24, %c0_67], %64 {strides = array<i32>} : memref<340x128xbf16, #tpu.memory_space<vmem>>, vector<2x128xbf16>,
    %c42 = arith.constant 42 : index
    %c0_68 = arith.constant 0 : index
    %66 = vector.load %arg8[%c42, %c0_68] : memref<340x128xbf16, #tpu.memory_space<vmem>>, vector<2x128xbf16>
    tpu.vector_store %arg8[%c42, %c0_68], %64 {strides = array<i32>} : memref<340x128xbf16, #tpu.memory_space<vmem>>, vector<2x128xbf16>,
    %c60 = arith.constant 60 : index
    %c0_69 = arith.constant 0 : index
    %67 = vector.load %arg8[%c60, %c0_69] : memref<340x128xbf16, #tpu.memory_space<vmem>>, vector<2x128xbf16>
    tpu.vector_store %arg8[%c60, %c0_69], %64 {strides = array<i32>} : memref<340x128xbf16, #tpu.memory_space<vmem>>, vector<2x128xbf16>,
    %c78 = arith.constant 78 : index
    %c0_70 = arith.constant 0 : index
    %68 = vector.load %arg8[%c78, %c0_70] : memref<340x128xbf16, #tpu.memory_space<vmem>>, vector<2x128xbf16>
    tpu.vector_store %arg8[%c78, %c0_70], %64 {strides = array<i32>} : memref<340x128xbf16, #tpu.memory_space<vmem>>, vector<2x128xbf16>,
    %c96 = arith.constant 96 : index
    %c0_71 = arith.constant 0 : index
    %69 = vector.load %arg8[%c96, %c0_71] : memref<340x128xbf16, #tpu.memory_space<vmem>>, vector<2x128xbf16>
    tpu.vector_store %arg8[%c96, %c0_71], %64 {strides = array<i32>} : memref<340x128xbf16, #tpu.memory_space<vmem>>, vector<2x128xbf16>,
    %c114 = arith.constant 114 : index
    %c0_72 = arith.constant 0 : index
    %70 = vector.load %arg8[%c114, %c0_72] : memref<340x128xbf16, #tpu.memory_space<vmem>>, vector<2x128xbf16>
    tpu.vector_store %arg8[%c114, %c0_72], %64 {strides = array<i32>} : memref<340x128xbf16, #tpu.memory_space<vmem>>, vector<2x128xbf16>,
    %c132 = arith.constant 132 : index
    %c0_73 = arith.constant 0 : index
    %71 = vector.load %arg8[%c132, %c0_73] : memref<340x128xbf16, #tpu.memory_space<vmem>>, vector<2x128xbf16>
    tpu.vector_store %arg8[%c132, %c0_73], %64 {strides = array<i32>} : memref<340x128xbf16, #tpu.memory_space<vmem>>, vector<2x128xbf16>,
    %c150 = arith.constant 150 : index
    %c0_74 = arith.constant 0 : index
    %72 = vector.load %arg8[%c150, %c0_74] : memref<340x128xbf16, #tpu.memory_space<vmem>>, vector<2x128xbf16>
    tpu.vector_store %arg8[%c150, %c0_74], %64 {strides = array<i32>} : memref<340x128xbf16, #tpu.memory_space<vmem>>, vector<2x128xbf16>,
    %c168 = arith.constant 168 : index
    %c0_75 = arith.constant 0 : index
    %73 = vector.load %arg8[%c168, %c0_75] : memref<340x128xbf16, #tpu.memory_space<vmem>>, vector<2x128xbf16>
    tpu.vector_store %arg8[%c168, %c0_75], %64 {strides = array<i32>} : memref<340x128xbf16, #tpu.memory_space<vmem>>, vector<2x128xbf16>,
    %c186 = arith.constant 186 : index
    %c0_76 = arith.constant 0 : index
    %74 = vector.load %arg8[%c186, %c0_76] : memref<340x128xbf16, #tpu.memory_space<vmem>>, vector<2x128xbf16>
    tpu.vector_store %arg8[%c186, %c0_76], %64 {strides = array<i32>} : memref<340x128xbf16, #tpu.memory_space<vmem>>, vector<2x128xbf16>,
    %c204 = arith.constant 204 : index
    %c0_77 = arith.constant 0 : index
    %75 = vector.load %arg8[%c204, %c0_77] : memref<340x128xbf16, #tpu.memory_space<vmem>>, vector<2x128xbf16>
    tpu.vector_store %arg8[%c204, %c0_77], %64 {strides = array<i32>} : memref<340x128xbf16, #tpu.memory_space<vmem>>, vector<2x128xbf16>,
    %c222 = arith.constant 222 : index
    %c0_78 = arith.constant 0 : index
    %76 = vector.load %arg8[%c222, %c0_78] : memref<340x128xbf16, #tpu.memory_space<vmem>>, vector<2x128xbf16>
    tpu.vector_store %arg8[%c222, %c0_78], %64 {strides = array<i32>} : memref<340x128xbf16, #tpu.memory_space<vmem>>, vector<2x128xbf16>,
    %c240 = arith.constant 240 : index
    %c0_79 = arith.constant 0 : index
    %77 = vector.load %arg8[%c240, %c0_79] : memref<340x128xbf16, #tpu.memory_space<vmem>>, vector<2x128xbf16>
    tpu.vector_store %arg8[%c240, %c0_79], %64 {strides = array<i32>} : memref<340x128xbf16, #tpu.memory_space<vmem>>, vector<2x128xbf16>,
    %c258 = arith.constant 258 : index
    %c0_80 = arith.constant 0 : index
    %78 = vector.load %arg8[%c258, %c0_80] : memref<340x128xbf16, #tpu.memory_space<vmem>>, vector<2x128xbf16>
    tpu.vector_store %arg8[%c258, %c0_80], %64 {strides = array<i32>} : memref<340x128xbf16, #tpu.memory_space<vmem>>, vector<2x128xbf16>,
    %c276 = arith.constant 276 : index
    %c0_81 = arith.constant 0 : index
    %79 = vector.load %arg8[%c276, %c0_81] : memref<340x128xbf16, #tpu.memory_space<vmem>>, vector<2x128xbf16>
    tpu.vector_store %arg8[%c276, %c0_81], %64 {strides = array<i32>} : memref<340x128xbf16, #tpu.memory_space<vmem>>, vector<2x128xbf16>,
    %c294 = arith.constant 294 : index
    %c0_82 = arith.constant 0 : index
    %80 = vector.load %arg8[%c294, %c0_82] : memref<340x128xbf16, #tpu.memory_space<vmem>>, vector<2x128xbf16>
    tpu.vector_store %arg8[%c294, %c0_82], %64 {strides = array<i32>} : memref<340x128xbf16, #tpu.memory_space<vmem>>, vector<2x128xbf16>,
    %c312 = arith.constant 312 : index
    %c0_83 = arith.constant 0 : index
    %81 = vector.load %arg8[%c312, %c0_83] : memref<340x128xbf16, #tpu.memory_space<vmem>>, vector<2x128xbf16>
    tpu.vector_store %arg8[%c312, %c0_83], %64 {strides = array<i32>} : memref<340x128xbf16, #tpu.memory_space<vmem>>, vector<2x128xbf16>,
    %c330 = arith.constant 330 : index
    %c0_84 = arith.constant 0 : index
    %82 = vector.load %arg8[%c330, %c0_84] : memref<340x128xbf16, #tpu.memory_space<vmem>>, vector<2x128xbf16>
    tpu.vector_store %arg8[%c330, %c0_84], %64 {strides = array<i32>} : memref<340x128xbf16, #tpu.memory_space<vmem>>, vector<2x128xbf16>,
    %cst_85 = arith.constant 0.000000e+00 : bf16
    %83 = vector.broadcast %cst_85 : bf16 to vector<18x128xbf16>
    %c0_i32 = arith.constant 0 : i32
    %84 = arith.cmpi eq, %arg1, %c0_i32 : i32
    %85 = arith.extui %84 : i1 to i32
    %c0_i32_86 = arith.constant 0 : i32
    %86 = arith.cmpi ne, %85, %c0_i32_86 : i32
    scf.if %86 {
      %c8_147 = arith.constant 8 : index
      %c0_148 = arith.constant 0 : index
      %147 = vector.load %arg8[%c8_147, %c0_148] : memref<340x128xbf16, #tpu.memory_space<vmem>>, vector<18x128xbf16>
      tpu.vector_store %arg8[%c8_147, %c0_148], %83 {strides = array<i32>} : memref<340x128xbf16, #tpu.memory_space<vmem>>, vector<18x128xbf16>,
    } else {
    }
    %c0_i32_87 = arith.constant 0 : i32
    %87 = arith.cmpi eq, %arg1, %c0_i32_87 : i32
    %88 = arith.extui %87 : i1 to i32
    %c0_i32_88 = arith.constant 0 : i32
    %89 = arith.cmpi ne, %88, %c0_i32_88 : i32
    scf.if %89 {
      %c314 = arith.constant 314 : index
      %c0_147 = arith.constant 0 : index
      %147 = vector.load %arg8[%c314, %c0_147] : memref<340x128xbf16, #tpu.memory_space<vmem>>, vector<18x128xbf16>
      tpu.vector_store %arg8[%c314, %c0_147], %83 {strides = array<i32>} : memref<340x128xbf16, #tpu.memory_space<vmem>>, vector<18x128xbf16>,
    } else {
    }
    %c7_89 = arith.constant 7 : index
    %c0_90 = arith.constant 0 : index
    %90 = vector.load %arg8[%c7_89, %c0_90] : memref<340x128xbf16, #tpu.memory_space<vmem>>, vector<288x128xbf16>
    %c0_91 = arith.constant 0 : index
    %c0_92 = arith.constant 0 : index
    %c0_93 = arith.constant 0 : index
    %91 = vector.load %arg5[%c0_91, %c0_92, %c0_93] : memref<9x128x128xbf16, #tpu.memory_space<vmem>>, vector<1x128x128xbf16>
    %92 = vector.shape_cast %91 : vector<1x128x128xbf16> to vector<128x128xbf16>
    %cst_94 = arith.constant dense<0.000000e+00> : vector<288x128xf32>
    %93 = tpu.matmul %90, %92, %cst_94 {dimension_numbers = #tpu.dot_dimension_numbers<[1], [0], [0], [1], [0, 0, 1, 1], [], []>} : vector<288x128xbf16>, vector<128x128xbf16>, vector<288x128xf32> -> vector<288x128xf32>
    %c8_95 = arith.constant 8 : index
    %c0_96 = arith.constant 0 : index
    %94 = vector.load %arg8[%c8_95, %c0_96] : memref<340x128xbf16, #tpu.memory_space<vmem>>, vector<288x128xbf16>
    %c1_97 = arith.constant 1 : index
    %c0_98 = arith.constant 0 : index
    %c0_99 = arith.constant 0 : index
    %95 = vector.load %arg5[%c1_97, %c0_98, %c0_99] : memref<9x128x128xbf16, #tpu.memory_space<vmem>>, vector<1x128x128xbf16>
    %96 = vector.shape_cast %95 : vector<1x128x128xbf16> to vector<128x128xbf16>
    %cst_100 = arith.constant dense<0.000000e+00> : vector<288x128xf32>
    %97 = tpu.matmul %94, %96, %cst_100 {dimension_numbers = #tpu.dot_dimension_numbers<[1], [0], [0], [1], [0, 0, 1, 1], [], []>} : vector<288x128xbf16>, vector<128x128xbf16>, vector<288x128xf32> -> vector<288x128xf32>
    %98 = arith.addf %93, %97 : vector<288x128xf32>
    %c9 = arith.constant 9 : index
    %c0_101 = arith.constant 0 : index
    %99 = vector.load %arg8[%c9, %c0_101] : memref<340x128xbf16, #tpu.memory_space<vmem>>, vector<288x128xbf16>
    %c2_102 = arith.constant 2 : index
    %c0_103 = arith.constant 0 : index
    %c0_104 = arith.constant 0 : index
    %100 = vector.load %arg5[%c2_102, %c0_103, %c0_104] : memref<9x128x128xbf16, #tpu.memory_space<vmem>>, vector<1x128x128xbf16>
    %101 = vector.shape_cast %100 : vector<1x128x128xbf16> to vector<128x128xbf16>
    %cst_105 = arith.constant dense<0.000000e+00> : vector<288x128xf32>
    %102 = tpu.matmul %99, %101, %cst_105 {dimension_numbers = #tpu.dot_dimension_numbers<[1], [0], [0], [1], [0, 0, 1, 1], [], []>} : vector<288x128xbf16>, vector<128x128xbf16>, vector<288x128xf32> -> vector<288x128xf32>
    %103 = arith.addf %98, %102 : vector<288x128xf32>
    %c25 = arith.constant 25 : index
    %c0_106 = arith.constant 0 : index
    %104 = vector.load %arg8[%c25, %c0_106] : memref<340x128xbf16, #tpu.memory_space<vmem>>, vector<288x128xbf16>
    %c3_107 = arith.constant 3 : index
    %c0_108 = arith.constant 0 : index
    %c0_109 = arith.constant 0 : index
    %105 = vector.load %arg5[%c3_107, %c0_108, %c0_109] : memref<9x128x128xbf16, #tpu.memory_space<vmem>>, vector<1x128x128xbf16>
    %106 = vector.shape_cast %105 : vector<1x128x128xbf16> to vector<128x128xbf16>
    %cst_110 = arith.constant dense<0.000000e+00> : vector<288x128xf32>
    %107 = tpu.matmul %104, %106, %cst_110 {dimension_numbers = #tpu.dot_dimension_numbers<[1], [0], [0], [1], [0, 0, 1, 1], [], []>} : vector<288x128xbf16>, vector<128x128xbf16>, vector<288x128xf32> -> vector<288x128xf32>
    %108 = arith.addf %103, %107 : vector<288x128xf32>
    %c26 = arith.constant 26 : index
    %c0_111 = arith.constant 0 : index
    %109 = vector.load %arg8[%c26, %c0_111] : memref<340x128xbf16, #tpu.memory_space<vmem>>, vector<288x128xbf16>
    %c4_112 = arith.constant 4 : index
    %c0_113 = arith.constant 0 : index
    %c0_114 = arith.constant 0 : index
    %110 = vector.load %arg5[%c4_112, %c0_113, %c0_114] : memref<9x128x128xbf16, #tpu.memory_space<vmem>>, vector<1x128x128xbf16>
    %111 = vector.shape_cast %110 : vector<1x128x128xbf16> to vector<128x128xbf16>
    %cst_115 = arith.constant dense<0.000000e+00> : vector<288x128xf32>
    %112 = tpu.matmul %109, %111, %cst_115 {dimension_numbers = #tpu.dot_dimension_numbers<[1], [0], [0], [1], [0, 0, 1, 1], [], []>} : vector<288x128xbf16>, vector<128x128xbf16>, vector<288x128xf32> -> vector<288x128xf32>
    %113 = arith.addf %108, %112 : vector<288x128xf32>
    %c27 = arith.constant 27 : index
    %c0_116 = arith.constant 0 : index
    %114 = vector.load %arg8[%c27, %c0_116] : memref<340x128xbf16, #tpu.memory_space<vmem>>, vector<288x128xbf16>
    %c5_117 = arith.constant 5 : index
    %c0_118 = arith.constant 0 : index
    %c0_119 = arith.constant 0 : index
    %115 = vector.load %arg5[%c5_117, %c0_118, %c0_119] : memref<9x128x128xbf16, #tpu.memory_space<vmem>>, vector<1x128x128xbf16>
    %116 = vector.shape_cast %115 : vector<1x128x128xbf16> to vector<128x128xbf16>
    %cst_120 = arith.constant dense<0.000000e+00> : vector<288x128xf32>
    %117 = tpu.matmul %114, %116, %cst_120 {dimension_numbers = #tpu.dot_dimension_numbers<[1], [0], [0], [1], [0, 0, 1, 1], [], []>} : vector<288x128xbf16>, vector<128x128xbf16>, vector<288x128xf32> -> vector<288x128xf32>
    %118 = arith.addf %113, %117 : vector<288x128xf32>
    %c43 = arith.constant 43 : index
    %c0_121 = arith.constant 0 : index
    %119 = vector.load %arg8[%c43, %c0_121] : memref<340x128xbf16, #tpu.memory_space<vmem>>, vector<288x128xbf16>
    %c6_122 = arith.constant 6 : index
    %c0_123 = arith.constant 0 : index
    %c0_124 = arith.constant 0 : index
    %120 = vector.load %arg5[%c6_122, %c0_123, %c0_124] : memref<9x128x128xbf16, #tpu.memory_space<vmem>>, vector<1x128x128xbf16>
    %121 = vector.shape_cast %120 : vector<1x128x128xbf16> to vector<128x128xbf16>
    %cst_125 = arith.constant dense<0.000000e+00> : vector<288x128xf32>
    %122 = tpu.matmul %119, %121, %cst_125 {dimension_numbers = #tpu.dot_dimension_numbers<[1], [0], [0], [1], [0, 0, 1, 1], [], []>} : vector<288x128xbf16>, vector<128x128xbf16>, vector<288x128xf32> -> vector<288x128xf32>
    %123 = arith.addf %118, %122 : vector<288x128xf32>
    %c44 = arith.constant 44 : index
    %c0_126 = arith.constant 0 : index
    %124 = vector.load %arg8[%c44, %c0_126] : memref<340x128xbf16, #tpu.memory_space<vmem>>, vector<288x128xbf16>
    %c7_127 = arith.constant 7 : index
    %c0_128 = arith.constant 0 : index
    %c0_129 = arith.constant 0 : index
    %125 = vector.load %arg5[%c7_127, %c0_128, %c0_129] : memref<9x128x128xbf16, #tpu.memory_space<vmem>>, vector<1x128x128xbf16>
    %126 = vector.shape_cast %125 : vector<1x128x128xbf16> to vector<128x128xbf16>
    %cst_130 = arith.constant dense<0.000000e+00> : vector<288x128xf32>
    %127 = tpu.matmul %124, %126, %cst_130 {dimension_numbers = #tpu.dot_dimension_numbers<[1], [0], [0], [1], [0, 0, 1, 1], [], []>} : vector<288x128xbf16>, vector<128x128xbf16>, vector<288x128xf32> -> vector<288x128xf32>
    %128 = arith.addf %123, %127 : vector<288x128xf32>
    %c45 = arith.constant 45 : index
    %c0_131 = arith.constant 0 : index
    %129 = vector.load %arg8[%c45, %c0_131] : memref<340x128xbf16, #tpu.memory_space<vmem>>, vector<288x128xbf16>
    %c8_132 = arith.constant 8 : index
    %c0_133 = arith.constant 0 : index
    %c0_134 = arith.constant 0 : index
    %130 = vector.load %arg5[%c8_132, %c0_133, %c0_134] : memref<9x128x128xbf16, #tpu.memory_space<vmem>>, vector<1x128x128xbf16>
    %131 = vector.shape_cast %130 : vector<1x128x128xbf16> to vector<128x128xbf16>
    %cst_135 = arith.constant dense<0.000000e+00> : vector<288x128xf32>
    %132 = tpu.matmul %129, %131, %cst_135 {dimension_numbers = #tpu.dot_dimension_numbers<[1], [0], [0], [1], [0, 0, 1, 1], [], []>} : vector<288x128xbf16>, vector<128x128xbf16>, vector<288x128xf32> -> vector<288x128xf32>
    %133 = arith.addf %128, %132 : vector<288x128xf32>
    %c0_136 = arith.constant 0 : index
    %c0_137 = arith.constant 0 : index
    %134 = vector.load %arg6[%c0_136, %c0_137] : memref<1x128xf32, #tpu.memory_space<vmem>>, vector<1x128xf32>
    %135 = vector.broadcast %134 : vector<1x128xf32> to vector<288x128xf32>
    %136 = arith.addf %133, %135 : vector<288x128xf32>
    %c0_138 = arith.constant 0 : index
    %c0_139 = arith.constant 0 : index
    %c37_140 = arith.constant 37 : index
    %c0_141 = arith.constant 0 : index
    %137 = vector.load %arg2[%c0_138, %c0_139, %c37_140, %c0_141] : memref<1x1x378x128xbf16, #tpu.memory_space<vmem>>, vector<1x1x288x128xbf16>
    %138 = vector.shape_cast %137 : vector<1x1x288x128xbf16> to vector<288x128xbf16>
    %139 = arith.extf %138 : vector<288x128xbf16> to vector<288x128xf32>
    %140 = arith.addf %136, %139 : vector<288x128xf32>
    %cst_142 = arith.constant 0.000000e+00 : f32
    %141 = vector.broadcast %cst_142 : f32 to vector<288x128xf32>
    %142 = arith.maximumf %140, %141 : vector<288x128xf32>
    %143 = arith.truncf %142 : vector<288x128xf32> to vector<288x128xbf16>
    %c0_143 = arith.constant 0 : index
    %c0_144 = arith.constant 0 : index
    %c0_145 = arith.constant 0 : index
    %c0_146 = arith.constant 0 : index
    %144 = vector.load %arg7[%c0_143, %c0_144, %c0_145, %c0_146] : memref<1x1x288x128xbf16, #tpu.memory_space<vmem>>, vector<1x1x288x128xbf16>
    %145 = vector.shape_cast %144 : vector<1x1x288x128xbf16> to vector<288x128xbf16>
    %146 = vector.shape_cast %143 : vector<288x128xbf16> to vector<1x1x288x128xbf16>
    tpu.vector_store %arg7[%c0_143, %c0_144, %c0_145, %c0_146], %146 {strides = array<i32>} : memref<1x1x288x128xbf16, #tpu.memory_space<vmem>>, vector<1x1x288x128xbf16>,
    return
  }
  func.func @transform_0(%arg0: i32, %arg1: i32) -> (i32, i32, i32, i32) {
    %c0_i32 = arith.constant 0 : i32
    %c0_i32_0 = arith.constant 0 : i32
    %c0_i32_1 = arith.constant 0 : i32
    return %arg0, %arg1, %c0_i32, %c0_i32_0 : i32, i32, i32, i32
  }
  func.func @transform_1(%arg0: i32, %arg1: i32) -> (i32, i32, i32) {
    %c0_i32 = arith.constant 0 : i32
    %c0_i32_0 = arith.constant 0 : i32
    %c0_i32_1 = arith.constant 0 : i32
    %c0_i32_2 = arith.constant 0 : i32
    return %c0_i32, %c0_i32_0, %c0_i32_1 : i32, i32, i32
  }
  func.func @transform_2(%arg0: i32, %arg1: i32) -> (i32, i32) {
    %c0_i32 = arith.constant 0 : i32
    %c0_i32_0 = arith.constant 0 : i32
    %c0_i32_1 = arith.constant 0 : i32
    return %c0_i32, %c0_i32_0 : i32, i32
  }
  func.func @transform_3(%arg0: i32, %arg1: i32) -> (i32, i32, i32) {
    %c0_i32 = arith.constant 0 : i32
    %c0_i32_0 = arith.constant 0 : i32
    %c0_i32_1 = arith.constant 0 : i32
    %c0_i32_2 = arith.constant 0 : i32
    return %c0_i32, %c0_i32_0, %c0_i32_1 : i32, i32, i32
  }
  func.func @transform_4(%arg0: i32, %arg1: i32) -> (i32, i32) {
    %c0_i32 = arith.constant 0 : i32
    %c0_i32_0 = arith.constant 0 : i32
    %c0_i32_1 = arith.constant 0 : i32
    return %c0_i32, %c0_i32_0 : i32, i32
  }
  func.func @transform_5(%arg0: i32, %arg1: i32) -> (i32, i32, i32, i32) {
    %c0_i32 = arith.constant 0 : i32
    %c0_i32_0 = arith.constant 0 : i32
    %c0_i32_1 = arith.constant 0 : i32
    return %arg0, %arg1, %c0_i32, %c0_i32_0 : i32, i32, i32, i32
  }
}

</mosaic_0001>

<llo_original>
// kernel: tpu_custom_call.1
$region0: #{tpu_custom_call.1}
  #allocation0 [shape = 'u32[]', space=smem, size = 0x4, offset = 0x4, fixed_abs, tag = 'smem constant byte address 0x4 - core index']
  #allocation1 [shape = 'u32[72,128]{1,0:T(1,128)}', space=vmem, size = 0x9000, scoped, tag = 'internal scratch']
  #allocation2 [shape = 'bf16[340,128]{1,0:T(8,128)(2,1)}', space=vmem, size = 0x15800, scoped, tag = 'scratch operand']
  %s0 = inlined_call_operand.vmem [shape: bf16[2,1,378,128], index: 0, kind: input, shape index: {}]
  %s1 = inlined_call_operand.vmem [shape: bf16[9,128,128], index: 1, kind: input, shape index: {}]
  %s2 = inlined_call_operand.vmem [shape: f32[1,128], index: 2, kind: input, shape index: {}]
  %s3 = inlined_call_operand.hbm [shape: bf16[9,128,128], index: 3, kind: input, shape index: {}]
  %s4 = inlined_call_operand.vmem [shape: f32[1,128], index: 4, kind: input, shape index: {}]
  %s5 = inlined_call_operand.hbm [shape: bf16[2,1,288,128], index: 5, kind: output, shape index: {}]
  %s6 = sld [smem:[#allocation0]]
  $region61: #{tpu_custom_call.1} parent=0
    _
  %s8 = ssub.s32 1, %s6
  %s9 = scalar_select 0, %s8, %s6
  $region1: #{tpu_custom_call.1} parent=0
    #allocation3 [shape = 'u8[294912]{0}', space=vmem, size = 0x48000, scoped, tag = 'input window, operand 3, single buffered']
    #allocation4 [shape = 's32[2]{0}', space=sflag, size = 0x8, scoped, tag = 'scoped memory for tpu_custom_call.1']
    #allocation5 [shape = 's32[2]{0}', space=sflag, size = 0x8, scoped, tag = 'scoped memory for tpu_custom_call.1']
    #allocation6 [shape = 'u8[147456]{0}', space=vmem, size = 0x24000, scoped, tag = 'output window, operand 0']
    %10 = vsyncpa [#allocation4], 0
    %11 = vsyncpa [#allocation5], 0
    %s12 = scalar_lea.sflag [#allocation5], 1
    %13 = vsyncpa %s12, 0
    loop: start=0, step=1, limit=4
    $region2: #{tpu_custom_call.1} parent=1 // loop_pre_header
      _
    $region3: #{tpu_custom_call.1} parent=1 // loop_header
      %s15 = sphi 0, %s19
      %p16 = scmp.ge.s32.totalorder %s15, 4
      %s22 = sphi 0, %s34
      %s23 = sphi 0, %s30
      %s24 = sphi 0, %s22
      %s25 = sphi 0, %s23
      %s26 = sphi 0, %s24
      %s27 = sphi 0, %s25
      %s39 = sphi 0, %s41
      %s42 = sphi 0, %s39
      %s43 = sphi 0, %s42
      %s59 = sphi 0, %s43
      %s63 = sphi 0, %s63
      %s65 = sphi 0, %s63
      %s66 = sphi 0, %s65
      %s80 = sphi 0, %s66
      %s84 = sphi 0, %s84
      %s86 = sphi 0, %s84
      %s87 = sphi 0, %s86
      %s101 = sphi 0, %s87
      %s105 = sphi 0, %s105
      %s107 = sphi 0, %s105
      %s108 = sphi 0, %s107
      %s122 = sphi 0, %s108
      %s126 = sphi 0, %s126
      %s128 = sphi 0, %s126
      %s129 = sphi 0, %s128
      %s143 = sphi 0, %s129
      %s151 = sphi 0, %s153
      %s154 = sphi 0, %s151
      %s155 = sphi 0, %s154
      %s171 = sphi 0, %s155
    $region4: #{tpu_custom_call.1} parent=1 // loop_header_branch
      %18 = sbr.rel (%p16) target = $region8
    $region5: #{tpu_custom_call.1} parent=1 // loop_body
      %s20 = ssub.s32 %s15, 1
      %s21 = ssub.s32 %s15, 2
      %s28 = sadd.s32 1, %s23
      %p29 = scmp.ge.s32.totalorder %s28, 1
      %s30 = scalar_select %p29, 0, %s28
      %s31 = sadd.s32 1, %s22
      %s32 = scalar_select %p29, %s31, %s22
      %p33 = scmp.ge.s32.totalorder %s32, 2
      %s34 = scalar_select %p33, 0, %s32
      %s35 = ssub.s32 %s22, %s34
      %s36 = ssub.s32 %s23, %s30
      %s37 = sor.u32 %s35, %s36
      %p38 = scmp.eq.s32.totalorder %s37, 0
      %s40 = sadd.s32 %s39, 1
      %s41 = scalar_select %p38, %s39, %s40
      %p44 = pneg %p38
      %p45 = scmp.eq.s32.totalorder %s15, 1
      %p46 = por %p44, %p45
      %p47 = scmp.ne.s32.totalorder %s39, %s42
      %p48 = scmp.eq.s32.totalorder %s15, 0
      %p49 = por %p47, %p48
      %p50 = scmp.ne.s32.totalorder %s39, %s42
      %p51 = scmp.eq.s32.totalorder %s20, 1
      %p52 = por %p50, %p51
      %p53 = scmp.ne.s32.totalorder %s42, %s43
      %p54 = scmp.eq.s32.totalorder %s20, 0
      %p55 = por %p53, %p54
      %p56 = scmp.ne.s32.totalorder %s42, %s43
      %p57 = scmp.eq.s32.totalorder %s21, 1
      %p58 = por %p56, %p57
      %p60 = scmp.ne.s32.totalorder %s43, %s59
      %p61 = scmp.eq.s32.totalorder %s21, 0
      %p62 = por %p60, %p61
      %s64 = sadd.s32 %s63, 1
      %p67 = scmp.eq.s32.totalorder %s15, 1
      %p68 = scmp.ne.s32.totalorder %s63, %s65
      %p69 = scmp.eq.s32.totalorder %s15, 0
      %p70 = por %p68, %p69
      %p71 = scmp.ne.s32.totalorder %s63, %s65
      %p72 = scmp.eq.s32.totalorder %s20, 1
      %p73 = por %p71, %p72
      %p74 = scmp.ne.s32.totalorder %s65, %s66
      %p75 = scmp.eq.s32.totalorder %s20, 0
      %p76 = por %p74, %p75
      %p77 = scmp.ne.s32.totalorder %s65, %s66
      %p78 = scmp.eq.s32.totalorder %s21, 1
      %p79 = por %p77, %p78
      %p81 = scmp.ne.s32.totalorder %s66, %s80
      %p82 = scmp.eq.s32.totalorder %s21, 0
      %p83 = por %p81, %p82
      %s85 = sadd.s32 %s84, 1
      %p88 = scmp.eq.s32.totalorder %s15, 1
      %p89 = scmp.ne.s32.totalorder %s84, %s86
      %p90 = scmp.eq.s32.totalorder %s15, 0
      %p91 = por %p89, %p90
      %p92 = scmp.ne.s32.totalorder %s84, %s86
      %p93 = scmp.eq.s32.totalorder %s20, 1
      %p94 = por %p92, %p93
      %p95 = scmp.ne.s32.totalorder %s86, %s87
      %p96 = scmp.eq.s32.totalorder %s20, 0
      %p97 = por %p95, %p96
      %p98 = scmp.ne.s32.totalorder %s86, %s87
      %p99 = scmp.eq.s32.totalorder %s21, 1
      %p100 = por %p98, %p99
      %p102 = scmp.ne.s32.totalorder %s87, %s101
      %p103 = scmp.eq.s32.totalorder %s21, 0
      %p104 = por %p102, %p103
      %s106 = sadd.s32 %s105, 1
      %p109 = scmp.eq.s32.totalorder %s15, 1
      %p110 = scmp.ne.s32.totalorder %s105, %s107
      %p111 = scmp.eq.s32.totalorder %s15, 0
      %p112 = por %p110, %p111
      %p113 = scmp.ne.s32.totalorder %s105, %s107
      %p114 = scmp.eq.s32.totalorder %s20, 1
      %p115 = por %p113, %p114
      %p116 = scmp.ne.s32.totalorder %s107, %s108
      %p117 = scmp.eq.s32.totalorder %s20, 0
      %p118 = por %p116, %p117
      %p119 = scmp.ne.s32.totalorder %s107, %s108
      %p120 = scmp.eq.s32.totalorder %s21, 1
      %p121 = por %p119, %p120
      %p123 = scmp.ne.s32.totalorder %s108, %s122
      %p124 = scmp.eq.s32.totalorder %s21, 0
      %p125 = por %p123, %p124
      %s127 = sadd.s32 %s126, 1
      %p130 = scmp.eq.s32.totalorder %s15, 1
      %p131 = scmp.ne.s32.totalorder %s126, %s128
      %p132 = scmp.eq.s32.totalorder %s15, 0
      %p133 = por %p131, %p132
      %p134 = scmp.ne.s32.totalorder %s126, %s128
      %p135 = scmp.eq.s32.totalorder %s20, 1
      %p136 = por %p134, %p135
      %p137 = scmp.ne.s32.totalorder %s128, %s129
      %p138 = scmp.eq.s32.totalorder %s20, 0
      %p139 = por %p137, %p138
      %p140 = scmp.ne.s32.totalorder %s128, %s129
      %p141 = scmp.eq.s32.totalorder %s21, 1
      %p142 = por %p140, %p141
      %p144 = scmp.ne.s32.totalorder %s129, %s143
      %p145 = scmp.eq.s32.totalorder %s21, 0
      %p146 = por %p144, %p145
      %s147 = ssub.s32 %s22, %s34
      %s148 = ssub.s32 %s23, %s30
      %s149 = sor.u32 %s147, %s148
      %p150 = scmp.eq.s32.totalorder %s149, 0
      %s152 = sadd.s32 %s151, 1
      %s153 = scalar_select %p150, %s151, %s152
      %p156 = pneg %p150
      %p157 = scmp.eq.s32.totalorder %s15, 1
      %p158 = por %p156, %p157
      %p159 = scmp.ne.s32.totalorder %s151, %s154
      %p160 = scmp.eq.s32.totalorder %s15, 0
      %p161 = por %p159, %p160
      %p162 = scmp.ne.s32.totalorder %s151, %s154
      %p163 = scmp.eq.s32.totalorder %s20, 1
      %p164 = por %p162, %p163
      %p165 = scmp.ne.s32.totalorder %s154, %s155
      %p166 = scmp.eq.s32.totalorder %s20, 0
      %p167 = por %p165, %p166
      %p168 = scmp.ne.s32.totalorder %s154, %s155
      %p169 = scmp.eq.s32.totalorder %s21, 1
      %p170 = por %p168, %p169
      %p172 = scmp.ne.s32.totalorder %s155, %s171
      %p173 = scmp.eq.s32.totalorder %s21, 0
      %p174 = por %p172, %p173
      %p175 = scmp.le.s32.totalorder 1, %s15
      %p176 = scmp.lt.s32.totalorder %s15, 3
      %p177 = pnand %p175, %p176
      %p178 = pneg %p177
      // Predicated region
      $region9: #{tpu_custom_call.1} parent=5 // pred_check
        _
      $region10: #{tpu_custom_call.1} parent=5 // pred_check_branch
        %180 = sbr.rel (%p177) target = $region12
      $region11: #{tpu_custom_call.1} parent=5 // pred_region
        %s181 = ssub.s32 %s15, 1
        // Predicated region
        $region13: #{tpu_custom_call.1} parent=11 // pred_check
          %p182 = pneg %p76
        $region14: #{tpu_custom_call.1} parent=11 // pred_check_branch
          %184 = sbr.rel (%p182) target = $region16
        $region15: #{tpu_custom_call.1} parent=11 // pred_region
          _
        $region16: #{tpu_custom_call.1} parent=11 // pred_fallthru
          _
        // Predicated region
        $region17: #{tpu_custom_call.1} parent=11 // pred_check
          %p185 = pneg %p97
        $region18: #{tpu_custom_call.1} parent=11 // pred_check_branch
          %187 = sbr.rel (%p185) target = $region20
        $region19: #{tpu_custom_call.1} parent=11 // pred_region
          _
        $region20: #{tpu_custom_call.1} parent=11 // pred_fallthru
          _
        // Predicated region
        $region21: #{tpu_custom_call.1} parent=11 // pred_check
          %p188 = pneg %p118
        $region22: #{tpu_custom_call.1} parent=11 // pred_check_branch
          %190 = sbr.rel (%p188) target = $region24
        $region23: #{tpu_custom_call.1} parent=11 // pred_region
          %192 = vsyncadd [#allocation4], 0
          %s193 = sshll.u32 %s3, 4
          %s194 = int_to_ptr.hbm [resolvable:$true] %s193
          %s195 = sshll.u32 [#allocation3], 4
          %s196 = int_to_ptr.vmem [resolvable:$true] %s195
          %201 = dma.hbm_to_vmem [thread:$0]  %s194, 9216, %s196, [#allocation4], 64, 64, 4
        $region24: #{tpu_custom_call.1} parent=11 // pred_fallthru
          _
        // Predicated region
        $region25: #{tpu_custom_call.1} parent=11 // pred_check
          %p202 = pneg %p139
        $region26: #{tpu_custom_call.1} parent=11 // pred_check_branch
          %204 = sbr.rel (%p202) target = $region28
        $region27: #{tpu_custom_call.1} parent=11 // pred_region
          _
        $region28: #{tpu_custom_call.1} parent=11 // pred_fallthru
          _
      $region12: #{tpu_custom_call.1} parent=5 // pred_fallthru
        _
      %p205 = scmp.lt.s32.totalorder %s15, 2
      // Predicated region
      $region29: #{tpu_custom_call.1} parent=5 // pred_check
        %p206 = pneg %p205
      $region30: #{tpu_custom_call.1} parent=5 // pred_check_branch
        %208 = sbr.rel (%p206) target = $region32
      $region31: #{tpu_custom_call.1} parent=5 // pred_region
        // Predicated region
        $region33: #{tpu_custom_call.1} parent=31 // pred_check
          %p209 = pneg %p49
        $region34: #{tpu_custom_call.1} parent=31 // pred_check_branch
          %211 = sbr.rel (%p209) target = $region36
        $region35: #{tpu_custom_call.1} parent=31 // pred_region
          %p212 = scmp.lt.s32.totalorder %s22, 1
          %s213 = scalar_select %p212, %s22, 1
          %p214 = scmp.lt.s32.totalorder %s23, 0
          %s215 = scalar_select %p214, %s23, 0
          %s216 = smul.addr %s215, 48
          %s217 = smul.addr %s213, 48
          %s218 = sadd.s32 %s216, %s217
          %s219 = smul.addr %s218, 4
          %s220 = scalar_lea.vmem %s0, %s219
        $region36: #{tpu_custom_call.1} parent=31 // pred_fallthru
          _
      $region32: #{tpu_custom_call.1} parent=5 // pred_fallthru
        _
      %p221 = scmp.le.s32.totalorder 1, %s15
      %p222 = scmp.lt.s32.totalorder %s15, 3
      %p223 = pnand %p221, %p222
      %p224 = pneg %p223
      // Predicated region
      $region37: #{tpu_custom_call.1} parent=5 // pred_check
        _
      $region38: #{tpu_custom_call.1} parent=5 // pred_check_branch
        %226 = sbr.rel (%p223) target = $region40
      $region39: #{tpu_custom_call.1} parent=5 // pred_region
        %s227 = ssub.s32 %s15, 1
        // Predicated region
        $region41: #{tpu_custom_call.1} parent=39 // pred_check
          %p228 = pneg %p118
        $region42: #{tpu_custom_call.1} parent=39 // pred_check_branch
          %230 = sbr.rel (%p228) target = $region44
        $region43: #{tpu_custom_call.1} parent=39 // pred_region
          %232 = dma.done [#allocation4], 9216
        $region44: #{tpu_custom_call.1} parent=39 // pred_fallthru
          _
        %p233 = scmp.lt.s32.totalorder %s24, 1
        %s234 = scalar_select %p233, %s24, 1
        %p235 = scmp.lt.s32.totalorder %s25, 0
        %s236 = scalar_select %p235, %s25, 0
        %s237 = smul.addr %s236, 48
        %s238 = smul.addr %s234, 48
        %s239 = sadd.s32 %s237, %s238
        %s240 = smul.addr %s239, 4
        %s241 = scalar_lea.vmem %s0, %s240
        %p242 = pneg %p55
        %p243 = pneg %p52
        %p244 = pneg %p76
        %p245 = pneg %p73
        %p246 = pneg %p97
        %p247 = pneg %p94
        %p248 = pneg %p118
        %p249 = pneg %p115
        %p250 = pneg %p139
        %p251 = pneg %p136
        %p252 = pneg %p167
        %p253 = pneg %p164
        %s254 = sand.u32 %s154, 1
        %s255 = scalar_lea.sflag [#allocation5], %s254
        %s256 = sand.u32 %s154, 1
        %s257 = smul.addr %s256, 144
        %s258 = scalar_lea.vmem [#allocation6], %s257
        %p259 = scmp.lt.s32.totalorder %s24, 1
        %s260 = scalar_select %p259, %s24, 1
        %p261 = scmp.lt.s32.totalorder %s25, 0
        %s262 = scalar_select %p261, %s25, 0
        %s263 = smul.addr %s262, 48
        %s264 = smul.addr %s260, 48
        %s265 = sadd.s32 %s263, %s264
        %s266 = smul.addr %s265, 4
        %s267 = scalar_lea.vmem %s0, %s266
        %269 = vst [vmem:[#allocation2] sm:$0xf] 0
        %270 = vst [vmem:[#allocation2 + $0xa4] sm:$0xc] 0
        %271 = vst [vmem:[#allocation2 + $0xa8] sm:$0x3] 0
        %v272 = vld [vmem:[%s267] sm:$0xf]
        %v273 = vld [vmem:[%s267 + $0x4] sm:$0xf]
        %v274 = vld [vmem:[%s267 + $0x8] sm:$0xf]
        %v275 = vld [vmem:[%s267 + $0xc] sm:$0xf]
        %v276 = vld [vmem:[%s267 + $0x10] sm:$0xf]
        %v277 = vld [vmem:[%s267 + $0x14] sm:$0xf]
        %v278 = vld [vmem:[%s267 + $0x18] sm:$0xf]
        %v279 = vld [vmem:[%s267 + $0x1c] sm:$0xf]
        %v280 = vld [vmem:[%s267 + $0x20] sm:$0xf]
        %v281 = vld [vmem:[%s267 + $0x24] sm:$0xf]
        %v282 = vld [vmem:[%s267 + $0x28] sm:$0xf]
        %v283 = vld [vmem:[%s267 + $0x2c] sm:$0xf]
        %v284 = vld [vmem:[%s267 + $0x30] sm:$0xf]
        %v285 = vld [vmem:[%s267 + $0x34] sm:$0xf]
        %v286 = vld [vmem:[%s267 + $0x38] sm:$0xf]
        %v287 = vld [vmem:[%s267 + $0x3c] sm:$0xf]
        %v288 = vld [vmem:[%s267 + $0x40] sm:$0xf]
        %v289 = vld [vmem:[%s267 + $0x44] sm:$0xf]
        %v290 = vld [vmem:[%s267 + $0x48] sm:$0xf]
        %v291 = vld [vmem:[%s267 + $0x4c] sm:$0xf]
        %v292 = vld [vmem:[%s267 + $0x50] sm:$0xf]
        %v293 = vld [vmem:[%s267 + $0x54] sm:$0xf]
        %v294 = vld [vmem:[%s267 + $0x58] sm:$0xf]
        %v295 = vld [vmem:[%s267 + $0x5c] sm:$0xf]
        %v296 = vld [vmem:[%s267 + $0x60] sm:$0xf]
        %v297 = vld [vmem:[%s267 + $0x64] sm:$0xf]
        %v298 = vld [vmem:[%s267 + $0x68] sm:$0xf]
        %v299 = vld [vmem:[%s267 + $0x6c] sm:$0xf]
        %v300 = vld [vmem:[%s267 + $0x70] sm:$0xf]
        %v301 = vld [vmem:[%s267 + $0x74] sm:$0xf]
        %v302 = vld [vmem:[%s267 + $0x78] sm:$0xf]
        %v303 = vld [vmem:[%s267 + $0x7c] sm:$0xf]
        %v304 = vld [vmem:[%s267 + $0x80] sm:$0xf]
        %v305 = vld [vmem:[%s267 + $0x84] sm:$0xf]
        %v306 = vld [vmem:[%s267 + $0x88] sm:$0xf]
        %v307 = vld [vmem:[%s267 + $0x8c] sm:$0xf]
        %v308 = vld [vmem:[%s267 + $0x90] sm:$0xf]
        %v309 = vld [vmem:[%s267 + $0x94] sm:$0xf]
        %v310 = vld [vmem:[%s267 + $0x98] sm:$0xf]
        %v311 = vld [vmem:[%s267 + $0x9c] sm:$0xf]
        %v312 = vld [vmem:[%s267 + $0xa0] sm:$0x3]
        %v313 = vld [vmem:[%s1] sm:$0xf]
        %v314 = vld [vmem:[%s1 + $0x4] sm:$0xf]
        %v315 = vld [vmem:[%s1 + $0x8] sm:$0xf]
        %v316 = vld [vmem:[%s1 + $0xc] sm:$0xf]
        %v317 = vld [vmem:[%s1 + $0x10] sm:$0xf]
        %v318 = vld [vmem:[%s1 + $0x14] sm:$0xf]
        %v319 = vld [vmem:[%s1 + $0x18] sm:$0xf]
        %v320 = vld [vmem:[%s1 + $0x1c] sm:$0xf]
        %v321 = vld [vmem:[%s1 + $0x20] sm:$0xf]
        %v322 = vld [vmem:[%s1 + $0x24] sm:$0xf]
        %v323 = vld [vmem:[%s1 + $0x28] sm:$0xf]
        %v324 = vld [vmem:[%s1 + $0x2c] sm:$0xf]
        %v325 = vld [vmem:[%s1 + $0x30] sm:$0xf]
        %v326 = vld [vmem:[%s1 + $0x34] sm:$0xf]
        %v327 = vld [vmem:[%s1 + $0x38] sm:$0xf]
        %v328 = vld [vmem:[%s1 + $0x3c] sm:$0xf]
        %v329 = vld [vmem:[%s267 + $0xa0] sm:$0x7]
        %s330 = scalar_lea.vmem %s1, 64
        %v331 = vld [vmem:[%s330] sm:$0xf]
        %v332 = vld [vmem:[%s330 + $0x4] sm:$0xf]
        %v333 = vld [vmem:[%s330 + $0x8] sm:$0xf]
        %v334 = vld [vmem:[%s330 + $0xc] sm:$0xf]
        %v335 = vld [vmem:[%s330 + $0x10] sm:$0xf]
        %v336 = vld [vmem:[%s330 + $0x14] sm:$0xf]
        %v337 = vld [vmem:[%s330 + $0x18] sm:$0xf]
        %v338 = vld [vmem:[%s330 + $0x1c] sm:$0xf]
        %v339 = vld [vmem:[%s330 + $0x20] sm:$0xf]
        %v340 = vld [vmem:[%s330 + $0x24] sm:$0xf]
        %v341 = vld [vmem:[%s330 + $0x28] sm:$0xf]
        %v342 = vld [vmem:[%s330 + $0x2c] sm:$0xf]
        %v343 = vld [vmem:[%s330 + $0x30] sm:$0xf]
        %v344 = vld [vmem:[%s330 + $0x34] sm:$0xf]
        %v345 = vld [vmem:[%s330 + $0x38] sm:$0xf]
        %v346 = vld [vmem:[%s330 + $0x3c] sm:$0xf]
        %v388 = vunpack.c.l.b16 %v272
        %v389 = vunpack.c.l.b16 %v273
        %v390 = vunpack.c.l.b16 %v274
        %v391 = vunpack.c.l.b16 %v275
        %v392 = vunpack.c.l.b16 %v276
        %v393 = vunpack.c.l.b16 %v277
        %v394 = vunpack.c.l.b16 %v278
        %v395 = vunpack.c.l.b16 %v279
        %v396 = vunpack.c.l.b16 %v280
        %v397 = vunpack.c.l.b16 %v281
        %v398 = vunpack.c.l.b16 %v282
        %v399 = vunpack.c.l.b16 %v283
        %v400 = vunpack.c.l.b16 %v284
        %v401 = vunpack.c.l.b16 %v285
        %v402 = vunpack.c.l.b16 %v286
        %v403 = vunpack.c.l.b16 %v287
        %v404 = vunpack.c.l.b16 %v288
        %v405 = vunpack.c.l.b16 %v289
        %v406 = vunpack.c.l.b16 %v290
        %v407 = vunpack.c.l.b16 %v291
        %v408 = vunpack.c.l.b16 %v292
        %v409 = vunpack.c.l.b16 %v293
        %v410 = vunpack.c.l.b16 %v294
        %v411 = vunpack.c.l.b16 %v295
        %v412 = vunpack.c.l.b16 %v296
        %v413 = vunpack.c.l.b16 %v297
        %v414 = vunpack.c.l.b16 %v298
        %v415 = vunpack.c.l.b16 %v299
        %v416 = vunpack.c.l.b16 %v300
        %v417 = vunpack.c.l.b16 %v301
        %v418 = vunpack.c.l.b16 %v302
        %v419 = vunpack.c.l.b16 %v303
        %v420 = vunpack.c.l.b16 %v304
        %v421 = vunpack.c.l.b16 %v305
        %v422 = vunpack.c.l.b16 %v306
        %v423 = vunpack.c.l.b16 %v307
        %v424 = vunpack.c.l.b16 %v308
        %v425 = vunpack.c.l.b16 %v309
        %v426 = vunpack.c.l.b16 %v310
        %v427 = vunpack.c.l.b16 %v311
        %v428 = vunpack.c.l.b16 %v329
        %v429 = vpack.c.b16 %v389, %v388
        %v430 = vpack.c.b16 %v391, %v390
        %v431 = vpack.c.b16 %v393, %v392
        %v432 = vpack.c.b16 %v395, %v394
        %v433 = vpack.c.b16 %v397, %v396
        %v434 = vpack.c.b16 %v399, %v398
        %v435 = vpack.c.b16 %v401, %v400
        %v436 = vpack.c.b16 %v403, %v402
        %v437 = vpack.c.b16 %v405, %v404
        %v438 = vpack.c.b16 %v407, %v406
        %v439 = vpack.c.b16 %v409, %v408
        %v440 = vpack.c.b16 %v411, %v410
        %v441 = vpack.c.b16 %v413, %v412
        %v442 = vpack.c.b16 %v415, %v414
        %v443 = vpack.c.b16 %v417, %v416
        %v444 = vpack.c.b16 %v419, %v418
        %v445 = vpack.c.b16 %v421, %v420
        %v446 = vpack.c.b16 %v423, %v422
        %v447 = vpack.c.b16 %v425, %v424
        %v448 = vpack.c.b16 %v427, %v426
        %v449 = vpack.c.b16 %v428, %v428
        %vm450 = vsmask.f32 7424
        %v452 = vshrl.u32 %v429, 16
        %v454 = vshll.u32 %v429, 16
        %v456 = vrot.slane %v454, 1
        %v457 = vor.u32 %v452, %v456
        %v459 = vshll.u32 %v430, 16
        %v461 = vrot.slane %v459, 1
        %v462 = vsel %vm450, %v457, %v461
        %v463 = vshrl.u32 %v430, 16
        %v465 = vor.u32 %v463, %v461
        %v467 = vshll.u32 %v431, 16
        %v469 = vrot.slane %v467, 1
        %v470 = vsel %vm450, %v465, %v469
        %v471 = vshrl.u32 %v431, 16
        %v473 = vor.u32 %v471, %v469
        %v475 = vshll.u32 %v432, 16
        %v477 = vrot.slane %v475, 1
        %v478 = vsel %vm450, %v473, %v477
        %v479 = vshrl.u32 %v432, 16
        %v481 = vor.u32 %v479, %v477
        %v483 = vshll.u32 %v433, 16
        %v485 = vrot.slane %v483, 1
        %v486 = vsel %vm450, %v481, %v485
        %v487 = vshrl.u32 %v433, 16
        %v489 = vor.u32 %v487, %v485
        %v491 = vshll.u32 %v434, 16
        %v493 = vrot.slane %v491, 1
        %v494 = vsel %vm450, %v489, %v493
        %v495 = vshrl.u32 %v434, 16
        %v497 = vor.u32 %v495, %v493
        %v499 = vshll.u32 %v435, 16
        %v501 = vrot.slane %v499, 1
        %v502 = vsel %vm450, %v497, %v501
        %v503 = vshrl.u32 %v435, 16
        %v505 = vor.u32 %v503, %v501
        %v507 = vshll.u32 %v436, 16
        %v509 = vrot.slane %v507, 1
        %v510 = vsel %vm450, %v505, %v509
        %v511 = vshrl.u32 %v436, 16
        %v513 = vor.u32 %v511, %v509
        %v515 = vshll.u32 %v437, 16
        %v517 = vrot.slane %v515, 1
        %v518 = vsel %vm450, %v513, %v517
        %v519 = vshrl.u32 %v437, 16
        %v521 = vor.u32 %v519, %v517
        %v523 = vshll.u32 %v438, 16
        %v525 = vrot.slane %v523, 1
        %v526 = vsel %vm450, %v521, %v525
        %v527 = vshrl.u32 %v438, 16
        %v529 = vor.u32 %v527, %v525
        %v531 = vshll.u32 %v439, 16
        %v533 = vrot.slane %v531, 1
        %v534 = vsel %vm450, %v529, %v533
        %v535 = vshrl.u32 %v439, 16
        %v537 = vor.u32 %v535, %v533
        %v539 = vshll.u32 %v440, 16
        %v541 = vrot.slane %v539, 1
        %v542 = vsel %vm450, %v537, %v541
        %v543 = vshrl.u32 %v440, 16
        %v545 = vor.u32 %v543, %v541
        %v547 = vshll.u32 %v441, 16
        %v549 = vrot.slane %v547, 1
        %v550 = vsel %vm450, %v545, %v549
        %v551 = vshrl.u32 %v441, 16
        %v553 = vor.u32 %v551, %v549
        %v555 = vshll.u32 %v442, 16
        %v557 = vrot.slane %v555, 1
        %v558 = vsel %vm450, %v553, %v557
        %v559 = vshrl.u32 %v442, 16
        %v561 = vor.u32 %v559, %v557
        %v563 = vshll.u32 %v443, 16
        %v565 = vrot.slane %v563, 1
        %v566 = vsel %vm450, %v561, %v565
        %v567 = vshrl.u32 %v443, 16
        %v569 = vor.u32 %v567, %v565
        %v571 = vshll.u32 %v444, 16
        %v573 = vrot.slane %v571, 1
        %v574 = vsel %vm450, %v569, %v573
        %v575 = vshrl.u32 %v444, 16
        %v577 = vor.u32 %v575, %v573
        %v579 = vshll.u32 %v445, 16
        %v581 = vrot.slane %v579, 1
        %v582 = vsel %vm450, %v577, %v581
        %v583 = vshrl.u32 %v445, 16
        %v585 = vor.u32 %v583, %v581
        %v587 = vshll.u32 %v446, 16
        %v589 = vrot.slane %v587, 1
        %v590 = vsel %vm450, %v585, %v589
        %v591 = vshrl.u32 %v446, 16
        %v593 = vor.u32 %v591, %v589
        %v595 = vshll.u32 %v447, 16
        %v597 = vrot.slane %v595, 1
        %v598 = vsel %vm450, %v593, %v597
        %v599 = vshrl.u32 %v447, 16
        %v601 = vor.u32 %v599, %v597
        %v603 = vshll.u32 %v448, 16
        %v605 = vrot.slane %v603, 1
        %v606 = vsel %vm450, %v601, %v605
        %v607 = vshrl.u32 %v448, 16
        %v609 = vor.u32 %v607, %v605
        %v611 = vshll.u32 %v449, 16
        %v613 = vrot.slane %v611, 1
        %v614 = vsel %vm450, %v609, %v613
        %v615 = vshrl.u32 %v449, 16
        %v617 = vor.u32 %v615, %v613
        %v655 = vunpack.c.l.b16 %v331
        %v656 = vunpack.c.l.b16 %v332
        %v657 = vunpack.c.l.b16 %v333
        %v658 = vunpack.c.l.b16 %v334
        %v659 = vunpack.c.l.b16 %v335
        %v660 = vunpack.c.l.b16 %v336
        %v661 = vunpack.c.l.b16 %v337
        %v662 = vunpack.c.l.b16 %v338
        %v663 = vunpack.c.l.b16 %v339
        %v664 = vunpack.c.l.b16 %v340
        %v665 = vunpack.c.l.b16 %v341
        %v666 = vunpack.c.l.b16 %v342
        %v667 = vunpack.c.l.b16 %v343
        %v668 = vunpack.c.l.b16 %v344
        %v669 = vunpack.c.l.b16 %v345
        %v670 = vunpack.c.l.b16 %v346
        %v671 = vpack.c.b16 %v656, %v655
        %v672 = vpack.c.b16 %v658, %v657
        %v673 = vpack.c.b16 %v660, %v659
        %v674 = vpack.c.b16 %v662, %v661
        %v675 = vpack.c.b16 %v664, %v663
        %v676 = vpack.c.b16 %v666, %v665
        %v677 = vpack.c.b16 %v668, %v667
        %v678 = vpack.c.b16 %v670, %v669
        %687 = vmatpush.bf16.msra.mxu0 %v678
        %688 = vmatpush.bf16.msra.mxu0 %v677
        %689 = vmatpush.bf16.msra.mxu0 %v676
        %690 = vmatpush.bf16.msra.mxu0 %v675
        %691 = vmatpush.bf16.msra.mxu0 %v674
        %692 = vmatpush.bf16.msra.mxu0 %v673
        %693 = vmatpush.bf16.msra.mxu0 %v672
        %694 = vmatpush.bf16.msra.mxu0 %v671
        %695 = vmatmul.bf16.gmra.mxu0 %v462
        %v696 = vpop.f32.mrf.mxu0
        %v697 = vadd.f32 0.0, %v696
        %v698 = vpop.f32.mrf.mxu0
        %v699 = vadd.f32 0.0, %v698
        %700 = vmatmul.bf16.gmra.mxu0 %v470
        %v701 = vpop.f32.mrf.mxu0
        %v702 = vadd.f32 0.0, %v701
        %v703 = vpop.f32.mrf.mxu0
        %v704 = vadd.f32 0.0, %v703
        %705 = vmatmul.bf16.gmra.mxu0 %v478
        %v706 = vpop.f32.mrf.mxu0
        %v707 = vadd.f32 0.0, %v706
        %v708 = vpop.f32.mrf.mxu0
        %v709 = vadd.f32 0.0, %v708
        %710 = vmatmul.bf16.gmra.mxu0 %v486
        %v711 = vpop.f32.mrf.mxu0
        %v712 = vadd.f32 0.0, %v711
        %v713 = vpop.f32.mrf.mxu0
        %v714 = vadd.f32 0.0, %v713
        %715 = vmatmul.bf16.gmra.mxu0 %v494
        %v716 = vpop.f32.mrf.mxu0
        %v717 = vadd.f32 0.0, %v716
        %v718 = vpop.f32.mrf.mxu0
        %v719 = vadd.f32 0.0, %v718
        %720 = vmatmul.bf16.gmra.mxu0 %v502
        %v721 = vpop.f32.mrf.mxu0
        %v722 = vadd.f32 0.0, %v721
        %v723 = vpop.f32.mrf.mxu0
        %v724 = vadd.f32 0.0, %v723
        %725 = vmatmul.bf16.gmra.mxu0 %v510
        %v726 = vpop.f32.mrf.mxu0
        %v727 = vadd.f32 0.0, %v726
        %v728 = vpop.f32.mrf.mxu0
        %v729 = vadd.f32 0.0, %v728
        %730 = vmatmul.bf16.gmra.mxu0 %v518
        %v731 = vpop.f32.mrf.mxu0
        %v732 = vadd.f32 0.0, %v731
        %v733 = vpop.f32.mrf.mxu0
        %v734 = vadd.f32 0.0, %v733
        %735 = vmatmul.bf16.gmra.mxu0 %v526
        %v736 = vpop.f32.mrf.mxu0
        %v737 = vadd.f32 0.0, %v736
        %v738 = vpop.f32.mrf.mxu0
        %v739 = vadd.f32 0.0, %v738
        %740 = vmatmul.bf16.gmra.mxu0 %v534
        %v741 = vpop.f32.mrf.mxu0
        %v742 = vadd.f32 0.0, %v741
        %v743 = vpop.f32.mrf.mxu0
        %v744 = vadd.f32 0.0, %v743
        %745 = vmatmul.bf16.gmra.mxu0 %v542
        %v746 = vpop.f32.mrf.mxu0
        %v747 = vadd.f32 0.0, %v746
        %v748 = vpop.f32.mrf.mxu0
        %v749 = vadd.f32 0.0, %v748
        %750 = vmatmul.bf16.gmra.mxu0 %v550
        %v751 = vpop.f32.mrf.mxu0
        %v752 = vadd.f32 0.0, %v751
        %v753 = vpop.f32.mrf.mxu0
        %v754 = vadd.f32 0.0, %v753
        %755 = vmatmul.bf16.gmra.mxu0 %v558
        %v756 = vpop.f32.mrf.mxu0
        %v757 = vadd.f32 0.0, %v756
        %v758 = vpop.f32.mrf.mxu0
        %v759 = vadd.f32 0.0, %v758
        %760 = vmatmul.bf16.gmra.mxu0 %v566
        %v761 = vpop.f32.mrf.mxu0
        %v762 = vadd.f32 0.0, %v761
        %v763 = vpop.f32.mrf.mxu0
        %v764 = vadd.f32 0.0, %v763
        %765 = vmatmul.bf16.gmra.mxu0 %v574
        %v766 = vpop.f32.mrf.mxu0
        %v767 = vadd.f32 0.0, %v766
        %v768 = vpop.f32.mrf.mxu0
        %v769 = vadd.f32 0.0, %v768
        %770 = vmatmul.bf16.gmra.mxu0 %v582
        %v771 = vpop.f32.mrf.mxu0
        %v772 = vadd.f32 0.0, %v771
        %v773 = vpop.f32.mrf.mxu0
        %v774 = vadd.f32 0.0, %v773
        %775 = vmatmul.bf16.gmra.mxu0 %v590
        %v776 = vpop.f32.mrf.mxu0
        %v777 = vadd.f32 0.0, %v776
        %v778 = vpop.f32.mrf.mxu0
        %v779 = vadd.f32 0.0, %v778
        %780 = vmatmul.bf16.gmra.mxu0 %v598
        %v781 = vpop.f32.mrf.mxu0
        %v782 = vadd.f32 0.0, %v781
        %v783 = vpop.f32.mrf.mxu0
        %v784 = vadd.f32 0.0, %v783
        %785 = vmatmul.bf16.gmra.mxu0 %v606
        %v786 = vpop.f32.mrf.mxu0
        %v787 = vadd.f32 0.0, %v786
        %v788 = vpop.f32.mrf.mxu0
        %v789 = vadd.f32 0.0, %v788
        %790 = vmatmul.bf16.gmra.mxu0 %v614
        %v791 = vpop.f32.mrf.mxu0
        %v792 = vadd.f32 0.0, %v791
        %v793 = vpop.f32.mrf.mxu0
        %v794 = vadd.f32 0.0, %v793
        %795 = vmatmul.bf16.gmra.mxu0 %v617
        %v796 = vpop.f32.mrf.mxu0
        %v797 = vadd.f32 0.0, %v796
        %v798 = vpop.f32.mrf.mxu0
        %799 = vdwg.mxu0
        %v801 = vunpack.c.l.b16 %v312
        %v802 = vpack.c.b16 %v801, %v801
        %v840 = vunpack.c.l.b16 %v313
        %v841 = vunpack.c.l.b16 %v314
        %v842 = vunpack.c.l.b16 %v315
        %v843 = vunpack.c.l.b16 %v316
        %v844 = vunpack.c.l.b16 %v317
        %v845 = vunpack.c.l.b16 %v318
        %v846 = vunpack.c.l.b16 %v319
        %v847 = vunpack.c.l.b16 %v320
        %v848 = vunpack.c.l.b16 %v321
        %v849 = vunpack.c.l.b16 %v322
        %v850 = vunpack.c.l.b16 %v323
        %v851 = vunpack.c.l.b16 %v324
        %v852 = vunpack.c.l.b16 %v325
        %v853 = vunpack.c.l.b16 %v326
        %v854 = vunpack.c.l.b16 %v327
        %v855 = vunpack.c.l.b16 %v328
        %v856 = vpack.c.b16 %v841, %v840
        %v857 = vpack.c.b16 %v843, %v842
        %v858 = vpack.c.b16 %v845, %v844
        %v859 = vpack.c.b16 %v847, %v846
        %v860 = vpack.c.b16 %v849, %v848
        %v861 = vpack.c.b16 %v851, %v850
        %v862 = vpack.c.b16 %v853, %v852
        %v863 = vpack.c.b16 %v855, %v854
        %872 = vmatpush.bf16.msra.mxu0 %v863
        %873 = vmatpush.bf16.msra.mxu0 %v862
        %874 = vmatpush.bf16.msra.mxu0 %v861
        %875 = vmatpush.bf16.msra.mxu0 %v860
        %876 = vmatpush.bf16.msra.mxu0 %v859
        %877 = vmatpush.bf16.msra.mxu0 %v858
        %878 = vmatpush.bf16.msra.mxu0 %v857
        %879 = vmatpush.bf16.msra.mxu0 %v856
        %880 = vmatmul.bf16.gmra.mxu0 %v429
        %v881 = vpop.f32.mrf.mxu0
        %v882 = vadd.f32 %v697, %v881
        %v883 = vpop.f32.mrf.mxu0
        %v884 = vadd.f32 %v699, %v883
        %885 = vmatmul.bf16.gmra.mxu0 %v430
        %v886 = vpop.f32.mrf.mxu0
        %v887 = vadd.f32 %v702, %v886
        %v888 = vpop.f32.mrf.mxu0
        %v889 = vadd.f32 %v704, %v888
        %890 = vmatmul.bf16.gmra.mxu0 %v431
        %v891 = vpop.f32.mrf.mxu0
        %v892 = vadd.f32 %v707, %v891
        %v893 = vpop.f32.mrf.mxu0
        %v894 = vadd.f32 %v709, %v893
        %895 = vmatmul.bf16.gmra.mxu0 %v432
        %v896 = vpop.f32.mrf.mxu0
        %v897 = vadd.f32 %v712, %v896
        %v898 = vpop.f32.mrf.mxu0
        %v899 = vadd.f32 %v714, %v898
        %900 = vmatmul.bf16.gmra.mxu0 %v433
        %v901 = vpop.f32.mrf.mxu0
        %v902 = vadd.f32 %v717, %v901
        %v903 = vpop.f32.mrf.mxu0
        %v904 = vadd.f32 %v719, %v903
        %905 = vmatmul.bf16.gmra.mxu0 %v434
        %v906 = vpop.f32.mrf.mxu0
        %v907 = vadd.f32 %v722, %v906
        %v908 = vpop.f32.mrf.mxu0
        %v909 = vadd.f32 %v724, %v908
        %910 = vmatmul.bf16.gmra.mxu0 %v435
        %v911 = vpop.f32.mrf.mxu0
        %v912 = vadd.f32 %v727, %v911
        %v913 = vpop.f32.mrf.mxu0
        %v914 = vadd.f32 %v729, %v913
        %915 = vmatmul.bf16.gmra.mxu0 %v436
        %v916 = vpop.f32.mrf.mxu0
        %v917 = vadd.f32 %v732, %v916
        %v918 = vpop.f32.mrf.mxu0
        %v919 = vadd.f32 %v734, %v918
        %920 = vmatmul.bf16.gmra.mxu0 %v437
        %v921 = vpop.f32.mrf.mxu0
        %v922 = vadd.f32 %v737, %v921
        %v923 = vpop.f32.mrf.mxu0
        %v924 = vadd.f32 %v739, %v923
        %925 = vmatmul.bf16.gmra.mxu0 %v438
        %v926 = vpop.f32.mrf.mxu0
        %v927 = vadd.f32 %v742, %v926
        %v928 = vpop.f32.mrf.mxu0
        %v929 = vadd.f32 %v744, %v928
        %930 = vmatmul.bf16.gmra.mxu0 %v439
        %v931 = vpop.f32.mrf.mxu0
        %v932 = vadd.f32 %v747, %v931
        %v933 = vpop.f32.mrf.mxu0
        %v934 = vadd.f32 %v749, %v933
        %935 = vmatmul.bf16.gmra.mxu0 %v440
        %v936 = vpop.f32.mrf.mxu0
        %v937 = vadd.f32 %v752, %v936
        %v938 = vpop.f32.mrf.mxu0
        %v939 = vadd.f32 %v754, %v938
        %940 = vmatmul.bf16.gmra.mxu0 %v441
        %v941 = vpop.f32.mrf.mxu0
        %v942 = vadd.f32 %v757, %v941
        %v943 = vpop.f32.mrf.mxu0
        %v944 = vadd.f32 %v759, %v943
        %945 = vmatmul.bf16.gmra.mxu0 %v442
        %v946 = vpop.f32.mrf.mxu0
        %v947 = vadd.f32 %v762, %v946
        %v948 = vpop.f32.mrf.mxu0
        %v949 = vadd.f32 %v764, %v948
        %950 = vmatmul.bf16.gmra.mxu0 %v443
        %v951 = vpop.f32.mrf.mxu0
        %v952 = vadd.f32 %v767, %v951
        %v953 = vpop.f32.mrf.mxu0
        %v954 = vadd.f32 %v769, %v953
        %955 = vmatmul.bf16.gmra.mxu0 %v444
        %v956 = vpop.f32.mrf.mxu0
        %v957 = vadd.f32 %v772, %v956
        %v958 = vpop.f32.mrf.mxu0
        %v959 = vadd.f32 %v774, %v958
        %960 = vmatmul.bf16.gmra.mxu0 %v445
        %v961 = vpop.f32.mrf.mxu0
        %v962 = vadd.f32 %v777, %v961
        %v963 = vpop.f32.mrf.mxu0
        %v964 = vadd.f32 %v779, %v963
        %965 = vmatmul.bf16.gmra.mxu0 %v446
        %v966 = vpop.f32.mrf.mxu0
        %v967 = vadd.f32 %v782, %v966
        %v968 = vpop.f32.mrf.mxu0
        %v969 = vadd.f32 %v784, %v968
        %970 = vmatmul.bf16.gmra.mxu0 %v447
        %v971 = vpop.f32.mrf.mxu0
        %v972 = vadd.f32 %v787, %v971
        %v973 = vpop.f32.mrf.mxu0
        %v974 = vadd.f32 %v789, %v973
        %975 = vmatmul.bf16.gmra.mxu0 %v448
        %v976 = vpop.f32.mrf.mxu0
        %v977 = vadd.f32 %v792, %v976
        %v978 = vpop.f32.mrf.mxu0
        %v979 = vadd.f32 %v794, %v978
        %980 = vmatmul.bf16.gmra.mxu0 %v802
        %v981 = vpop.f32.mrf.mxu0
        %v982 = vadd.f32 %v797, %v981
        %v983 = vpop.f32.mrf.mxu0
        %984 = vdwg.mxu0
        %v985 = vld [vmem:[%s267] sm:$0xe]
        %s986 = scalar_lea.vmem %s1, 128
        %v987 = vld [vmem:[%s986] sm:$0xf]
        %v988 = vld [vmem:[%s986 + $0x4] sm:$0xf]
        %v989 = vld [vmem:[%s986 + $0x8] sm:$0xf]
        %v990 = vld [vmem:[%s986 + $0xc] sm:$0xf]
        %v991 = vld [vmem:[%s986 + $0x10] sm:$0xf]
        %v992 = vld [vmem:[%s986 + $0x14] sm:$0xf]
        %v993 = vld [vmem:[%s986 + $0x18] sm:$0xf]
        %v994 = vld [vmem:[%s986 + $0x1c] sm:$0xf]
        %v995 = vld [vmem:[%s986 + $0x20] sm:$0xf]
        %v996 = vld [vmem:[%s986 + $0x24] sm:$0xf]
        %v997 = vld [vmem:[%s986 + $0x28] sm:$0xf]
        %v998 = vld [vmem:[%s986 + $0x2c] sm:$0xf]
        %v999 = vld [vmem:[%s986 + $0x30] sm:$0xf]
        %v1000 = vld [vmem:[%s986 + $0x34] sm:$0xf]
        %v1001 = vld [vmem:[%s986 + $0x38] sm:$0xf]
        %v1002 = vld [vmem:[%s986 + $0x3c] sm:$0xf]
        %v1004 = vunpack.c.l.b16 %v985
        %v1005 = vpack.c.b16 %v389, %v1004
        %vm1006 = vcmask 1046528
        %v1007 = vrot.slane %v1005, 1
        %v1008 = vrot.slane %v430, 1
        %v1009 = vsel %vm1006, %v1007, %v1008
        %v1010 = vrot.slane %v431, 1
        %v1011 = vsel %vm1006, %v1008, %v1010
        %v1012 = vrot.slane %v432, 1
        %v1013 = vsel %vm1006, %v1010, %v1012
        %v1014 = vrot.slane %v433, 1
        %v1015 = vsel %vm1006, %v1012, %v1014
        %v1016 = vrot.slane %v434, 1
        %v1017 = vsel %vm1006, %v1014, %v1016
        %v1018 = vrot.slane %v435, 1
        %v1019 = vsel %vm1006, %v1016, %v1018
        %v1020 = vrot.slane %v436, 1
        %v1021 = vsel %vm1006, %v1018, %v1020
        %v1022 = vrot.slane %v437, 1
        %v1023 = vsel %vm1006, %v1020, %v1022
        %v1024 = vrot.slane %v438, 1
        %v1025 = vsel %vm1006, %v1022, %v1024
        %v1026 = vrot.slane %v439, 1
        %v1027 = vsel %vm1006, %v1024, %v1026
        %v1028 = vrot.slane %v440, 1
        %v1029 = vsel %vm1006, %v1026, %v1028
        %v1030 = vrot.slane %v441, 1
        %v1031 = vsel %vm1006, %v1028, %v1030
        %v1032 = vrot.slane %v442, 1
        %v1033 = vsel %vm1006, %v1030, %v1032
        %v1034 = vrot.slane %v443, 1
        %v1035 = vsel %vm1006, %v1032, %v1034
        %v1036 = vrot.slane %v444, 1
        %v1037 = vsel %vm1006, %v1034, %v1036
        %v1038 = vrot.slane %v445, 1
        %v1039 = vsel %vm1006, %v1036, %v1038
        %v1040 = vrot.slane %v446, 1
        %v1041 = vsel %vm1006, %v1038, %v1040
        %v1042 = vrot.slane %v447, 1
        %v1043 = vsel %vm1006, %v1040, %v1042
        %v1044 = vrot.slane %v448, 1
        %v1045 = vsel %vm1006, %v1042, %v1044
        %v1046 = vrot.slane %v449, 1
        %v1047 = vsel %vm1006, %v1044, %v1046
        %v1085 = vunpack.c.l.b16 %v987
        %v1086 = vunpack.c.l.b16 %v988
        %v1087 = vunpack.c.l.b16 %v989
        %v1088 = vunpack.c.l.b16 %v990
        %v1089 = vunpack.c.l.b16 %v991
        %v1090 = vunpack.c.l.b16 %v992
        %v1091 = vunpack.c.l.b16 %v993
        %v1092 = vunpack.c.l.b16 %v994
        %v1093 = vunpack.c.l.b16 %v995
        %v1094 = vunpack.c.l.b16 %v996
        %v1095 = vunpack.c.l.b16 %v997
        %v1096 = vunpack.c.l.b16 %v998
        %v1097 = vunpack.c.l.b16 %v999
        %v1098 = vunpack.c.l.b16 %v1000
        %v1099 = vunpack.c.l.b16 %v1001
        %v1100 = vunpack.c.l.b16 %v1002
        %v1101 = vpack.c.b16 %v1086, %v1085
        %v1102 = vpack.c.b16 %v1088, %v1087
        %v1103 = vpack.c.b16 %v1090, %v1089
        %v1104 = vpack.c.b16 %v1092, %v1091
        %v1105 = vpack.c.b16 %v1094, %v1093
        %v1106 = vpack.c.b16 %v1096, %v1095
        %v1107 = vpack.c.b16 %v1098, %v1097
        %v1108 = vpack.c.b16 %v1100, %v1099
        %1117 = vmatpush.bf16.msra.mxu0 %v1108
        %1118 = vmatpush.bf16.msra.mxu0 %v1107
        %1119 = vmatpush.bf16.msra.mxu0 %v1106
        %1120 = vmatpush.bf16.msra.mxu0 %v1105
        %1121 = vmatpush.bf16.msra.mxu0 %v1104
        %1122 = vmatpush.bf16.msra.mxu0 %v1103
        %1123 = vmatpush.bf16.msra.mxu0 %v1102
        %1124 = vmatpush.bf16.msra.mxu0 %v1101
        %1125 = vmatmul.bf16.gmra.mxu0 %v1009
        %v1126 = vpop.f32.mrf.mxu0
        %v1127 = vadd.f32 0.0, %v1126
        %v1128 = vpop.f32.mrf.mxu0
        %v1129 = vadd.f32 0.0, %v1128
        %1130 = vmatmul.bf16.gmra.mxu0 %v1011
        %v1131 = vpop.f32.mrf.mxu0
        %v1132 = vadd.f32 0.0, %v1131
        %v1133 = vpop.f32.mrf.mxu0
        %v1134 = vadd.f32 0.0, %v1133
        %1135 = vmatmul.bf16.gmra.mxu0 %v1013
        %v1136 = vpop.f32.mrf.mxu0
        %v1137 = vadd.f32 0.0, %v1136
        %v1138 = vpop.f32.mrf.mxu0
        %v1139 = vadd.f32 0.0, %v1138
        %1140 = vmatmul.bf16.gmra.mxu0 %v1015
        %v1141 = vpop.f32.mrf.mxu0
        %v1142 = vadd.f32 0.0, %v1141
        %v1143 = vpop.f32.mrf.mxu0
        %v1144 = vadd.f32 0.0, %v1143
        %1145 = vmatmul.bf16.gmra.mxu0 %v1017
        %v1146 = vpop.f32.mrf.mxu0
        %v1147 = vadd.f32 0.0, %v1146
        %v1148 = vpop.f32.mrf.mxu0
        %v1149 = vadd.f32 0.0, %v1148
        %1150 = vmatmul.bf16.gmra.mxu0 %v1019
        %v1151 = vpop.f32.mrf.mxu0
        %v1152 = vadd.f32 0.0, %v1151
        %v1153 = vpop.f32.mrf.mxu0
        %v1154 = vadd.f32 0.0, %v1153
        %1155 = vmatmul.bf16.gmra.mxu0 %v1021
        %v1156 = vpop.f32.mrf.mxu0
        %v1157 = vadd.f32 0.0, %v1156
        %v1158 = vpop.f32.mrf.mxu0
        %v1159 = vadd.f32 0.0, %v1158
        %1160 = vmatmul.bf16.gmra.mxu0 %v1023
        %v1161 = vpop.f32.mrf.mxu0
        %v1162 = vadd.f32 0.0, %v1161
        %v1163 = vpop.f32.mrf.mxu0
        %v1164 = vadd.f32 0.0, %v1163
        %1165 = vmatmul.bf16.gmra.mxu0 %v1025
        %v1166 = vpop.f32.mrf.mxu0
        %v1167 = vadd.f32 0.0, %v1166
        %v1168 = vpop.f32.mrf.mxu0
        %v1169 = vadd.f32 0.0, %v1168
        %1170 = vmatmul.bf16.gmra.mxu0 %v1027
        %v1171 = vpop.f32.mrf.mxu0
        %v1172 = vadd.f32 0.0, %v1171
        %v1173 = vpop.f32.mrf.mxu0
        %v1174 = vadd.f32 0.0, %v1173
        %1175 = vmatmul.bf16.gmra.mxu0 %v1029
        %v1176 = vpop.f32.mrf.mxu0
        %v1177 = vadd.f32 0.0, %v1176
        %v1178 = vpop.f32.mrf.mxu0
        %v1179 = vadd.f32 0.0, %v1178
        %1180 = vmatmul.bf16.gmra.mxu0 %v1031
        %v1181 = vpop.f32.mrf.mxu0
        %v1182 = vadd.f32 0.0, %v1181
        %v1183 = vpop.f32.mrf.mxu0
        %v1184 = vadd.f32 0.0, %v1183
        %1185 = vmatmul.bf16.gmra.mxu0 %v1033
        %v1186 = vpop.f32.mrf.mxu0
        %v1187 = vadd.f32 0.0, %v1186
        %v1188 = vpop.f32.mrf.mxu0
        %v1189 = vadd.f32 0.0, %v1188
        %1190 = vmatmul.bf16.gmra.mxu0 %v1035
        %v1191 = vpop.f32.mrf.mxu0
        %v1192 = vadd.f32 0.0, %v1191
        %v1193 = vpop.f32.mrf.mxu0
        %v1194 = vadd.f32 0.0, %v1193
        %1195 = vmatmul.bf16.gmra.mxu0 %v1037
        %v1196 = vpop.f32.mrf.mxu0
        %v1197 = vadd.f32 0.0, %v1196
        %v1198 = vpop.f32.mrf.mxu0
        %v1199 = vadd.f32 0.0, %v1198
        %1200 = vmatmul.bf16.gmra.mxu0 %v1039
        %v1201 = vpop.f32.mrf.mxu0
        %v1202 = vadd.f32 0.0, %v1201
        %v1203 = vpop.f32.mrf.mxu0
        %v1204 = vadd.f32 0.0, %v1203
        %1205 = vmatmul.bf16.gmra.mxu0 %v1041
        %v1206 = vpop.f32.mrf.mxu0
        %v1207 = vadd.f32 0.0, %v1206
        %v1208 = vpop.f32.mrf.mxu0
        %v1209 = vadd.f32 0.0, %v1208
        %1210 = vmatmul.bf16.gmra.mxu0 %v1043
        %v1211 = vpop.f32.mrf.mxu0
        %v1212 = vadd.f32 0.0, %v1211
        %v1213 = vpop.f32.mrf.mxu0
        %v1214 = vadd.f32 0.0, %v1213
        %1215 = vmatmul.bf16.gmra.mxu0 %v1045
        %v1216 = vpop.f32.mrf.mxu0
        %v1217 = vadd.f32 0.0, %v1216
        %v1218 = vpop.f32.mrf.mxu0
        %v1219 = vadd.f32 0.0, %v1218
        %1220 = vmatmul.bf16.gmra.mxu0 %v1047
        %v1221 = vpop.f32.mrf.mxu0
        %v1222 = vadd.f32 0.0, %v1221
        %v1223 = vpop.f32.mrf.mxu0
        %v1224 = vadd.f32 0.0, %v1223
        %1225 = vmatmul.bf16.gmra.mxu0 %v1046
        %v1226 = vpop.f32.mrf.mxu0
        %v1227 = vadd.f32 0.0, %v1226
        %v1228 = vpop.f32.mrf.mxu0
        %1229 = vdwg.mxu0
        %v1230 = vadd.f32 %v882, %v1127
        %v1231 = vadd.f32 %v884, %v1129
        %v1232 = vadd.f32 %v887, %v1132
        %v1233 = vadd.f32 %v889, %v1134
        %v1234 = vadd.f32 %v892, %v1137
        %v1235 = vadd.f32 %v894, %v1139
        %v1236 = vadd.f32 %v897, %v1142
        %v1237 = vadd.f32 %v899, %v1144
        %v1238 = vadd.f32 %v902, %v1147
        %v1239 = vadd.f32 %v904, %v1149
        %v1240 = vadd.f32 %v907, %v1152
        %v1241 = vadd.f32 %v909, %v1154
        %v1242 = vadd.f32 %v912, %v1157
        %v1243 = vadd.f32 %v914, %v1159
        %v1244 = vadd.f32 %v917, %v1162
        %v1245 = vadd.f32 %v919, %v1164
        %v1246 = vadd.f32 %v922, %v1167
        %v1247 = vadd.f32 %v924, %v1169
        %v1248 = vadd.f32 %v927, %v1172
        %v1249 = vadd.f32 %v929, %v1174
        %v1250 = vadd.f32 %v932, %v1177
        %v1251 = vadd.f32 %v934, %v1179
        %v1252 = vadd.f32 %v937, %v1182
        %v1253 = vadd.f32 %v939, %v1184
        %v1254 = vadd.f32 %v942, %v1187
        %v1255 = vadd.f32 %v944, %v1189
        %v1256 = vadd.f32 %v947, %v1192
        %v1257 = vadd.f32 %v949, %v1194
        %v1258 = vadd.f32 %v952, %v1197
        %v1259 = vadd.f32 %v954, %v1199
        %v1260 = vadd.f32 %v957, %v1202
        %v1261 = vadd.f32 %v959, %v1204
        %v1262 = vadd.f32 %v962, %v1207
        %v1263 = vadd.f32 %v964, %v1209
        %v1264 = vadd.f32 %v967, %v1212
        %v1265 = vadd.f32 %v969, %v1214
        %v1266 = vadd.f32 %v972, %v1217
        %v1267 = vadd.f32 %v974, %v1219
        %v1268 = vadd.f32 %v977, %v1222
        %v1269 = vadd.f32 %v979, %v1224
        %v1270 = vadd.f32 %v982, %v1227
        %v1271 = vld [vmem:[%s267 + $0x8] sm:$0xe]
        %v1272 = vld [vmem:[%s267 + $0xc] sm:$0xf]
        %v1273 = vld [vmem:[%s267 + $0x10] sm:$0xf]
        %v1274 = vld [vmem:[%s267 + $0x14] sm:$0xf]
        %v1275 = vld [vmem:[%s267 + $0x18] sm:$0xf]
        %v1276 = vld [vmem:[%s267 + $0x1c] sm:$0xf]
        %v1277 = vld [vmem:[%s267 + $0x20] sm:$0xf]
        %v1278 = vld [vmem:[%s267 + $0x24] sm:$0xf]
        %v1279 = vld [vmem:[%s267 + $0x28] sm:$0xf]
        %v1280 = vld [vmem:[%s267 + $0x2c] sm:$0xf]
        %v1281 = vld [vmem:[%s267 + $0x30] sm:$0xf]
        %v1282 = vld [vmem:[%s267 + $0x34] sm:$0xf]
        %v1283 = vld [vmem:[%s267 + $0x38] sm:$0xf]
        %v1284 = vld [vmem:[%s267 + $0x3c] sm:$0xf]
        %v1285 = vld [vmem:[%s267 + $0x40] sm:$0xf]
        %v1286 = vld [vmem:[%s267 + $0x44] sm:$0xf]
        %v1287 = vld [vmem:[%s267 + $0x48] sm:$0xf]
        %v1288 = vld [vmem:[%s267 + $0x4c] sm:$0xf]
        %v1289 = vld [vmem:[%s267 + $0x50] sm:$0xf]
        %v1290 = vld [vmem:[%s267 + $0x54] sm:$0xf]
        %v1291 = vld [vmem:[%s267 + $0x58] sm:$0xf]
        %v1292 = vld [vmem:[%s267 + $0x5c] sm:$0xf]
        %v1293 = vld [vmem:[%s267 + $0x60] sm:$0xf]
        %v1294 = vld [vmem:[%s267 + $0x64] sm:$0xf]
        %v1295 = vld [vmem:[%s267 + $0x68] sm:$0xf]
        %v1296 = vld [vmem:[%s267 + $0x6c] sm:$0xf]
        %v1297 = vld [vmem:[%s267 + $0x70] sm:$0xf]
        %v1298 = vld [vmem:[%s267 + $0x74] sm:$0xf]
        %v1299 = vld [vmem:[%s267 + $0x78] sm:$0xf]
        %v1300 = vld [vmem:[%s267 + $0x7c] sm:$0xf]
        %v1301 = vld [vmem:[%s267 + $0x80] sm:$0xf]
        %v1302 = vld [vmem:[%s267 + $0x84] sm:$0xf]
        %v1303 = vld [vmem:[%s267 + $0x88] sm:$0xf]
        %v1304 = vld [vmem:[%s267 + $0x8c] sm:$0xf]
        %v1305 = vld [vmem:[%s267 + $0x90] sm:$0xf]
        %v1306 = vld [vmem:[%s267 + $0x94] sm:$0xf]
        %v1307 = vld [vmem:[%s267 + $0x98] sm:$0xf]
        %v1308 = vld [vmem:[%s267 + $0x9c] sm:$0xf]
        %v1309 = vld [vmem:[%s267 + $0xa0] sm:$0xf]
        %v1310 = vld [vmem:[%s267 + $0xa4] sm:$0xf]
        %v1311 = vld [vmem:[%s267 + $0xa8] sm:$0x7]
        %s1312 = scalar_lea.vmem %s1, 192
        %v1313 = vld [vmem:[%s1312] sm:$0xf]
        %v1314 = vld [vmem:[%s1312 + $0x4] sm:$0xf]
        %v1315 = vld [vmem:[%s1312 + $0x8] sm:$0xf]
        %v1316 = vld [vmem:[%s1312 + $0xc] sm:$0xf]
        %v1317 = vld [vmem:[%s1312 + $0x10] sm:$0xf]
        %v1318 = vld [vmem:[%s1312 + $0x14] sm:$0xf]
        %v1319 = vld [vmem:[%s1312 + $0x18] sm:$0xf]
        %v1320 = vld [vmem:[%s1312 + $0x1c] sm:$0xf]
        %v1321 = vld [vmem:[%s1312 + $0x20] sm:$0xf]
        %v1322 = vld [vmem:[%s1312 + $0x24] sm:$0xf]
        %v1323 = vld [vmem:[%s1312 + $0x28] sm:$0xf]
        %v1324 = vld [vmem:[%s1312 + $0x2c] sm:$0xf]
        %v1325 = vld [vmem:[%s1312 + $0x30] sm:$0xf]
        %v1326 = vld [vmem:[%s1312 + $0x34] sm:$0xf]
        %v1327 = vld [vmem:[%s1312 + $0x38] sm:$0xf]
        %v1328 = vld [vmem:[%s1312 + $0x3c] sm:$0xf]
        %v1370 = vunpack.c.l.b16 %v1271
        %v1371 = vunpack.c.l.b16 %v1272
        %v1372 = vunpack.c.l.b16 %v1273
        %v1373 = vunpack.c.l.b16 %v1274
        %v1374 = vunpack.c.l.b16 %v1275
        %v1375 = vunpack.c.l.b16 %v1276
        %v1376 = vunpack.c.l.b16 %v1277
        %v1377 = vunpack.c.l.b16 %v1278
        %v1378 = vunpack.c.l.b16 %v1279
        %v1379 = vunpack.c.l.b16 %v1280
        %v1380 = vunpack.c.l.b16 %v1281
        %v1381 = vunpack.c.l.b16 %v1282
        %v1382 = vunpack.c.l.b16 %v1283
        %v1383 = vunpack.c.l.b16 %v1284
        %v1384 = vunpack.c.l.b16 %v1285
        %v1385 = vunpack.c.l.b16 %v1286
        %v1386 = vunpack.c.l.b16 %v1287
        %v1387 = vunpack.c.l.b16 %v1288
        %v1388 = vunpack.c.l.b16 %v1289
        %v1389 = vunpack.c.l.b16 %v1290
        %v1390 = vunpack.c.l.b16 %v1291
        %v1391 = vunpack.c.l.b16 %v1292
        %v1392 = vunpack.c.l.b16 %v1293
        %v1393 = vunpack.c.l.b16 %v1294
        %v1394 = vunpack.c.l.b16 %v1295
        %v1395 = vunpack.c.l.b16 %v1296
        %v1396 = vunpack.c.l.b16 %v1297
        %v1397 = vunpack.c.l.b16 %v1298
        %v1398 = vunpack.c.l.b16 %v1299
        %v1399 = vunpack.c.l.b16 %v1300
        %v1400 = vunpack.c.l.b16 %v1301
        %v1401 = vunpack.c.l.b16 %v1302
        %v1402 = vunpack.c.l.b16 %v1303
        %v1403 = vunpack.c.l.b16 %v1304
        %v1404 = vunpack.c.l.b16 %v1305
        %v1405 = vunpack.c.l.b16 %v1306
        %v1406 = vunpack.c.l.b16 %v1307
        %v1407 = vunpack.c.l.b16 %v1308
        %v1408 = vunpack.c.l.b16 %v1309
        %v1409 = vunpack.c.l.b16 %v1310
        %v1410 = vunpack.c.l.b16 %v1311
        %v1411 = vpack.c.b16 %v1371, %v1370
        %v1412 = vpack.c.b16 %v1373, %v1372
        %v1413 = vpack.c.b16 %v1375, %v1374
        %v1414 = vpack.c.b16 %v1377, %v1376
        %v1415 = vpack.c.b16 %v1379, %v1378
        %v1416 = vpack.c.b16 %v1381, %v1380
        %v1417 = vpack.c.b16 %v1383, %v1382
        %v1418 = vpack.c.b16 %v1385, %v1384
        %v1419 = vpack.c.b16 %v1387, %v1386
        %v1420 = vpack.c.b16 %v1389, %v1388
        %v1421 = vpack.c.b16 %v1391, %v1390
        %v1422 = vpack.c.b16 %v1393, %v1392
        %v1423 = vpack.c.b16 %v1395, %v1394
        %v1424 = vpack.c.b16 %v1397, %v1396
        %v1425 = vpack.c.b16 %v1399, %v1398
        %v1426 = vpack.c.b16 %v1401, %v1400
        %v1427 = vpack.c.b16 %v1403, %v1402
        %v1428 = vpack.c.b16 %v1405, %v1404
        %v1429 = vpack.c.b16 %v1407, %v1406
        %v1430 = vpack.c.b16 %v1409, %v1408
        %v1431 = vpack.c.b16 %v1410, %v1410
        %v1432 = vrot.slane %v1411, 1
        %v1433 = vrot.slane %v1412, 1
        %v1434 = vsel %vm1006, %v1432, %v1433
        %v1435 = vrot.slane %v1413, 1
        %v1436 = vsel %vm1006, %v1433, %v1435
        %v1437 = vrot.slane %v1414, 1
        %v1438 = vsel %vm1006, %v1435, %v1437
        %v1439 = vrot.slane %v1415, 1
        %v1440 = vsel %vm1006, %v1437, %v1439
        %v1441 = vrot.slane %v1416, 1
        %v1442 = vsel %vm1006, %v1439, %v1441
        %v1443 = vrot.slane %v1417, 1
        %v1444 = vsel %vm1006, %v1441, %v1443
        %v1445 = vrot.slane %v1418, 1
        %v1446 = vsel %vm1006, %v1443, %v1445
        %v1447 = vrot.slane %v1419, 1
        %v1448 = vsel %vm1006, %v1445, %v1447
        %v1449 = vrot.slane %v1420, 1
        %v1450 = vsel %vm1006, %v1447, %v1449
        %v1451 = vrot.slane %v1421, 1
        %v1452 = vsel %vm1006, %v1449, %v1451
        %v1453 = vrot.slane %v1422, 1
        %v1454 = vsel %vm1006, %v1451, %v1453
        %v1455 = vrot.slane %v1423, 1
        %v1456 = vsel %vm1006, %v1453, %v1455
        %v1457 = vrot.slane %v1424, 1
        %v1458 = vsel %vm1006, %v1455, %v1457
        %v1459 = vrot.slane %v1425, 1
        %v1460 = vsel %vm1006, %v1457, %v1459
        %v1461 = vrot.slane %v1426, 1
        %v1462 = vsel %vm1006, %v1459, %v1461
        %v1463 = vrot.slane %v1427, 1
        %v1464 = vsel %vm1006, %v1461, %v1463
        %v1465 = vrot.slane %v1428, 1
        %v1466 = vsel %vm1006, %v1463, %v1465
        %v1467 = vrot.slane %v1429, 1
        %v1468 = vsel %vm1006, %v1465, %v1467
        %v1469 = vrot.slane %v1430, 1
        %v1470 = vsel %vm1006, %v1467, %v1469
        %v1471 = vrot.slane %v1431, 1
        %v1472 = vsel %vm1006, %v1469, %v1471
        %v1510 = vunpack.c.l.b16 %v1313
        %v1511 = vunpack.c.l.b16 %v1314
        %v1512 = vunpack.c.l.b16 %v1315
        %v1513 = vunpack.c.l.b16 %v1316
        %v1514 = vunpack.c.l.b16 %v1317
        %v1515 = vunpack.c.l.b16 %v1318
        %v1516 = vunpack.c.l.b16 %v1319
        %v1517 = vunpack.c.l.b16 %v1320
        %v1518 = vunpack.c.l.b16 %v1321
        %v1519 = vunpack.c.l.b16 %v1322
        %v1520 = vunpack.c.l.b16 %v1323
        %v1521 = vunpack.c.l.b16 %v1324
        %v1522 = vunpack.c.l.b16 %v1325
        %v1523 = vunpack.c.l.b16 %v1326
        %v1524 = vunpack.c.l.b16 %v1327
        %v1525 = vunpack.c.l.b16 %v1328
        %v1526 = vpack.c.b16 %v1511, %v1510
        %v1527 = vpack.c.b16 %v1513, %v1512
        %v1528 = vpack.c.b16 %v1515, %v1514
        %v1529 = vpack.c.b16 %v1517, %v1516
        %v1530 = vpack.c.b16 %v1519, %v1518
        %v1531 = vpack.c.b16 %v1521, %v1520
        %v1532 = vpack.c.b16 %v1523, %v1522
        %v1533 = vpack.c.b16 %v1525, %v1524
        %1542 = vmatpush.bf16.msra.mxu0 %v1533
        %1543 = vmatpush.bf16.msra.mxu0 %v1532
        %1544 = vmatpush.bf16.msra.mxu0 %v1531
        %1545 = vmatpush.bf16.msra.mxu0 %v1530
        %1546 = vmatpush.bf16.msra.mxu0 %v1529
        %1547 = vmatpush.bf16.msra.mxu0 %v1528
        %1548 = vmatpush.bf16.msra.mxu0 %v1527
        %1549 = vmatpush.bf16.msra.mxu0 %v1526
        %1550 = vmatmul.bf16.gmra.mxu0 %v1434
        %v1551 = vpop.f32.mrf.mxu0
        %v1552 = vadd.f32 0.0, %v1551
        %v1553 = vpop.f32.mrf.mxu0
        %v1554 = vadd.f32 0.0, %v1553
        %1555 = vmatmul.bf16.gmra.mxu0 %v1436
        %v1556 = vpop.f32.mrf.mxu0
        %v1557 = vadd.f32 0.0, %v1556
        %v1558 = vpop.f32.mrf.mxu0
        %v1559 = vadd.f32 0.0, %v1558
        %1560 = vmatmul.bf16.gmra.mxu0 %v1438
        %v1561 = vpop.f32.mrf.mxu0
        %v1562 = vadd.f32 0.0, %v1561
        %v1563 = vpop.f32.mrf.mxu0
        %v1564 = vadd.f32 0.0, %v1563
        %1565 = vmatmul.bf16.gmra.mxu0 %v1440
        %v1566 = vpop.f32.mrf.mxu0
        %v1567 = vadd.f32 0.0, %v1566
        %v1568 = vpop.f32.mrf.mxu0
        %v1569 = vadd.f32 0.0, %v1568
        %1570 = vmatmul.bf16.gmra.mxu0 %v1442
        %v1571 = vpop.f32.mrf.mxu0
        %v1572 = vadd.f32 0.0, %v1571
        %v1573 = vpop.f32.mrf.mxu0
        %v1574 = vadd.f32 0.0, %v1573
        %1575 = vmatmul.bf16.gmra.mxu0 %v1444
        %v1576 = vpop.f32.mrf.mxu0
        %v1577 = vadd.f32 0.0, %v1576
        %v1578 = vpop.f32.mrf.mxu0
        %v1579 = vadd.f32 0.0, %v1578
        %1580 = vmatmul.bf16.gmra.mxu0 %v1446
        %v1581 = vpop.f32.mrf.mxu0
        %v1582 = vadd.f32 0.0, %v1581
        %v1583 = vpop.f32.mrf.mxu0
        %v1584 = vadd.f32 0.0, %v1583
        %1585 = vmatmul.bf16.gmra.mxu0 %v1448
        %v1586 = vpop.f32.mrf.mxu0
        %v1587 = vadd.f32 0.0, %v1586
        %v1588 = vpop.f32.mrf.mxu0
        %v1589 = vadd.f32 0.0, %v1588
        %1590 = vmatmul.bf16.gmra.mxu0 %v1450
        %v1591 = vpop.f32.mrf.mxu0
        %v1592 = vadd.f32 0.0, %v1591
        %v1593 = vpop.f32.mrf.mxu0
        %v1594 = vadd.f32 0.0, %v1593
        %1595 = vmatmul.bf16.gmra.mxu0 %v1452
        %v1596 = vpop.f32.mrf.mxu0
        %v1597 = vadd.f32 0.0, %v1596
        %v1598 = vpop.f32.mrf.mxu0
        %v1599 = vadd.f32 0.0, %v1598
        %1600 = vmatmul.bf16.gmra.mxu0 %v1454
        %v1601 = vpop.f32.mrf.mxu0
        %v1602 = vadd.f32 0.0, %v1601
        %v1603 = vpop.f32.mrf.mxu0
        %v1604 = vadd.f32 0.0, %v1603
        %1605 = vmatmul.bf16.gmra.mxu0 %v1456
        %v1606 = vpop.f32.mrf.mxu0
        %v1607 = vadd.f32 0.0, %v1606
        %v1608 = vpop.f32.mrf.mxu0
        %v1609 = vadd.f32 0.0, %v1608
        %1610 = vmatmul.bf16.gmra.mxu0 %v1458
        %v1611 = vpop.f32.mrf.mxu0
        %v1612 = vadd.f32 0.0, %v1611
        %v1613 = vpop.f32.mrf.mxu0
        %v1614 = vadd.f32 0.0, %v1613
        %1615 = vmatmul.bf16.gmra.mxu0 %v1460
        %v1616 = vpop.f32.mrf.mxu0
        %v1617 = vadd.f32 0.0, %v1616
        %v1618 = vpop.f32.mrf.mxu0
        %v1619 = vadd.f32 0.0, %v1618
        %1620 = vmatmul.bf16.gmra.mxu0 %v1462
        %v1621 = vpop.f32.mrf.mxu0
        %v1622 = vadd.f32 0.0, %v1621
        %v1623 = vpop.f32.mrf.mxu0
        %v1624 = vadd.f32 0.0, %v1623
        %1625 = vmatmul.bf16.gmra.mxu0 %v1464
        %v1626 = vpop.f32.mrf.mxu0
        %v1627 = vadd.f32 0.0, %v1626
        %v1628 = vpop.f32.mrf.mxu0
        %v1629 = vadd.f32 0.0, %v1628
        %1630 = vmatmul.bf16.gmra.mxu0 %v1466
        %v1631 = vpop.f32.mrf.mxu0
        %v1632 = vadd.f32 0.0, %v1631
        %v1633 = vpop.f32.mrf.mxu0
        %v1634 = vadd.f32 0.0, %v1633
        %1635 = vmatmul.bf16.gmra.mxu0 %v1468
        %v1636 = vpop.f32.mrf.mxu0
        %v1637 = vadd.f32 0.0, %v1636
        %v1638 = vpop.f32.mrf.mxu0
        %v1639 = vadd.f32 0.0, %v1638
        %1640 = vmatmul.bf16.gmra.mxu0 %v1470
        %v1641 = vpop.f32.mrf.mxu0
        %v1642 = vadd.f32 0.0, %v1641
        %v1643 = vpop.f32.mrf.mxu0
        %v1644 = vadd.f32 0.0, %v1643
        %1645 = vmatmul.bf16.gmra.mxu0 %v1472
        %v1646 = vpop.f32.mrf.mxu0
        %v1647 = vadd.f32 0.0, %v1646
        %v1648 = vpop.f32.mrf.mxu0
        %v1649 = vadd.f32 0.0, %v1648
        %1650 = vmatmul.bf16.gmra.mxu0 %v1471
        %v1651 = vpop.f32.mrf.mxu0
        %v1652 = vadd.f32 0.0, %v1651
        %v1653 = vpop.f32.mrf.mxu0
        %1654 = vdwg.mxu0
        %v1655 = vadd.f32 %v1230, %v1552
        %v1656 = vadd.f32 %v1231, %v1554
        %v1657 = vadd.f32 %v1232, %v1557
        %v1658 = vadd.f32 %v1233, %v1559
        %v1659 = vadd.f32 %v1234, %v1562
        %v1660 = vadd.f32 %v1235, %v1564
        %v1661 = vadd.f32 %v1236, %v1567
        %v1662 = vadd.f32 %v1237, %v1569
        %v1663 = vadd.f32 %v1238, %v1572
        %v1664 = vadd.f32 %v1239, %v1574
        %v1665 = vadd.f32 %v1240, %v1577
        %v1666 = vadd.f32 %v1241, %v1579
        %v1667 = vadd.f32 %v1242, %v1582
        %v1668 = vadd.f32 %v1243, %v1584
        %v1669 = vadd.f32 %v1244, %v1587
        %v1670 = vadd.f32 %v1245, %v1589
        %v1671 = vadd.f32 %v1246, %v1592
        %v1672 = vadd.f32 %v1247, %v1594
        %v1673 = vadd.f32 %v1248, %v1597
        %v1674 = vadd.f32 %v1249, %v1599
        %v1675 = vadd.f32 %v1250, %v1602
        %v1676 = vadd.f32 %v1251, %v1604
        %v1677 = vadd.f32 %v1252, %v1607
        %v1678 = vadd.f32 %v1253, %v1609
        %v1679 = vadd.f32 %v1254, %v1612
        %v1680 = vadd.f32 %v1255, %v1614
        %v1681 = vadd.f32 %v1256, %v1617
        %v1682 = vadd.f32 %v1257, %v1619
        %v1683 = vadd.f32 %v1258, %v1622
        %v1684 = vadd.f32 %v1259, %v1624
        %v1685 = vadd.f32 %v1260, %v1627
        %v1686 = vadd.f32 %v1261, %v1629
        %v1687 = vadd.f32 %v1262, %v1632
        %v1688 = vadd.f32 %v1263, %v1634
        %v1689 = vadd.f32 %v1264, %v1637
        %v1690 = vadd.f32 %v1265, %v1639
        %v1691 = vadd.f32 %v1266, %v1642
        %v1692 = vadd.f32 %v1267, %v1644
        %v1693 = vadd.f32 %v1268, %v1647
        %v1694 = vadd.f32 %v1269, %v1649
        %v1695 = vadd.f32 %v1270, %v1652
        %v1696 = vld [vmem:[%s267 + $0xa8] sm:$0xf]
        %s1697 = scalar_lea.vmem %s1, 256
        %v1698 = vld [vmem:[%s1697] sm:$0xf]
        %v1699 = vld [vmem:[%s1697 + $0x4] sm:$0xf]
        %v1700 = vld [vmem:[%s1697 + $0x8] sm:$0xf]
        %v1701 = vld [vmem:[%s1697 + $0xc] sm:$0xf]
        %v1702 = vld [vmem:[%s1697 + $0x10] sm:$0xf]
        %v1703 = vld [vmem:[%s1697 + $0x14] sm:$0xf]
        %v1704 = vld [vmem:[%s1697 + $0x18] sm:$0xf]
        %v1705 = vld [vmem:[%s1697 + $0x1c] sm:$0xf]
        %v1706 = vld [vmem:[%s1697 + $0x20] sm:$0xf]
        %v1707 = vld [vmem:[%s1697 + $0x24] sm:$0xf]
        %v1708 = vld [vmem:[%s1697 + $0x28] sm:$0xf]
        %v1709 = vld [vmem:[%s1697 + $0x2c] sm:$0xf]
        %v1710 = vld [vmem:[%s1697 + $0x30] sm:$0xf]
        %v1711 = vld [vmem:[%s1697 + $0x34] sm:$0xf]
        %v1712 = vld [vmem:[%s1697 + $0x38] sm:$0xf]
        %v1713 = vld [vmem:[%s1697 + $0x3c] sm:$0xf]
        %v1715 = vunpack.c.l.b16 %v1696
        %v1716 = vpack.c.b16 %v1715, %v1715
        %vm1717 = vsmask.f32 6400
        %v1719 = vshrl.u32 %v1411, 16
        %v1721 = vrot.slane %v1719, 1
        %v1722 = vshll.u32 %v1411, 16
        %v1724 = vrot.slane %v1722, 2
        %v1725 = vor.u32 %v1721, %v1724
        %v1727 = vshrl.u32 %v1412, 16
        %v1729 = vrot.slane %v1727, 1
        %v1730 = vshll.u32 %v1412, 16
        %v1732 = vrot.slane %v1730, 2
        %v1733 = vor.u32 %v1729, %v1732
        %v1734 = vsel %vm1717, %v1725, %v1733
        %v1736 = vshrl.u32 %v1413, 16
        %v1738 = vrot.slane %v1736, 1
        %v1739 = vshll.u32 %v1413, 16
        %v1741 = vrot.slane %v1739, 2
        %v1742 = vor.u32 %v1738, %v1741
        %v1743 = vsel %vm1717, %v1733, %v1742
        %v1745 = vshrl.u32 %v1414, 16
        %v1747 = vrot.slane %v1745, 1
        %v1748 = vshll.u32 %v1414, 16
        %v1750 = vrot.slane %v1748, 2
        %v1751 = vor.u32 %v1747, %v1750
        %v1752 = vsel %vm1717, %v1742, %v1751
        %v1754 = vshrl.u32 %v1415, 16
        %v1756 = vrot.slane %v1754, 1
        %v1757 = vshll.u32 %v1415, 16
        %v1759 = vrot.slane %v1757, 2
        %v1760 = vor.u32 %v1756, %v1759
        %v1761 = vsel %vm1717, %v1751, %v1760
        %v1763 = vshrl.u32 %v1416, 16
        %v1765 = vrot.slane %v1763, 1
        %v1766 = vshll.u32 %v1416, 16
        %v1768 = vrot.slane %v1766, 2
        %v1769 = vor.u32 %v1765, %v1768
        %v1770 = vsel %vm1717, %v1760, %v1769
        %v1772 = vshrl.u32 %v1417, 16
        %v1774 = vrot.slane %v1772, 1
        %v1775 = vshll.u32 %v1417, 16
        %v1777 = vrot.slane %v1775, 2
        %v1778 = vor.u32 %v1774, %v1777
        %v1779 = vsel %vm1717, %v1769, %v1778
        %v1781 = vshrl.u32 %v1418, 16
        %v1783 = vrot.slane %v1781, 1
        %v1784 = vshll.u32 %v1418, 16
        %v1786 = vrot.slane %v1784, 2
        %v1787 = vor.u32 %v1783, %v1786
        %v1788 = vsel %vm1717, %v1778, %v1787
        %v1790 = vshrl.u32 %v1419, 16
        %v1792 = vrot.slane %v1790, 1
        %v1793 = vshll.u32 %v1419, 16
        %v1795 = vrot.slane %v1793, 2
        %v1796 = vor.u32 %v1792, %v1795
        %v1797 = vsel %vm1717, %v1787, %v1796
        %v1799 = vshrl.u32 %v1420, 16
        %v1801 = vrot.slane %v1799, 1
        %v1802 = vshll.u32 %v1420, 16
        %v1804 = vrot.slane %v1802, 2
        %v1805 = vor.u32 %v1801, %v1804
        %v1806 = vsel %vm1717, %v1796, %v1805
        %v1808 = vshrl.u32 %v1421, 16
        %v1810 = vrot.slane %v1808, 1
        %v1811 = vshll.u32 %v1421, 16
        %v1813 = vrot.slane %v1811, 2
        %v1814 = vor.u32 %v1810, %v1813
        %v1815 = vsel %vm1717, %v1805, %v1814
        %v1817 = vshrl.u32 %v1422, 16
        %v1819 = vrot.slane %v1817, 1
        %v1820 = vshll.u32 %v1422, 16
        %v1822 = vrot.slane %v1820, 2
        %v1823 = vor.u32 %v1819, %v1822
        %v1824 = vsel %vm1717, %v1814, %v1823
        %v1826 = vshrl.u32 %v1423, 16
        %v1828 = vrot.slane %v1826, 1
        %v1829 = vshll.u32 %v1423, 16
        %v1831 = vrot.slane %v1829, 2
        %v1832 = vor.u32 %v1828, %v1831
        %v1833 = vsel %vm1717, %v1823, %v1832
        %v1835 = vshrl.u32 %v1424, 16
        %v1837 = vrot.slane %v1835, 1
        %v1838 = vshll.u32 %v1424, 16
        %v1840 = vrot.slane %v1838, 2
        %v1841 = vor.u32 %v1837, %v1840
        %v1842 = vsel %vm1717, %v1832, %v1841
        %v1844 = vshrl.u32 %v1425, 16
        %v1846 = vrot.slane %v1844, 1
        %v1847 = vshll.u32 %v1425, 16
        %v1849 = vrot.slane %v1847, 2
        %v1850 = vor.u32 %v1846, %v1849
        %v1851 = vsel %vm1717, %v1841, %v1850
        %v1853 = vshrl.u32 %v1426, 16
        %v1855 = vrot.slane %v1853, 1
        %v1856 = vshll.u32 %v1426, 16
        %v1858 = vrot.slane %v1856, 2
        %v1859 = vor.u32 %v1855, %v1858
        %v1860 = vsel %vm1717, %v1850, %v1859
        %v1862 = vshrl.u32 %v1427, 16
        %v1864 = vrot.slane %v1862, 1
        %v1865 = vshll.u32 %v1427, 16
        %v1867 = vrot.slane %v1865, 2
        %v1868 = vor.u32 %v1864, %v1867
        %v1869 = vsel %vm1717, %v1859, %v1868
        %v1871 = vshrl.u32 %v1428, 16
        %v1873 = vrot.slane %v1871, 1
        %v1874 = vshll.u32 %v1428, 16
        %v1876 = vrot.slane %v1874, 2
        %v1877 = vor.u32 %v1873, %v1876
        %v1878 = vsel %vm1717, %v1868, %v1877
        %v1880 = vshrl.u32 %v1429, 16
        %v1882 = vrot.slane %v1880, 1
        %v1883 = vshll.u32 %v1429, 16
        %v1885 = vrot.slane %v1883, 2
        %v1886 = vor.u32 %v1882, %v1885
        %v1887 = vsel %vm1717, %v1877, %v1886
        %v1889 = vshrl.u32 %v1430, 16
        %v1891 = vrot.slane %v1889, 1
        %v1892 = vshll.u32 %v1430, 16
        %v1894 = vrot.slane %v1892, 2
        %v1895 = vor.u32 %v1891, %v1894
        %v1896 = vsel %vm1717, %v1886, %v1895
        %v1898 = vshrl.u32 %v1716, 16
        %v1900 = vrot.slane %v1898, 1
        %v1901 = vshll.u32 %v1716, 16
        %v1903 = vrot.slane %v1901, 2
        %v1904 = vor.u32 %v1900, %v1903
        %v1905 = vsel %vm1717, %v1895, %v1904
        %v1943 = vunpack.c.l.b16 %v1698
        %v1944 = vunpack.c.l.b16 %v1699
        %v1945 = vunpack.c.l.b16 %v1700
        %v1946 = vunpack.c.l.b16 %v1701
        %v1947 = vunpack.c.l.b16 %v1702
        %v1948 = vunpack.c.l.b16 %v1703
        %v1949 = vunpack.c.l.b16 %v1704
        %v1950 = vunpack.c.l.b16 %v1705
        %v1951 = vunpack.c.l.b16 %v1706
        %v1952 = vunpack.c.l.b16 %v1707
        %v1953 = vunpack.c.l.b16 %v1708
        %v1954 = vunpack.c.l.b16 %v1709
        %v1955 = vunpack.c.l.b16 %v1710
        %v1956 = vunpack.c.l.b16 %v1711
        %v1957 = vunpack.c.l.b16 %v1712
        %v1958 = vunpack.c.l.b16 %v1713
        %v1959 = vpack.c.b16 %v1944, %v1943
        %v1960 = vpack.c.b16 %v1946, %v1945
        %v1961 = vpack.c.b16 %v1948, %v1947
        %v1962 = vpack.c.b16 %v1950, %v1949
        %v1963 = vpack.c.b16 %v1952, %v1951
        %v1964 = vpack.c.b16 %v1954, %v1953
        %v1965 = vpack.c.b16 %v1956, %v1955
        %v1966 = vpack.c.b16 %v1958, %v1957
        %1975 = vmatpush.bf16.msra.mxu0 %v1966
        %1976 = vmatpush.bf16.msra.mxu0 %v1965
        %1977 = vmatpush.bf16.msra.mxu0 %v1964
        %1978 = vmatpush.bf16.msra.mxu0 %v1963
        %1979 = vmatpush.bf16.msra.mxu0 %v1962
        %1980 = vmatpush.bf16.msra.mxu0 %v1961
        %1981 = vmatpush.bf16.msra.mxu0 %v1960
        %1982 = vmatpush.bf16.msra.mxu0 %v1959
        %1983 = vmatmul.bf16.gmra.mxu0 %v1734
        %v1984 = vpop.f32.mrf.mxu0
        %v1985 = vadd.f32 0.0, %v1984
        %v1986 = vpop.f32.mrf.mxu0
        %v1987 = vadd.f32 0.0, %v1986
        %1988 = vmatmul.bf16.gmra.mxu0 %v1743
        %v1989 = vpop.f32.mrf.mxu0
        %v1990 = vadd.f32 0.0, %v1989
        %v1991 = vpop.f32.mrf.mxu0
        %v1992 = vadd.f32 0.0, %v1991
        %1993 = vmatmul.bf16.gmra.mxu0 %v1752
        %v1994 = vpop.f32.mrf.mxu0
        %v1995 = vadd.f32 0.0, %v1994
        %v1996 = vpop.f32.mrf.mxu0
        %v1997 = vadd.f32 0.0, %v1996
        %1998 = vmatmul.bf16.gmra.mxu0 %v1761
        %v1999 = vpop.f32.mrf.mxu0
        %v2000 = vadd.f32 0.0, %v1999
        %v2001 = vpop.f32.mrf.mxu0
        %v2002 = vadd.f32 0.0, %v2001
        %2003 = vmatmul.bf16.gmra.mxu0 %v1770
        %v2004 = vpop.f32.mrf.mxu0
        %v2005 = vadd.f32 0.0, %v2004
        %v2006 = vpop.f32.mrf.mxu0
        %v2007 = vadd.f32 0.0, %v2006
        %2008 = vmatmul.bf16.gmra.mxu0 %v1779
        %v2009 = vpop.f32.mrf.mxu0
        %v2010 = vadd.f32 0.0, %v2009
        %v2011 = vpop.f32.mrf.mxu0
        %v2012 = vadd.f32 0.0, %v2011
        %2013 = vmatmul.bf16.gmra.mxu0 %v1788
        %v2014 = vpop.f32.mrf.mxu0
        %v2015 = vadd.f32 0.0, %v2014
        %v2016 = vpop.f32.mrf.mxu0
        %v2017 = vadd.f32 0.0, %v2016
        %2018 = vmatmul.bf16.gmra.mxu0 %v1797
        %v2019 = vpop.f32.mrf.mxu0
        %v2020 = vadd.f32 0.0, %v2019
        %v2021 = vpop.f32.mrf.mxu0
        %v2022 = vadd.f32 0.0, %v2021
        %2023 = vmatmul.bf16.gmra.mxu0 %v1806
        %v2024 = vpop.f32.mrf.mxu0
        %v2025 = vadd.f32 0.0, %v2024
        %v2026 = vpop.f32.mrf.mxu0
        %v2027 = vadd.f32 0.0, %v2026
        %2028 = vmatmul.bf16.gmra.mxu0 %v1815
        %v2029 = vpop.f32.mrf.mxu0
        %v2030 = vadd.f32 0.0, %v2029
        %v2031 = vpop.f32.mrf.mxu0
        %v2032 = vadd.f32 0.0, %v2031
        %2033 = vmatmul.bf16.gmra.mxu0 %v1824
        %v2034 = vpop.f32.mrf.mxu0
        %v2035 = vadd.f32 0.0, %v2034
        %v2036 = vpop.f32.mrf.mxu0
        %v2037 = vadd.f32 0.0, %v2036
        %2038 = vmatmul.bf16.gmra.mxu0 %v1833
        %v2039 = vpop.f32.mrf.mxu0
        %v2040 = vadd.f32 0.0, %v2039
        %v2041 = vpop.f32.mrf.mxu0
        %v2042 = vadd.f32 0.0, %v2041
        %2043 = vmatmul.bf16.gmra.mxu0 %v1842
        %v2044 = vpop.f32.mrf.mxu0
        %v2045 = vadd.f32 0.0, %v2044
        %v2046 = vpop.f32.mrf.mxu0
        %v2047 = vadd.f32 0.0, %v2046
        %2048 = vmatmul.bf16.gmra.mxu0 %v1851
        %v2049 = vpop.f32.mrf.mxu0
        %v2050 = vadd.f32 0.0, %v2049
        %v2051 = vpop.f32.mrf.mxu0
        %v2052 = vadd.f32 0.0, %v2051
        %2053 = vmatmul.bf16.gmra.mxu0 %v1860
        %v2054 = vpop.f32.mrf.mxu0
        %v2055 = vadd.f32 0.0, %v2054
        %v2056 = vpop.f32.mrf.mxu0
        %v2057 = vadd.f32 0.0, %v2056
        %2058 = vmatmul.bf16.gmra.mxu0 %v1869
        %v2059 = vpop.f32.mrf.mxu0
        %v2060 = vadd.f32 0.0, %v2059
        %v2061 = vpop.f32.mrf.mxu0
        %v2062 = vadd.f32 0.0, %v2061
        %2063 = vmatmul.bf16.gmra.mxu0 %v1878
        %v2064 = vpop.f32.mrf.mxu0
        %v2065 = vadd.f32 0.0, %v2064
        %v2066 = vpop.f32.mrf.mxu0
        %v2067 = vadd.f32 0.0, %v2066
        %2068 = vmatmul.bf16.gmra.mxu0 %v1887
        %v2069 = vpop.f32.mrf.mxu0
        %v2070 = vadd.f32 0.0, %v2069
        %v2071 = vpop.f32.mrf.mxu0
        %v2072 = vadd.f32 0.0, %v2071
        %2073 = vmatmul.bf16.gmra.mxu0 %v1896
        %v2074 = vpop.f32.mrf.mxu0
        %v2075 = vadd.f32 0.0, %v2074
        %v2076 = vpop.f32.mrf.mxu0
        %v2077 = vadd.f32 0.0, %v2076
        %2078 = vmatmul.bf16.gmra.mxu0 %v1905
        %v2079 = vpop.f32.mrf.mxu0
        %v2080 = vadd.f32 0.0, %v2079
        %v2081 = vpop.f32.mrf.mxu0
        %v2082 = vadd.f32 0.0, %v2081
        %2083 = vmatmul.bf16.gmra.mxu0 %v1904
        %v2084 = vpop.f32.mrf.mxu0
        %v2085 = vadd.f32 0.0, %v2084
        %v2086 = vpop.f32.mrf.mxu0
        %2087 = vdwg.mxu0
        %v2088 = vadd.f32 %v1655, %v1985
        %v2089 = vadd.f32 %v1656, %v1987
        %v2090 = vadd.f32 %v1657, %v1990
        %v2091 = vadd.f32 %v1658, %v1992
        %v2092 = vadd.f32 %v1659, %v1995
        %v2093 = vadd.f32 %v1660, %v1997
        %v2094 = vadd.f32 %v1661, %v2000
        %v2095 = vadd.f32 %v1662, %v2002
        %v2096 = vadd.f32 %v1663, %v2005
        %v2097 = vadd.f32 %v1664, %v2007
        %v2098 = vadd.f32 %v1665, %v2010
        %v2099 = vadd.f32 %v1666, %v2012
        %v2100 = vadd.f32 %v1667, %v2015
        %v2101 = vadd.f32 %v1668, %v2017
        %v2102 = vadd.f32 %v1669, %v2020
        %v2103 = vadd.f32 %v1670, %v2022
        %v2104 = vadd.f32 %v1671, %v2025
        %v2105 = vadd.f32 %v1672, %v2027
        %v2106 = vadd.f32 %v1673, %v2030
        %v2107 = vadd.f32 %v1674, %v2032
        %v2108 = vadd.f32 %v1675, %v2035
        %v2109 = vadd.f32 %v1676, %v2037
        %v2110 = vadd.f32 %v1677, %v2040
        %v2111 = vadd.f32 %v1678, %v2042
        %v2112 = vadd.f32 %v1679, %v2045
        %v2113 = vadd.f32 %v1680, %v2047
        %v2114 = vadd.f32 %v1681, %v2050
        %v2115 = vadd.f32 %v1682, %v2052
        %v2116 = vadd.f32 %v1683, %v2055
        %v2117 = vadd.f32 %v1684, %v2057
        %v2118 = vadd.f32 %v1685, %v2060
        %v2119 = vadd.f32 %v1686, %v2062
        %v2120 = vadd.f32 %v1687, %v2065
        %v2121 = vadd.f32 %v1688, %v2067
        %v2122 = vadd.f32 %v1689, %v2070
        %v2123 = vadd.f32 %v1690, %v2072
        %v2124 = vadd.f32 %v1691, %v2075
        %v2125 = vadd.f32 %v1692, %v2077
        %v2126 = vadd.f32 %v1693, %v2080
        %v2127 = vadd.f32 %v1694, %v2082
        %v2128 = vadd.f32 %v1695, %v2085
        %v2129 = vld [vmem:[%s267 + $0x8] sm:$0xc]
        %s2130 = scalar_lea.vmem %s1, 320
        %v2131 = vld [vmem:[%s2130] sm:$0xf]
        %v2132 = vld [vmem:[%s2130 + $0x4] sm:$0xf]
        %v2133 = vld [vmem:[%s2130 + $0x8] sm:$0xf]
        %v2134 = vld [vmem:[%s2130 + $0xc] sm:$0xf]
        %v2135 = vld [vmem:[%s2130 + $0x10] sm:$0xf]
        %v2136 = vld [vmem:[%s2130 + $0x14] sm:$0xf]
        %v2137 = vld [vmem:[%s2130 + $0x18] sm:$0xf]
        %v2138 = vld [vmem:[%s2130 + $0x1c] sm:$0xf]
        %v2139 = vld [vmem:[%s2130 + $0x20] sm:$0xf]
        %v2140 = vld [vmem:[%s2130 + $0x24] sm:$0xf]
        %v2141 = vld [vmem:[%s2130 + $0x28] sm:$0xf]
        %v2142 = vld [vmem:[%s2130 + $0x2c] sm:$0xf]
        %v2143 = vld [vmem:[%s2130 + $0x30] sm:$0xf]
        %v2144 = vld [vmem:[%s2130 + $0x34] sm:$0xf]
        %v2145 = vld [vmem:[%s2130 + $0x38] sm:$0xf]
        %v2146 = vld [vmem:[%s2130 + $0x3c] sm:$0xf]
        %v2148 = vunpack.c.l.b16 %v2129
        %v2149 = vpack.c.b16 %v1371, %v2148
        %vm2150 = vcmask 1045504
        %v2151 = vrot.slane %v2149, 2
        %v2152 = vrot.slane %v1412, 2
        %v2153 = vsel %vm2150, %v2151, %v2152
        %v2154 = vrot.slane %v1413, 2
        %v2155 = vsel %vm2150, %v2152, %v2154
        %v2156 = vrot.slane %v1414, 2
        %v2157 = vsel %vm2150, %v2154, %v2156
        %v2158 = vrot.slane %v1415, 2
        %v2159 = vsel %vm2150, %v2156, %v2158
        %v2160 = vrot.slane %v1416, 2
        %v2161 = vsel %vm2150, %v2158, %v2160
        %v2162 = vrot.slane %v1417, 2
        %v2163 = vsel %vm2150, %v2160, %v2162
        %v2164 = vrot.slane %v1418, 2
        %v2165 = vsel %vm2150, %v2162, %v2164
        %v2166 = vrot.slane %v1419, 2
        %v2167 = vsel %vm2150, %v2164, %v2166
        %v2168 = vrot.slane %v1420, 2
        %v2169 = vsel %vm2150, %v2166, %v2168
        %v2170 = vrot.slane %v1421, 2
        %v2171 = vsel %vm2150, %v2168, %v2170
        %v2172 = vrot.slane %v1422, 2
        %v2173 = vsel %vm2150, %v2170, %v2172
        %v2174 = vrot.slane %v1423, 2
        %v2175 = vsel %vm2150, %v2172, %v2174
        %v2176 = vrot.slane %v1424, 2
        %v2177 = vsel %vm2150, %v2174, %v2176
        %v2178 = vrot.slane %v1425, 2
        %v2179 = vsel %vm2150, %v2176, %v2178
        %v2180 = vrot.slane %v1426, 2
        %v2181 = vsel %vm2150, %v2178, %v2180
        %v2182 = vrot.slane %v1427, 2
        %v2183 = vsel %vm2150, %v2180, %v2182
        %v2184 = vrot.slane %v1428, 2
        %v2185 = vsel %vm2150, %v2182, %v2184
        %v2186 = vrot.slane %v1429, 2
        %v2187 = vsel %vm2150, %v2184, %v2186
        %v2188 = vrot.slane %v1430, 2
        %v2189 = vsel %vm2150, %v2186, %v2188
        %v2190 = vrot.slane %v1716, 2
        %v2191 = vsel %vm2150, %v2188, %v2190
        %v2229 = vunpack.c.l.b16 %v2131
        %v2230 = vunpack.c.l.b16 %v2132
        %v2231 = vunpack.c.l.b16 %v2133
        %v2232 = vunpack.c.l.b16 %v2134
        %v2233 = vunpack.c.l.b16 %v2135
        %v2234 = vunpack.c.l.b16 %v2136
        %v2235 = vunpack.c.l.b16 %v2137
        %v2236 = vunpack.c.l.b16 %v2138
        %v2237 = vunpack.c.l.b16 %v2139
        %v2238 = vunpack.c.l.b16 %v2140
        %v2239 = vunpack.c.l.b16 %v2141
        %v2240 = vunpack.c.l.b16 %v2142
        %v2241 = vunpack.c.l.b16 %v2143
        %v2242 = vunpack.c.l.b16 %v2144
        %v2243 = vunpack.c.l.b16 %v2145
        %v2244 = vunpack.c.l.b16 %v2146
        %v2245 = vpack.c.b16 %v2230, %v2229
        %v2246 = vpack.c.b16 %v2232, %v2231
        %v2247 = vpack.c.b16 %v2234, %v2233
        %v2248 = vpack.c.b16 %v2236, %v2235
        %v2249 = vpack.c.b16 %v2238, %v2237
        %v2250 = vpack.c.b16 %v2240, %v2239
        %v2251 = vpack.c.b16 %v2242, %v2241
        %v2252 = vpack.c.b16 %v2244, %v2243
        %2261 = vmatpush.bf16.msra.mxu0 %v2252
        %2262 = vmatpush.bf16.msra.mxu0 %v2251
        %2263 = vmatpush.bf16.msra.mxu0 %v2250
        %2264 = vmatpush.bf16.msra.mxu0 %v2249
        %2265 = vmatpush.bf16.msra.mxu0 %v2248
        %2266 = vmatpush.bf16.msra.mxu0 %v2247
        %2267 = vmatpush.bf16.msra.mxu0 %v2246
        %2268 = vmatpush.bf16.msra.mxu0 %v2245
        %2269 = vmatmul.bf16.gmra.mxu0 %v2153
        %v2270 = vpop.f32.mrf.mxu0
        %v2271 = vadd.f32 0.0, %v2270
        %v2272 = vpop.f32.mrf.mxu0
        %v2273 = vadd.f32 0.0, %v2272
        %2274 = vmatmul.bf16.gmra.mxu0 %v2155
        %v2275 = vpop.f32.mrf.mxu0
        %v2276 = vadd.f32 0.0, %v2275
        %v2277 = vpop.f32.mrf.mxu0
        %v2278 = vadd.f32 0.0, %v2277
        %2279 = vmatmul.bf16.gmra.mxu0 %v2157
        %v2280 = vpop.f32.mrf.mxu0
        %v2281 = vadd.f32 0.0, %v2280
        %v2282 = vpop.f32.mrf.mxu0
        %v2283 = vadd.f32 0.0, %v2282
        %2284 = vmatmul.bf16.gmra.mxu0 %v2159
        %v2285 = vpop.f32.mrf.mxu0
        %v2286 = vadd.f32 0.0, %v2285
        %v2287 = vpop.f32.mrf.mxu0
        %v2288 = vadd.f32 0.0, %v2287
        %2289 = vmatmul.bf16.gmra.mxu0 %v2161
        %v2290 = vpop.f32.mrf.mxu0
        %v2291 = vadd.f32 0.0, %v2290
        %v2292 = vpop.f32.mrf.mxu0
        %v2293 = vadd.f32 0.0, %v2292
        %2294 = vmatmul.bf16.gmra.mxu0 %v2163
        %v2295 = vpop.f32.mrf.mxu0
        %v2296 = vadd.f32 0.0, %v2295
        %v2297 = vpop.f32.mrf.mxu0
        %v2298 = vadd.f32 0.0, %v2297
        %2299 = vmatmul.bf16.gmra.mxu0 %v2165
        %v2300 = vpop.f32.mrf.mxu0
        %v2301 = vadd.f32 0.0, %v2300
        %v2302 = vpop.f32.mrf.mxu0
        %v2303 = vadd.f32 0.0, %v2302
        %2304 = vmatmul.bf16.gmra.mxu0 %v2167
        %v2305 = vpop.f32.mrf.mxu0
        %v2306 = vadd.f32 0.0, %v2305
        %v2307 = vpop.f32.mrf.mxu0
        %v2308 = vadd.f32 0.0, %v2307
        %2309 = vmatmul.bf16.gmra.mxu0 %v2169
        %v2310 = vpop.f32.mrf.mxu0
        %v2311 = vadd.f32 0.0, %v2310
        %v2312 = vpop.f32.mrf.mxu0
        %v2313 = vadd.f32 0.0, %v2312
        %2314 = vmatmul.bf16.gmra.mxu0 %v2171
        %v2315 = vpop.f32.mrf.mxu0
        %v2316 = vadd.f32 0.0, %v2315
        %v2317 = vpop.f32.mrf.mxu0
        %v2318 = vadd.f32 0.0, %v2317
        %2319 = vmatmul.bf16.gmra.mxu0 %v2173
        %v2320 = vpop.f32.mrf.mxu0
        %v2321 = vadd.f32 0.0, %v2320
        %v2322 = vpop.f32.mrf.mxu0
        %v2323 = vadd.f32 0.0, %v2322
        %2324 = vmatmul.bf16.gmra.mxu0 %v2175
        %v2325 = vpop.f32.mrf.mxu0
        %v2326 = vadd.f32 0.0, %v2325
        %v2327 = vpop.f32.mrf.mxu0
        %v2328 = vadd.f32 0.0, %v2327
        %2329 = vmatmul.bf16.gmra.mxu0 %v2177
        %v2330 = vpop.f32.mrf.mxu0
        %v2331 = vadd.f32 0.0, %v2330
        %v2332 = vpop.f32.mrf.mxu0
        %v2333 = vadd.f32 0.0, %v2332
        %2334 = vmatmul.bf16.gmra.mxu0 %v2179
        %v2335 = vpop.f32.mrf.mxu0
        %v2336 = vadd.f32 0.0, %v2335
        %v2337 = vpop.f32.mrf.mxu0
        %v2338 = vadd.f32 0.0, %v2337
        %2339 = vmatmul.bf16.gmra.mxu0 %v2181
        %v2340 = vpop.f32.mrf.mxu0
        %v2341 = vadd.f32 0.0, %v2340
        %v2342 = vpop.f32.mrf.mxu0
        %v2343 = vadd.f32 0.0, %v2342
        %2344 = vmatmul.bf16.gmra.mxu0 %v2183
        %v2345 = vpop.f32.mrf.mxu0
        %v2346 = vadd.f32 0.0, %v2345
        %v2347 = vpop.f32.mrf.mxu0
        %v2348 = vadd.f32 0.0, %v2347
        %2349 = vmatmul.bf16.gmra.mxu0 %v2185
        %v2350 = vpop.f32.mrf.mxu0
        %v2351 = vadd.f32 0.0, %v2350
        %v2352 = vpop.f32.mrf.mxu0
        %v2353 = vadd.f32 0.0, %v2352
        %2354 = vmatmul.bf16.gmra.mxu0 %v2187
        %v2355 = vpop.f32.mrf.mxu0
        %v2356 = vadd.f32 0.0, %v2355
        %v2357 = vpop.f32.mrf.mxu0
        %v2358 = vadd.f32 0.0, %v2357
        %2359 = vmatmul.bf16.gmra.mxu0 %v2189
        %v2360 = vpop.f32.mrf.mxu0
        %v2361 = vadd.f32 0.0, %v2360
        %v2362 = vpop.f32.mrf.mxu0
        %v2363 = vadd.f32 0.0, %v2362
        %2364 = vmatmul.bf16.gmra.mxu0 %v2191
        %v2365 = vpop.f32.mrf.mxu0
        %v2366 = vadd.f32 0.0, %v2365
        %v2367 = vpop.f32.mrf.mxu0
        %v2368 = vadd.f32 0.0, %v2367
        %2369 = vmatmul.bf16.gmra.mxu0 %v2190
        %v2370 = vpop.f32.mrf.mxu0
        %v2371 = vadd.f32 0.0, %v2370
        %v2372 = vpop.f32.mrf.mxu0
        %2373 = vdwg.mxu0
        %v2374 = vadd.f32 %v2088, %v2271
        %v2375 = vadd.f32 %v2089, %v2273
        %v2376 = vadd.f32 %v2090, %v2276
        %v2377 = vadd.f32 %v2091, %v2278
        %v2378 = vadd.f32 %v2092, %v2281
        %v2379 = vadd.f32 %v2093, %v2283
        %v2380 = vadd.f32 %v2094, %v2286
        %v2381 = vadd.f32 %v2095, %v2288
        %v2382 = vadd.f32 %v2096, %v2291
        %v2383 = vadd.f32 %v2097, %v2293
        %v2384 = vadd.f32 %v2098, %v2296
        %v2385 = vadd.f32 %v2099, %v2298
        %v2386 = vadd.f32 %v2100, %v2301
        %v2387 = vadd.f32 %v2101, %v2303
        %v2388 = vadd.f32 %v2102, %v2306
        %v2389 = vadd.f32 %v2103, %v2308
        %v2390 = vadd.f32 %v2104, %v2311
        %v2391 = vadd.f32 %v2105, %v2313
        %v2392 = vadd.f32 %v2106, %v2316
        %v2393 = vadd.f32 %v2107, %v2318
        %v2394 = vadd.f32 %v2108, %v2321
        %v2395 = vadd.f32 %v2109, %v2323
        %v2396 = vadd.f32 %v2110, %v2326
        %v2397 = vadd.f32 %v2111, %v2328
        %v2398 = vadd.f32 %v2112, %v2331
        %v2399 = vadd.f32 %v2113, %v2333
        %v2400 = vadd.f32 %v2114, %v2336
        %v2401 = vadd.f32 %v2115, %v2338
        %v2402 = vadd.f32 %v2116, %v2341
        %v2403 = vadd.f32 %v2117, %v2343
        %v2404 = vadd.f32 %v2118, %v2346
        %v2405 = vadd.f32 %v2119, %v2348
        %v2406 = vadd.f32 %v2120, %v2351
        %v2407 = vadd.f32 %v2121, %v2353
        %v2408 = vadd.f32 %v2122, %v2356
        %v2409 = vadd.f32 %v2123, %v2358
        %v2410 = vadd.f32 %v2124, %v2361
        %v2411 = vadd.f32 %v2125, %v2363
        %v2412 = vadd.f32 %v2126, %v2366
        %v2413 = vadd.f32 %v2127, %v2368
        %v2414 = vadd.f32 %v2128, %v2371
        %v2415 = vld [vmem:[%s267 + $0x10] sm:$0xc]
        %v2416 = vld [vmem:[%s267 + $0x14] sm:$0xf]
        %v2417 = vld [vmem:[%s267 + $0x18] sm:$0xf]
        %v2418 = vld [vmem:[%s267 + $0x1c] sm:$0xf]
        %v2419 = vld [vmem:[%s267 + $0x20] sm:$0xf]
        %v2420 = vld [vmem:[%s267 + $0x24] sm:$0xf]
        %v2421 = vld [vmem:[%s267 + $0x28] sm:$0xf]
        %v2422 = vld [vmem:[%s267 + $0x2c] sm:$0xf]
        %v2423 = vld [vmem:[%s267 + $0x30] sm:$0xf]
        %v2424 = vld [vmem:[%s267 + $0x34] sm:$0xf]
        %v2425 = vld [vmem:[%s267 + $0x38] sm:$0xf]
        %v2426 = vld [vmem:[%s267 + $0x3c] sm:$0xf]
        %v2427 = vld [vmem:[%s267 + $0x40] sm:$0xf]
        %v2428 = vld [vmem:[%s267 + $0x44] sm:$0xf]
        %v2429 = vld [vmem:[%s267 + $0x48] sm:$0xf]
        %v2430 = vld [vmem:[%s267 + $0x4c] sm:$0xf]
        %v2431 = vld [vmem:[%s267 + $0x50] sm:$0xf]
        %v2432 = vld [vmem:[%s267 + $0x54] sm:$0xf]
        %v2433 = vld [vmem:[%s267 + $0x58] sm:$0xf]
        %v2434 = vld [vmem:[%s267 + $0x5c] sm:$0xf]
        %v2435 = vld [vmem:[%s267 + $0x60] sm:$0xf]
        %v2436 = vld [vmem:[%s267 + $0x64] sm:$0xf]
        %v2437 = vld [vmem:[%s267 + $0x68] sm:$0xf]
        %v2438 = vld [vmem:[%s267 + $0x6c] sm:$0xf]
        %v2439 = vld [vmem:[%s267 + $0x70] sm:$0xf]
        %v2440 = vld [vmem:[%s267 + $0x74] sm:$0xf]
        %v2441 = vld [vmem:[%s267 + $0x78] sm:$0xf]
        %v2442 = vld [vmem:[%s267 + $0x7c] sm:$0xf]
        %v2443 = vld [vmem:[%s267 + $0x80] sm:$0xf]
        %v2444 = vld [vmem:[%s267 + $0x84] sm:$0xf]
        %v2445 = vld [vmem:[%s267 + $0x88] sm:$0xf]
        %v2446 = vld [vmem:[%s267 + $0x8c] sm:$0xf]
        %v2447 = vld [vmem:[%s267 + $0x90] sm:$0xf]
        %v2448 = vld [vmem:[%s267 + $0x94] sm:$0xf]
        %v2449 = vld [vmem:[%s267 + $0x98] sm:$0xf]
        %v2450 = vld [vmem:[%s267 + $0x9c] sm:$0xf]
        %v2451 = vld [vmem:[%s267 + $0xa0] sm:$0xf]
        %v2452 = vld [vmem:[%s267 + $0xa4] sm:$0xf]
        %v2453 = vld [vmem:[%s267 + $0xa8] sm:$0xf]
        %v2454 = vld [vmem:[%s267 + $0xac] sm:$0xf]
        %v2455 = vld [vmem:[%s267 + $0xb0] sm:$0xf]
        %s2456 = scalar_lea.vmem %s1, 384
        %v2457 = vld [vmem:[%s2456] sm:$0xf]
        %v2458 = vld [vmem:[%s2456 + $0x4] sm:$0xf]
        %v2459 = vld [vmem:[%s2456 + $0x8] sm:$0xf]
        %v2460 = vld [vmem:[%s2456 + $0xc] sm:$0xf]
        %v2461 = vld [vmem:[%s2456 + $0x10] sm:$0xf]
        %v2462 = vld [vmem:[%s2456 + $0x14] sm:$0xf]
        %v2463 = vld [vmem:[%s2456 + $0x18] sm:$0xf]
        %v2464 = vld [vmem:[%s2456 + $0x1c] sm:$0xf]
        %v2465 = vld [vmem:[%s2456 + $0x20] sm:$0xf]
        %v2466 = vld [vmem:[%s2456 + $0x24] sm:$0xf]
        %v2467 = vld [vmem:[%s2456 + $0x28] sm:$0xf]
        %v2468 = vld [vmem:[%s2456 + $0x2c] sm:$0xf]
        %v2469 = vld [vmem:[%s2456 + $0x30] sm:$0xf]
        %v2470 = vld [vmem:[%s2456 + $0x34] sm:$0xf]
        %v2471 = vld [vmem:[%s2456 + $0x38] sm:$0xf]
        %v2472 = vld [vmem:[%s2456 + $0x3c] sm:$0xf]
        %v2514 = vunpack.c.l.b16 %v2415
        %v2515 = vunpack.c.l.b16 %v2416
        %v2516 = vunpack.c.l.b16 %v2417
        %v2517 = vunpack.c.l.b16 %v2418
        %v2518 = vunpack.c.l.b16 %v2419
        %v2519 = vunpack.c.l.b16 %v2420
        %v2520 = vunpack.c.l.b16 %v2421
        %v2521 = vunpack.c.l.b16 %v2422
        %v2522 = vunpack.c.l.b16 %v2423
        %v2523 = vunpack.c.l.b16 %v2424
        %v2524 = vunpack.c.l.b16 %v2425
        %v2525 = vunpack.c.l.b16 %v2426
        %v2526 = vunpack.c.l.b16 %v2427
        %v2527 = vunpack.c.l.b16 %v2428
        %v2528 = vunpack.c.l.b16 %v2429
        %v2529 = vunpack.c.l.b16 %v2430
        %v2530 = vunpack.c.l.b16 %v2431
        %v2531 = vunpack.c.l.b16 %v2432
        %v2532 = vunpack.c.l.b16 %v2433
        %v2533 = vunpack.c.l.b16 %v2434
        %v2534 = vunpack.c.l.b16 %v2435
        %v2535 = vunpack.c.l.b16 %v2436
        %v2536 = vunpack.c.l.b16 %v2437
        %v2537 = vunpack.c.l.b16 %v2438
        %v2538 = vunpack.c.l.b16 %v2439
        %v2539 = vunpack.c.l.b16 %v2440
        %v2540 = vunpack.c.l.b16 %v2441
        %v2541 = vunpack.c.l.b16 %v2442
        %v2542 = vunpack.c.l.b16 %v2443
        %v2543 = vunpack.c.l.b16 %v2444
        %v2544 = vunpack.c.l.b16 %v2445
        %v2545 = vunpack.c.l.b16 %v2446
        %v2546 = vunpack.c.l.b16 %v2447
        %v2547 = vunpack.c.l.b16 %v2448
        %v2548 = vunpack.c.l.b16 %v2449
        %v2549 = vunpack.c.l.b16 %v2450
        %v2550 = vunpack.c.l.b16 %v2451
        %v2551 = vunpack.c.l.b16 %v2452
        %v2552 = vunpack.c.l.b16 %v2453
        %v2553 = vunpack.c.l.b16 %v2454
        %v2554 = vunpack.c.l.b16 %v2455
        %v2555 = vpack.c.b16 %v2515, %v2514
        %v2556 = vpack.c.b16 %v2517, %v2516
        %v2557 = vpack.c.b16 %v2519, %v2518
        %v2558 = vpack.c.b16 %v2521, %v2520
        %v2559 = vpack.c.b16 %v2523, %v2522
        %v2560 = vpack.c.b16 %v2525, %v2524
        %v2561 = vpack.c.b16 %v2527, %v2526
        %v2562 = vpack.c.b16 %v2529, %v2528
        %v2563 = vpack.c.b16 %v2531, %v2530
        %v2564 = vpack.c.b16 %v2533, %v2532
        %v2565 = vpack.c.b16 %v2535, %v2534
        %v2566 = vpack.c.b16 %v2537, %v2536
        %v2567 = vpack.c.b16 %v2539, %v2538
        %v2568 = vpack.c.b16 %v2541, %v2540
        %v2569 = vpack.c.b16 %v2543, %v2542
        %v2570 = vpack.c.b16 %v2545, %v2544
        %v2571 = vpack.c.b16 %v2547, %v2546
        %v2572 = vpack.c.b16 %v2549, %v2548
        %v2573 = vpack.c.b16 %v2551, %v2550
        %v2574 = vpack.c.b16 %v2553, %v2552
        %v2575 = vpack.c.b16 %v2554, %v2554
        %v2576 = vrot.slane %v2555, 2
        %v2577 = vrot.slane %v2556, 2
        %v2578 = vsel %vm2150, %v2576, %v2577
        %v2579 = vrot.slane %v2557, 2
        %v2580 = vsel %vm2150, %v2577, %v2579
        %v2581 = vrot.slane %v2558, 2
        %v2582 = vsel %vm2150, %v2579, %v2581
        %v2583 = vrot.slane %v2559, 2
        %v2584 = vsel %vm2150, %v2581, %v2583
        %v2585 = vrot.slane %v2560, 2
        %v2586 = vsel %vm2150, %v2583, %v2585
        %v2587 = vrot.slane %v2561, 2
        %v2588 = vsel %vm2150, %v2585, %v2587
        %v2589 = vrot.slane %v2562, 2
        %v2590 = vsel %vm2150, %v2587, %v2589
        %v2591 = vrot.slane %v2563, 2
        %v2592 = vsel %vm2150, %v2589, %v2591
        %v2593 = vrot.slane %v2564, 2
        %v2594 = vsel %vm2150, %v2591, %v2593
        %v2595 = vrot.slane %v2565, 2
        %v2596 = vsel %vm2150, %v2593, %v2595
        %v2597 = vrot.slane %v2566, 2
        %v2598 = vsel %vm2150, %v2595, %v2597
        %v2599 = vrot.slane %v2567, 2
        %v2600 = vsel %vm2150, %v2597, %v2599
        %v2601 = vrot.slane %v2568, 2
        %v2602 = vsel %vm2150, %v2599, %v2601
        %v2603 = vrot.slane %v2569, 2
        %v2604 = vsel %vm2150, %v2601, %v2603
        %v2605 = vrot.slane %v2570, 2
        %v2606 = vsel %vm2150, %v2603, %v2605
        %v2607 = vrot.slane %v2571, 2
        %v2608 = vsel %vm2150, %v2605, %v2607
        %v2609 = vrot.slane %v2572, 2
        %v2610 = vsel %vm2150, %v2607, %v2609
        %v2611 = vrot.slane %v2573, 2
        %v2612 = vsel %vm2150, %v2609, %v2611
        %v2613 = vrot.slane %v2574, 2
        %v2614 = vsel %vm2150, %v2611, %v2613
        %v2615 = vrot.slane %v2575, 2
        %v2616 = vsel %vm2150, %v2613, %v2615
        %v2654 = vunpack.c.l.b16 %v2457
        %v2655 = vunpack.c.l.b16 %v2458
        %v2656 = vunpack.c.l.b16 %v2459
        %v2657 = vunpack.c.l.b16 %v2460
        %v2658 = vunpack.c.l.b16 %v2461
        %v2659 = vunpack.c.l.b16 %v2462
        %v2660 = vunpack.c.l.b16 %v2463
        %v2661 = vunpack.c.l.b16 %v2464
        %v2662 = vunpack.c.l.b16 %v2465
        %v2663 = vunpack.c.l.b16 %v2466
        %v2664 = vunpack.c.l.b16 %v2467
        %v2665 = vunpack.c.l.b16 %v2468
        %v2666 = vunpack.c.l.b16 %v2469
        %v2667 = vunpack.c.l.b16 %v2470
        %v2668 = vunpack.c.l.b16 %v2471
        %v2669 = vunpack.c.l.b16 %v2472
        %v2670 = vpack.c.b16 %v2655, %v2654
        %v2671 = vpack.c.b16 %v2657, %v2656
        %v2672 = vpack.c.b16 %v2659, %v2658
        %v2673 = vpack.c.b16 %v2661, %v2660
        %v2674 = vpack.c.b16 %v2663, %v2662
        %v2675 = vpack.c.b16 %v2665, %v2664
        %v2676 = vpack.c.b16 %v2667, %v2666
        %v2677 = vpack.c.b16 %v2669, %v2668
        %2686 = vmatpush.bf16.msra.mxu0 %v2677
        %2687 = vmatpush.bf16.msra.mxu0 %v2676
        %2688 = vmatpush.bf16.msra.mxu0 %v2675
        %2689 = vmatpush.bf16.msra.mxu0 %v2674
        %2690 = vmatpush.bf16.msra.mxu0 %v2673
        %2691 = vmatpush.bf16.msra.mxu0 %v2672
        %2692 = vmatpush.bf16.msra.mxu0 %v2671
        %2693 = vmatpush.bf16.msra.mxu0 %v2670
        %2694 = vmatmul.bf16.gmra.mxu0 %v2578
        %v2695 = vpop.f32.mrf.mxu0
        %v2696 = vadd.f32 0.0, %v2695
        %v2697 = vpop.f32.mrf.mxu0
        %v2698 = vadd.f32 0.0, %v2697
        %2699 = vmatmul.bf16.gmra.mxu0 %v2580
        %v2700 = vpop.f32.mrf.mxu0
        %v2701 = vadd.f32 0.0, %v2700
        %v2702 = vpop.f32.mrf.mxu0
        %v2703 = vadd.f32 0.0, %v2702
        %2704 = vmatmul.bf16.gmra.mxu0 %v2582
        %v2705 = vpop.f32.mrf.mxu0
        %v2706 = vadd.f32 0.0, %v2705
        %v2707 = vpop.f32.mrf.mxu0
        %v2708 = vadd.f32 0.0, %v2707
        %2709 = vmatmul.bf16.gmra.mxu0 %v2584
        %v2710 = vpop.f32.mrf.mxu0
        %v2711 = vadd.f32 0.0, %v2710
        %v2712 = vpop.f32.mrf.mxu0
        %v2713 = vadd.f32 0.0, %v2712
        %2714 = vmatmul.bf16.gmra.mxu0 %v2586
        %v2715 = vpop.f32.mrf.mxu0
        %v2716 = vadd.f32 0.0, %v2715
        %v2717 = vpop.f32.mrf.mxu0
        %v2718 = vadd.f32 0.0, %v2717
        %2719 = vmatmul.bf16.gmra.mxu0 %v2588
        %v2720 = vpop.f32.mrf.mxu0
        %v2721 = vadd.f32 0.0, %v2720
        %v2722 = vpop.f32.mrf.mxu0
        %v2723 = vadd.f32 0.0, %v2722
        %2724 = vmatmul.bf16.gmra.mxu0 %v2590
        %v2725 = vpop.f32.mrf.mxu0
        %v2726 = vadd.f32 0.0, %v2725
        %v2727 = vpop.f32.mrf.mxu0
        %v2728 = vadd.f32 0.0, %v2727
        %2729 = vmatmul.bf16.gmra.mxu0 %v2592
        %v2730 = vpop.f32.mrf.mxu0
        %v2731 = vadd.f32 0.0, %v2730
        %v2732 = vpop.f32.mrf.mxu0
        %v2733 = vadd.f32 0.0, %v2732
        %2734 = vmatmul.bf16.gmra.mxu0 %v2594
        %v2735 = vpop.f32.mrf.mxu0
        %v2736 = vadd.f32 0.0, %v2735
        %v2737 = vpop.f32.mrf.mxu0
        %v2738 = vadd.f32 0.0, %v2737
        %2739 = vmatmul.bf16.gmra.mxu0 %v2596
        %v2740 = vpop.f32.mrf.mxu0
        %v2741 = vadd.f32 0.0, %v2740
        %v2742 = vpop.f32.mrf.mxu0
        %v2743 = vadd.f32 0.0, %v2742
        %2744 = vmatmul.bf16.gmra.mxu0 %v2598
        %v2745 = vpop.f32.mrf.mxu0
        %v2746 = vadd.f32 0.0, %v2745
        %v2747 = vpop.f32.mrf.mxu0
        %v2748 = vadd.f32 0.0, %v2747
        %2749 = vmatmul.bf16.gmra.mxu0 %v2600
        %v2750 = vpop.f32.mrf.mxu0
        %v2751 = vadd.f32 0.0, %v2750
        %v2752 = vpop.f32.mrf.mxu0
        %v2753 = vadd.f32 0.0, %v2752
        %2754 = vmatmul.bf16.gmra.mxu0 %v2602
        %v2755 = vpop.f32.mrf.mxu0
        %v2756 = vadd.f32 0.0, %v2755
        %v2757 = vpop.f32.mrf.mxu0
        %v2758 = vadd.f32 0.0, %v2757
        %2759 = vmatmul.bf16.gmra.mxu0 %v2604
        %v2760 = vpop.f32.mrf.mxu0
        %v2761 = vadd.f32 0.0, %v2760
        %v2762 = vpop.f32.mrf.mxu0
        %v2763 = vadd.f32 0.0, %v2762
        %2764 = vmatmul.bf16.gmra.mxu0 %v2606
        %v2765 = vpop.f32.mrf.mxu0
        %v2766 = vadd.f32 0.0, %v2765
        %v2767 = vpop.f32.mrf.mxu0
        %v2768 = vadd.f32 0.0, %v2767
        %2769 = vmatmul.bf16.gmra.mxu0 %v2608
        %v2770 = vpop.f32.mrf.mxu0
        %v2771 = vadd.f32 0.0, %v2770
        %v2772 = vpop.f32.mrf.mxu0
        %v2773 = vadd.f32 0.0, %v2772
        %2774 = vmatmul.bf16.gmra.mxu0 %v2610
        %v2775 = vpop.f32.mrf.mxu0
        %v2776 = vadd.f32 0.0, %v2775
        %v2777 = vpop.f32.mrf.mxu0
        %v2778 = vadd.f32 0.0, %v2777
        %2779 = vmatmul.bf16.gmra.mxu0 %v2612
        %v2780 = vpop.f32.mrf.mxu0
        %v2781 = vadd.f32 0.0, %v2780
        %v2782 = vpop.f32.mrf.mxu0
        %v2783 = vadd.f32 0.0, %v2782
        %2784 = vmatmul.bf16.gmra.mxu0 %v2614
        %v2785 = vpop.f32.mrf.mxu0
        %v2786 = vadd.f32 0.0, %v2785
        %v2787 = vpop.f32.mrf.mxu0
        %v2788 = vadd.f32 0.0, %v2787
        %2789 = vmatmul.bf16.gmra.mxu0 %v2616
        %v2790 = vpop.f32.mrf.mxu0
        %v2791 = vadd.f32 0.0, %v2790
        %v2792 = vpop.f32.mrf.mxu0
        %v2793 = vadd.f32 0.0, %v2792
        %2794 = vmatmul.bf16.gmra.mxu0 %v2615
        %v2795 = vpop.f32.mrf.mxu0
        %v2796 = vadd.f32 0.0, %v2795
        %v2797 = vpop.f32.mrf.mxu0
        %2798 = vdwg.mxu0
        %v2799 = vadd.f32 %v2374, %v2696
        %v2800 = vadd.f32 %v2375, %v2698
        %v2801 = vadd.f32 %v2376, %v2701
        %v2802 = vadd.f32 %v2377, %v2703
        %v2803 = vadd.f32 %v2378, %v2706
        %v2804 = vadd.f32 %v2379, %v2708
        %v2805 = vadd.f32 %v2380, %v2711
        %v2806 = vadd.f32 %v2381, %v2713
        %v2807 = vadd.f32 %v2382, %v2716
        %v2808 = vadd.f32 %v2383, %v2718
        %v2809 = vadd.f32 %v2384, %v2721
        %v2810 = vadd.f32 %v2385, %v2723
        %v2811 = vadd.f32 %v2386, %v2726
        %v2812 = vadd.f32 %v2387, %v2728
        %v2813 = vadd.f32 %v2388, %v2731
        %v2814 = vadd.f32 %v2389, %v2733
        %v2815 = vadd.f32 %v2390, %v2736
        %v2816 = vadd.f32 %v2391, %v2738
        %v2817 = vadd.f32 %v2392, %v2741
        %v2818 = vadd.f32 %v2393, %v2743
        %v2819 = vadd.f32 %v2394, %v2746
        %v2820 = vadd.f32 %v2395, %v2748
        %v2821 = vadd.f32 %v2396, %v2751
        %v2822 = vadd.f32 %v2397, %v2753
        %v2823 = vadd.f32 %v2398, %v2756
        %v2824 = vadd.f32 %v2399, %v2758
        %v2825 = vadd.f32 %v2400, %v2761
        %v2826 = vadd.f32 %v2401, %v2763
        %v2827 = vadd.f32 %v2402, %v2766
        %v2828 = vadd.f32 %v2403, %v2768
        %v2829 = vadd.f32 %v2404, %v2771
        %v2830 = vadd.f32 %v2405, %v2773
        %v2831 = vadd.f32 %v2406, %v2776
        %v2832 = vadd.f32 %v2407, %v2778
        %v2833 = vadd.f32 %v2408, %v2781
        %v2834 = vadd.f32 %v2409, %v2783
        %v2835 = vadd.f32 %v2410, %v2786
        %v2836 = vadd.f32 %v2411, %v2788
        %v2837 = vadd.f32 %v2412, %v2791
        %v2838 = vadd.f32 %v2413, %v2793
        %v2839 = vadd.f32 %v2414, %v2796
        %v2840 = vld [vmem:[%s267 + $0x10] sm:$0xc]
        %v2841 = vld [vmem:[%s267 + $0x14] sm:$0xf]
        %v2842 = vld [vmem:[%s267 + $0x18] sm:$0xf]
        %v2843 = vld [vmem:[%s267 + $0x1c] sm:$0xf]
        %v2844 = vld [vmem:[%s267 + $0x20] sm:$0xf]
        %v2845 = vld [vmem:[%s267 + $0x24] sm:$0xf]
        %v2846 = vld [vmem:[%s267 + $0x28] sm:$0xf]
        %v2847 = vld [vmem:[%s267 + $0x2c] sm:$0xf]
        %v2848 = vld [vmem:[%s267 + $0x30] sm:$0xf]
        %v2849 = vld [vmem:[%s267 + $0x34] sm:$0xf]
        %v2850 = vld [vmem:[%s267 + $0x38] sm:$0xf]
        %v2851 = vld [vmem:[%s267 + $0x3c] sm:$0xf]
        %v2852 = vld [vmem:[%s267 + $0x40] sm:$0xf]
        %v2853 = vld [vmem:[%s267 + $0x44] sm:$0xf]
        %v2854 = vld [vmem:[%s267 + $0x48] sm:$0xf]
        %v2855 = vld [vmem:[%s267 + $0x4c] sm:$0xf]
        %v2856 = vld [vmem:[%s267 + $0x50] sm:$0xf]
        %v2857 = vld [vmem:[%s267 + $0x54] sm:$0xf]
        %v2858 = vld [vmem:[%s267 + $0x58] sm:$0xf]
        %v2859 = vld [vmem:[%s267 + $0x5c] sm:$0xf]
        %v2860 = vld [vmem:[%s267 + $0x60] sm:$0xf]
        %v2861 = vld [vmem:[%s267 + $0x64] sm:$0xf]
        %v2862 = vld [vmem:[%s267 + $0x68] sm:$0xf]
        %v2863 = vld [vmem:[%s267 + $0x6c] sm:$0xf]
        %v2864 = vld [vmem:[%s267 + $0x70] sm:$0xf]
        %v2865 = vld [vmem:[%s267 + $0x74] sm:$0xf]
        %v2866 = vld [vmem:[%s267 + $0x78] sm:$0xf]
        %v2867 = vld [vmem:[%s267 + $0x7c] sm:$0xf]
        %v2868 = vld [vmem:[%s267 + $0x80] sm:$0xf]
        %v2869 = vld [vmem:[%s267 + $0x84] sm:$0xf]
        %v2870 = vld [vmem:[%s267 + $0x88] sm:$0xf]
        %v2871 = vld [vmem:[%s267 + $0x8c] sm:$0xf]
        %v2872 = vld [vmem:[%s267 + $0x90] sm:$0xf]
        %v2873 = vld [vmem:[%s267 + $0x94] sm:$0xf]
        %v2874 = vld [vmem:[%s267 + $0x98] sm:$0xf]
        %v2875 = vld [vmem:[%s267 + $0x9c] sm:$0xf]
        %v2876 = vld [vmem:[%s267 + $0xa0] sm:$0xf]
        %v2877 = vld [vmem:[%s267 + $0xa4] sm:$0xf]
        %v2878 = vld [vmem:[%s267 + $0xa8] sm:$0xf]
        %v2879 = vld [vmem:[%s267 + $0xac] sm:$0xf]
        %v2880 = vld [vmem:[%s267 + $0xb0] sm:$0xf]
        %v2881 = vld [vmem:[%s267 + $0xb4] sm:$0x1]
        %s2882 = scalar_lea.vmem %s1, 448
        %v2883 = vld [vmem:[%s2882] sm:$0xf]
        %v2884 = vld [vmem:[%s2882 + $0x4] sm:$0xf]
        %v2885 = vld [vmem:[%s2882 + $0x8] sm:$0xf]
        %v2886 = vld [vmem:[%s2882 + $0xc] sm:$0xf]
        %v2887 = vld [vmem:[%s2882 + $0x10] sm:$0xf]
        %v2888 = vld [vmem:[%s2882 + $0x14] sm:$0xf]
        %v2889 = vld [vmem:[%s2882 + $0x18] sm:$0xf]
        %v2890 = vld [vmem:[%s2882 + $0x1c] sm:$0xf]
        %v2891 = vld [vmem:[%s2882 + $0x20] sm:$0xf]
        %v2892 = vld [vmem:[%s2882 + $0x24] sm:$0xf]
        %v2893 = vld [vmem:[%s2882 + $0x28] sm:$0xf]
        %v2894 = vld [vmem:[%s2882 + $0x2c] sm:$0xf]
        %v2895 = vld [vmem:[%s2882 + $0x30] sm:$0xf]
        %v2896 = vld [vmem:[%s2882 + $0x34] sm:$0xf]
        %v2897 = vld [vmem:[%s2882 + $0x38] sm:$0xf]
        %v2898 = vld [vmem:[%s2882 + $0x3c] sm:$0xf]
        %v2941 = vunpack.c.l.b16 %v2840
        %v2942 = vunpack.c.l.b16 %v2841
        %v2943 = vunpack.c.l.b16 %v2842
        %v2944 = vunpack.c.l.b16 %v2843
        %v2945 = vunpack.c.l.b16 %v2844
        %v2946 = vunpack.c.l.b16 %v2845
        %v2947 = vunpack.c.l.b16 %v2846
        %v2948 = vunpack.c.l.b16 %v2847
        %v2949 = vunpack.c.l.b16 %v2848
        %v2950 = vunpack.c.l.b16 %v2849
        %v2951 = vunpack.c.l.b16 %v2850
        %v2952 = vunpack.c.l.b16 %v2851
        %v2953 = vunpack.c.l.b16 %v2852
        %v2954 = vunpack.c.l.b16 %v2853
        %v2955 = vunpack.c.l.b16 %v2854
        %v2956 = vunpack.c.l.b16 %v2855
        %v2957 = vunpack.c.l.b16 %v2856
        %v2958 = vunpack.c.l.b16 %v2857
        %v2959 = vunpack.c.l.b16 %v2858
        %v2960 = vunpack.c.l.b16 %v2859
        %v2961 = vunpack.c.l.b16 %v2860
        %v2962 = vunpack.c.l.b16 %v2861
        %v2963 = vunpack.c.l.b16 %v2862
        %v2964 = vunpack.c.l.b16 %v2863
        %v2965 = vunpack.c.l.b16 %v2864
        %v2966 = vunpack.c.l.b16 %v2865
        %v2967 = vunpack.c.l.b16 %v2866
        %v2968 = vunpack.c.l.b16 %v2867
        %v2969 = vunpack.c.l.b16 %v2868
        %v2970 = vunpack.c.l.b16 %v2869
        %v2971 = vunpack.c.l.b16 %v2870
        %v2972 = vunpack.c.l.b16 %v2871
        %v2973 = vunpack.c.l.b16 %v2872
        %v2974 = vunpack.c.l.b16 %v2873
        %v2975 = vunpack.c.l.b16 %v2874
        %v2976 = vunpack.c.l.b16 %v2875
        %v2977 = vunpack.c.l.b16 %v2876
        %v2978 = vunpack.c.l.b16 %v2877
        %v2979 = vunpack.c.l.b16 %v2878
        %v2980 = vunpack.c.l.b16 %v2879
        %v2981 = vunpack.c.l.b16 %v2880
        %v2982 = vunpack.c.l.b16 %v2881
        %v2983 = vpack.c.b16 %v2942, %v2941
        %v2984 = vpack.c.b16 %v2944, %v2943
        %v2985 = vpack.c.b16 %v2946, %v2945
        %v2986 = vpack.c.b16 %v2948, %v2947
        %v2987 = vpack.c.b16 %v2950, %v2949
        %v2988 = vpack.c.b16 %v2952, %v2951
        %v2989 = vpack.c.b16 %v2954, %v2953
        %v2990 = vpack.c.b16 %v2956, %v2955
        %v2991 = vpack.c.b16 %v2958, %v2957
        %v2992 = vpack.c.b16 %v2960, %v2959
        %v2993 = vpack.c.b16 %v2962, %v2961
        %v2994 = vpack.c.b16 %v2964, %v2963
        %v2995 = vpack.c.b16 %v2966, %v2965
        %v2996 = vpack.c.b16 %v2968, %v2967
        %v2997 = vpack.c.b16 %v2970, %v2969
        %v2998 = vpack.c.b16 %v2972, %v2971
        %v2999 = vpack.c.b16 %v2974, %v2973
        %v3000 = vpack.c.b16 %v2976, %v2975
        %v3001 = vpack.c.b16 %v2978, %v2977
        %v3002 = vpack.c.b16 %v2980, %v2979
        %v3003 = vpack.c.b16 %v2982, %v2981
        %vm3004 = vsmask.f32 5376
        %v3006 = vshrl.u32 %v2983, 16
        %v3008 = vrot.slane %v3006, 2
        %v3009 = vshll.u32 %v2983, 16
        %v3011 = vrot.slane %v3009, 3
        %v3012 = vor.u32 %v3008, %v3011
        %v3014 = vshrl.u32 %v2984, 16
        %v3016 = vrot.slane %v3014, 2
        %v3017 = vshll.u32 %v2984, 16
        %v3019 = vrot.slane %v3017, 3
        %v3020 = vor.u32 %v3016, %v3019
        %v3021 = vsel %vm3004, %v3012, %v3020
        %v3023 = vshrl.u32 %v2985, 16
        %v3025 = vrot.slane %v3023, 2
        %v3026 = vshll.u32 %v2985, 16
        %v3028 = vrot.slane %v3026, 3
        %v3029 = vor.u32 %v3025, %v3028
        %v3030 = vsel %vm3004, %v3020, %v3029
        %v3032 = vshrl.u32 %v2986, 16
        %v3034 = vrot.slane %v3032, 2
        %v3035 = vshll.u32 %v2986, 16
        %v3037 = vrot.slane %v3035, 3
        %v3038 = vor.u32 %v3034, %v3037
        %v3039 = vsel %vm3004, %v3029, %v3038
        %v3041 = vshrl.u32 %v2987, 16
        %v3043 = vrot.slane %v3041, 2
        %v3044 = vshll.u32 %v2987, 16
        %v3046 = vrot.slane %v3044, 3
        %v3047 = vor.u32 %v3043, %v3046
        %v3048 = vsel %vm3004, %v3038, %v3047
        %v3050 = vshrl.u32 %v2988, 16
        %v3052 = vrot.slane %v3050, 2
        %v3053 = vshll.u32 %v2988, 16
        %v3055 = vrot.slane %v3053, 3
        %v3056 = vor.u32 %v3052, %v3055
        %v3057 = vsel %vm3004, %v3047, %v3056
        %v3059 = vshrl.u32 %v2989, 16
        %v3061 = vrot.slane %v3059, 2
        %v3062 = vshll.u32 %v2989, 16
        %v3064 = vrot.slane %v3062, 3
        %v3065 = vor.u32 %v3061, %v3064
        %v3066 = vsel %vm3004, %v3056, %v3065
        %v3068 = vshrl.u32 %v2990, 16
        %v3070 = vrot.slane %v3068, 2
        %v3071 = vshll.u32 %v2990, 16
        %v3073 = vrot.slane %v3071, 3
        %v3074 = vor.u32 %v3070, %v3073
        %v3075 = vsel %vm3004, %v3065, %v3074
        %v3077 = vshrl.u32 %v2991, 16
        %v3079 = vrot.slane %v3077, 2
        %v3080 = vshll.u32 %v2991, 16
        %v3082 = vrot.slane %v3080, 3
        %v3083 = vor.u32 %v3079, %v3082
        %v3084 = vsel %vm3004, %v3074, %v3083
        %v3086 = vshrl.u32 %v2992, 16
        %v3088 = vrot.slane %v3086, 2
        %v3089 = vshll.u32 %v2992, 16
        %v3091 = vrot.slane %v3089, 3
        %v3092 = vor.u32 %v3088, %v3091
        %v3093 = vsel %vm3004, %v3083, %v3092
        %v3095 = vshrl.u32 %v2993, 16
        %v3097 = vrot.slane %v3095, 2
        %v3098 = vshll.u32 %v2993, 16
        %v3100 = vrot.slane %v3098, 3
        %v3101 = vor.u32 %v3097, %v3100
        %v3102 = vsel %vm3004, %v3092, %v3101
        %v3104 = vshrl.u32 %v2994, 16
        %v3106 = vrot.slane %v3104, 2
        %v3107 = vshll.u32 %v2994, 16
        %v3109 = vrot.slane %v3107, 3
        %v3110 = vor.u32 %v3106, %v3109
        %v3111 = vsel %vm3004, %v3101, %v3110
        %v3113 = vshrl.u32 %v2995, 16
        %v3115 = vrot.slane %v3113, 2
        %v3116 = vshll.u32 %v2995, 16
        %v3118 = vrot.slane %v3116, 3
        %v3119 = vor.u32 %v3115, %v3118
        %v3120 = vsel %vm3004, %v3110, %v3119
        %v3122 = vshrl.u32 %v2996, 16
        %v3124 = vrot.slane %v3122, 2
        %v3125 = vshll.u32 %v2996, 16
        %v3127 = vrot.slane %v3125, 3
        %v3128 = vor.u32 %v3124, %v3127
        %v3129 = vsel %vm3004, %v3119, %v3128
        %v3131 = vshrl.u32 %v2997, 16
        %v3133 = vrot.slane %v3131, 2
        %v3134 = vshll.u32 %v2997, 16
        %v3136 = vrot.slane %v3134, 3
        %v3137 = vor.u32 %v3133, %v3136
        %v3138 = vsel %vm3004, %v3128, %v3137
        %v3140 = vshrl.u32 %v2998, 16
        %v3142 = vrot.slane %v3140, 2
        %v3143 = vshll.u32 %v2998, 16
        %v3145 = vrot.slane %v3143, 3
        %v3146 = vor.u32 %v3142, %v3145
        %v3147 = vsel %vm3004, %v3137, %v3146
        %v3149 = vshrl.u32 %v2999, 16
        %v3151 = vrot.slane %v3149, 2
        %v3152 = vshll.u32 %v2999, 16
        %v3154 = vrot.slane %v3152, 3
        %v3155 = vor.u32 %v3151, %v3154
        %v3156 = vsel %vm3004, %v3146, %v3155
        %v3158 = vshrl.u32 %v3000, 16
        %v3160 = vrot.slane %v3158, 2
        %v3161 = vshll.u32 %v3000, 16
        %v3163 = vrot.slane %v3161, 3
        %v3164 = vor.u32 %v3160, %v3163
        %v3165 = vsel %vm3004, %v3155, %v3164
        %v3167 = vshrl.u32 %v3001, 16
        %v3169 = vrot.slane %v3167, 2
        %v3170 = vshll.u32 %v3001, 16
        %v3172 = vrot.slane %v3170, 3
        %v3173 = vor.u32 %v3169, %v3172
        %v3174 = vsel %vm3004, %v3164, %v3173
        %v3176 = vshrl.u32 %v3002, 16
        %v3178 = vrot.slane %v3176, 2
        %v3179 = vshll.u32 %v3002, 16
        %v3181 = vrot.slane %v3179, 3
        %v3182 = vor.u32 %v3178, %v3181
        %v3183 = vsel %vm3004, %v3173, %v3182
        %v3185 = vshrl.u32 %v3003, 16
        %v3187 = vrot.slane %v3185, 2
        %v3188 = vshll.u32 %v3003, 16
        %v3190 = vrot.slane %v3188, 3
        %v3191 = vor.u32 %v3187, %v3190
        %v3192 = vsel %vm3004, %v3182, %v3191
        %v3230 = vunpack.c.l.b16 %v2883
        %v3231 = vunpack.c.l.b16 %v2884
        %v3232 = vunpack.c.l.b16 %v2885
        %v3233 = vunpack.c.l.b16 %v2886
        %v3234 = vunpack.c.l.b16 %v2887
        %v3235 = vunpack.c.l.b16 %v2888
        %v3236 = vunpack.c.l.b16 %v2889
        %v3237 = vunpack.c.l.b16 %v2890
        %v3238 = vunpack.c.l.b16 %v2891
        %v3239 = vunpack.c.l.b16 %v2892
        %v3240 = vunpack.c.l.b16 %v2893
        %v3241 = vunpack.c.l.b16 %v2894
        %v3242 = vunpack.c.l.b16 %v2895
        %v3243 = vunpack.c.l.b16 %v2896
        %v3244 = vunpack.c.l.b16 %v2897
        %v3245 = vunpack.c.l.b16 %v2898
        %v3246 = vpack.c.b16 %v3231, %v3230
        %v3247 = vpack.c.b16 %v3233, %v3232
        %v3248 = vpack.c.b16 %v3235, %v3234
        %v3249 = vpack.c.b16 %v3237, %v3236
        %v3250 = vpack.c.b16 %v3239, %v3238
        %v3251 = vpack.c.b16 %v3241, %v3240
        %v3252 = vpack.c.b16 %v3243, %v3242
        %v3253 = vpack.c.b16 %v3245, %v3244
        %3262 = vmatpush.bf16.msra.mxu0 %v3253
        %3263 = vmatpush.bf16.msra.mxu0 %v3252
        %3264 = vmatpush.bf16.msra.mxu0 %v3251
        %3265 = vmatpush.bf16.msra.mxu0 %v3250
        %3266 = vmatpush.bf16.msra.mxu0 %v3249
        %3267 = vmatpush.bf16.msra.mxu0 %v3248
        %3268 = vmatpush.bf16.msra.mxu0 %v3247
        %3269 = vmatpush.bf16.msra.mxu0 %v3246
        %3270 = vmatmul.bf16.gmra.mxu0 %v3021
        %v3271 = vpop.f32.mrf.mxu0
        %v3272 = vadd.f32 0.0, %v3271
        %v3273 = vpop.f32.mrf.mxu0
        %v3274 = vadd.f32 0.0, %v3273
        %3275 = vmatmul.bf16.gmra.mxu0 %v3030
        %v3276 = vpop.f32.mrf.mxu0
        %v3277 = vadd.f32 0.0, %v3276
        %v3278 = vpop.f32.mrf.mxu0
        %v3279 = vadd.f32 0.0, %v3278
        %3280 = vmatmul.bf16.gmra.mxu0 %v3039
        %v3281 = vpop.f32.mrf.mxu0
        %v3282 = vadd.f32 0.0, %v3281
        %v3283 = vpop.f32.mrf.mxu0
        %v3284 = vadd.f32 0.0, %v3283
        %3285 = vmatmul.bf16.gmra.mxu0 %v3048
        %v3286 = vpop.f32.mrf.mxu0
        %v3287 = vadd.f32 0.0, %v3286
        %v3288 = vpop.f32.mrf.mxu0
        %v3289 = vadd.f32 0.0, %v3288
        %3290 = vmatmul.bf16.gmra.mxu0 %v3057
        %v3291 = vpop.f32.mrf.mxu0
        %v3292 = vadd.f32 0.0, %v3291
        %v3293 = vpop.f32.mrf.mxu0
        %v3294 = vadd.f32 0.0, %v3293
        %3295 = vmatmul.bf16.gmra.mxu0 %v3066
        %v3296 = vpop.f32.mrf.mxu0
        %v3297 = vadd.f32 0.0, %v3296
        %v3298 = vpop.f32.mrf.mxu0
        %v3299 = vadd.f32 0.0, %v3298
        %3300 = vmatmul.bf16.gmra.mxu0 %v3075
        %v3301 = vpop.f32.mrf.mxu0
        %v3302 = vadd.f32 0.0, %v3301
        %v3303 = vpop.f32.mrf.mxu0
        %v3304 = vadd.f32 0.0, %v3303
        %3305 = vmatmul.bf16.gmra.mxu0 %v3084
        %v3306 = vpop.f32.mrf.mxu0
        %v3307 = vadd.f32 0.0, %v3306
        %v3308 = vpop.f32.mrf.mxu0
        %v3309 = vadd.f32 0.0, %v3308
        %3310 = vmatmul.bf16.gmra.mxu0 %v3093
        %v3311 = vpop.f32.mrf.mxu0
        %v3312 = vadd.f32 0.0, %v3311
        %v3313 = vpop.f32.mrf.mxu0
        %v3314 = vadd.f32 0.0, %v3313
        %3315 = vmatmul.bf16.gmra.mxu0 %v3102
        %v3316 = vpop.f32.mrf.mxu0
        %v3317 = vadd.f32 0.0, %v3316
        %v3318 = vpop.f32.mrf.mxu0
        %v3319 = vadd.f32 0.0, %v3318
        %3320 = vmatmul.bf16.gmra.mxu0 %v3111
        %v3321 = vpop.f32.mrf.mxu0
        %v3322 = vadd.f32 0.0, %v3321
        %v3323 = vpop.f32.mrf.mxu0
        %v3324 = vadd.f32 0.0, %v3323
        %3325 = vmatmul.bf16.gmra.mxu0 %v3120
        %v3326 = vpop.f32.mrf.mxu0
        %v3327 = vadd.f32 0.0, %v3326
        %v3328 = vpop.f32.mrf.mxu0
        %v3329 = vadd.f32 0.0, %v3328
        %3330 = vmatmul.bf16.gmra.mxu0 %v3129
        %v3331 = vpop.f32.mrf.mxu0
        %v3332 = vadd.f32 0.0, %v3331
        %v3333 = vpop.f32.mrf.mxu0
        %v3334 = vadd.f32 0.0, %v3333
        %3335 = vmatmul.bf16.gmra.mxu0 %v3138
        %v3336 = vpop.f32.mrf.mxu0
        %v3337 = vadd.f32 0.0, %v3336
        %v3338 = vpop.f32.mrf.mxu0
        %v3339 = vadd.f32 0.0, %v3338
        %3340 = vmatmul.bf16.gmra.mxu0 %v3147
        %v3341 = vpop.f32.mrf.mxu0
        %v3342 = vadd.f32 0.0, %v3341
        %v3343 = vpop.f32.mrf.mxu0
        %v3344 = vadd.f32 0.0, %v3343
        %3345 = vmatmul.bf16.gmra.mxu0 %v3156
        %v3346 = vpop.f32.mrf.mxu0
        %v3347 = vadd.f32 0.0, %v3346
        %v3348 = vpop.f32.mrf.mxu0
        %v3349 = vadd.f32 0.0, %v3348
        %3350 = vmatmul.bf16.gmra.mxu0 %v3165
        %v3351 = vpop.f32.mrf.mxu0
        %v3352 = vadd.f32 0.0, %v3351
        %v3353 = vpop.f32.mrf.mxu0
        %v3354 = vadd.f32 0.0, %v3353
        %3355 = vmatmul.bf16.gmra.mxu0 %v3174
        %v3356 = vpop.f32.mrf.mxu0
        %v3357 = vadd.f32 0.0, %v3356
        %v3358 = vpop.f32.mrf.mxu0
        %v3359 = vadd.f32 0.0, %v3358
        %3360 = vmatmul.bf16.gmra.mxu0 %v3183
        %v3361 = vpop.f32.mrf.mxu0
        %v3362 = vadd.f32 0.0, %v3361
        %v3363 = vpop.f32.mrf.mxu0
        %v3364 = vadd.f32 0.0, %v3363
        %3365 = vmatmul.bf16.gmra.mxu0 %v3192
        %v3366 = vpop.f32.mrf.mxu0
        %v3367 = vadd.f32 0.0, %v3366
        %v3368 = vpop.f32.mrf.mxu0
        %v3369 = vadd.f32 0.0, %v3368
        %3370 = vmatmul.bf16.gmra.mxu0 %v3191
        %v3371 = vpop.f32.mrf.mxu0
        %v3372 = vadd.f32 0.0, %v3371
        %v3373 = vpop.f32.mrf.mxu0
        %3374 = vdwg.mxu0
        %v3375 = vadd.f32 %v2799, %v3272
        %v3376 = vadd.f32 %v2800, %v3274
        %v3377 = vadd.f32 %v2801, %v3277
        %v3378 = vadd.f32 %v2802, %v3279
        %v3379 = vadd.f32 %v2803, %v3282
        %v3380 = vadd.f32 %v2804, %v3284
        %v3381 = vadd.f32 %v2805, %v3287
        %v3382 = vadd.f32 %v2806, %v3289
        %v3383 = vadd.f32 %v2807, %v3292
        %v3384 = vadd.f32 %v2808, %v3294
        %v3385 = vadd.f32 %v2809, %v3297
        %v3386 = vadd.f32 %v2810, %v3299
        %v3387 = vadd.f32 %v2811, %v3302
        %v3388 = vadd.f32 %v2812, %v3304
        %v3389 = vadd.f32 %v2813, %v3307
        %v3390 = vadd.f32 %v2814, %v3309
        %v3391 = vadd.f32 %v2815, %v3312
        %v3392 = vadd.f32 %v2816, %v3314
        %v3393 = vadd.f32 %v2817, %v3317
        %v3394 = vadd.f32 %v2818, %v3319
        %v3395 = vadd.f32 %v2819, %v3322
        %v3396 = vadd.f32 %v2820, %v3324
        %v3397 = vadd.f32 %v2821, %v3327
        %v3398 = vadd.f32 %v2822, %v3329
        %v3399 = vadd.f32 %v2823, %v3332
        %v3400 = vadd.f32 %v2824, %v3334
        %v3401 = vadd.f32 %v2825, %v3337
        %v3402 = vadd.f32 %v2826, %v3339
        %v3403 = vadd.f32 %v2827, %v3342
        %v3404 = vadd.f32 %v2828, %v3344
        %v3405 = vadd.f32 %v2829, %v3347
        %v3406 = vadd.f32 %v2830, %v3349
        %v3407 = vadd.f32 %v2831, %v3352
        %v3408 = vadd.f32 %v2832, %v3354
        %v3409 = vadd.f32 %v2833, %v3357
        %v3410 = vadd.f32 %v2834, %v3359
        %v3411 = vadd.f32 %v2835, %v3362
        %v3412 = vadd.f32 %v2836, %v3364
        %v3413 = vadd.f32 %v2837, %v3367
        %v3414 = vadd.f32 %v2838, %v3369
        %v3415 = vadd.f32 %v2839, %v3372
        %v3416 = vld [vmem:[%s267 + $0x10] sm:$0x8]
        %s3417 = scalar_lea.vmem %s1, 512
        %v3418 = vld [vmem:[%s3417] sm:$0xf]
        %v3419 = vld [vmem:[%s3417 + $0x4] sm:$0xf]
        %v3420 = vld [vmem:[%s3417 + $0x8] sm:$0xf]
        %v3421 = vld [vmem:[%s3417 + $0xc] sm:$0xf]
        %v3422 = vld [vmem:[%s3417 + $0x10] sm:$0xf]
        %v3423 = vld [vmem:[%s3417 + $0x14] sm:$0xf]
        %v3424 = vld [vmem:[%s3417 + $0x18] sm:$0xf]
        %v3425 = vld [vmem:[%s3417 + $0x1c] sm:$0xf]
        %v3426 = vld [vmem:[%s3417 + $0x20] sm:$0xf]
        %v3427 = vld [vmem:[%s3417 + $0x24] sm:$0xf]
        %v3428 = vld [vmem:[%s3417 + $0x28] sm:$0xf]
        %v3429 = vld [vmem:[%s3417 + $0x2c] sm:$0xf]
        %v3430 = vld [vmem:[%s3417 + $0x30] sm:$0xf]
        %v3431 = vld [vmem:[%s3417 + $0x34] sm:$0xf]
        %v3432 = vld [vmem:[%s3417 + $0x38] sm:$0xf]
        %v3433 = vld [vmem:[%s3417 + $0x3c] sm:$0xf]
        %v3435 = vunpack.c.l.b16 %v3416
        %v3436 = vpack.c.b16 %v2942, %v3435
        %vm3437 = vcmask 1044480
        %v3438 = vrot.slane %v3436, 3
        %v3439 = vrot.slane %v2984, 3
        %v3440 = vsel %vm3437, %v3438, %v3439
        %v3441 = vrot.slane %v2985, 3
        %v3442 = vsel %vm3437, %v3439, %v3441
        %v3443 = vrot.slane %v2986, 3
        %v3444 = vsel %vm3437, %v3441, %v3443
        %v3445 = vrot.slane %v2987, 3
        %v3446 = vsel %vm3437, %v3443, %v3445
        %v3447 = vrot.slane %v2988, 3
        %v3448 = vsel %vm3437, %v3445, %v3447
        %v3449 = vrot.slane %v2989, 3
        %v3450 = vsel %vm3437, %v3447, %v3449
        %v3451 = vrot.slane %v2990, 3
        %v3452 = vsel %vm3437, %v3449, %v3451
        %v3453 = vrot.slane %v2991, 3
        %v3454 = vsel %vm3437, %v3451, %v3453
        %v3455 = vrot.slane %v2992, 3
        %v3456 = vsel %vm3437, %v3453, %v3455
        %v3457 = vrot.slane %v2993, 3
        %v3458 = vsel %vm3437, %v3455, %v3457
        %v3459 = vrot.slane %v2994, 3
        %v3460 = vsel %vm3437, %v3457, %v3459
        %v3461 = vrot.slane %v2995, 3
        %v3462 = vsel %vm3437, %v3459, %v3461
        %v3463 = vrot.slane %v2996, 3
        %v3464 = vsel %vm3437, %v3461, %v3463
        %v3465 = vrot.slane %v2997, 3
        %v3466 = vsel %vm3437, %v3463, %v3465
        %v3467 = vrot.slane %v2998, 3
        %v3468 = vsel %vm3437, %v3465, %v3467
        %v3469 = vrot.slane %v2999, 3
        %v3470 = vsel %vm3437, %v3467, %v3469
        %v3471 = vrot.slane %v3000, 3
        %v3472 = vsel %vm3437, %v3469, %v3471
        %v3473 = vrot.slane %v3001, 3
        %v3474 = vsel %vm3437, %v3471, %v3473
        %v3475 = vrot.slane %v3002, 3
        %v3476 = vsel %vm3437, %v3473, %v3475
        %v3477 = vrot.slane %v3003, 3
        %v3478 = vsel %vm3437, %v3475, %v3477
        %v3516 = vunpack.c.l.b16 %v3418
        %v3517 = vunpack.c.l.b16 %v3419
        %v3518 = vunpack.c.l.b16 %v3420
        %v3519 = vunpack.c.l.b16 %v3421
        %v3520 = vunpack.c.l.b16 %v3422
        %v3521 = vunpack.c.l.b16 %v3423
        %v3522 = vunpack.c.l.b16 %v3424
        %v3523 = vunpack.c.l.b16 %v3425
        %v3524 = vunpack.c.l.b16 %v3426
        %v3525 = vunpack.c.l.b16 %v3427
        %v3526 = vunpack.c.l.b16 %v3428
        %v3527 = vunpack.c.l.b16 %v3429
        %v3528 = vunpack.c.l.b16 %v3430
        %v3529 = vunpack.c.l.b16 %v3431
        %v3530 = vunpack.c.l.b16 %v3432
        %v3531 = vunpack.c.l.b16 %v3433
        %v3532 = vpack.c.b16 %v3517, %v3516
        %v3533 = vpack.c.b16 %v3519, %v3518
        %v3534 = vpack.c.b16 %v3521, %v3520
        %v3535 = vpack.c.b16 %v3523, %v3522
        %v3536 = vpack.c.b16 %v3525, %v3524
        %v3537 = vpack.c.b16 %v3527, %v3526
        %v3538 = vpack.c.b16 %v3529, %v3528
        %v3539 = vpack.c.b16 %v3531, %v3530
        %3548 = vmatpush.bf16.msra.mxu0 %v3539
        %3549 = vmatpush.bf16.msra.mxu0 %v3538
        %3550 = vmatpush.bf16.msra.mxu0 %v3537
        %3551 = vmatpush.bf16.msra.mxu0 %v3536
        %3552 = vmatpush.bf16.msra.mxu0 %v3535
        %3553 = vmatpush.bf16.msra.mxu0 %v3534
        %3554 = vmatpush.bf16.msra.mxu0 %v3533
        %3555 = vmatpush.bf16.msra.mxu0 %v3532
        %3556 = vmatmul.bf16.gmra.mxu0 %v3440
        %v3557 = vpop.f32.mrf.mxu0
        %v3558 = vadd.f32 0.0, %v3557
        %v3559 = vpop.f32.mrf.mxu0
        %v3560 = vadd.f32 0.0, %v3559
        %3561 = vmatmul.bf16.gmra.mxu0 %v3442
        %v3562 = vpop.f32.mrf.mxu0
        %v3563 = vadd.f32 0.0, %v3562
        %v3564 = vpop.f32.mrf.mxu0
        %v3565 = vadd.f32 0.0, %v3564
        %3566 = vmatmul.bf16.gmra.mxu0 %v3444
        %v3567 = vpop.f32.mrf.mxu0
        %v3568 = vadd.f32 0.0, %v3567
        %v3569 = vpop.f32.mrf.mxu0
        %v3570 = vadd.f32 0.0, %v3569
        %3571 = vmatmul.bf16.gmra.mxu0 %v3446
        %v3572 = vpop.f32.mrf.mxu0
        %v3573 = vadd.f32 0.0, %v3572
        %v3574 = vpop.f32.mrf.mxu0
        %v3575 = vadd.f32 0.0, %v3574
        %3576 = vmatmul.bf16.gmra.mxu0 %v3448
        %v3577 = vpop.f32.mrf.mxu0
        %v3578 = vadd.f32 0.0, %v3577
        %v3579 = vpop.f32.mrf.mxu0
        %v3580 = vadd.f32 0.0, %v3579
        %3581 = vmatmul.bf16.gmra.mxu0 %v3450
        %v3582 = vpop.f32.mrf.mxu0
        %v3583 = vadd.f32 0.0, %v3582
        %v3584 = vpop.f32.mrf.mxu0
        %v3585 = vadd.f32 0.0, %v3584
        %3586 = vmatmul.bf16.gmra.mxu0 %v3452
        %v3587 = vpop.f32.mrf.mxu0
        %v3588 = vadd.f32 0.0, %v3587
        %v3589 = vpop.f32.mrf.mxu0
        %v3590 = vadd.f32 0.0, %v3589
        %3591 = vmatmul.bf16.gmra.mxu0 %v3454
        %v3592 = vpop.f32.mrf.mxu0
        %v3593 = vadd.f32 0.0, %v3592
        %v3594 = vpop.f32.mrf.mxu0
        %v3595 = vadd.f32 0.0, %v3594
        %3596 = vmatmul.bf16.gmra.mxu0 %v3456
        %v3597 = vpop.f32.mrf.mxu0
        %v3598 = vadd.f32 0.0, %v3597
        %v3599 = vpop.f32.mrf.mxu0
        %v3600 = vadd.f32 0.0, %v3599
        %3601 = vmatmul.bf16.gmra.mxu0 %v3458
        %v3602 = vpop.f32.mrf.mxu0
        %v3603 = vadd.f32 0.0, %v3602
        %v3604 = vpop.f32.mrf.mxu0
        %v3605 = vadd.f32 0.0, %v3604
        %3606 = vmatmul.bf16.gmra.mxu0 %v3460
        %v3607 = vpop.f32.mrf.mxu0
        %v3608 = vadd.f32 0.0, %v3607
        %v3609 = vpop.f32.mrf.mxu0
        %v3610 = vadd.f32 0.0, %v3609
        %3611 = vmatmul.bf16.gmra.mxu0 %v3462
        %v3612 = vpop.f32.mrf.mxu0
        %v3613 = vadd.f32 0.0, %v3612
        %v3614 = vpop.f32.mrf.mxu0
        %v3615 = vadd.f32 0.0, %v3614
        %3616 = vmatmul.bf16.gmra.mxu0 %v3464
        %v3617 = vpop.f32.mrf.mxu0
        %v3618 = vadd.f32 0.0, %v3617
        %v3619 = vpop.f32.mrf.mxu0
        %v3620 = vadd.f32 0.0, %v3619
        %3621 = vmatmul.bf16.gmra.mxu0 %v3466
        %v3622 = vpop.f32.mrf.mxu0
        %v3623 = vadd.f32 0.0, %v3622
        %v3624 = vpop.f32.mrf.mxu0
        %v3625 = vadd.f32 0.0, %v3624
        %3626 = vmatmul.bf16.gmra.mxu0 %v3468
        %v3627 = vpop.f32.mrf.mxu0
        %v3628 = vadd.f32 0.0, %v3627
        %v3629 = vpop.f32.mrf.mxu0
        %v3630 = vadd.f32 0.0, %v3629
        %3631 = vmatmul.bf16.gmra.mxu0 %v3470
        %v3632 = vpop.f32.mrf.mxu0
        %v3633 = vadd.f32 0.0, %v3632
        %v3634 = vpop.f32.mrf.mxu0
        %v3635 = vadd.f32 0.0, %v3634
        %3636 = vmatmul.bf16.gmra.mxu0 %v3472
        %v3637 = vpop.f32.mrf.mxu0
        %v3638 = vadd.f32 0.0, %v3637
        %v3639 = vpop.f32.mrf.mxu0
        %v3640 = vadd.f32 0.0, %v3639
        %3641 = vmatmul.bf16.gmra.mxu0 %v3474
        %v3642 = vpop.f32.mrf.mxu0
        %v3643 = vadd.f32 0.0, %v3642
        %v3644 = vpop.f32.mrf.mxu0
        %v3645 = vadd.f32 0.0, %v3644
        %3646 = vmatmul.bf16.gmra.mxu0 %v3476
        %v3647 = vpop.f32.mrf.mxu0
        %v3648 = vadd.f32 0.0, %v3647
        %v3649 = vpop.f32.mrf.mxu0
        %v3650 = vadd.f32 0.0, %v3649
        %3651 = vmatmul.bf16.gmra.mxu0 %v3478
        %v3652 = vpop.f32.mrf.mxu0
        %v3653 = vadd.f32 0.0, %v3652
        %v3654 = vpop.f32.mrf.mxu0
        %v3655 = vadd.f32 0.0, %v3654
        %3656 = vmatmul.bf16.gmra.mxu0 %v3477
        %v3657 = vpop.f32.mrf.mxu0
        %v3658 = vadd.f32 0.0, %v3657
        %v3659 = vpop.f32.mrf.mxu0
        %3660 = vdwg.mxu0
        %v3661 = vadd.f32 %v3375, %v3558
        %v3662 = vadd.f32 %v3376, %v3560
        %v3663 = vadd.f32 %v3377, %v3563
        %v3664 = vadd.f32 %v3378, %v3565
        %v3665 = vadd.f32 %v3379, %v3568
        %v3666 = vadd.f32 %v3380, %v3570
        %v3667 = vadd.f32 %v3381, %v3573
        %v3668 = vadd.f32 %v3382, %v3575
        %v3669 = vadd.f32 %v3383, %v3578
        %v3670 = vadd.f32 %v3384, %v3580
        %v3671 = vadd.f32 %v3385, %v3583
        %v3672 = vadd.f32 %v3386, %v3585
        %v3673 = vadd.f32 %v3387, %v3588
        %v3674 = vadd.f32 %v3388, %v3590
        %v3675 = vadd.f32 %v3389, %v3593
        %v3676 = vadd.f32 %v3390, %v3595
        %v3677 = vadd.f32 %v3391, %v3598
        %v3678 = vadd.f32 %v3392, %v3600
        %v3679 = vadd.f32 %v3393, %v3603
        %v3680 = vadd.f32 %v3394, %v3605
        %v3681 = vadd.f32 %v3395, %v3608
        %v3682 = vadd.f32 %v3396, %v3610
        %v3683 = vadd.f32 %v3397, %v3613
        %v3684 = vadd.f32 %v3398, %v3615
        %v3685 = vadd.f32 %v3399, %v3618
        %v3686 = vadd.f32 %v3400, %v3620
        %v3687 = vadd.f32 %v3401, %v3623
        %v3688 = vadd.f32 %v3402, %v3625
        %v3689 = vadd.f32 %v3403, %v3628
        %v3690 = vadd.f32 %v3404, %v3630
        %v3691 = vadd.f32 %v3405, %v3633
        %v3692 = vadd.f32 %v3406, %v3635
        %v3693 = vadd.f32 %v3407, %v3638
        %v3694 = vadd.f32 %v3408, %v3640
        %v3695 = vadd.f32 %v3409, %v3643
        %v3696 = vadd.f32 %v3410, %v3645
        %v3697 = vadd.f32 %v3411, %v3648
        %v3698 = vadd.f32 %v3412, %v3650
        %v3699 = vadd.f32 %v3413, %v3653
        %v3700 = vadd.f32 %v3414, %v3655
        %v3701 = vadd.f32 %v3415, %v3658
        %v3702 = vld [vmem:[%s2] sm:$0x1]
        %v3704 = vperm.slane %v3702, 0
        %v3706 = vadd.f32 %v3661, %v3704
        %v3707 = vadd.f32 %v3662, %v3704
        %v3708 = vadd.f32 %v3663, %v3704
        %v3709 = vadd.f32 %v3664, %v3704
        %v3710 = vadd.f32 %v3665, %v3704
        %v3711 = vadd.f32 %v3666, %v3704
        %v3712 = vadd.f32 %v3667, %v3704
        %v3713 = vadd.f32 %v3668, %v3704
        %v3714 = vadd.f32 %v3669, %v3704
        %v3715 = vadd.f32 %v3670, %v3704
        %v3716 = vadd.f32 %v3671, %v3704
        %v3717 = vadd.f32 %v3672, %v3704
        %v3718 = vadd.f32 %v3673, %v3704
        %v3719 = vadd.f32 %v3674, %v3704
        %v3720 = vadd.f32 %v3675, %v3704
        %v3721 = vadd.f32 %v3676, %v3704
        %v3722 = vadd.f32 %v3677, %v3704
        %v3723 = vadd.f32 %v3678, %v3704
        %v3724 = vadd.f32 %v3679, %v3704
        %v3725 = vadd.f32 %v3680, %v3704
        %v3726 = vadd.f32 %v3681, %v3704
        %v3727 = vadd.f32 %v3682, %v3704
        %v3728 = vadd.f32 %v3683, %v3704
        %v3729 = vadd.f32 %v3684, %v3704
        %v3730 = vadd.f32 %v3685, %v3704
        %v3731 = vadd.f32 %v3686, %v3704
        %v3732 = vadd.f32 %v3687, %v3704
        %v3733 = vadd.f32 %v3688, %v3704
        %v3734 = vadd.f32 %v3689, %v3704
        %v3735 = vadd.f32 %v3690, %v3704
        %v3736 = vadd.f32 %v3691, %v3704
        %v3737 = vadd.f32 %v3692, %v3704
        %v3738 = vadd.f32 %v3693, %v3704
        %v3739 = vadd.f32 %v3694, %v3704
        %v3740 = vadd.f32 %v3695, %v3704
        %v3741 = vadd.f32 %v3696, %v3704
        %v3742 = vadd.f32 %v3697, %v3704
        %v3743 = vadd.f32 %v3698, %v3704
        %v3744 = vadd.f32 %v3699, %v3704
        %v3745 = vadd.f32 %v3700, %v3704
        %v3746 = vadd.f32 %v3701, %v3704
        %v3747 = vmax.f32 %v3706, 0.0
        %v3748 = vmax.f32 %v3707, 0.0
        %v3749 = vmax.f32 %v3708, 0.0
        %v3750 = vmax.f32 %v3709, 0.0
        %v3751 = vmax.f32 %v3710, 0.0
        %v3752 = vmax.f32 %v3711, 0.0
        %v3753 = vmax.f32 %v3712, 0.0
        %v3754 = vmax.f32 %v3713, 0.0
        %v3755 = vmax.f32 %v3714, 0.0
        %v3756 = vmax.f32 %v3715, 0.0
        %v3757 = vmax.f32 %v3716, 0.0
        %v3758 = vmax.f32 %v3717, 0.0
        %v3759 = vmax.f32 %v3718, 0.0
        %v3760 = vmax.f32 %v3719, 0.0
        %v3761 = vmax.f32 %v3720, 0.0
        %v3762 = vmax.f32 %v3721, 0.0
        %v3763 = vmax.f32 %v3722, 0.0
        %v3764 = vmax.f32 %v3723, 0.0
        %v3765 = vmax.f32 %v3724, 0.0
        %v3766 = vmax.f32 %v3725, 0.0
        %v3767 = vmax.f32 %v3726, 0.0
        %v3768 = vmax.f32 %v3727, 0.0
        %v3769 = vmax.f32 %v3728, 0.0
        %v3770 = vmax.f32 %v3729, 0.0
        %v3771 = vmax.f32 %v3730, 0.0
        %v3772 = vmax.f32 %v3731, 0.0
        %v3773 = vmax.f32 %v3732, 0.0
        %v3774 = vmax.f32 %v3733, 0.0
        %v3775 = vmax.f32 %v3734, 0.0
        %v3776 = vmax.f32 %v3735, 0.0
        %v3777 = vmax.f32 %v3736, 0.0
        %v3778 = vmax.f32 %v3737, 0.0
        %v3779 = vmax.f32 %v3738, 0.0
        %v3780 = vmax.f32 %v3739, 0.0
        %v3781 = vmax.f32 %v3740, 0.0
        %v3782 = vmax.f32 %v3741, 0.0
        %v3783 = vmax.f32 %v3742, 0.0
        %v3784 = vmax.f32 %v3743, 0.0
        %v3785 = vmax.f32 %v3744, 0.0
        %v3786 = vmax.f32 %v3745, 0.0
        %v3787 = vmax.f32 %v3746, 0.0
        %v3788 = vpack.c.bf16 %v3747, %v3747
        %v3789 = vpack.c.bf16 %v3748, %v3748
        %v3790 = vpack.c.bf16 %v3749, %v3749
        %v3791 = vpack.c.bf16 %v3750, %v3750
        %v3792 = vpack.c.bf16 %v3751, %v3751
        %v3793 = vpack.c.bf16 %v3752, %v3752
        %v3794 = vpack.c.bf16 %v3753, %v3753
        %v3795 = vpack.c.bf16 %v3754, %v3754
        %v3796 = vpack.c.bf16 %v3755, %v3755
        %v3797 = vpack.c.bf16 %v3756, %v3756
        %v3798 = vpack.c.bf16 %v3757, %v3757
        %v3799 = vpack.c.bf16 %v3758, %v3758
        %v3800 = vpack.c.bf16 %v3759, %v3759
        %v3801 = vpack.c.bf16 %v3760, %v3760
        %v3802 = vpack.c.bf16 %v3761, %v3761
        %v3803 = vpack.c.bf16 %v3762, %v3762
        %v3804 = vpack.c.bf16 %v3763, %v3763
        %v3805 = vpack.c.bf16 %v3764, %v3764
        %v3806 = vpack.c.bf16 %v3765, %v3765
        %v3807 = vpack.c.bf16 %v3766, %v3766
        %v3808 = vpack.c.bf16 %v3767, %v3767
        %v3809 = vpack.c.bf16 %v3768, %v3768
        %v3810 = vpack.c.bf16 %v3769, %v3769
        %v3811 = vpack.c.bf16 %v3770, %v3770
        %v3812 = vpack.c.bf16 %v3771, %v3771
        %v3813 = vpack.c.bf16 %v3772, %v3772
        %v3814 = vpack.c.bf16 %v3773, %v3773
        %v3815 = vpack.c.bf16 %v3774, %v3774
        %v3816 = vpack.c.bf16 %v3775, %v3775
        %v3817 = vpack.c.bf16 %v3776, %v3776
        %v3818 = vpack.c.bf16 %v3777, %v3777
        %v3819 = vpack.c.bf16 %v3778, %v3778
        %v3820 = vpack.c.bf16 %v3779, %v3779
        %v3821 = vpack.c.bf16 %v3780, %v3780
        %v3822 = vpack.c.bf16 %v3781, %v3781
        %v3823 = vpack.c.bf16 %v3782, %v3782
        %v3824 = vpack.c.bf16 %v3783, %v3783
        %v3825 = vpack.c.bf16 %v3784, %v3784
        %v3826 = vpack.c.bf16 %v3785, %v3785
        %v3827 = vpack.c.bf16 %v3786, %v3786
        %v3828 = vpack.c.bf16 %v3787, %v3787
        %3829 = vst [vmem:[#allocation2 + $0x4] sm:$0xf] %v3788
        %3830 = vst [vmem:[#allocation2 + $0x8] sm:$0xf] %v3789
        %3831 = vst [vmem:[#allocation2 + $0xc] sm:$0xf] %v3790
        %3832 = vst [vmem:[#allocation2 + $0x10] sm:$0xf] %v3791
        %3833 = vst [vmem:[#allocation2 + $0x14] sm:$0xf] %v3792
        %3834 = vst [vmem:[#allocation2 + $0x18] sm:$0xf] %v3793
        %3835 = vst [vmem:[#allocation2 + $0x1c] sm:$0xf] %v3794
        %3836 = vst [vmem:[#allocation2 + $0x20] sm:$0xf] %v3795
        %3837 = vst [vmem:[#allocation2 + $0x24] sm:$0xf] %v3796
        %3838 = vst [vmem:[#allocation2 + $0x28] sm:$0xf] %v3797
        %3839 = vst [vmem:[#allocation2 + $0x2c] sm:$0xf] %v3798
        %3840 = vst [vmem:[#allocation2 + $0x30] sm:$0xf] %v3799
        %3841 = vst [vmem:[#allocation2 + $0x34] sm:$0xf] %v3800
        %3842 = vst [vmem:[#allocation2 + $0x38] sm:$0xf] %v3801
        %3843 = vst [vmem:[#allocation2 + $0x3c] sm:$0xf] %v3802
        %3844 = vst [vmem:[#allocation2 + $0x40] sm:$0xf] %v3803
        %3845 = vst [vmem:[#allocation2 + $0x44] sm:$0xf] %v3804
        %3846 = vst [vmem:[#allocation2 + $0x48] sm:$0xf] %v3805
        %3847 = vst [vmem:[#allocation2 + $0x4c] sm:$0xf] %v3806
        %3848 = vst [vmem:[#allocation2 + $0x50] sm:$0xf] %v3807
        %3849 = vst [vmem:[#allocation2 + $0x54] sm:$0xf] %v3808
        %3850 = vst [vmem:[#allocation2 + $0x58] sm:$0xf] %v3809
        %3851 = vst [vmem:[#allocation2 + $0x5c] sm:$0xf] %v3810
        %3852 = vst [vmem:[#allocation2 + $0x60] sm:$0xf] %v3811
        %3853 = vst [vmem:[#allocation2 + $0x64] sm:$0xf] %v3812
        %3854 = vst [vmem:[#allocation2 + $0x68] sm:$0xf] %v3813
        %3855 = vst [vmem:[#allocation2 + $0x6c] sm:$0xf] %v3814
        %3856 = vst [vmem:[#allocation2 + $0x70] sm:$0xf] %v3815
        %3857 = vst [vmem:[#allocation2 + $0x74] sm:$0xf] %v3816
        %3858 = vst [vmem:[#allocation2 + $0x78] sm:$0xf] %v3817
        %3859 = vst [vmem:[#allocation2 + $0x7c] sm:$0xf] %v3818
        %3860 = vst [vmem:[#allocation2 + $0x80] sm:$0xf] %v3819
        %3861 = vst [vmem:[#allocation2 + $0x84] sm:$0xf] %v3820
        %3862 = vst [vmem:[#allocation2 + $0x88] sm:$0xf] %v3821
        %3863 = vst [vmem:[#allocation2 + $0x8c] sm:$0xf] %v3822
        %3864 = vst [vmem:[#allocation2 + $0x90] sm:$0xf] %v3823
        %3865 = vst [vmem:[#allocation2 + $0x94] sm:$0xf] %v3824
        %3866 = vst [vmem:[#allocation2 + $0x98] sm:$0xf] %v3825
        %3867 = vst [vmem:[#allocation2 + $0x9c] sm:$0xf] %v3826
        %3868 = vst [vmem:[#allocation2 + $0xa0] sm:$0xf] %v3827
        %3869 = vst [vmem:[#allocation2 + $0xa4] sm:$0x3] %v3828
        %3870 = vst [vmem:[#allocation2 + $0xc] sm:$0x1] 0
        %3871 = vst [vmem:[#allocation2 + $0x14] sm:$0x2] 0
        %3872 = vst [vmem:[#allocation2 + $0x1c] sm:$0x4] 0
        %3873 = vst [vmem:[#allocation2 + $0x24] sm:$0x8] 0
        %3874 = vst [vmem:[#allocation2 + $0x30] sm:$0x1] 0
        %3875 = vst [vmem:[#allocation2 + $0x38] sm:$0x2] 0
        %3876 = vst [vmem:[#allocation2 + $0x40] sm:$0x4] 0
        %3877 = vst [vmem:[#allocation2 + $0x48] sm:$0x8] 0
        %3878 = vst [vmem:[#allocation2 + $0x54] sm:$0x1] 0
        %3879 = vst [vmem:[#allocation2 + $0x5c] sm:$0x2] 0
        %3880 = vst [vmem:[#allocation2 + $0x64] sm:$0x4] 0
        %3881 = vst [vmem:[#allocation2 + $0x6c] sm:$0x8] 0
        %3882 = vst [vmem:[#allocation2 + $0x78] sm:$0x1] 0
        %3883 = vst [vmem:[#allocation2 + $0x80] sm:$0x2] 0
        %3884 = vst [vmem:[#allocation2 + $0x88] sm:$0x4] 0
        %3885 = vst [vmem:[#allocation2 + $0x90] sm:$0x8] 0
        %3886 = vst [vmem:[#allocation2 + $0x9c] sm:$0x1] 0
        %3887 = vst [vmem:[#allocation2 + $0xa4] sm:$0x2] 0
        %p3888 = scmp.eq.s32.totalorder %s25, 0
        // Predicated region
        $region45: #{tpu_custom_call.1} parent=39 // pred_check
          %p3889 = pneg %p3888
        $region46: #{tpu_custom_call.1} parent=39 // pred_check_branch
          %3891 = sbr.rel (%p3889) target = $region48
        $region47: #{tpu_custom_call.1} parent=39 // pred_region
          %3892 = vst [vmem:[#allocation2 + $0x4] sm:$0xf] 0
          %3893 = vst [vmem:[#allocation2 + $0x8] sm:$0xf] 0
          %3894 = vst [vmem:[#allocation2 + $0xc] sm:$0x1] 0
          %3895 = vst [vmem:[#allocation2 + $0x9c] sm:$0xe] 0
          %3896 = vst [vmem:[#allocation2 + $0xa0] sm:$0xf] 0
          %3897 = vst [vmem:[#allocation2 + $0xa4] sm:$0x3] 0
        $region48: #{tpu_custom_call.1} parent=39 // pred_fallthru
          _
        %v3898 = vld [vmem:[#allocation2] sm:$0x8]
        %v3899 = vld [vmem:[#allocation2 + $0x4] sm:$0xf]
        %v3900 = vld [vmem:[#allocation2 + $0x8] sm:$0xf]
        %v3901 = vld [vmem:[#allocation2 + $0xc] sm:$0xf]
        %v3902 = vld [vmem:[#allocation2 + $0x10] sm:$0xf]
        %v3903 = vld [vmem:[#allocation2 + $0x14] sm:$0xf]
        %v3904 = vld [vmem:[#allocation2 + $0x18] sm:$0xf]
        %v3905 = vld [vmem:[#allocation2 + $0x1c] sm:$0xf]
        %v3906 = vld [vmem:[#allocation2 + $0x20] sm:$0xf]
        %v3907 = vld [vmem:[#allocation2 + $0x24] sm:$0xf]
        %v3908 = vld [vmem:[#allocation2 + $0x28] sm:$0xf]
        %v3909 = vld [vmem:[#allocation2 + $0x2c] sm:$0xf]
        %v3910 = vld [vmem:[#allocation2 + $0x30] sm:$0xf]
        %v3911 = vld [vmem:[#allocation2 + $0x34] sm:$0xf]
        %v3912 = vld [vmem:[#allocation2 + $0x38] sm:$0xf]
        %v3913 = vld [vmem:[#allocation2 + $0x3c] sm:$0xf]
        %v3914 = vld [vmem:[#allocation2 + $0x40] sm:$0xf]
        %v3915 = vld [vmem:[#allocation2 + $0x44] sm:$0xf]
        %v3916 = vld [vmem:[#allocation2 + $0x48] sm:$0xf]
        %v3917 = vld [vmem:[#allocation2 + $0x4c] sm:$0xf]
        %v3918 = vld [vmem:[#allocation2 + $0x50] sm:$0xf]
        %v3919 = vld [vmem:[#allocation2 + $0x54] sm:$0xf]
        %v3920 = vld [vmem:[#allocation2 + $0x58] sm:$0xf]
        %v3921 = vld [vmem:[#allocation2 + $0x5c] sm:$0xf]
        %v3922 = vld [vmem:[#allocation2 + $0x60] sm:$0xf]
        %v3923 = vld [vmem:[#allocation2 + $0x64] sm:$0xf]
        %v3924 = vld [vmem:[#allocation2 + $0x68] sm:$0xf]
        %v3925 = vld [vmem:[#allocation2 + $0x6c] sm:$0xf]
        %v3926 = vld [vmem:[#allocation2 + $0x70] sm:$0xf]
        %v3927 = vld [vmem:[#allocation2 + $0x74] sm:$0xf]
        %v3928 = vld [vmem:[#allocation2 + $0x78] sm:$0xf]
        %v3929 = vld [vmem:[#allocation2 + $0x7c] sm:$0xf]
        %v3930 = vld [vmem:[#allocation2 + $0x80] sm:$0xf]
        %v3931 = vld [vmem:[#allocation2 + $0x84] sm:$0xf]
        %v3932 = vld [vmem:[#allocation2 + $0x88] sm:$0xf]
        %v3933 = vld [vmem:[#allocation2 + $0x8c] sm:$0xf]
        %v3934 = vld [vmem:[#allocation2 + $0x90] sm:$0xf]
        %v3935 = vld [vmem:[#allocation3] sm:$0xf]
        %v3936 = vld [vmem:[#allocation3 + $0x4] sm:$0xf]
        %v3937 = vld [vmem:[#allocation3 + $0x8] sm:$0xf]
        %v3938 = vld [vmem:[#allocation3 + $0xc] sm:$0xf]
        %v3939 = vld [vmem:[#allocation3 + $0x10] sm:$0xf]
        %v3940 = vld [vmem:[#allocation3 + $0x14] sm:$0xf]
        %v3941 = vld [vmem:[#allocation3 + $0x18] sm:$0xf]
        %v3942 = vld [vmem:[#allocation3 + $0x1c] sm:$0xf]
        %v3943 = vld [vmem:[#allocation3 + $0x20] sm:$0xf]
        %v3944 = vld [vmem:[#allocation3 + $0x24] sm:$0xf]
        %v3945 = vld [vmem:[#allocation3 + $0x28] sm:$0xf]
        %v3946 = vld [vmem:[#allocation3 + $0x2c] sm:$0xf]
        %v3947 = vld [vmem:[#allocation3 + $0x30] sm:$0xf]
        %v3948 = vld [vmem:[#allocation3 + $0x34] sm:$0xf]
        %v3949 = vld [vmem:[#allocation3 + $0x38] sm:$0xf]
        %v3950 = vld [vmem:[#allocation3 + $0x3c] sm:$0xf]
        %s3951 = scalar_lea.vmem [#allocation3], 64
        %v3952 = vld [vmem:[%s3951] sm:$0xf]
        %v3953 = vld [vmem:[%s3951 + $0x4] sm:$0xf]
        %v3954 = vld [vmem:[%s3951 + $0x8] sm:$0xf]
        %v3955 = vld [vmem:[%s3951 + $0xc] sm:$0xf]
        %v3956 = vld [vmem:[%s3951 + $0x10] sm:$0xf]
        %v3957 = vld [vmem:[%s3951 + $0x14] sm:$0xf]
        %v3958 = vld [vmem:[%s3951 + $0x18] sm:$0xf]
        %v3959 = vld [vmem:[%s3951 + $0x1c] sm:$0xf]
        %v3960 = vld [vmem:[%s3951 + $0x20] sm:$0xf]
        %v3961 = vld [vmem:[%s3951 + $0x24] sm:$0xf]
        %v3962 = vld [vmem:[%s3951 + $0x28] sm:$0xf]
        %v3963 = vld [vmem:[%s3951 + $0x2c] sm:$0xf]
        %v3964 = vld [vmem:[%s3951 + $0x30] sm:$0xf]
        %v3965 = vld [vmem:[%s3951 + $0x34] sm:$0xf]
        %v3966 = vld [vmem:[%s3951 + $0x38] sm:$0xf]
        %v3967 = vld [vmem:[%s3951 + $0x3c] sm:$0xf]
        %v4004 = vunpack.c.l.b16 %v3899
        %v4005 = vunpack.c.l.b16 %v3900
        %v4006 = vunpack.c.l.b16 %v3901
        %v4007 = vunpack.c.l.b16 %v3902
        %v4008 = vunpack.c.l.b16 %v3903
        %v4009 = vunpack.c.l.b16 %v3904
        %v4010 = vunpack.c.l.b16 %v3905
        %v4011 = vunpack.c.l.b16 %v3906
        %v4012 = vunpack.c.l.b16 %v3907
        %v4013 = vunpack.c.l.b16 %v3908
        %v4014 = vunpack.c.l.b16 %v3909
        %v4015 = vunpack.c.l.b16 %v3910
        %v4016 = vunpack.c.l.b16 %v3911
        %v4017 = vunpack.c.l.b16 %v3912
        %v4018 = vunpack.c.l.b16 %v3913
        %v4019 = vunpack.c.l.b16 %v3914
        %v4020 = vunpack.c.l.b16 %v3915
        %v4021 = vunpack.c.l.b16 %v3916
        %v4022 = vunpack.c.l.b16 %v3917
        %v4023 = vunpack.c.l.b16 %v3918
        %v4024 = vunpack.c.l.b16 %v3919
        %v4025 = vunpack.c.l.b16 %v3920
        %v4026 = vunpack.c.l.b16 %v3921
        %v4027 = vunpack.c.l.b16 %v3922
        %v4028 = vunpack.c.l.b16 %v3923
        %v4029 = vunpack.c.l.b16 %v3924
        %v4030 = vunpack.c.l.b16 %v3925
        %v4031 = vunpack.c.l.b16 %v3926
        %v4032 = vunpack.c.l.b16 %v3927
        %v4033 = vunpack.c.l.b16 %v3928
        %v4034 = vunpack.c.l.b16 %v3929
        %v4035 = vunpack.c.l.b16 %v3930
        %v4036 = vunpack.c.l.b16 %v3931
        %v4037 = vunpack.c.l.b16 %v3932
        %v4038 = vunpack.c.l.b16 %v3933
        %v4039 = vunpack.c.l.b16 %v3934
        %v4040 = vpack.c.b16 %v4005, %v4004
        %v4041 = vpack.c.b16 %v4007, %v4006
        %v4042 = vpack.c.b16 %v4009, %v4008
        %v4043 = vpack.c.b16 %v4011, %v4010
        %v4044 = vpack.c.b16 %v4013, %v4012
        %v4045 = vpack.c.b16 %v4015, %v4014
        %v4046 = vpack.c.b16 %v4017, %v4016
        %v4047 = vpack.c.b16 %v4019, %v4018
        %v4048 = vpack.c.b16 %v4021, %v4020
        %v4049 = vpack.c.b16 %v4023, %v4022
        %v4050 = vpack.c.b16 %v4025, %v4024
        %v4051 = vpack.c.b16 %v4027, %v4026
        %v4052 = vpack.c.b16 %v4029, %v4028
        %v4053 = vpack.c.b16 %v4031, %v4030
        %v4054 = vpack.c.b16 %v4033, %v4032
        %v4055 = vpack.c.b16 %v4035, %v4034
        %v4056 = vpack.c.b16 %v4037, %v4036
        %v4057 = vpack.c.b16 %v4039, %v4038
        %v4092 = vunpack.c.l.b16 %v3952
        %v4093 = vunpack.c.l.b16 %v3953
        %v4094 = vunpack.c.l.b16 %v3954
        %v4095 = vunpack.c.l.b16 %v3955
        %v4096 = vunpack.c.l.b16 %v3956
        %v4097 = vunpack.c.l.b16 %v3957
        %v4098 = vunpack.c.l.b16 %v3958
        %v4099 = vunpack.c.l.b16 %v3959
        %v4100 = vunpack.c.l.b16 %v3960
        %v4101 = vunpack.c.l.b16 %v3961
        %v4102 = vunpack.c.l.b16 %v3962
        %v4103 = vunpack.c.l.b16 %v3963
        %v4104 = vunpack.c.l.b16 %v3964
        %v4105 = vunpack.c.l.b16 %v3965
        %v4106 = vunpack.c.l.b16 %v3966
        %v4107 = vunpack.c.l.b16 %v3967
        %v4108 = vpack.c.b16 %v4093, %v4092
        %v4109 = vpack.c.b16 %v4095, %v4094
        %v4110 = vpack.c.b16 %v4097, %v4096
        %v4111 = vpack.c.b16 %v4099, %v4098
        %v4112 = vpack.c.b16 %v4101, %v4100
        %v4113 = vpack.c.b16 %v4103, %v4102
        %v4114 = vpack.c.b16 %v4105, %v4104
        %v4115 = vpack.c.b16 %v4107, %v4106
        %4124 = vmatpush.bf16.msra.mxu0 %v4115
        %4125 = vmatpush.bf16.msra.mxu0 %v4114
        %4126 = vmatpush.bf16.msra.mxu0 %v4113
        %4127 = vmatpush.bf16.msra.mxu0 %v4112
        %4128 = vmatpush.bf16.msra.mxu0 %v4111
        %4129 = vmatpush.bf16.msra.mxu0 %v4110
        %4130 = vmatpush.bf16.msra.mxu0 %v4109
        %4131 = vmatpush.bf16.msra.mxu0 %v4108
        %4132 = vmatmul.bf16.gmra.mxu0 %v4040
        %v4133 = vpop.f32.mrf.mxu0
        %v4134 = vadd.f32 0.0, %v4133
        %v4135 = vpop.f32.mrf.mxu0
        %v4136 = vadd.f32 0.0, %v4135
        %4137 = vmatmul.bf16.gmra.mxu0 %v4041
        %v4138 = vpop.f32.mrf.mxu0
        %v4139 = vadd.f32 0.0, %v4138
        %v4140 = vpop.f32.mrf.mxu0
        %v4141 = vadd.f32 0.0, %v4140
        %4142 = vmatmul.bf16.gmra.mxu0 %v4042
        %v4143 = vpop.f32.mrf.mxu0
        %v4144 = vadd.f32 0.0, %v4143
        %v4145 = vpop.f32.mrf.mxu0
        %v4146 = vadd.f32 0.0, %v4145
        %4147 = vmatmul.bf16.gmra.mxu0 %v4043
        %v4148 = vpop.f32.mrf.mxu0
        %v4149 = vadd.f32 0.0, %v4148
        %v4150 = vpop.f32.mrf.mxu0
        %v4151 = vadd.f32 0.0, %v4150
        %4152 = vmatmul.bf16.gmra.mxu0 %v4044
        %v4153 = vpop.f32.mrf.mxu0
        %v4154 = vadd.f32 0.0, %v4153
        %v4155 = vpop.f32.mrf.mxu0
        %v4156 = vadd.f32 0.0, %v4155
        %4157 = vmatmul.bf16.gmra.mxu0 %v4045
        %v4158 = vpop.f32.mrf.mxu0
        %v4159 = vadd.f32 0.0, %v4158
        %v4160 = vpop.f32.mrf.mxu0
        %v4161 = vadd.f32 0.0, %v4160
        %4162 = vmatmul.bf16.gmra.mxu0 %v4046
        %v4163 = vpop.f32.mrf.mxu0
        %v4164 = vadd.f32 0.0, %v4163
        %v4165 = vpop.f32.mrf.mxu0
        %v4166 = vadd.f32 0.0, %v4165
        %4167 = vmatmul.bf16.gmra.mxu0 %v4047
        %v4168 = vpop.f32.mrf.mxu0
        %v4169 = vadd.f32 0.0, %v4168
        %v4170 = vpop.f32.mrf.mxu0
        %v4171 = vadd.f32 0.0, %v4170
        %4172 = vmatmul.bf16.gmra.mxu0 %v4048
        %v4173 = vpop.f32.mrf.mxu0
        %v4174 = vadd.f32 0.0, %v4173
        %v4175 = vpop.f32.mrf.mxu0
        %v4176 = vadd.f32 0.0, %v4175
        %4177 = vmatmul.bf16.gmra.mxu0 %v4049
        %v4178 = vpop.f32.mrf.mxu0
        %v4179 = vadd.f32 0.0, %v4178
        %v4180 = vpop.f32.mrf.mxu0
        %v4181 = vadd.f32 0.0, %v4180
        %4182 = vmatmul.bf16.gmra.mxu0 %v4050
        %v4183 = vpop.f32.mrf.mxu0
        %v4184 = vadd.f32 0.0, %v4183
        %v4185 = vpop.f32.mrf.mxu0
        %v4186 = vadd.f32 0.0, %v4185
        %4187 = vmatmul.bf16.gmra.mxu0 %v4051
        %v4188 = vpop.f32.mrf.mxu0
        %v4189 = vadd.f32 0.0, %v4188
        %v4190 = vpop.f32.mrf.mxu0
        %v4191 = vadd.f32 0.0, %v4190
        %4192 = vmatmul.bf16.gmra.mxu0 %v4052
        %v4193 = vpop.f32.mrf.mxu0
        %v4194 = vadd.f32 0.0, %v4193
        %v4195 = vpop.f32.mrf.mxu0
        %v4196 = vadd.f32 0.0, %v4195
        %4197 = vmatmul.bf16.gmra.mxu0 %v4053
        %v4198 = vpop.f32.mrf.mxu0
        %v4199 = vadd.f32 0.0, %v4198
        %v4200 = vpop.f32.mrf.mxu0
        %v4201 = vadd.f32 0.0, %v4200
        %4202 = vmatmul.bf16.gmra.mxu0 %v4054
        %v4203 = vpop.f32.mrf.mxu0
        %v4204 = vadd.f32 0.0, %v4203
        %v4205 = vpop.f32.mrf.mxu0
        %v4206 = vadd.f32 0.0, %v4205
        %4207 = vmatmul.bf16.gmra.mxu0 %v4055
        %v4208 = vpop.f32.mrf.mxu0
        %v4209 = vadd.f32 0.0, %v4208
        %v4210 = vpop.f32.mrf.mxu0
        %v4211 = vadd.f32 0.0, %v4210
        %4212 = vmatmul.bf16.gmra.mxu0 %v4056
        %v4213 = vpop.f32.mrf.mxu0
        %v4214 = vadd.f32 0.0, %v4213
        %v4215 = vpop.f32.mrf.mxu0
        %v4216 = vadd.f32 0.0, %v4215
        %4217 = vmatmul.bf16.gmra.mxu0 %v4057
        %v4218 = vpop.f32.mrf.mxu0
        %v4219 = vadd.f32 0.0, %v4218
        %v4220 = vpop.f32.mrf.mxu0
        %v4221 = vadd.f32 0.0, %v4220
        %4222 = vdwg.mxu0
        %v4224 = vunpack.c.l.b16 %v3898
        %v4225 = vpack.c.b16 %v4004, %v4224
        %v4226 = vpack.c.b16 %v4006, %v4005
        %v4227 = vpack.c.b16 %v4008, %v4007
        %v4228 = vpack.c.b16 %v4010, %v4009
        %v4229 = vpack.c.b16 %v4012, %v4011
        %v4230 = vpack.c.b16 %v4014, %v4013
        %v4231 = vpack.c.b16 %v4016, %v4015
        %v4232 = vpack.c.b16 %v4018, %v4017
        %v4233 = vpack.c.b16 %v4020, %v4019
        %v4234 = vpack.c.b16 %v4022, %v4021
        %v4235 = vpack.c.b16 %v4024, %v4023
        %v4236 = vpack.c.b16 %v4026, %v4025
        %v4237 = vpack.c.b16 %v4028, %v4027
        %v4238 = vpack.c.b16 %v4030, %v4029
        %v4239 = vpack.c.b16 %v4032, %v4031
        %v4240 = vpack.c.b16 %v4034, %v4033
        %v4241 = vpack.c.b16 %v4036, %v4035
        %v4242 = vpack.c.b16 %v4038, %v4037
        %v4243 = vpack.c.b16 %v4039, %v4039
        %vm4244 = vsmask.f32 4352
        %v4246 = vshrl.u32 %v4225, 16
        %v4248 = vrot.slane %v4246, 3
        %v4249 = vshll.u32 %v4225, 16
        %v4251 = vrot.slane %v4249, 4
        %v4252 = vor.u32 %v4248, %v4251
        %v4254 = vshrl.u32 %v4226, 16
        %v4256 = vrot.slane %v4254, 3
        %v4257 = vshll.u32 %v4226, 16
        %v4259 = vrot.slane %v4257, 4
        %v4260 = vor.u32 %v4256, %v4259
        %v4261 = vsel %vm4244, %v4252, %v4260
        %v4263 = vshrl.u32 %v4227, 16
        %v4265 = vrot.slane %v4263, 3
        %v4266 = vshll.u32 %v4227, 16
        %v4268 = vrot.slane %v4266, 4
        %v4269 = vor.u32 %v4265, %v4268
        %v4270 = vsel %vm4244, %v4260, %v4269
        %v4272 = vshrl.u32 %v4228, 16
        %v4274 = vrot.slane %v4272, 3
        %v4275 = vshll.u32 %v4228, 16
        %v4277 = vrot.slane %v4275, 4
        %v4278 = vor.u32 %v4274, %v4277
        %v4279 = vsel %vm4244, %v4269, %v4278
        %v4281 = vshrl.u32 %v4229, 16
        %v4283 = vrot.slane %v4281, 3
        %v4284 = vshll.u32 %v4229, 16
        %v4286 = vrot.slane %v4284, 4
        %v4287 = vor.u32 %v4283, %v4286
        %v4288 = vsel %vm4244, %v4278, %v4287
        %v4290 = vshrl.u32 %v4230, 16
        %v4292 = vrot.slane %v4290, 3
        %v4293 = vshll.u32 %v4230, 16
        %v4295 = vrot.slane %v4293, 4
        %v4296 = vor.u32 %v4292, %v4295
        %v4297 = vsel %vm4244, %v4287, %v4296
        %v4299 = vshrl.u32 %v4231, 16
        %v4301 = vrot.slane %v4299, 3
        %v4302 = vshll.u32 %v4231, 16
        %v4304 = vrot.slane %v4302, 4
        %v4305 = vor.u32 %v4301, %v4304
        %v4306 = vsel %vm4244, %v4296, %v4305
        %v4308 = vshrl.u32 %v4232, 16
        %v4310 = vrot.slane %v4308, 3
        %v4311 = vshll.u32 %v4232, 16
        %v4313 = vrot.slane %v4311, 4
        %v4314 = vor.u32 %v4310, %v4313
        %v4315 = vsel %vm4244, %v4305, %v4314
        %v4317 = vshrl.u32 %v4233, 16
        %v4319 = vrot.slane %v4317, 3
        %v4320 = vshll.u32 %v4233, 16
        %v4322 = vrot.slane %v4320, 4
        %v4323 = vor.u32 %v4319, %v4322
        %v4324 = vsel %vm4244, %v4314, %v4323
        %v4326 = vshrl.u32 %v4234, 16
        %v4328 = vrot.slane %v4326, 3
        %v4329 = vshll.u32 %v4234, 16
        %v4331 = vrot.slane %v4329, 4
        %v4332 = vor.u32 %v4328, %v4331
        %v4333 = vsel %vm4244, %v4323, %v4332
        %v4335 = vshrl.u32 %v4235, 16
        %v4337 = vrot.slane %v4335, 3
        %v4338 = vshll.u32 %v4235, 16
        %v4340 = vrot.slane %v4338, 4
        %v4341 = vor.u32 %v4337, %v4340
        %v4342 = vsel %vm4244, %v4332, %v4341
        %v4344 = vshrl.u32 %v4236, 16
        %v4346 = vrot.slane %v4344, 3
        %v4347 = vshll.u32 %v4236, 16
        %v4349 = vrot.slane %v4347, 4
        %v4350 = vor.u32 %v4346, %v4349
        %v4351 = vsel %vm4244, %v4341, %v4350
        %v4353 = vshrl.u32 %v4237, 16
        %v4355 = vrot.slane %v4353, 3
        %v4356 = vshll.u32 %v4237, 16
        %v4358 = vrot.slane %v4356, 4
        %v4359 = vor.u32 %v4355, %v4358
        %v4360 = vsel %vm4244, %v4350, %v4359
        %v4362 = vshrl.u32 %v4238, 16
        %v4364 = vrot.slane %v4362, 3
        %v4365 = vshll.u32 %v4238, 16
        %v4367 = vrot.slane %v4365, 4
        %v4368 = vor.u32 %v4364, %v4367
        %v4369 = vsel %vm4244, %v4359, %v4368
        %v4371 = vshrl.u32 %v4239, 16
        %v4373 = vrot.slane %v4371, 3
        %v4374 = vshll.u32 %v4239, 16
        %v4376 = vrot.slane %v4374, 4
        %v4377 = vor.u32 %v4373, %v4376
        %v4378 = vsel %vm4244, %v4368, %v4377
        %v4380 = vshrl.u32 %v4240, 16
        %v4382 = vrot.slane %v4380, 3
        %v4383 = vshll.u32 %v4240, 16
        %v4385 = vrot.slane %v4383, 4
        %v4386 = vor.u32 %v4382, %v4385
        %v4387 = vsel %vm4244, %v4377, %v4386
        %v4389 = vshrl.u32 %v4241, 16
        %v4391 = vrot.slane %v4389, 3
        %v4392 = vshll.u32 %v4241, 16
        %v4394 = vrot.slane %v4392, 4
        %v4395 = vor.u32 %v4391, %v4394
        %v4396 = vsel %vm4244, %v4386, %v4395
        %v4398 = vshrl.u32 %v4242, 16
        %v4400 = vrot.slane %v4398, 3
        %v4401 = vshll.u32 %v4242, 16
        %v4403 = vrot.slane %v4401, 4
        %v4404 = vor.u32 %v4400, %v4403
        %v4405 = vsel %vm4244, %v4395, %v4404
        %v4407 = vshrl.u32 %v4243, 16
        %v4409 = vrot.slane %v4407, 3
        %v4410 = vshll.u32 %v4243, 16
        %v4412 = vrot.slane %v4410, 4
        %v4413 = vor.u32 %v4409, %v4412
        %v4414 = vsel %vm4244, %v4404, %v4413
        %v4449 = vunpack.c.l.b16 %v3935
        %v4450 = vunpack.c.l.b16 %v3936
        %v4451 = vunpack.c.l.b16 %v3937
        %v4452 = vunpack.c.l.b16 %v3938
        %v4453 = vunpack.c.l.b16 %v3939
        %v4454 = vunpack.c.l.b16 %v3940
        %v4455 = vunpack.c.l.b16 %v3941
        %v4456 = vunpack.c.l.b16 %v3942
        %v4457 = vunpack.c.l.b16 %v3943
        %v4458 = vunpack.c.l.b16 %v3944
        %v4459 = vunpack.c.l.b16 %v3945
        %v4460 = vunpack.c.l.b16 %v3946
        %v4461 = vunpack.c.l.b16 %v3947
        %v4462 = vunpack.c.l.b16 %v3948
        %v4463 = vunpack.c.l.b16 %v3949
        %v4464 = vunpack.c.l.b16 %v3950
        %v4465 = vpack.c.b16 %v4450, %v4449
        %v4466 = vpack.c.b16 %v4452, %v4451
        %v4467 = vpack.c.b16 %v4454, %v4453
        %v4468 = vpack.c.b16 %v4456, %v4455
        %v4469 = vpack.c.b16 %v4458, %v4457
        %v4470 = vpack.c.b16 %v4460, %v4459
        %v4471 = vpack.c.b16 %v4462, %v4461
        %v4472 = vpack.c.b16 %v4464, %v4463
        %4481 = vmatpush.bf16.msra.mxu0 %v4472
        %4482 = vmatpush.bf16.msra.mxu0 %v4471
        %4483 = vmatpush.bf16.msra.mxu0 %v4470
        %4484 = vmatpush.bf16.msra.mxu0 %v4469
        %4485 = vmatpush.bf16.msra.mxu0 %v4468
        %4486 = vmatpush.bf16.msra.mxu0 %v4467
        %4487 = vmatpush.bf16.msra.mxu0 %v4466
        %4488 = vmatpush.bf16.msra.mxu0 %v4465
        %4489 = vmatmul.bf16.gmra.mxu0 %v4261
        %v4490 = vpop.f32.mrf.mxu0
        %v4491 = vadd.f32 %v4134, %v4490
        %v4492 = vpop.f32.mrf.mxu0
        %v4493 = vadd.f32 %v4136, %v4492
        %4494 = vmatmul.bf16.gmra.mxu0 %v4270
        %v4495 = vpop.f32.mrf.mxu0
        %v4496 = vadd.f32 %v4139, %v4495
        %v4497 = vpop.f32.mrf.mxu0
        %v4498 = vadd.f32 %v4141, %v4497
        %4499 = vmatmul.bf16.gmra.mxu0 %v4279
        %v4500 = vpop.f32.mrf.mxu0
        %v4501 = vadd.f32 %v4144, %v4500
        %v4502 = vpop.f32.mrf.mxu0
        %v4503 = vadd.f32 %v4146, %v4502
        %4504 = vmatmul.bf16.gmra.mxu0 %v4288
        %v4505 = vpop.f32.mrf.mxu0
        %v4506 = vadd.f32 %v4149, %v4505
        %v4507 = vpop.f32.mrf.mxu0
        %v4508 = vadd.f32 %v4151, %v4507
        %4509 = vmatmul.bf16.gmra.mxu0 %v4297
        %v4510 = vpop.f32.mrf.mxu0
        %v4511 = vadd.f32 %v4154, %v4510
        %v4512 = vpop.f32.mrf.mxu0
        %v4513 = vadd.f32 %v4156, %v4512
        %4514 = vmatmul.bf16.gmra.mxu0 %v4306
        %v4515 = vpop.f32.mrf.mxu0
        %v4516 = vadd.f32 %v4159, %v4515
        %v4517 = vpop.f32.mrf.mxu0
        %v4518 = vadd.f32 %v4161, %v4517
        %4519 = vmatmul.bf16.gmra.mxu0 %v4315
        %v4520 = vpop.f32.mrf.mxu0
        %v4521 = vadd.f32 %v4164, %v4520
        %v4522 = vpop.f32.mrf.mxu0
        %v4523 = vadd.f32 %v4166, %v4522
        %4524 = vmatmul.bf16.gmra.mxu0 %v4324
        %v4525 = vpop.f32.mrf.mxu0
        %v4526 = vadd.f32 %v4169, %v4525
        %v4527 = vpop.f32.mrf.mxu0
        %v4528 = vadd.f32 %v4171, %v4527
        %4529 = vmatmul.bf16.gmra.mxu0 %v4333
        %v4530 = vpop.f32.mrf.mxu0
        %v4531 = vadd.f32 %v4174, %v4530
        %v4532 = vpop.f32.mrf.mxu0
        %v4533 = vadd.f32 %v4176, %v4532
        %4534 = vmatmul.bf16.gmra.mxu0 %v4342
        %v4535 = vpop.f32.mrf.mxu0
        %v4536 = vadd.f32 %v4179, %v4535
        %v4537 = vpop.f32.mrf.mxu0
        %v4538 = vadd.f32 %v4181, %v4537
        %4539 = vmatmul.bf16.gmra.mxu0 %v4351
        %v4540 = vpop.f32.mrf.mxu0
        %v4541 = vadd.f32 %v4184, %v4540
        %v4542 = vpop.f32.mrf.mxu0
        %v4543 = vadd.f32 %v4186, %v4542
        %4544 = vmatmul.bf16.gmra.mxu0 %v4360
        %v4545 = vpop.f32.mrf.mxu0
        %v4546 = vadd.f32 %v4189, %v4545
        %v4547 = vpop.f32.mrf.mxu0
        %v4548 = vadd.f32 %v4191, %v4547
        %4549 = vmatmul.bf16.gmra.mxu0 %v4369
        %v4550 = vpop.f32.mrf.mxu0
        %v4551 = vadd.f32 %v4194, %v4550
        %v4552 = vpop.f32.mrf.mxu0
        %v4553 = vadd.f32 %v4196, %v4552
        %4554 = vmatmul.bf16.gmra.mxu0 %v4378
        %v4555 = vpop.f32.mrf.mxu0
        %v4556 = vadd.f32 %v4199, %v4555
        %v4557 = vpop.f32.mrf.mxu0
        %v4558 = vadd.f32 %v4201, %v4557
        %4559 = vmatmul.bf16.gmra.mxu0 %v4387
        %v4560 = vpop.f32.mrf.mxu0
        %v4561 = vadd.f32 %v4204, %v4560
        %v4562 = vpop.f32.mrf.mxu0
        %v4563 = vadd.f32 %v4206, %v4562
        %4564 = vmatmul.bf16.gmra.mxu0 %v4396
        %v4565 = vpop.f32.mrf.mxu0
        %v4566 = vadd.f32 %v4209, %v4565
        %v4567 = vpop.f32.mrf.mxu0
        %v4568 = vadd.f32 %v4211, %v4567
        %4569 = vmatmul.bf16.gmra.mxu0 %v4405
        %v4570 = vpop.f32.mrf.mxu0
        %v4571 = vadd.f32 %v4214, %v4570
        %v4572 = vpop.f32.mrf.mxu0
        %v4573 = vadd.f32 %v4216, %v4572
        %4574 = vmatmul.bf16.gmra.mxu0 %v4414
        %v4575 = vpop.f32.mrf.mxu0
        %v4576 = vadd.f32 %v4219, %v4575
        %v4577 = vpop.f32.mrf.mxu0
        %v4578 = vadd.f32 %v4221, %v4577
        %4579 = vdwg.mxu0
        %v4580 = vld [vmem:[#allocation2 + $0x4] sm:$0xf]
        %v4581 = vld [vmem:[#allocation2 + $0x8] sm:$0xf]
        %v4582 = vld [vmem:[#allocation2 + $0xc] sm:$0xf]
        %v4583 = vld [vmem:[#allocation2 + $0x10] sm:$0xf]
        %v4584 = vld [vmem:[#allocation2 + $0x14] sm:$0xf]
        %v4585 = vld [vmem:[#allocation2 + $0x18] sm:$0xf]
        %v4586 = vld [vmem:[#allocation2 + $0x1c] sm:$0xf]
        %v4587 = vld [vmem:[#allocation2 + $0x20] sm:$0xf]
        %v4588 = vld [vmem:[#allocation2 + $0x24] sm:$0xf]
        %v4589 = vld [vmem:[#allocation2 + $0x28] sm:$0xf]
        %v4590 = vld [vmem:[#allocation2 + $0x2c] sm:$0xf]
        %v4591 = vld [vmem:[#allocation2 + $0x30] sm:$0xf]
        %v4592 = vld [vmem:[#allocation2 + $0x34] sm:$0xf]
        %v4593 = vld [vmem:[#allocation2 + $0x38] sm:$0xf]
        %v4594 = vld [vmem:[#allocation2 + $0x3c] sm:$0xf]
        %v4595 = vld [vmem:[#allocation2 + $0x40] sm:$0xf]
        %v4596 = vld [vmem:[#allocation2 + $0x44] sm:$0xf]
        %v4597 = vld [vmem:[#allocation2 + $0x48] sm:$0xf]
        %v4598 = vld [vmem:[#allocation2 + $0x4c] sm:$0xf]
        %v4599 = vld [vmem:[#allocation2 + $0x50] sm:$0xf]
        %v4600 = vld [vmem:[#allocation2 + $0x54] sm:$0xf]
        %v4601 = vld [vmem:[#allocation2 + $0x58] sm:$0xf]
        %v4602 = vld [vmem:[#allocation2 + $0x5c] sm:$0xf]
        %v4603 = vld [vmem:[#allocation2 + $0x60] sm:$0xf]
        %v4604 = vld [vmem:[#allocation2 + $0x64] sm:$0xf]
        %v4605 = vld [vmem:[#allocation2 + $0x68] sm:$0xf]
        %v4606 = vld [vmem:[#allocation2 + $0x6c] sm:$0xf]
        %v4607 = vld [vmem:[#allocation2 + $0x70] sm:$0xf]
        %v4608 = vld [vmem:[#allocation2 + $0x74] sm:$0xf]
        %v4609 = vld [vmem:[#allocation2 + $0x78] sm:$0xf]
        %v4610 = vld [vmem:[#allocation2 + $0x7c] sm:$0xf]
        %v4611 = vld [vmem:[#allocation2 + $0x80] sm:$0xf]
        %v4612 = vld [vmem:[#allocation2 + $0x84] sm:$0xf]
        %v4613 = vld [vmem:[#allocation2 + $0x88] sm:$0xf]
        %v4614 = vld [vmem:[#allocation2 + $0x8c] sm:$0xf]
        %v4615 = vld [vmem:[#allocation2 + $0x90] sm:$0xf]
        %v4616 = vld [vmem:[#allocation2 + $0x94] sm:$0x1]
        %s4617 = scalar_lea.vmem [#allocation3], 128
        %v4618 = vld [vmem:[%s4617] sm:$0xf]
        %v4619 = vld [vmem:[%s4617 + $0x4] sm:$0xf]
        %v4620 = vld [vmem:[%s4617 + $0x8] sm:$0xf]
        %v4621 = vld [vmem:[%s4617 + $0xc] sm:$0xf]
        %v4622 = vld [vmem:[%s4617 + $0x10] sm:$0xf]
        %v4623 = vld [vmem:[%s4617 + $0x14] sm:$0xf]
        %v4624 = vld [vmem:[%s4617 + $0x18] sm:$0xf]
        %v4625 = vld [vmem:[%s4617 + $0x1c] sm:$0xf]
        %v4626 = vld [vmem:[%s4617 + $0x20] sm:$0xf]
        %v4627 = vld [vmem:[%s4617 + $0x24] sm:$0xf]
        %v4628 = vld [vmem:[%s4617 + $0x28] sm:$0xf]
        %v4629 = vld [vmem:[%s4617 + $0x2c] sm:$0xf]
        %v4630 = vld [vmem:[%s4617 + $0x30] sm:$0xf]
        %v4631 = vld [vmem:[%s4617 + $0x34] sm:$0xf]
        %v4632 = vld [vmem:[%s4617 + $0x38] sm:$0xf]
        %v4633 = vld [vmem:[%s4617 + $0x3c] sm:$0xf]
        %v4671 = vunpack.c.l.b16 %v4580
        %v4672 = vunpack.c.l.b16 %v4581
        %v4673 = vunpack.c.l.b16 %v4582
        %v4674 = vunpack.c.l.b16 %v4583
        %v4675 = vunpack.c.l.b16 %v4584
        %v4676 = vunpack.c.l.b16 %v4585
        %v4677 = vunpack.c.l.b16 %v4586
        %v4678 = vunpack.c.l.b16 %v4587
        %v4679 = vunpack.c.l.b16 %v4588
        %v4680 = vunpack.c.l.b16 %v4589
        %v4681 = vunpack.c.l.b16 %v4590
        %v4682 = vunpack.c.l.b16 %v4591
        %v4683 = vunpack.c.l.b16 %v4592
        %v4684 = vunpack.c.l.b16 %v4593
        %v4685 = vunpack.c.l.b16 %v4594
        %v4686 = vunpack.c.l.b16 %v4595
        %v4687 = vunpack.c.l.b16 %v4596
        %v4688 = vunpack.c.l.b16 %v4597
        %v4689 = vunpack.c.l.b16 %v4598
        %v4690 = vunpack.c.l.b16 %v4599
        %v4691 = vunpack.c.l.b16 %v4600
        %v4692 = vunpack.c.l.b16 %v4601
        %v4693 = vunpack.c.l.b16 %v4602
        %v4694 = vunpack.c.l.b16 %v4603
        %v4695 = vunpack.c.l.b16 %v4604
        %v4696 = vunpack.c.l.b16 %v4605
        %v4697 = vunpack.c.l.b16 %v4606
        %v4698 = vunpack.c.l.b16 %v4607
        %v4699 = vunpack.c.l.b16 %v4608
        %v4700 = vunpack.c.l.b16 %v4609
        %v4701 = vunpack.c.l.b16 %v4610
        %v4702 = vunpack.c.l.b16 %v4611
        %v4703 = vunpack.c.l.b16 %v4612
        %v4704 = vunpack.c.l.b16 %v4613
        %v4705 = vunpack.c.l.b16 %v4614
        %v4706 = vunpack.c.l.b16 %v4615
        %v4707 = vunpack.c.l.b16 %v4616
        %v4708 = vpack.c.b16 %v4672, %v4671
        %v4709 = vpack.c.b16 %v4674, %v4673
        %v4710 = vpack.c.b16 %v4676, %v4675
        %v4711 = vpack.c.b16 %v4678, %v4677
        %v4712 = vpack.c.b16 %v4680, %v4679
        %v4713 = vpack.c.b16 %v4682, %v4681
        %v4714 = vpack.c.b16 %v4684, %v4683
        %v4715 = vpack.c.b16 %v4686, %v4685
        %v4716 = vpack.c.b16 %v4688, %v4687
        %v4717 = vpack.c.b16 %v4690, %v4689
        %v4718 = vpack.c.b16 %v4692, %v4691
        %v4719 = vpack.c.b16 %v4694, %v4693
        %v4720 = vpack.c.b16 %v4696, %v4695
        %v4721 = vpack.c.b16 %v4698, %v4697
        %v4722 = vpack.c.b16 %v4700, %v4699
        %v4723 = vpack.c.b16 %v4702, %v4701
        %v4724 = vpack.c.b16 %v4704, %v4703
        %v4725 = vpack.c.b16 %v4706, %v4705
        %v4726 = vpack.c.b16 %v4707, %v4707
        %v4728 = vshrl.u32 %v4708, 16
        %v4730 = vshll.u32 %v4708, 16
        %v4732 = vrot.slane %v4730, 1
        %v4733 = vor.u32 %v4728, %v4732
        %v4735 = vshll.u32 %v4709, 16
        %v4737 = vrot.slane %v4735, 1
        %v4738 = vsel %vm450, %v4733, %v4737
        %v4739 = vshrl.u32 %v4709, 16
        %v4741 = vor.u32 %v4739, %v4737
        %v4743 = vshll.u32 %v4710, 16
        %v4745 = vrot.slane %v4743, 1
        %v4746 = vsel %vm450, %v4741, %v4745
        %v4747 = vshrl.u32 %v4710, 16
        %v4749 = vor.u32 %v4747, %v4745
        %v4751 = vshll.u32 %v4711, 16
        %v4753 = vrot.slane %v4751, 1
        %v4754 = vsel %vm450, %v4749, %v4753
        %v4755 = vshrl.u32 %v4711, 16
        %v4757 = vor.u32 %v4755, %v4753
        %v4759 = vshll.u32 %v4712, 16
        %v4761 = vrot.slane %v4759, 1
        %v4762 = vsel %vm450, %v4757, %v4761
        %v4763 = vshrl.u32 %v4712, 16
        %v4765 = vor.u32 %v4763, %v4761
        %v4767 = vshll.u32 %v4713, 16
        %v4769 = vrot.slane %v4767, 1
        %v4770 = vsel %vm450, %v4765, %v4769
        %v4771 = vshrl.u32 %v4713, 16
        %v4773 = vor.u32 %v4771, %v4769
        %v4775 = vshll.u32 %v4714, 16
        %v4777 = vrot.slane %v4775, 1
        %v4778 = vsel %vm450, %v4773, %v4777
        %v4779 = vshrl.u32 %v4714, 16
        %v4781 = vor.u32 %v4779, %v4777
        %v4783 = vshll.u32 %v4715, 16
        %v4785 = vrot.slane %v4783, 1
        %v4786 = vsel %vm450, %v4781, %v4785
        %v4787 = vshrl.u32 %v4715, 16
        %v4789 = vor.u32 %v4787, %v4785
        %v4791 = vshll.u32 %v4716, 16
        %v4793 = vrot.slane %v4791, 1
        %v4794 = vsel %vm450, %v4789, %v4793
        %v4795 = vshrl.u32 %v4716, 16
        %v4797 = vor.u32 %v4795, %v4793
        %v4799 = vshll.u32 %v4717, 16
        %v4801 = vrot.slane %v4799, 1
        %v4802 = vsel %vm450, %v4797, %v4801
        %v4803 = vshrl.u32 %v4717, 16
        %v4805 = vor.u32 %v4803, %v4801
        %v4807 = vshll.u32 %v4718, 16
        %v4809 = vrot.slane %v4807, 1
        %v4810 = vsel %vm450, %v4805, %v4809
        %v4811 = vshrl.u32 %v4718, 16
        %v4813 = vor.u32 %v4811, %v4809
        %v4815 = vshll.u32 %v4719, 16
        %v4817 = vrot.slane %v4815, 1
        %v4818 = vsel %vm450, %v4813, %v4817
        %v4819 = vshrl.u32 %v4719, 16
        %v4821 = vor.u32 %v4819, %v4817
        %v4823 = vshll.u32 %v4720, 16
        %v4825 = vrot.slane %v4823, 1
        %v4826 = vsel %vm450, %v4821, %v4825
        %v4827 = vshrl.u32 %v4720, 16
        %v4829 = vor.u32 %v4827, %v4825
        %v4831 = vshll.u32 %v4721, 16
        %v4833 = vrot.slane %v4831, 1
        %v4834 = vsel %vm450, %v4829, %v4833
        %v4835 = vshrl.u32 %v4721, 16
        %v4837 = vor.u32 %v4835, %v4833
        %v4839 = vshll.u32 %v4722, 16
        %v4841 = vrot.slane %v4839, 1
        %v4842 = vsel %vm450, %v4837, %v4841
        %v4843 = vshrl.u32 %v4722, 16
        %v4845 = vor.u32 %v4843, %v4841
        %v4847 = vshll.u32 %v4723, 16
        %v4849 = vrot.slane %v4847, 1
        %v4850 = vsel %vm450, %v4845, %v4849
        %v4851 = vshrl.u32 %v4723, 16
        %v4853 = vor.u32 %v4851, %v4849
        %v4855 = vshll.u32 %v4724, 16
        %v4857 = vrot.slane %v4855, 1
        %v4858 = vsel %vm450, %v4853, %v4857
        %v4859 = vshrl.u32 %v4724, 16
        %v4861 = vor.u32 %v4859, %v4857
        %v4863 = vshll.u32 %v4725, 16
        %v4865 = vrot.slane %v4863, 1
        %v4866 = vsel %vm450, %v4861, %v4865
        %v4867 = vshrl.u32 %v4725, 16
        %v4869 = vor.u32 %v4867, %v4865
        %v4871 = vshll.u32 %v4726, 16
        %v4873 = vrot.slane %v4871, 1
        %v4874 = vsel %vm450, %v4869, %v4873
        %v4909 = vunpack.c.l.b16 %v4618
        %v4910 = vunpack.c.l.b16 %v4619
        %v4911 = vunpack.c.l.b16 %v4620
        %v4912 = vunpack.c.l.b16 %v4621
        %v4913 = vunpack.c.l.b16 %v4622
        %v4914 = vunpack.c.l.b16 %v4623
        %v4915 = vunpack.c.l.b16 %v4624
        %v4916 = vunpack.c.l.b16 %v4625
        %v4917 = vunpack.c.l.b16 %v4626
        %v4918 = vunpack.c.l.b16 %v4627
        %v4919 = vunpack.c.l.b16 %v4628
        %v4920 = vunpack.c.l.b16 %v4629
        %v4921 = vunpack.c.l.b16 %v4630
        %v4922 = vunpack.c.l.b16 %v4631
        %v4923 = vunpack.c.l.b16 %v4632
        %v4924 = vunpack.c.l.b16 %v4633
        %v4925 = vpack.c.b16 %v4910, %v4909
        %v4926 = vpack.c.b16 %v4912, %v4911
        %v4927 = vpack.c.b16 %v4914, %v4913
        %v4928 = vpack.c.b16 %v4916, %v4915
        %v4929 = vpack.c.b16 %v4918, %v4917
        %v4930 = vpack.c.b16 %v4920, %v4919
        %v4931 = vpack.c.b16 %v4922, %v4921
        %v4932 = vpack.c.b16 %v4924, %v4923
        %4941 = vmatpush.bf16.msra.mxu0 %v4932
        %4942 = vmatpush.bf16.msra.mxu0 %v4931
        %4943 = vmatpush.bf16.msra.mxu0 %v4930
        %4944 = vmatpush.bf16.msra.mxu0 %v4929
        %4945 = vmatpush.bf16.msra.mxu0 %v4928
        %4946 = vmatpush.bf16.msra.mxu0 %v4927
        %4947 = vmatpush.bf16.msra.mxu0 %v4926
        %4948 = vmatpush.bf16.msra.mxu0 %v4925
        %4949 = vmatmul.bf16.gmra.mxu0 %v4738
        %v4950 = vpop.f32.mrf.mxu0
        %v4951 = vadd.f32 0.0, %v4950
        %v4952 = vpop.f32.mrf.mxu0
        %v4953 = vadd.f32 0.0, %v4952
        %4954 = vmatmul.bf16.gmra.mxu0 %v4746
        %v4955 = vpop.f32.mrf.mxu0
        %v4956 = vadd.f32 0.0, %v4955
        %v4957 = vpop.f32.mrf.mxu0
        %v4958 = vadd.f32 0.0, %v4957
        %4959 = vmatmul.bf16.gmra.mxu0 %v4754
        %v4960 = vpop.f32.mrf.mxu0
        %v4961 = vadd.f32 0.0, %v4960
        %v4962 = vpop.f32.mrf.mxu0
        %v4963 = vadd.f32 0.0, %v4962
        %4964 = vmatmul.bf16.gmra.mxu0 %v4762
        %v4965 = vpop.f32.mrf.mxu0
        %v4966 = vadd.f32 0.0, %v4965
        %v4967 = vpop.f32.mrf.mxu0
        %v4968 = vadd.f32 0.0, %v4967
        %4969 = vmatmul.bf16.gmra.mxu0 %v4770
        %v4970 = vpop.f32.mrf.mxu0
        %v4971 = vadd.f32 0.0, %v4970
        %v4972 = vpop.f32.mrf.mxu0
        %v4973 = vadd.f32 0.0, %v4972
        %4974 = vmatmul.bf16.gmra.mxu0 %v4778
        %v4975 = vpop.f32.mrf.mxu0
        %v4976 = vadd.f32 0.0, %v4975
        %v4977 = vpop.f32.mrf.mxu0
        %v4978 = vadd.f32 0.0, %v4977
        %4979 = vmatmul.bf16.gmra.mxu0 %v4786
        %v4980 = vpop.f32.mrf.mxu0
        %v4981 = vadd.f32 0.0, %v4980
        %v4982 = vpop.f32.mrf.mxu0
        %v4983 = vadd.f32 0.0, %v4982
        %4984 = vmatmul.bf16.gmra.mxu0 %v4794
        %v4985 = vpop.f32.mrf.mxu0
        %v4986 = vadd.f32 0.0, %v4985
        %v4987 = vpop.f32.mrf.mxu0
        %v4988 = vadd.f32 0.0, %v4987
        %4989 = vmatmul.bf16.gmra.mxu0 %v4802
        %v4990 = vpop.f32.mrf.mxu0
        %v4991 = vadd.f32 0.0, %v4990
        %v4992 = vpop.f32.mrf.mxu0
        %v4993 = vadd.f32 0.0, %v4992
        %4994 = vmatmul.bf16.gmra.mxu0 %v4810
        %v4995 = vpop.f32.mrf.mxu0
        %v4996 = vadd.f32 0.0, %v4995
        %v4997 = vpop.f32.mrf.mxu0
        %v4998 = vadd.f32 0.0, %v4997
        %4999 = vmatmul.bf16.gmra.mxu0 %v4818
        %v5000 = vpop.f32.mrf.mxu0
        %v5001 = vadd.f32 0.0, %v5000
        %v5002 = vpop.f32.mrf.mxu0
        %v5003 = vadd.f32 0.0, %v5002
        %5004 = vmatmul.bf16.gmra.mxu0 %v4826
        %v5005 = vpop.f32.mrf.mxu0
        %v5006 = vadd.f32 0.0, %v5005
        %v5007 = vpop.f32.mrf.mxu0
        %v5008 = vadd.f32 0.0, %v5007
        %5009 = vmatmul.bf16.gmra.mxu0 %v4834
        %v5010 = vpop.f32.mrf.mxu0
        %v5011 = vadd.f32 0.0, %v5010
        %v5012 = vpop.f32.mrf.mxu0
        %v5013 = vadd.f32 0.0, %v5012
        %5014 = vmatmul.bf16.gmra.mxu0 %v4842
        %v5015 = vpop.f32.mrf.mxu0
        %v5016 = vadd.f32 0.0, %v5015
        %v5017 = vpop.f32.mrf.mxu0
        %v5018 = vadd.f32 0.0, %v5017
        %5019 = vmatmul.bf16.gmra.mxu0 %v4850
        %v5020 = vpop.f32.mrf.mxu0
        %v5021 = vadd.f32 0.0, %v5020
        %v5022 = vpop.f32.mrf.mxu0
        %v5023 = vadd.f32 0.0, %v5022
        %5024 = vmatmul.bf16.gmra.mxu0 %v4858
        %v5025 = vpop.f32.mrf.mxu0
        %v5026 = vadd.f32 0.0, %v5025
        %v5027 = vpop.f32.mrf.mxu0
        %v5028 = vadd.f32 0.0, %v5027
        %5029 = vmatmul.bf16.gmra.mxu0 %v4866
        %v5030 = vpop.f32.mrf.mxu0
        %v5031 = vadd.f32 0.0, %v5030
        %v5032 = vpop.f32.mrf.mxu0
        %v5033 = vadd.f32 0.0, %v5032
        %5034 = vmatmul.bf16.gmra.mxu0 %v4874
        %v5035 = vpop.f32.mrf.mxu0
        %v5036 = vadd.f32 0.0, %v5035
        %v5037 = vpop.f32.mrf.mxu0
        %v5038 = vadd.f32 0.0, %v5037
        %5039 = vdwg.mxu0
        %v5040 = vadd.f32 %v4491, %v4951
        %v5041 = vadd.f32 %v4493, %v4953
        %v5042 = vadd.f32 %v4496, %v4956
        %v5043 = vadd.f32 %v4498, %v4958
        %v5044 = vadd.f32 %v4501, %v4961
        %v5045 = vadd.f32 %v4503, %v4963
        %v5046 = vadd.f32 %v4506, %v4966
        %v5047 = vadd.f32 %v4508, %v4968
        %v5048 = vadd.f32 %v4511, %v4971
        %v5049 = vadd.f32 %v4513, %v4973
        %v5050 = vadd.f32 %v4516, %v4976
        %v5051 = vadd.f32 %v4518, %v4978
        %v5052 = vadd.f32 %v4521, %v4981
        %v5053 = vadd.f32 %v4523, %v4983
        %v5054 = vadd.f32 %v4526, %v4986
        %v5055 = vadd.f32 %v4528, %v4988
        %v5056 = vadd.f32 %v4531, %v4991
        %v5057 = vadd.f32 %v4533, %v4993
        %v5058 = vadd.f32 %v4536, %v4996
        %v5059 = vadd.f32 %v4538, %v4998
        %v5060 = vadd.f32 %v4541, %v5001
        %v5061 = vadd.f32 %v4543, %v5003
        %v5062 = vadd.f32 %v4546, %v5006
        %v5063 = vadd.f32 %v4548, %v5008
        %v5064 = vadd.f32 %v4551, %v5011
        %v5065 = vadd.f32 %v4553, %v5013
        %v5066 = vadd.f32 %v4556, %v5016
        %v5067 = vadd.f32 %v4558, %v5018
        %v5068 = vadd.f32 %v4561, %v5021
        %v5069 = vadd.f32 %v4563, %v5023
        %v5070 = vadd.f32 %v4566, %v5026
        %v5071 = vadd.f32 %v4568, %v5028
        %v5072 = vadd.f32 %v4571, %v5031
        %v5073 = vadd.f32 %v4573, %v5033
        %v5074 = vadd.f32 %v4576, %v5036
        %v5075 = vadd.f32 %v4578, %v5038
        %v5076 = vld [vmem:[#allocation2 + $0xc] sm:$0xf]
        %v5077 = vld [vmem:[#allocation2 + $0x10] sm:$0xf]
        %v5078 = vld [vmem:[#allocation2 + $0x14] sm:$0xf]
        %v5079 = vld [vmem:[#allocation2 + $0x18] sm:$0xf]
        %v5080 = vld [vmem:[#allocation2 + $0x1c] sm:$0xf]
        %v5081 = vld [vmem:[#allocation2 + $0x20] sm:$0xf]
        %v5082 = vld [vmem:[#allocation2 + $0x24] sm:$0xf]
        %v5083 = vld [vmem:[#allocation2 + $0x28] sm:$0xf]
        %v5084 = vld [vmem:[#allocation2 + $0x2c] sm:$0xf]
        %v5085 = vld [vmem:[#allocation2 + $0x30] sm:$0xf]
        %v5086 = vld [vmem:[#allocation2 + $0x34] sm:$0xf]
        %v5087 = vld [vmem:[#allocation2 + $0x38] sm:$0xf]
        %v5088 = vld [vmem:[#allocation2 + $0x3c] sm:$0xf]
        %v5089 = vld [vmem:[#allocation2 + $0x40] sm:$0xf]
        %v5090 = vld [vmem:[#allocation2 + $0x44] sm:$0xf]
        %v5091 = vld [vmem:[#allocation2 + $0x48] sm:$0xf]
        %v5092 = vld [vmem:[#allocation2 + $0x4c] sm:$0xf]
        %v5093 = vld [vmem:[#allocation2 + $0x50] sm:$0xf]
        %v5094 = vld [vmem:[#allocation2 + $0x54] sm:$0xf]
        %v5095 = vld [vmem:[#allocation2 + $0x58] sm:$0xf]
        %v5096 = vld [vmem:[#allocation2 + $0x5c] sm:$0xf]
        %v5097 = vld [vmem:[#allocation2 + $0x60] sm:$0xf]
        %v5098 = vld [vmem:[#allocation2 + $0x64] sm:$0xf]
        %v5099 = vld [vmem:[#allocation2 + $0x68] sm:$0xf]
        %v5100 = vld [vmem:[#allocation2 + $0x6c] sm:$0xf]
        %v5101 = vld [vmem:[#allocation2 + $0x70] sm:$0xf]
        %v5102 = vld [vmem:[#allocation2 + $0x74] sm:$0xf]
        %v5103 = vld [vmem:[#allocation2 + $0x78] sm:$0xf]
        %v5104 = vld [vmem:[#allocation2 + $0x7c] sm:$0xf]
        %v5105 = vld [vmem:[#allocation2 + $0x80] sm:$0xf]
        %v5106 = vld [vmem:[#allocation2 + $0x84] sm:$0xf]
        %v5107 = vld [vmem:[#allocation2 + $0x88] sm:$0xf]
        %v5108 = vld [vmem:[#allocation2 + $0x8c] sm:$0xf]
        %v5109 = vld [vmem:[#allocation2 + $0x90] sm:$0xf]
        %v5110 = vld [vmem:[#allocation2 + $0x94] sm:$0xf]
        %v5111 = vld [vmem:[#allocation2 + $0x98] sm:$0xf]
        %v5112 = vld [vmem:[#allocation2 + $0x9c] sm:$0x1]
        %s5113 = scalar_lea.vmem [#allocation3], 192
        %v5114 = vld [vmem:[%s5113] sm:$0xf]
        %v5115 = vld [vmem:[%s5113 + $0x4] sm:$0xf]
        %v5116 = vld [vmem:[%s5113 + $0x8] sm:$0xf]
        %v5117 = vld [vmem:[%s5113 + $0xc] sm:$0xf]
        %v5118 = vld [vmem:[%s5113 + $0x10] sm:$0xf]
        %v5119 = vld [vmem:[%s5113 + $0x14] sm:$0xf]
        %v5120 = vld [vmem:[%s5113 + $0x18] sm:$0xf]
        %v5121 = vld [vmem:[%s5113 + $0x1c] sm:$0xf]
        %v5122 = vld [vmem:[%s5113 + $0x20] sm:$0xf]
        %v5123 = vld [vmem:[%s5113 + $0x24] sm:$0xf]
        %v5124 = vld [vmem:[%s5113 + $0x28] sm:$0xf]
        %v5125 = vld [vmem:[%s5113 + $0x2c] sm:$0xf]
        %v5126 = vld [vmem:[%s5113 + $0x30] sm:$0xf]
        %v5127 = vld [vmem:[%s5113 + $0x34] sm:$0xf]
        %v5128 = vld [vmem:[%s5113 + $0x38] sm:$0xf]
        %v5129 = vld [vmem:[%s5113 + $0x3c] sm:$0xf]
        %v5167 = vunpack.c.l.b16 %v5076
        %v5168 = vunpack.c.l.b16 %v5077
        %v5169 = vunpack.c.l.b16 %v5078
        %v5170 = vunpack.c.l.b16 %v5079
        %v5171 = vunpack.c.l.b16 %v5080
        %v5172 = vunpack.c.l.b16 %v5081
        %v5173 = vunpack.c.l.b16 %v5082
        %v5174 = vunpack.c.l.b16 %v5083
        %v5175 = vunpack.c.l.b16 %v5084
        %v5176 = vunpack.c.l.b16 %v5085
        %v5177 = vunpack.c.l.b16 %v5086
        %v5178 = vunpack.c.l.b16 %v5087
        %v5179 = vunpack.c.l.b16 %v5088
        %v5180 = vunpack.c.l.b16 %v5089
        %v5181 = vunpack.c.l.b16 %v5090
        %v5182 = vunpack.c.l.b16 %v5091
        %v5183 = vunpack.c.l.b16 %v5092
        %v5184 = vunpack.c.l.b16 %v5093
        %v5185 = vunpack.c.l.b16 %v5094
        %v5186 = vunpack.c.l.b16 %v5095
        %v5187 = vunpack.c.l.b16 %v5096
        %v5188 = vunpack.c.l.b16 %v5097
        %v5189 = vunpack.c.l.b16 %v5098
        %v5190 = vunpack.c.l.b16 %v5099
        %v5191 = vunpack.c.l.b16 %v5100
        %v5192 = vunpack.c.l.b16 %v5101
        %v5193 = vunpack.c.l.b16 %v5102
        %v5194 = vunpack.c.l.b16 %v5103
        %v5195 = vunpack.c.l.b16 %v5104
        %v5196 = vunpack.c.l.b16 %v5105
        %v5197 = vunpack.c.l.b16 %v5106
        %v5198 = vunpack.c.l.b16 %v5107
        %v5199 = vunpack.c.l.b16 %v5108
        %v5200 = vunpack.c.l.b16 %v5109
        %v5201 = vunpack.c.l.b16 %v5110
        %v5202 = vunpack.c.l.b16 %v5111
        %v5203 = vunpack.c.l.b16 %v5112
        %v5204 = vpack.c.b16 %v5168, %v5167
        %v5205 = vpack.c.b16 %v5170, %v5169
        %v5206 = vpack.c.b16 %v5172, %v5171
        %v5207 = vpack.c.b16 %v5174, %v5173
        %v5208 = vpack.c.b16 %v5176, %v5175
        %v5209 = vpack.c.b16 %v5178, %v5177
        %v5210 = vpack.c.b16 %v5180, %v5179
        %v5211 = vpack.c.b16 %v5182, %v5181
        %v5212 = vpack.c.b16 %v5184, %v5183
        %v5213 = vpack.c.b16 %v5186, %v5185
        %v5214 = vpack.c.b16 %v5188, %v5187
        %v5215 = vpack.c.b16 %v5190, %v5189
        %v5216 = vpack.c.b16 %v5192, %v5191
        %v5217 = vpack.c.b16 %v5194, %v5193
        %v5218 = vpack.c.b16 %v5196, %v5195
        %v5219 = vpack.c.b16 %v5198, %v5197
        %v5220 = vpack.c.b16 %v5200, %v5199
        %v5221 = vpack.c.b16 %v5202, %v5201
        %v5222 = vpack.c.b16 %v5203, %v5203
        %v5224 = vshrl.u32 %v5204, 16
        %v5226 = vshll.u32 %v5204, 16
        %v5228 = vrot.slane %v5226, 1
        %v5229 = vor.u32 %v5224, %v5228
        %v5231 = vshll.u32 %v5205, 16
        %v5233 = vrot.slane %v5231, 1
        %v5234 = vsel %vm450, %v5229, %v5233
        %v5235 = vshrl.u32 %v5205, 16
        %v5237 = vor.u32 %v5235, %v5233
        %v5239 = vshll.u32 %v5206, 16
        %v5241 = vrot.slane %v5239, 1
        %v5242 = vsel %vm450, %v5237, %v5241
        %v5243 = vshrl.u32 %v5206, 16
        %v5245 = vor.u32 %v5243, %v5241
        %v5247 = vshll.u32 %v5207, 16
        %v5249 = vrot.slane %v5247, 1
        %v5250 = vsel %vm450, %v5245, %v5249
        %v5251 = vshrl.u32 %v5207, 16
        %v5253 = vor.u32 %v5251, %v5249
        %v5255 = vshll.u32 %v5208, 16
        %v5257 = vrot.slane %v5255, 1
        %v5258 = vsel %vm450, %v5253, %v5257
        %v5259 = vshrl.u32 %v5208, 16
        %v5261 = vor.u32 %v5259, %v5257
        %v5263 = vshll.u32 %v5209, 16
        %v5265 = vrot.slane %v5263, 1
        %v5266 = vsel %vm450, %v5261, %v5265
        %v5267 = vshrl.u32 %v5209, 16
        %v5269 = vor.u32 %v5267, %v5265
        %v5271 = vshll.u32 %v5210, 16
        %v5273 = vrot.slane %v5271, 1
        %v5274 = vsel %vm450, %v5269, %v5273
        %v5275 = vshrl.u32 %v5210, 16
        %v5277 = vor.u32 %v5275, %v5273
        %v5279 = vshll.u32 %v5211, 16
        %v5281 = vrot.slane %v5279, 1
        %v5282 = vsel %vm450, %v5277, %v5281
        %v5283 = vshrl.u32 %v5211, 16
        %v5285 = vor.u32 %v5283, %v5281
        %v5287 = vshll.u32 %v5212, 16
        %v5289 = vrot.slane %v5287, 1
        %v5290 = vsel %vm450, %v5285, %v5289
        %v5291 = vshrl.u32 %v5212, 16
        %v5293 = vor.u32 %v5291, %v5289
        %v5295 = vshll.u32 %v5213, 16
        %v5297 = vrot.slane %v5295, 1
        %v5298 = vsel %vm450, %v5293, %v5297
        %v5299 = vshrl.u32 %v5213, 16
        %v5301 = vor.u32 %v5299, %v5297
        %v5303 = vshll.u32 %v5214, 16
        %v5305 = vrot.slane %v5303, 1
        %v5306 = vsel %vm450, %v5301, %v5305
        %v5307 = vshrl.u32 %v5214, 16
        %v5309 = vor.u32 %v5307, %v5305
        %v5311 = vshll.u32 %v5215, 16
        %v5313 = vrot.slane %v5311, 1
        %v5314 = vsel %vm450, %v5309, %v5313
        %v5315 = vshrl.u32 %v5215, 16
        %v5317 = vor.u32 %v5315, %v5313
        %v5319 = vshll.u32 %v5216, 16
        %v5321 = vrot.slane %v5319, 1
        %v5322 = vsel %vm450, %v5317, %v5321
        %v5323 = vshrl.u32 %v5216, 16
        %v5325 = vor.u32 %v5323, %v5321
        %v5327 = vshll.u32 %v5217, 16
        %v5329 = vrot.slane %v5327, 1
        %v5330 = vsel %vm450, %v5325, %v5329
        %v5331 = vshrl.u32 %v5217, 16
        %v5333 = vor.u32 %v5331, %v5329
        %v5335 = vshll.u32 %v5218, 16
        %v5337 = vrot.slane %v5335, 1
        %v5338 = vsel %vm450, %v5333, %v5337
        %v5339 = vshrl.u32 %v5218, 16
        %v5341 = vor.u32 %v5339, %v5337
        %v5343 = vshll.u32 %v5219, 16
        %v5345 = vrot.slane %v5343, 1
        %v5346 = vsel %vm450, %v5341, %v5345
        %v5347 = vshrl.u32 %v5219, 16
        %v5349 = vor.u32 %v5347, %v5345
        %v5351 = vshll.u32 %v5220, 16
        %v5353 = vrot.slane %v5351, 1
        %v5354 = vsel %vm450, %v5349, %v5353
        %v5355 = vshrl.u32 %v5220, 16
        %v5357 = vor.u32 %v5355, %v5353
        %v5359 = vshll.u32 %v5221, 16
        %v5361 = vrot.slane %v5359, 1
        %v5362 = vsel %vm450, %v5357, %v5361
        %v5363 = vshrl.u32 %v5221, 16
        %v5365 = vor.u32 %v5363, %v5361
        %v5367 = vshll.u32 %v5222, 16
        %v5369 = vrot.slane %v5367, 1
        %v5370 = vsel %vm450, %v5365, %v5369
        %v5405 = vunpack.c.l.b16 %v5114
        %v5406 = vunpack.c.l.b16 %v5115
        %v5407 = vunpack.c.l.b16 %v5116
        %v5408 = vunpack.c.l.b16 %v5117
        %v5409 = vunpack.c.l.b16 %v5118
        %v5410 = vunpack.c.l.b16 %v5119
        %v5411 = vunpack.c.l.b16 %v5120
        %v5412 = vunpack.c.l.b16 %v5121
        %v5413 = vunpack.c.l.b16 %v5122
        %v5414 = vunpack.c.l.b16 %v5123
        %v5415 = vunpack.c.l.b16 %v5124
        %v5416 = vunpack.c.l.b16 %v5125
        %v5417 = vunpack.c.l.b16 %v5126
        %v5418 = vunpack.c.l.b16 %v5127
        %v5419 = vunpack.c.l.b16 %v5128
        %v5420 = vunpack.c.l.b16 %v5129
        %v5421 = vpack.c.b16 %v5406, %v5405
        %v5422 = vpack.c.b16 %v5408, %v5407
        %v5423 = vpack.c.b16 %v5410, %v5409
        %v5424 = vpack.c.b16 %v5412, %v5411
        %v5425 = vpack.c.b16 %v5414, %v5413
        %v5426 = vpack.c.b16 %v5416, %v5415
        %v5427 = vpack.c.b16 %v5418, %v5417
        %v5428 = vpack.c.b16 %v5420, %v5419
        %5437 = vmatpush.bf16.msra.mxu0 %v5428
        %5438 = vmatpush.bf16.msra.mxu0 %v5427
        %5439 = vmatpush.bf16.msra.mxu0 %v5426
        %5440 = vmatpush.bf16.msra.mxu0 %v5425
        %5441 = vmatpush.bf16.msra.mxu0 %v5424
        %5442 = vmatpush.bf16.msra.mxu0 %v5423
        %5443 = vmatpush.bf16.msra.mxu0 %v5422
        %5444 = vmatpush.bf16.msra.mxu0 %v5421
        %5445 = vmatmul.bf16.gmra.mxu0 %v5234
        %v5446 = vpop.f32.mrf.mxu0
        %v5447 = vadd.f32 0.0, %v5446
        %v5448 = vpop.f32.mrf.mxu0
        %v5449 = vadd.f32 0.0, %v5448
        %5450 = vmatmul.bf16.gmra.mxu0 %v5242
        %v5451 = vpop.f32.mrf.mxu0
        %v5452 = vadd.f32 0.0, %v5451
        %v5453 = vpop.f32.mrf.mxu0
        %v5454 = vadd.f32 0.0, %v5453
        %5455 = vmatmul.bf16.gmra.mxu0 %v5250
        %v5456 = vpop.f32.mrf.mxu0
        %v5457 = vadd.f32 0.0, %v5456
        %v5458 = vpop.f32.mrf.mxu0
        %v5459 = vadd.f32 0.0, %v5458
        %5460 = vmatmul.bf16.gmra.mxu0 %v5258
        %v5461 = vpop.f32.mrf.mxu0
        %v5462 = vadd.f32 0.0, %v5461
        %v5463 = vpop.f32.mrf.mxu0
        %v5464 = vadd.f32 0.0, %v5463
        %5465 = vmatmul.bf16.gmra.mxu0 %v5266
        %v5466 = vpop.f32.mrf.mxu0
        %v5467 = vadd.f32 0.0, %v5466
        %v5468 = vpop.f32.mrf.mxu0
        %v5469 = vadd.f32 0.0, %v5468
        %5470 = vmatmul.bf16.gmra.mxu0 %v5274
        %v5471 = vpop.f32.mrf.mxu0
        %v5472 = vadd.f32 0.0, %v5471
        %v5473 = vpop.f32.mrf.mxu0
        %v5474 = vadd.f32 0.0, %v5473
        %5475 = vmatmul.bf16.gmra.mxu0 %v5282
        %v5476 = vpop.f32.mrf.mxu0
        %v5477 = vadd.f32 0.0, %v5476
        %v5478 = vpop.f32.mrf.mxu0
        %v5479 = vadd.f32 0.0, %v5478
        %5480 = vmatmul.bf16.gmra.mxu0 %v5290
        %v5481 = vpop.f32.mrf.mxu0
        %v5482 = vadd.f32 0.0, %v5481
        %v5483 = vpop.f32.mrf.mxu0
        %v5484 = vadd.f32 0.0, %v5483
        %5485 = vmatmul.bf16.gmra.mxu0 %v5298
        %v5486 = vpop.f32.mrf.mxu0
        %v5487 = vadd.f32 0.0, %v5486
        %v5488 = vpop.f32.mrf.mxu0
        %v5489 = vadd.f32 0.0, %v5488
        %5490 = vmatmul.bf16.gmra.mxu0 %v5306
        %v5491 = vpop.f32.mrf.mxu0
        %v5492 = vadd.f32 0.0, %v5491
        %v5493 = vpop.f32.mrf.mxu0
        %v5494 = vadd.f32 0.0, %v5493
        %5495 = vmatmul.bf16.gmra.mxu0 %v5314
        %v5496 = vpop.f32.mrf.mxu0
        %v5497 = vadd.f32 0.0, %v5496
        %v5498 = vpop.f32.mrf.mxu0
        %v5499 = vadd.f32 0.0, %v5498
        %5500 = vmatmul.bf16.gmra.mxu0 %v5322
        %v5501 = vpop.f32.mrf.mxu0
        %v5502 = vadd.f32 0.0, %v5501
        %v5503 = vpop.f32.mrf.mxu0
        %v5504 = vadd.f32 0.0, %v5503
        %5505 = vmatmul.bf16.gmra.mxu0 %v5330
        %v5506 = vpop.f32.mrf.mxu0
        %v5507 = vadd.f32 0.0, %v5506
        %v5508 = vpop.f32.mrf.mxu0
        %v5509 = vadd.f32 0.0, %v5508
        %5510 = vmatmul.bf16.gmra.mxu0 %v5338
        %v5511 = vpop.f32.mrf.mxu0
        %v5512 = vadd.f32 0.0, %v5511
        %v5513 = vpop.f32.mrf.mxu0
        %v5514 = vadd.f32 0.0, %v5513
        %5515 = vmatmul.bf16.gmra.mxu0 %v5346
        %v5516 = vpop.f32.mrf.mxu0
        %v5517 = vadd.f32 0.0, %v5516
        %v5518 = vpop.f32.mrf.mxu0
        %v5519 = vadd.f32 0.0, %v5518
        %5520 = vmatmul.bf16.gmra.mxu0 %v5354
        %v5521 = vpop.f32.mrf.mxu0
        %v5522 = vadd.f32 0.0, %v5521
        %v5523 = vpop.f32.mrf.mxu0
        %v5524 = vadd.f32 0.0, %v5523
        %5525 = vmatmul.bf16.gmra.mxu0 %v5362
        %v5526 = vpop.f32.mrf.mxu0
        %v5527 = vadd.f32 0.0, %v5526
        %v5528 = vpop.f32.mrf.mxu0
        %v5529 = vadd.f32 0.0, %v5528
        %5530 = vmatmul.bf16.gmra.mxu0 %v5370
        %v5531 = vpop.f32.mrf.mxu0
        %v5532 = vadd.f32 0.0, %v5531
        %v5533 = vpop.f32.mrf.mxu0
        %v5534 = vadd.f32 0.0, %v5533
        %5535 = vdwg.mxu0
        %v5536 = vadd.f32 %v5040, %v5447
        %v5537 = vadd.f32 %v5041, %v5449
        %v5538 = vadd.f32 %v5042, %v5452
        %v5539 = vadd.f32 %v5043, %v5454
        %v5540 = vadd.f32 %v5044, %v5457
        %v5541 = vadd.f32 %v5045, %v5459
        %v5542 = vadd.f32 %v5046, %v5462
        %v5543 = vadd.f32 %v5047, %v5464
        %v5544 = vadd.f32 %v5048, %v5467
        %v5545 = vadd.f32 %v5049, %v5469
        %v5546 = vadd.f32 %v5050, %v5472
        %v5547 = vadd.f32 %v5051, %v5474
        %v5548 = vadd.f32 %v5052, %v5477
        %v5549 = vadd.f32 %v5053, %v5479
        %v5550 = vadd.f32 %v5054, %v5482
        %v5551 = vadd.f32 %v5055, %v5484
        %v5552 = vadd.f32 %v5056, %v5487
        %v5553 = vadd.f32 %v5057, %v5489
        %v5554 = vadd.f32 %v5058, %v5492
        %v5555 = vadd.f32 %v5059, %v5494
        %v5556 = vadd.f32 %v5060, %v5497
        %v5557 = vadd.f32 %v5061, %v5499
        %v5558 = vadd.f32 %v5062, %v5502
        %v5559 = vadd.f32 %v5063, %v5504
        %v5560 = vadd.f32 %v5064, %v5507
        %v5561 = vadd.f32 %v5065, %v5509
        %v5562 = vadd.f32 %v5066, %v5512
        %v5563 = vadd.f32 %v5067, %v5514
        %v5564 = vadd.f32 %v5068, %v5517
        %v5565 = vadd.f32 %v5069, %v5519
        %v5566 = vadd.f32 %v5070, %v5522
        %v5567 = vadd.f32 %v5071, %v5524
        %v5568 = vadd.f32 %v5072, %v5527
        %v5569 = vadd.f32 %v5073, %v5529
        %v5570 = vadd.f32 %v5074, %v5532
        %v5571 = vadd.f32 %v5075, %v5534
        %v5572 = vld [vmem:[#allocation2 + $0xc] sm:$0xe]
        %s5573 = scalar_lea.vmem [#allocation3], 256
        %v5574 = vld [vmem:[%s5573] sm:$0xf]
        %v5575 = vld [vmem:[%s5573 + $0x4] sm:$0xf]
        %v5576 = vld [vmem:[%s5573 + $0x8] sm:$0xf]
        %v5577 = vld [vmem:[%s5573 + $0xc] sm:$0xf]
        %v5578 = vld [vmem:[%s5573 + $0x10] sm:$0xf]
        %v5579 = vld [vmem:[%s5573 + $0x14] sm:$0xf]
        %v5580 = vld [vmem:[%s5573 + $0x18] sm:$0xf]
        %v5581 = vld [vmem:[%s5573 + $0x1c] sm:$0xf]
        %v5582 = vld [vmem:[%s5573 + $0x20] sm:$0xf]
        %v5583 = vld [vmem:[%s5573 + $0x24] sm:$0xf]
        %v5584 = vld [vmem:[%s5573 + $0x28] sm:$0xf]
        %v5585 = vld [vmem:[%s5573 + $0x2c] sm:$0xf]
        %v5586 = vld [vmem:[%s5573 + $0x30] sm:$0xf]
        %v5587 = vld [vmem:[%s5573 + $0x34] sm:$0xf]
        %v5588 = vld [vmem:[%s5573 + $0x38] sm:$0xf]
        %v5589 = vld [vmem:[%s5573 + $0x3c] sm:$0xf]
        %v5591 = vunpack.c.l.b16 %v5572
        %v5592 = vpack.c.b16 %v5168, %v5591
        %v5593 = vrot.slane %v5592, 1
        %v5594 = vrot.slane %v5205, 1
        %v5595 = vsel %vm1006, %v5593, %v5594
        %v5596 = vrot.slane %v5206, 1
        %v5597 = vsel %vm1006, %v5594, %v5596
        %v5598 = vrot.slane %v5207, 1
        %v5599 = vsel %vm1006, %v5596, %v5598
        %v5600 = vrot.slane %v5208, 1
        %v5601 = vsel %vm1006, %v5598, %v5600
        %v5602 = vrot.slane %v5209, 1
        %v5603 = vsel %vm1006, %v5600, %v5602
        %v5604 = vrot.slane %v5210, 1
        %v5605 = vsel %vm1006, %v5602, %v5604
        %v5606 = vrot.slane %v5211, 1
        %v5607 = vsel %vm1006, %v5604, %v5606
        %v5608 = vrot.slane %v5212, 1
        %v5609 = vsel %vm1006, %v5606, %v5608
        %v5610 = vrot.slane %v5213, 1
        %v5611 = vsel %vm1006, %v5608, %v5610
        %v5612 = vrot.slane %v5214, 1
        %v5613 = vsel %vm1006, %v5610, %v5612
        %v5614 = vrot.slane %v5215, 1
        %v5615 = vsel %vm1006, %v5612, %v5614
        %v5616 = vrot.slane %v5216, 1
        %v5617 = vsel %vm1006, %v5614, %v5616
        %v5618 = vrot.slane %v5217, 1
        %v5619 = vsel %vm1006, %v5616, %v5618
        %v5620 = vrot.slane %v5218, 1
        %v5621 = vsel %vm1006, %v5618, %v5620
        %v5622 = vrot.slane %v5219, 1
        %v5623 = vsel %vm1006, %v5620, %v5622
        %v5624 = vrot.slane %v5220, 1
        %v5625 = vsel %vm1006, %v5622, %v5624
        %v5626 = vrot.slane %v5221, 1
        %v5627 = vsel %vm1006, %v5624, %v5626
        %v5628 = vrot.slane %v5222, 1
        %v5629 = vsel %vm1006, %v5626, %v5628
        %v5664 = vunpack.c.l.b16 %v5574
        %v5665 = vunpack.c.l.b16 %v5575
        %v5666 = vunpack.c.l.b16 %v5576
        %v5667 = vunpack.c.l.b16 %v5577
        %v5668 = vunpack.c.l.b16 %v5578
        %v5669 = vunpack.c.l.b16 %v5579
        %v5670 = vunpack.c.l.b16 %v5580
        %v5671 = vunpack.c.l.b16 %v5581
        %v5672 = vunpack.c.l.b16 %v5582
        %v5673 = vunpack.c.l.b16 %v5583
        %v5674 = vunpack.c.l.b16 %v5584
        %v5675 = vunpack.c.l.b16 %v5585
        %v5676 = vunpack.c.l.b16 %v5586
        %v5677 = vunpack.c.l.b16 %v5587
        %v5678 = vunpack.c.l.b16 %v5588
        %v5679 = vunpack.c.l.b16 %v5589
        %v5680 = vpack.c.b16 %v5665, %v5664
        %v5681 = vpack.c.b16 %v5667, %v5666
        %v5682 = vpack.c.b16 %v5669, %v5668
        %v5683 = vpack.c.b16 %v5671, %v5670
        %v5684 = vpack.c.b16 %v5673, %v5672
        %v5685 = vpack.c.b16 %v5675, %v5674
        %v5686 = vpack.c.b16 %v5677, %v5676
        %v5687 = vpack.c.b16 %v5679, %v5678
        %5696 = vmatpush.bf16.msra.mxu0 %v5687
        %5697 = vmatpush.bf16.msra.mxu0 %v5686
        %5698 = vmatpush.bf16.msra.mxu0 %v5685
        %5699 = vmatpush.bf16.msra.mxu0 %v5684
        %5700 = vmatpush.bf16.msra.mxu0 %v5683
        %5701 = vmatpush.bf16.msra.mxu0 %v5682
        %5702 = vmatpush.bf16.msra.mxu0 %v5681
        %5703 = vmatpush.bf16.msra.mxu0 %v5680
        %5704 = vmatmul.bf16.gmra.mxu0 %v5595
        %v5705 = vpop.f32.mrf.mxu0
        %v5706 = vadd.f32 0.0, %v5705
        %v5707 = vpop.f32.mrf.mxu0
        %v5708 = vadd.f32 0.0, %v5707
        %5709 = vmatmul.bf16.gmra.mxu0 %v5597
        %v5710 = vpop.f32.mrf.mxu0
        %v5711 = vadd.f32 0.0, %v5710
        %v5712 = vpop.f32.mrf.mxu0
        %v5713 = vadd.f32 0.0, %v5712
        %5714 = vmatmul.bf16.gmra.mxu0 %v5599
        %v5715 = vpop.f32.mrf.mxu0
        %v5716 = vadd.f32 0.0, %v5715
        %v5717 = vpop.f32.mrf.mxu0
        %v5718 = vadd.f32 0.0, %v5717
        %5719 = vmatmul.bf16.gmra.mxu0 %v5601
        %v5720 = vpop.f32.mrf.mxu0
        %v5721 = vadd.f32 0.0, %v5720
        %v5722 = vpop.f32.mrf.mxu0
        %v5723 = vadd.f32 0.0, %v5722
        %5724 = vmatmul.bf16.gmra.mxu0 %v5603
        %v5725 = vpop.f32.mrf.mxu0
        %v5726 = vadd.f32 0.0, %v5725
        %v5727 = vpop.f32.mrf.mxu0
        %v5728 = vadd.f32 0.0, %v5727
        %5729 = vmatmul.bf16.gmra.mxu0 %v5605
        %v5730 = vpop.f32.mrf.mxu0
        %v5731 = vadd.f32 0.0, %v5730
        %v5732 = vpop.f32.mrf.mxu0
        %v5733 = vadd.f32 0.0, %v5732
        %5734 = vmatmul.bf16.gmra.mxu0 %v5607
        %v5735 = vpop.f32.mrf.mxu0
        %v5736 = vadd.f32 0.0, %v5735
        %v5737 = vpop.f32.mrf.mxu0
        %v5738 = vadd.f32 0.0, %v5737
        %5739 = vmatmul.bf16.gmra.mxu0 %v5609
        %v5740 = vpop.f32.mrf.mxu0
        %v5741 = vadd.f32 0.0, %v5740
        %v5742 = vpop.f32.mrf.mxu0
        %v5743 = vadd.f32 0.0, %v5742
        %5744 = vmatmul.bf16.gmra.mxu0 %v5611
        %v5745 = vpop.f32.mrf.mxu0
        %v5746 = vadd.f32 0.0, %v5745
        %v5747 = vpop.f32.mrf.mxu0
        %v5748 = vadd.f32 0.0, %v5747
        %5749 = vmatmul.bf16.gmra.mxu0 %v5613
        %v5750 = vpop.f32.mrf.mxu0
        %v5751 = vadd.f32 0.0, %v5750
        %v5752 = vpop.f32.mrf.mxu0
        %v5753 = vadd.f32 0.0, %v5752
        %5754 = vmatmul.bf16.gmra.mxu0 %v5615
        %v5755 = vpop.f32.mrf.mxu0
        %v5756 = vadd.f32 0.0, %v5755
        %v5757 = vpop.f32.mrf.mxu0
        %v5758 = vadd.f32 0.0, %v5757
        %5759 = vmatmul.bf16.gmra.mxu0 %v5617
        %v5760 = vpop.f32.mrf.mxu0
        %v5761 = vadd.f32 0.0, %v5760
        %v5762 = vpop.f32.mrf.mxu0
        %v5763 = vadd.f32 0.0, %v5762
        %5764 = vmatmul.bf16.gmra.mxu0 %v5619
        %v5765 = vpop.f32.mrf.mxu0
        %v5766 = vadd.f32 0.0, %v5765
        %v5767 = vpop.f32.mrf.mxu0
        %v5768 = vadd.f32 0.0, %v5767
        %5769 = vmatmul.bf16.gmra.mxu0 %v5621
        %v5770 = vpop.f32.mrf.mxu0
        %v5771 = vadd.f32 0.0, %v5770
        %v5772 = vpop.f32.mrf.mxu0
        %v5773 = vadd.f32 0.0, %v5772
        %5774 = vmatmul.bf16.gmra.mxu0 %v5623
        %v5775 = vpop.f32.mrf.mxu0
        %v5776 = vadd.f32 0.0, %v5775
        %v5777 = vpop.f32.mrf.mxu0
        %v5778 = vadd.f32 0.0, %v5777
        %5779 = vmatmul.bf16.gmra.mxu0 %v5625
        %v5780 = vpop.f32.mrf.mxu0
        %v5781 = vadd.f32 0.0, %v5780
        %v5782 = vpop.f32.mrf.mxu0
        %v5783 = vadd.f32 0.0, %v5782
        %5784 = vmatmul.bf16.gmra.mxu0 %v5627
        %v5785 = vpop.f32.mrf.mxu0
        %v5786 = vadd.f32 0.0, %v5785
        %v5787 = vpop.f32.mrf.mxu0
        %v5788 = vadd.f32 0.0, %v5787
        %5789 = vmatmul.bf16.gmra.mxu0 %v5629
        %v5790 = vpop.f32.mrf.mxu0
        %v5791 = vadd.f32 0.0, %v5790
        %v5792 = vpop.f32.mrf.mxu0
        %v5793 = vadd.f32 0.0, %v5792
        %5794 = vdwg.mxu0
        %v5795 = vadd.f32 %v5536, %v5706
        %v5796 = vadd.f32 %v5537, %v5708
        %v5797 = vadd.f32 %v5538, %v5711
        %v5798 = vadd.f32 %v5539, %v5713
        %v5799 = vadd.f32 %v5540, %v5716
        %v5800 = vadd.f32 %v5541, %v5718
        %v5801 = vadd.f32 %v5542, %v5721
        %v5802 = vadd.f32 %v5543, %v5723
        %v5803 = vadd.f32 %v5544, %v5726
        %v5804 = vadd.f32 %v5545, %v5728
        %v5805 = vadd.f32 %v5546, %v5731
        %v5806 = vadd.f32 %v5547, %v5733
        %v5807 = vadd.f32 %v5548, %v5736
        %v5808 = vadd.f32 %v5549, %v5738
        %v5809 = vadd.f32 %v5550, %v5741
        %v5810 = vadd.f32 %v5551, %v5743
        %v5811 = vadd.f32 %v5552, %v5746
        %v5812 = vadd.f32 %v5553, %v5748
        %v5813 = vadd.f32 %v5554, %v5751
        %v5814 = vadd.f32 %v5555, %v5753
        %v5815 = vadd.f32 %v5556, %v5756
        %v5816 = vadd.f32 %v5557, %v5758
        %v5817 = vadd.f32 %v5558, %v5761
        %v5818 = vadd.f32 %v5559, %v5763
        %v5819 = vadd.f32 %v5560, %v5766
        %v5820 = vadd.f32 %v5561, %v5768
        %v5821 = vadd.f32 %v5562, %v5771
        %v5822 = vadd.f32 %v5563, %v5773
        %v5823 = vadd.f32 %v5564, %v5776
        %v5824 = vadd.f32 %v5565, %v5778
        %v5825 = vadd.f32 %v5566, %v5781
        %v5826 = vadd.f32 %v5567, %v5783
        %v5827 = vadd.f32 %v5568, %v5786
        %v5828 = vadd.f32 %v5569, %v5788
        %v5829 = vadd.f32 %v5570, %v5791
        %v5830 = vadd.f32 %v5571, %v5793
        %v5831 = vld [vmem:[#allocation2 + $0x9c] sm:$0x3]
        %s5832 = scalar_lea.vmem [#allocation3], 320
        %v5833 = vld [vmem:[%s5832] sm:$0xf]
        %v5834 = vld [vmem:[%s5832 + $0x4] sm:$0xf]
        %v5835 = vld [vmem:[%s5832 + $0x8] sm:$0xf]
        %v5836 = vld [vmem:[%s5832 + $0xc] sm:$0xf]
        %v5837 = vld [vmem:[%s5832 + $0x10] sm:$0xf]
        %v5838 = vld [vmem:[%s5832 + $0x14] sm:$0xf]
        %v5839 = vld [vmem:[%s5832 + $0x18] sm:$0xf]
        %v5840 = vld [vmem:[%s5832 + $0x1c] sm:$0xf]
        %v5841 = vld [vmem:[%s5832 + $0x20] sm:$0xf]
        %v5842 = vld [vmem:[%s5832 + $0x24] sm:$0xf]
        %v5843 = vld [vmem:[%s5832 + $0x28] sm:$0xf]
        %v5844 = vld [vmem:[%s5832 + $0x2c] sm:$0xf]
        %v5845 = vld [vmem:[%s5832 + $0x30] sm:$0xf]
        %v5846 = vld [vmem:[%s5832 + $0x34] sm:$0xf]
        %v5847 = vld [vmem:[%s5832 + $0x38] sm:$0xf]
        %v5848 = vld [vmem:[%s5832 + $0x3c] sm:$0xf]
        %v5850 = vunpack.c.l.b16 %v5831
        %v5851 = vpack.c.b16 %v5850, %v5850
        %v5853 = vshrl.u32 %v5592, 16
        %v5855 = vrot.slane %v5853, 1
        %v5856 = vshll.u32 %v5592, 16
        %v5858 = vrot.slane %v5856, 2
        %v5859 = vor.u32 %v5855, %v5858
        %v5860 = vrot.slane %v5235, 1
        %v5861 = vrot.slane %v5231, 2
        %v5862 = vor.u32 %v5860, %v5861
        %v5863 = vsel %vm1717, %v5859, %v5862
        %v5864 = vrot.slane %v5243, 1
        %v5865 = vrot.slane %v5239, 2
        %v5866 = vor.u32 %v5864, %v5865
        %v5867 = vsel %vm1717, %v5862, %v5866
        %v5868 = vrot.slane %v5251, 1
        %v5869 = vrot.slane %v5247, 2
        %v5870 = vor.u32 %v5868, %v5869
        %v5871 = vsel %vm1717, %v5866, %v5870
        %v5872 = vrot.slane %v5259, 1
        %v5873 = vrot.slane %v5255, 2
        %v5874 = vor.u32 %v5872, %v5873
        %v5875 = vsel %vm1717, %v5870, %v5874
        %v5876 = vrot.slane %v5267, 1
        %v5877 = vrot.slane %v5263, 2
        %v5878 = vor.u32 %v5876, %v5877
        %v5879 = vsel %vm1717, %v5874, %v5878
        %v5880 = vrot.slane %v5275, 1
        %v5881 = vrot.slane %v5271, 2
        %v5882 = vor.u32 %v5880, %v5881
        %v5883 = vsel %vm1717, %v5878, %v5882
        %v5884 = vrot.slane %v5283, 1
        %v5885 = vrot.slane %v5279, 2
        %v5886 = vor.u32 %v5884, %v5885
        %v5887 = vsel %vm1717, %v5882, %v5886
        %v5888 = vrot.slane %v5291, 1
        %v5889 = vrot.slane %v5287, 2
        %v5890 = vor.u32 %v5888, %v5889
        %v5891 = vsel %vm1717, %v5886, %v5890
        %v5892 = vrot.slane %v5299, 1
        %v5893 = vrot.slane %v5295, 2
        %v5894 = vor.u32 %v5892, %v5893
        %v5895 = vsel %vm1717, %v5890, %v5894
        %v5896 = vrot.slane %v5307, 1
        %v5897 = vrot.slane %v5303, 2
        %v5898 = vor.u32 %v5896, %v5897
        %v5899 = vsel %vm1717, %v5894, %v5898
        %v5900 = vrot.slane %v5315, 1
        %v5901 = vrot.slane %v5311, 2
        %v5902 = vor.u32 %v5900, %v5901
        %v5903 = vsel %vm1717, %v5898, %v5902
        %v5904 = vrot.slane %v5323, 1
        %v5905 = vrot.slane %v5319, 2
        %v5906 = vor.u32 %v5904, %v5905
        %v5907 = vsel %vm1717, %v5902, %v5906
        %v5908 = vrot.slane %v5331, 1
        %v5909 = vrot.slane %v5327, 2
        %v5910 = vor.u32 %v5908, %v5909
        %v5911 = vsel %vm1717, %v5906, %v5910
        %v5912 = vrot.slane %v5339, 1
        %v5913 = vrot.slane %v5335, 2
        %v5914 = vor.u32 %v5912, %v5913
        %v5915 = vsel %vm1717, %v5910, %v5914
        %v5916 = vrot.slane %v5347, 1
        %v5917 = vrot.slane %v5343, 2
        %v5918 = vor.u32 %v5916, %v5917
        %v5919 = vsel %vm1717, %v5914, %v5918
        %v5920 = vrot.slane %v5355, 1
        %v5921 = vrot.slane %v5351, 2
        %v5922 = vor.u32 %v5920, %v5921
        %v5923 = vsel %vm1717, %v5918, %v5922
        %v5924 = vrot.slane %v5363, 1
        %v5925 = vrot.slane %v5359, 2
        %v5926 = vor.u32 %v5924, %v5925
        %v5927 = vsel %vm1717, %v5922, %v5926
        %v5929 = vshrl.u32 %v5851, 16
        %v5931 = vrot.slane %v5929, 1
        %v5932 = vshll.u32 %v5851, 16
        %v5934 = vrot.slane %v5932, 2
        %v5935 = vor.u32 %v5931, %v5934
        %v5936 = vsel %vm1717, %v5926, %v5935
        %v5971 = vunpack.c.l.b16 %v5833
        %v5972 = vunpack.c.l.b16 %v5834
        %v5973 = vunpack.c.l.b16 %v5835
        %v5974 = vunpack.c.l.b16 %v5836
        %v5975 = vunpack.c.l.b16 %v5837
        %v5976 = vunpack.c.l.b16 %v5838
        %v5977 = vunpack.c.l.b16 %v5839
        %v5978 = vunpack.c.l.b16 %v5840
        %v5979 = vunpack.c.l.b16 %v5841
        %v5980 = vunpack.c.l.b16 %v5842
        %v5981 = vunpack.c.l.b16 %v5843
        %v5982 = vunpack.c.l.b16 %v5844
        %v5983 = vunpack.c.l.b16 %v5845
        %v5984 = vunpack.c.l.b16 %v5846
        %v5985 = vunpack.c.l.b16 %v5847
        %v5986 = vunpack.c.l.b16 %v5848
        %v5987 = vpack.c.b16 %v5972, %v5971
        %v5988 = vpack.c.b16 %v5974, %v5973
        %v5989 = vpack.c.b16 %v5976, %v5975
        %v5990 = vpack.c.b16 %v5978, %v5977
        %v5991 = vpack.c.b16 %v5980, %v5979
        %v5992 = vpack.c.b16 %v5982, %v5981
        %v5993 = vpack.c.b16 %v5984, %v5983
        %v5994 = vpack.c.b16 %v5986, %v5985
        %6003 = vmatpush.bf16.msra.mxu0 %v5994
        %6004 = vmatpush.bf16.msra.mxu0 %v5993
        %6005 = vmatpush.bf16.msra.mxu0 %v5992
        %6006 = vmatpush.bf16.msra.mxu0 %v5991
        %6007 = vmatpush.bf16.msra.mxu0 %v5990
        %6008 = vmatpush.bf16.msra.mxu0 %v5989
        %6009 = vmatpush.bf16.msra.mxu0 %v5988
        %6010 = vmatpush.bf16.msra.mxu0 %v5987
        %6011 = vmatmul.bf16.gmra.mxu0 %v5863
        %v6012 = vpop.f32.mrf.mxu0
        %v6013 = vadd.f32 0.0, %v6012
        %v6014 = vpop.f32.mrf.mxu0
        %v6015 = vadd.f32 0.0, %v6014
        %6016 = vmatmul.bf16.gmra.mxu0 %v5867
        %v6017 = vpop.f32.mrf.mxu0
        %v6018 = vadd.f32 0.0, %v6017
        %v6019 = vpop.f32.mrf.mxu0
        %v6020 = vadd.f32 0.0, %v6019
        %6021 = vmatmul.bf16.gmra.mxu0 %v5871
        %v6022 = vpop.f32.mrf.mxu0
        %v6023 = vadd.f32 0.0, %v6022
        %v6024 = vpop.f32.mrf.mxu0
        %v6025 = vadd.f32 0.0, %v6024
        %6026 = vmatmul.bf16.gmra.mxu0 %v5875
        %v6027 = vpop.f32.mrf.mxu0
        %v6028 = vadd.f32 0.0, %v6027
        %v6029 = vpop.f32.mrf.mxu0
        %v6030 = vadd.f32 0.0, %v6029
        %6031 = vmatmul.bf16.gmra.mxu0 %v5879
        %v6032 = vpop.f32.mrf.mxu0
        %v6033 = vadd.f32 0.0, %v6032
        %v6034 = vpop.f32.mrf.mxu0
        %v6035 = vadd.f32 0.0, %v6034
        %6036 = vmatmul.bf16.gmra.mxu0 %v5883
        %v6037 = vpop.f32.mrf.mxu0
        %v6038 = vadd.f32 0.0, %v6037
        %v6039 = vpop.f32.mrf.mxu0
        %v6040 = vadd.f32 0.0, %v6039
        %6041 = vmatmul.bf16.gmra.mxu0 %v5887
        %v6042 = vpop.f32.mrf.mxu0
        %v6043 = vadd.f32 0.0, %v6042
        %v6044 = vpop.f32.mrf.mxu0
        %v6045 = vadd.f32 0.0, %v6044
        %6046 = vmatmul.bf16.gmra.mxu0 %v5891
        %v6047 = vpop.f32.mrf.mxu0
        %v6048 = vadd.f32 0.0, %v6047
        %v6049 = vpop.f32.mrf.mxu0
        %v6050 = vadd.f32 0.0, %v6049
        %6051 = vmatmul.bf16.gmra.mxu0 %v5895
        %v6052 = vpop.f32.mrf.mxu0
        %v6053 = vadd.f32 0.0, %v6052
        %v6054 = vpop.f32.mrf.mxu0
        %v6055 = vadd.f32 0.0, %v6054
        %6056 = vmatmul.bf16.gmra.mxu0 %v5899
        %v6057 = vpop.f32.mrf.mxu0
        %v6058 = vadd.f32 0.0, %v6057
        %v6059 = vpop.f32.mrf.mxu0
        %v6060 = vadd.f32 0.0, %v6059
        %6061 = vmatmul.bf16.gmra.mxu0 %v5903
        %v6062 = vpop.f32.mrf.mxu0
        %v6063 = vadd.f32 0.0, %v6062
        %v6064 = vpop.f32.mrf.mxu0
        %v6065 = vadd.f32 0.0, %v6064
        %6066 = vmatmul.bf16.gmra.mxu0 %v5907
        %v6067 = vpop.f32.mrf.mxu0
        %v6068 = vadd.f32 0.0, %v6067
        %v6069 = vpop.f32.mrf.mxu0
        %v6070 = vadd.f32 0.0, %v6069
        %6071 = vmatmul.bf16.gmra.mxu0 %v5911
        %v6072 = vpop.f32.mrf.mxu0
        %v6073 = vadd.f32 0.0, %v6072
        %v6074 = vpop.f32.mrf.mxu0
        %v6075 = vadd.f32 0.0, %v6074
        %6076 = vmatmul.bf16.gmra.mxu0 %v5915
        %v6077 = vpop.f32.mrf.mxu0
        %v6078 = vadd.f32 0.0, %v6077
        %v6079 = vpop.f32.mrf.mxu0
        %v6080 = vadd.f32 0.0, %v6079
        %6081 = vmatmul.bf16.gmra.mxu0 %v5919
        %v6082 = vpop.f32.mrf.mxu0
        %v6083 = vadd.f32 0.0, %v6082
        %v6084 = vpop.f32.mrf.mxu0
        %v6085 = vadd.f32 0.0, %v6084
        %6086 = vmatmul.bf16.gmra.mxu0 %v5923
        %v6087 = vpop.f32.mrf.mxu0
        %v6088 = vadd.f32 0.0, %v6087
        %v6089 = vpop.f32.mrf.mxu0
        %v6090 = vadd.f32 0.0, %v6089
        %6091 = vmatmul.bf16.gmra.mxu0 %v5927
        %v6092 = vpop.f32.mrf.mxu0
        %v6093 = vadd.f32 0.0, %v6092
        %v6094 = vpop.f32.mrf.mxu0
        %v6095 = vadd.f32 0.0, %v6094
        %6096 = vmatmul.bf16.gmra.mxu0 %v5936
        %v6097 = vpop.f32.mrf.mxu0
        %v6098 = vadd.f32 0.0, %v6097
        %v6099 = vpop.f32.mrf.mxu0
        %v6100 = vadd.f32 0.0, %v6099
        %6101 = vdwg.mxu0
        %v6102 = vadd.f32 %v5795, %v6013
        %v6103 = vadd.f32 %v5796, %v6015
        %v6104 = vadd.f32 %v5797, %v6018
        %v6105 = vadd.f32 %v5798, %v6020
        %v6106 = vadd.f32 %v5799, %v6023
        %v6107 = vadd.f32 %v5800, %v6025
        %v6108 = vadd.f32 %v5801, %v6028
        %v6109 = vadd.f32 %v5802, %v6030
        %v6110 = vadd.f32 %v5803, %v6033
        %v6111 = vadd.f32 %v5804, %v6035
        %v6112 = vadd.f32 %v5805, %v6038
        %v6113 = vadd.f32 %v5806, %v6040
        %v6114 = vadd.f32 %v5807, %v6043
        %v6115 = vadd.f32 %v5808, %v6045
        %v6116 = vadd.f32 %v5809, %v6048
        %v6117 = vadd.f32 %v5810, %v6050
        %v6118 = vadd.f32 %v5811, %v6053
        %v6119 = vadd.f32 %v5812, %v6055
        %v6120 = vadd.f32 %v5813, %v6058
        %v6121 = vadd.f32 %v5814, %v6060
        %v6122 = vadd.f32 %v5815, %v6063
        %v6123 = vadd.f32 %v5816, %v6065
        %v6124 = vadd.f32 %v5817, %v6068
        %v6125 = vadd.f32 %v5818, %v6070
        %v6126 = vadd.f32 %v5819, %v6073
        %v6127 = vadd.f32 %v5820, %v6075
        %v6128 = vadd.f32 %v5821, %v6078
        %v6129 = vadd.f32 %v5822, %v6080
        %v6130 = vadd.f32 %v5823, %v6083
        %v6131 = vadd.f32 %v5824, %v6085
        %v6132 = vadd.f32 %v5825, %v6088
        %v6133 = vadd.f32 %v5826, %v6090
        %v6134 = vadd.f32 %v5827, %v6093
        %v6135 = vadd.f32 %v5828, %v6095
        %v6136 = vadd.f32 %v5829, %v6098
        %v6137 = vadd.f32 %v5830, %v6100
        %v6138 = vld [vmem:[#allocation2 + $0x14] sm:$0xe]
        %v6139 = vld [vmem:[#allocation2 + $0x18] sm:$0xf]
        %v6140 = vld [vmem:[#allocation2 + $0x1c] sm:$0xf]
        %v6141 = vld [vmem:[#allocation2 + $0x20] sm:$0xf]
        %v6142 = vld [vmem:[#allocation2 + $0x24] sm:$0xf]
        %v6143 = vld [vmem:[#allocation2 + $0x28] sm:$0xf]
        %v6144 = vld [vmem:[#allocation2 + $0x2c] sm:$0xf]
        %v6145 = vld [vmem:[#allocation2 + $0x30] sm:$0xf]
        %v6146 = vld [vmem:[#allocation2 + $0x34] sm:$0xf]
        %v6147 = vld [vmem:[#allocation2 + $0x38] sm:$0xf]
        %v6148 = vld [vmem:[#allocation2 + $0x3c] sm:$0xf]
        %v6149 = vld [vmem:[#allocation2 + $0x40] sm:$0xf]
        %v6150 = vld [vmem:[#allocation2 + $0x44] sm:$0xf]
        %v6151 = vld [vmem:[#allocation2 + $0x48] sm:$0xf]
        %v6152 = vld [vmem:[#allocation2 + $0x4c] sm:$0xf]
        %v6153 = vld [vmem:[#allocation2 + $0x50] sm:$0xf]
        %v6154 = vld [vmem:[#allocation2 + $0x54] sm:$0xf]
        %v6155 = vld [vmem:[#allocation2 + $0x58] sm:$0xf]
        %v6156 = vld [vmem:[#allocation2 + $0x5c] sm:$0xf]
        %v6157 = vld [vmem:[#allocation2 + $0x60] sm:$0xf]
        %v6158 = vld [vmem:[#allocation2 + $0x64] sm:$0xf]
        %v6159 = vld [vmem:[#allocation2 + $0x68] sm:$0xf]
        %v6160 = vld [vmem:[#allocation2 + $0x6c] sm:$0xf]
        %v6161 = vld [vmem:[#allocation2 + $0x70] sm:$0xf]
        %v6162 = vld [vmem:[#allocation2 + $0x74] sm:$0xf]
        %v6163 = vld [vmem:[#allocation2 + $0x78] sm:$0xf]
        %v6164 = vld [vmem:[#allocation2 + $0x7c] sm:$0xf]
        %v6165 = vld [vmem:[#allocation2 + $0x80] sm:$0xf]
        %v6166 = vld [vmem:[#allocation2 + $0x84] sm:$0xf]
        %v6167 = vld [vmem:[#allocation2 + $0x88] sm:$0xf]
        %v6168 = vld [vmem:[#allocation2 + $0x8c] sm:$0xf]
        %v6169 = vld [vmem:[#allocation2 + $0x90] sm:$0xf]
        %v6170 = vld [vmem:[#allocation2 + $0x94] sm:$0xf]
        %v6171 = vld [vmem:[#allocation2 + $0x98] sm:$0xf]
        %v6172 = vld [vmem:[#allocation2 + $0x9c] sm:$0xf]
        %v6173 = vld [vmem:[#allocation2 + $0xa0] sm:$0xf]
        %v6174 = vld [vmem:[#allocation2 + $0xa4] sm:$0x3]
        %s6175 = scalar_lea.vmem [#allocation3], 384
        %v6176 = vld [vmem:[%s6175] sm:$0xf]
        %v6177 = vld [vmem:[%s6175 + $0x4] sm:$0xf]
        %v6178 = vld [vmem:[%s6175 + $0x8] sm:$0xf]
        %v6179 = vld [vmem:[%s6175 + $0xc] sm:$0xf]
        %v6180 = vld [vmem:[%s6175 + $0x10] sm:$0xf]
        %v6181 = vld [vmem:[%s6175 + $0x14] sm:$0xf]
        %v6182 = vld [vmem:[%s6175 + $0x18] sm:$0xf]
        %v6183 = vld [vmem:[%s6175 + $0x1c] sm:$0xf]
        %v6184 = vld [vmem:[%s6175 + $0x20] sm:$0xf]
        %v6185 = vld [vmem:[%s6175 + $0x24] sm:$0xf]
        %v6186 = vld [vmem:[%s6175 + $0x28] sm:$0xf]
        %v6187 = vld [vmem:[%s6175 + $0x2c] sm:$0xf]
        %v6188 = vld [vmem:[%s6175 + $0x30] sm:$0xf]
        %v6189 = vld [vmem:[%s6175 + $0x34] sm:$0xf]
        %v6190 = vld [vmem:[%s6175 + $0x38] sm:$0xf]
        %v6191 = vld [vmem:[%s6175 + $0x3c] sm:$0xf]
        %v6229 = vunpack.c.l.b16 %v6138
        %v6230 = vunpack.c.l.b16 %v6139
        %v6231 = vunpack.c.l.b16 %v6140
        %v6232 = vunpack.c.l.b16 %v6141
        %v6233 = vunpack.c.l.b16 %v6142
        %v6234 = vunpack.c.l.b16 %v6143
        %v6235 = vunpack.c.l.b16 %v6144
        %v6236 = vunpack.c.l.b16 %v6145
        %v6237 = vunpack.c.l.b16 %v6146
        %v6238 = vunpack.c.l.b16 %v6147
        %v6239 = vunpack.c.l.b16 %v6148
        %v6240 = vunpack.c.l.b16 %v6149
        %v6241 = vunpack.c.l.b16 %v6150
        %v6242 = vunpack.c.l.b16 %v6151
        %v6243 = vunpack.c.l.b16 %v6152
        %v6244 = vunpack.c.l.b16 %v6153
        %v6245 = vunpack.c.l.b16 %v6154
        %v6246 = vunpack.c.l.b16 %v6155
        %v6247 = vunpack.c.l.b16 %v6156
        %v6248 = vunpack.c.l.b16 %v6157
        %v6249 = vunpack.c.l.b16 %v6158
        %v6250 = vunpack.c.l.b16 %v6159
        %v6251 = vunpack.c.l.b16 %v6160
        %v6252 = vunpack.c.l.b16 %v6161
        %v6253 = vunpack.c.l.b16 %v6162
        %v6254 = vunpack.c.l.b16 %v6163
        %v6255 = vunpack.c.l.b16 %v6164
        %v6256 = vunpack.c.l.b16 %v6165
        %v6257 = vunpack.c.l.b16 %v6166
        %v6258 = vunpack.c.l.b16 %v6167
        %v6259 = vunpack.c.l.b16 %v6168
        %v6260 = vunpack.c.l.b16 %v6169
        %v6261 = vunpack.c.l.b16 %v6170
        %v6262 = vunpack.c.l.b16 %v6171
        %v6263 = vunpack.c.l.b16 %v6172
        %v6264 = vunpack.c.l.b16 %v6173
        %v6265 = vunpack.c.l.b16 %v6174
        %v6266 = vpack.c.b16 %v6230, %v6229
        %v6267 = vpack.c.b16 %v6232, %v6231
        %v6268 = vpack.c.b16 %v6234, %v6233
        %v6269 = vpack.c.b16 %v6236, %v6235
        %v6270 = vpack.c.b16 %v6238, %v6237
        %v6271 = vpack.c.b16 %v6240, %v6239
        %v6272 = vpack.c.b16 %v6242, %v6241
        %v6273 = vpack.c.b16 %v6244, %v6243
        %v6274 = vpack.c.b16 %v6246, %v6245
        %v6275 = vpack.c.b16 %v6248, %v6247
        %v6276 = vpack.c.b16 %v6250, %v6249
        %v6277 = vpack.c.b16 %v6252, %v6251
        %v6278 = vpack.c.b16 %v6254, %v6253
        %v6279 = vpack.c.b16 %v6256, %v6255
        %v6280 = vpack.c.b16 %v6258, %v6257
        %v6281 = vpack.c.b16 %v6260, %v6259
        %v6282 = vpack.c.b16 %v6262, %v6261
        %v6283 = vpack.c.b16 %v6264, %v6263
        %v6284 = vpack.c.b16 %v6265, %v6265
        %v6286 = vshrl.u32 %v6266, 16
        %v6288 = vrot.slane %v6286, 1
        %v6289 = vshll.u32 %v6266, 16
        %v6291 = vrot.slane %v6289, 2
        %v6292 = vor.u32 %v6288, %v6291
        %v6294 = vshrl.u32 %v6267, 16
        %v6296 = vrot.slane %v6294, 1
        %v6297 = vshll.u32 %v6267, 16
        %v6299 = vrot.slane %v6297, 2
        %v6300 = vor.u32 %v6296, %v6299
        %v6301 = vsel %vm1717, %v6292, %v6300
        %v6303 = vshrl.u32 %v6268, 16
        %v6305 = vrot.slane %v6303, 1
        %v6306 = vshll.u32 %v6268, 16
        %v6308 = vrot.slane %v6306, 2
        %v6309 = vor.u32 %v6305, %v6308
        %v6310 = vsel %vm1717, %v6300, %v6309
        %v6312 = vshrl.u32 %v6269, 16
        %v6314 = vrot.slane %v6312, 1
        %v6315 = vshll.u32 %v6269, 16
        %v6317 = vrot.slane %v6315, 2
        %v6318 = vor.u32 %v6314, %v6317
        %v6319 = vsel %vm1717, %v6309, %v6318
        %v6321 = vshrl.u32 %v6270, 16
        %v6323 = vrot.slane %v6321, 1
        %v6324 = vshll.u32 %v6270, 16
        %v6326 = vrot.slane %v6324, 2
        %v6327 = vor.u32 %v6323, %v6326
        %v6328 = vsel %vm1717, %v6318, %v6327
        %v6330 = vshrl.u32 %v6271, 16
        %v6332 = vrot.slane %v6330, 1
        %v6333 = vshll.u32 %v6271, 16
        %v6335 = vrot.slane %v6333, 2
        %v6336 = vor.u32 %v6332, %v6335
        %v6337 = vsel %vm1717, %v6327, %v6336
        %v6339 = vshrl.u32 %v6272, 16
        %v6341 = vrot.slane %v6339, 1
        %v6342 = vshll.u32 %v6272, 16
        %v6344 = vrot.slane %v6342, 2
        %v6345 = vor.u32 %v6341, %v6344
        %v6346 = vsel %vm1717, %v6336, %v6345
        %v6348 = vshrl.u32 %v6273, 16
        %v6350 = vrot.slane %v6348, 1
        %v6351 = vshll.u32 %v6273, 16
        %v6353 = vrot.slane %v6351, 2
        %v6354 = vor.u32 %v6350, %v6353
        %v6355 = vsel %vm1717, %v6345, %v6354
        %v6357 = vshrl.u32 %v6274, 16
        %v6359 = vrot.slane %v6357, 1
        %v6360 = vshll.u32 %v6274, 16
        %v6362 = vrot.slane %v6360, 2
        %v6363 = vor.u32 %v6359, %v6362
        %v6364 = vsel %vm1717, %v6354, %v6363
        %v6366 = vshrl.u32 %v6275, 16
        %v6368 = vrot.slane %v6366, 1
        %v6369 = vshll.u32 %v6275, 16
        %v6371 = vrot.slane %v6369, 2
        %v6372 = vor.u32 %v6368, %v6371
        %v6373 = vsel %vm1717, %v6363, %v6372
        %v6375 = vshrl.u32 %v6276, 16
        %v6377 = vrot.slane %v6375, 1
        %v6378 = vshll.u32 %v6276, 16
        %v6380 = vrot.slane %v6378, 2
        %v6381 = vor.u32 %v6377, %v6380
        %v6382 = vsel %vm1717, %v6372, %v6381
        %v6384 = vshrl.u32 %v6277, 16
        %v6386 = vrot.slane %v6384, 1
        %v6387 = vshll.u32 %v6277, 16
        %v6389 = vrot.slane %v6387, 2
        %v6390 = vor.u32 %v6386, %v6389
        %v6391 = vsel %vm1717, %v6381, %v6390
        %v6393 = vshrl.u32 %v6278, 16
        %v6395 = vrot.slane %v6393, 1
        %v6396 = vshll.u32 %v6278, 16
        %v6398 = vrot.slane %v6396, 2
        %v6399 = vor.u32 %v6395, %v6398
        %v6400 = vsel %vm1717, %v6390, %v6399
        %v6402 = vshrl.u32 %v6279, 16
        %v6404 = vrot.slane %v6402, 1
        %v6405 = vshll.u32 %v6279, 16
        %v6407 = vrot.slane %v6405, 2
        %v6408 = vor.u32 %v6404, %v6407
        %v6409 = vsel %vm1717, %v6399, %v6408
        %v6411 = vshrl.u32 %v6280, 16
        %v6413 = vrot.slane %v6411, 1
        %v6414 = vshll.u32 %v6280, 16
        %v6416 = vrot.slane %v6414, 2
        %v6417 = vor.u32 %v6413, %v6416
        %v6418 = vsel %vm1717, %v6408, %v6417
        %v6420 = vshrl.u32 %v6281, 16
        %v6422 = vrot.slane %v6420, 1
        %v6423 = vshll.u32 %v6281, 16
        %v6425 = vrot.slane %v6423, 2
        %v6426 = vor.u32 %v6422, %v6425
        %v6427 = vsel %vm1717, %v6417, %v6426
        %v6429 = vshrl.u32 %v6282, 16
        %v6431 = vrot.slane %v6429, 1
        %v6432 = vshll.u32 %v6282, 16
        %v6434 = vrot.slane %v6432, 2
        %v6435 = vor.u32 %v6431, %v6434
        %v6436 = vsel %vm1717, %v6426, %v6435
        %v6438 = vshrl.u32 %v6283, 16
        %v6440 = vrot.slane %v6438, 1
        %v6441 = vshll.u32 %v6283, 16
        %v6443 = vrot.slane %v6441, 2
        %v6444 = vor.u32 %v6440, %v6443
        %v6445 = vsel %vm1717, %v6435, %v6444
        %v6447 = vshrl.u32 %v6284, 16
        %v6449 = vrot.slane %v6447, 1
        %v6450 = vshll.u32 %v6284, 16
        %v6452 = vrot.slane %v6450, 2
        %v6453 = vor.u32 %v6449, %v6452
        %v6454 = vsel %vm1717, %v6444, %v6453
        %v6489 = vunpack.c.l.b16 %v6176
        %v6490 = vunpack.c.l.b16 %v6177
        %v6491 = vunpack.c.l.b16 %v6178
        %v6492 = vunpack.c.l.b16 %v6179
        %v6493 = vunpack.c.l.b16 %v6180
        %v6494 = vunpack.c.l.b16 %v6181
        %v6495 = vunpack.c.l.b16 %v6182
        %v6496 = vunpack.c.l.b16 %v6183
        %v6497 = vunpack.c.l.b16 %v6184
        %v6498 = vunpack.c.l.b16 %v6185
        %v6499 = vunpack.c.l.b16 %v6186
        %v6500 = vunpack.c.l.b16 %v6187
        %v6501 = vunpack.c.l.b16 %v6188
        %v6502 = vunpack.c.l.b16 %v6189
        %v6503 = vunpack.c.l.b16 %v6190
        %v6504 = vunpack.c.l.b16 %v6191
        %v6505 = vpack.c.b16 %v6490, %v6489
        %v6506 = vpack.c.b16 %v6492, %v6491
        %v6507 = vpack.c.b16 %v6494, %v6493
        %v6508 = vpack.c.b16 %v6496, %v6495
        %v6509 = vpack.c.b16 %v6498, %v6497
        %v6510 = vpack.c.b16 %v6500, %v6499
        %v6511 = vpack.c.b16 %v6502, %v6501
        %v6512 = vpack.c.b16 %v6504, %v6503
        %6521 = vmatpush.bf16.msra.mxu0 %v6512
        %6522 = vmatpush.bf16.msra.mxu0 %v6511
        %6523 = vmatpush.bf16.msra.mxu0 %v6510
        %6524 = vmatpush.bf16.msra.mxu0 %v6509
        %6525 = vmatpush.bf16.msra.mxu0 %v6508
        %6526 = vmatpush.bf16.msra.mxu0 %v6507
        %6527 = vmatpush.bf16.msra.mxu0 %v6506
        %6528 = vmatpush.bf16.msra.mxu0 %v6505
        %6529 = vmatmul.bf16.gmra.mxu0 %v6301
        %v6530 = vpop.f32.mrf.mxu0
        %v6531 = vadd.f32 0.0, %v6530
        %v6532 = vpop.f32.mrf.mxu0
        %v6533 = vadd.f32 0.0, %v6532
        %6534 = vmatmul.bf16.gmra.mxu0 %v6310
        %v6535 = vpop.f32.mrf.mxu0
        %v6536 = vadd.f32 0.0, %v6535
        %v6537 = vpop.f32.mrf.mxu0
        %v6538 = vadd.f32 0.0, %v6537
        %6539 = vmatmul.bf16.gmra.mxu0 %v6319
        %v6540 = vpop.f32.mrf.mxu0
        %v6541 = vadd.f32 0.0, %v6540
        %v6542 = vpop.f32.mrf.mxu0
        %v6543 = vadd.f32 0.0, %v6542
        %6544 = vmatmul.bf16.gmra.mxu0 %v6328
        %v6545 = vpop.f32.mrf.mxu0
        %v6546 = vadd.f32 0.0, %v6545
        %v6547 = vpop.f32.mrf.mxu0
        %v6548 = vadd.f32 0.0, %v6547
        %6549 = vmatmul.bf16.gmra.mxu0 %v6337
        %v6550 = vpop.f32.mrf.mxu0
        %v6551 = vadd.f32 0.0, %v6550
        %v6552 = vpop.f32.mrf.mxu0
        %v6553 = vadd.f32 0.0, %v6552
        %6554 = vmatmul.bf16.gmra.mxu0 %v6346
        %v6555 = vpop.f32.mrf.mxu0
        %v6556 = vadd.f32 0.0, %v6555
        %v6557 = vpop.f32.mrf.mxu0
        %v6558 = vadd.f32 0.0, %v6557
        %6559 = vmatmul.bf16.gmra.mxu0 %v6355
        %v6560 = vpop.f32.mrf.mxu0
        %v6561 = vadd.f32 0.0, %v6560
        %v6562 = vpop.f32.mrf.mxu0
        %v6563 = vadd.f32 0.0, %v6562
        %6564 = vmatmul.bf16.gmra.mxu0 %v6364
        %v6565 = vpop.f32.mrf.mxu0
        %v6566 = vadd.f32 0.0, %v6565
        %v6567 = vpop.f32.mrf.mxu0
        %v6568 = vadd.f32 0.0, %v6567
        %6569 = vmatmul.bf16.gmra.mxu0 %v6373
        %v6570 = vpop.f32.mrf.mxu0
        %v6571 = vadd.f32 0.0, %v6570
        %v6572 = vpop.f32.mrf.mxu0
        %v6573 = vadd.f32 0.0, %v6572
        %6574 = vmatmul.bf16.gmra.mxu0 %v6382
        %v6575 = vpop.f32.mrf.mxu0
        %v6576 = vadd.f32 0.0, %v6575
        %v6577 = vpop.f32.mrf.mxu0
        %v6578 = vadd.f32 0.0, %v6577
        %6579 = vmatmul.bf16.gmra.mxu0 %v6391
        %v6580 = vpop.f32.mrf.mxu0
        %v6581 = vadd.f32 0.0, %v6580
        %v6582 = vpop.f32.mrf.mxu0
        %v6583 = vadd.f32 0.0, %v6582
        %6584 = vmatmul.bf16.gmra.mxu0 %v6400
        %v6585 = vpop.f32.mrf.mxu0
        %v6586 = vadd.f32 0.0, %v6585
        %v6587 = vpop.f32.mrf.mxu0
        %v6588 = vadd.f32 0.0, %v6587
        %6589 = vmatmul.bf16.gmra.mxu0 %v6409
        %v6590 = vpop.f32.mrf.mxu0
        %v6591 = vadd.f32 0.0, %v6590
        %v6592 = vpop.f32.mrf.mxu0
        %v6593 = vadd.f32 0.0, %v6592
        %6594 = vmatmul.bf16.gmra.mxu0 %v6418
        %v6595 = vpop.f32.mrf.mxu0
        %v6596 = vadd.f32 0.0, %v6595
        %v6597 = vpop.f32.mrf.mxu0
        %v6598 = vadd.f32 0.0, %v6597
        %6599 = vmatmul.bf16.gmra.mxu0 %v6427
        %v6600 = vpop.f32.mrf.mxu0
        %v6601 = vadd.f32 0.0, %v6600
        %v6602 = vpop.f32.mrf.mxu0
        %v6603 = vadd.f32 0.0, %v6602
        %6604 = vmatmul.bf16.gmra.mxu0 %v6436
        %v6605 = vpop.f32.mrf.mxu0
        %v6606 = vadd.f32 0.0, %v6605
        %v6607 = vpop.f32.mrf.mxu0
        %v6608 = vadd.f32 0.0, %v6607
        %6609 = vmatmul.bf16.gmra.mxu0 %v6445
        %v6610 = vpop.f32.mrf.mxu0
        %v6611 = vadd.f32 0.0, %v6610
        %v6612 = vpop.f32.mrf.mxu0
        %v6613 = vadd.f32 0.0, %v6612
        %6614 = vmatmul.bf16.gmra.mxu0 %v6454
        %v6615 = vpop.f32.mrf.mxu0
        %v6616 = vadd.f32 0.0, %v6615
        %v6617 = vpop.f32.mrf.mxu0
        %v6618 = vadd.f32 0.0, %v6617
        %6619 = vdwg.mxu0
        %v6620 = vadd.f32 %v6102, %v6531
        %v6621 = vadd.f32 %v6103, %v6533
        %v6622 = vadd.f32 %v6104, %v6536
        %v6623 = vadd.f32 %v6105, %v6538
        %v6624 = vadd.f32 %v6106, %v6541
        %v6625 = vadd.f32 %v6107, %v6543
        %v6626 = vadd.f32 %v6108, %v6546
        %v6627 = vadd.f32 %v6109, %v6548
        %v6628 = vadd.f32 %v6110, %v6551
        %v6629 = vadd.f32 %v6111, %v6553
        %v6630 = vadd.f32 %v6112, %v6556
        %v6631 = vadd.f32 %v6113, %v6558
        %v6632 = vadd.f32 %v6114, %v6561
        %v6633 = vadd.f32 %v6115, %v6563
        %v6634 = vadd.f32 %v6116, %v6566
        %v6635 = vadd.f32 %v6117, %v6568
        %v6636 = vadd.f32 %v6118, %v6571
        %v6637 = vadd.f32 %v6119, %v6573
        %v6638 = vadd.f32 %v6120, %v6576
        %v6639 = vadd.f32 %v6121, %v6578
        %v6640 = vadd.f32 %v6122, %v6581
        %v6641 = vadd.f32 %v6123, %v6583
        %v6642 = vadd.f32 %v6124, %v6586
        %v6643 = vadd.f32 %v6125, %v6588
        %v6644 = vadd.f32 %v6126, %v6591
        %v6645 = vadd.f32 %v6127, %v6593
        %v6646 = vadd.f32 %v6128, %v6596
        %v6647 = vadd.f32 %v6129, %v6598
        %v6648 = vadd.f32 %v6130, %v6601
        %v6649 = vadd.f32 %v6131, %v6603
        %v6650 = vadd.f32 %v6132, %v6606
        %v6651 = vadd.f32 %v6133, %v6608
        %v6652 = vadd.f32 %v6134, %v6611
        %v6653 = vadd.f32 %v6135, %v6613
        %v6654 = vadd.f32 %v6136, %v6616
        %v6655 = vadd.f32 %v6137, %v6618
        %v6656 = vld [vmem:[#allocation2 + $0x14] sm:$0xc]
        %s6657 = scalar_lea.vmem [#allocation3], 448
        %v6658 = vld [vmem:[%s6657] sm:$0xf]
        %v6659 = vld [vmem:[%s6657 + $0x4] sm:$0xf]
        %v6660 = vld [vmem:[%s6657 + $0x8] sm:$0xf]
        %v6661 = vld [vmem:[%s6657 + $0xc] sm:$0xf]
        %v6662 = vld [vmem:[%s6657 + $0x10] sm:$0xf]
        %v6663 = vld [vmem:[%s6657 + $0x14] sm:$0xf]
        %v6664 = vld [vmem:[%s6657 + $0x18] sm:$0xf]
        %v6665 = vld [vmem:[%s6657 + $0x1c] sm:$0xf]
        %v6666 = vld [vmem:[%s6657 + $0x20] sm:$0xf]
        %v6667 = vld [vmem:[%s6657 + $0x24] sm:$0xf]
        %v6668 = vld [vmem:[%s6657 + $0x28] sm:$0xf]
        %v6669 = vld [vmem:[%s6657 + $0x2c] sm:$0xf]
        %v6670 = vld [vmem:[%s6657 + $0x30] sm:$0xf]
        %v6671 = vld [vmem:[%s6657 + $0x34] sm:$0xf]
        %v6672 = vld [vmem:[%s6657 + $0x38] sm:$0xf]
        %v6673 = vld [vmem:[%s6657 + $0x3c] sm:$0xf]
        %v6675 = vunpack.c.l.b16 %v6656
        %v6676 = vpack.c.b16 %v6230, %v6675
        %v6677 = vrot.slane %v6676, 2
        %v6678 = vrot.slane %v6267, 2
        %v6679 = vsel %vm2150, %v6677, %v6678
        %v6680 = vrot.slane %v6268, 2
        %v6681 = vsel %vm2150, %v6678, %v6680
        %v6682 = vrot.slane %v6269, 2
        %v6683 = vsel %vm2150, %v6680, %v6682
        %v6684 = vrot.slane %v6270, 2
        %v6685 = vsel %vm2150, %v6682, %v6684
        %v6686 = vrot.slane %v6271, 2
        %v6687 = vsel %vm2150, %v6684, %v6686
        %v6688 = vrot.slane %v6272, 2
        %v6689 = vsel %vm2150, %v6686, %v6688
        %v6690 = vrot.slane %v6273, 2
        %v6691 = vsel %vm2150, %v6688, %v6690
        %v6692 = vrot.slane %v6274, 2
        %v6693 = vsel %vm2150, %v6690, %v6692
        %v6694 = vrot.slane %v6275, 2
        %v6695 = vsel %vm2150, %v6692, %v6694
        %v6696 = vrot.slane %v6276, 2
        %v6697 = vsel %vm2150, %v6694, %v6696
        %v6698 = vrot.slane %v6277, 2
        %v6699 = vsel %vm2150, %v6696, %v6698
        %v6700 = vrot.slane %v6278, 2
        %v6701 = vsel %vm2150, %v6698, %v6700
        %v6702 = vrot.slane %v6279, 2
        %v6703 = vsel %vm2150, %v6700, %v6702
        %v6704 = vrot.slane %v6280, 2
        %v6705 = vsel %vm2150, %v6702, %v6704
        %v6706 = vrot.slane %v6281, 2
        %v6707 = vsel %vm2150, %v6704, %v6706
        %v6708 = vrot.slane %v6282, 2
        %v6709 = vsel %vm2150, %v6706, %v6708
        %v6710 = vrot.slane %v6283, 2
        %v6711 = vsel %vm2150, %v6708, %v6710
        %v6712 = vrot.slane %v6284, 2
        %v6713 = vsel %vm2150, %v6710, %v6712
        %v6748 = vunpack.c.l.b16 %v6658
        %v6749 = vunpack.c.l.b16 %v6659
        %v6750 = vunpack.c.l.b16 %v6660
        %v6751 = vunpack.c.l.b16 %v6661
        %v6752 = vunpack.c.l.b16 %v6662
        %v6753 = vunpack.c.l.b16 %v6663
        %v6754 = vunpack.c.l.b16 %v6664
        %v6755 = vunpack.c.l.b16 %v6665
        %v6756 = vunpack.c.l.b16 %v6666
        %v6757 = vunpack.c.l.b16 %v6667
        %v6758 = vunpack.c.l.b16 %v6668
        %v6759 = vunpack.c.l.b16 %v6669
        %v6760 = vunpack.c.l.b16 %v6670
        %v6761 = vunpack.c.l.b16 %v6671
        %v6762 = vunpack.c.l.b16 %v6672
        %v6763 = vunpack.c.l.b16 %v6673
        %v6764 = vpack.c.b16 %v6749, %v6748
        %v6765 = vpack.c.b16 %v6751, %v6750
        %v6766 = vpack.c.b16 %v6753, %v6752
        %v6767 = vpack.c.b16 %v6755, %v6754
        %v6768 = vpack.c.b16 %v6757, %v6756
        %v6769 = vpack.c.b16 %v6759, %v6758
        %v6770 = vpack.c.b16 %v6761, %v6760
        %v6771 = vpack.c.b16 %v6763, %v6762
        %6780 = vmatpush.bf16.msra.mxu0 %v6771
        %6781 = vmatpush.bf16.msra.mxu0 %v6770
        %6782 = vmatpush.bf16.msra.mxu0 %v6769
        %6783 = vmatpush.bf16.msra.mxu0 %v6768
        %6784 = vmatpush.bf16.msra.mxu0 %v6767
        %6785 = vmatpush.bf16.msra.mxu0 %v6766
        %6786 = vmatpush.bf16.msra.mxu0 %v6765
        %6787 = vmatpush.bf16.msra.mxu0 %v6764
        %6788 = vmatmul.bf16.gmra.mxu0 %v6679
        %v6789 = vpop.f32.mrf.mxu0
        %v6790 = vadd.f32 0.0, %v6789
        %v6791 = vpop.f32.mrf.mxu0
        %v6792 = vadd.f32 0.0, %v6791
        %6793 = vmatmul.bf16.gmra.mxu0 %v6681
        %v6794 = vpop.f32.mrf.mxu0
        %v6795 = vadd.f32 0.0, %v6794
        %v6796 = vpop.f32.mrf.mxu0
        %v6797 = vadd.f32 0.0, %v6796
        %6798 = vmatmul.bf16.gmra.mxu0 %v6683
        %v6799 = vpop.f32.mrf.mxu0
        %v6800 = vadd.f32 0.0, %v6799
        %v6801 = vpop.f32.mrf.mxu0
        %v6802 = vadd.f32 0.0, %v6801
        %6803 = vmatmul.bf16.gmra.mxu0 %v6685
        %v6804 = vpop.f32.mrf.mxu0
        %v6805 = vadd.f32 0.0, %v6804
        %v6806 = vpop.f32.mrf.mxu0
        %v6807 = vadd.f32 0.0, %v6806
        %6808 = vmatmul.bf16.gmra.mxu0 %v6687
        %v6809 = vpop.f32.mrf.mxu0
        %v6810 = vadd.f32 0.0, %v6809
        %v6811 = vpop.f32.mrf.mxu0
        %v6812 = vadd.f32 0.0, %v6811
        %6813 = vmatmul.bf16.gmra.mxu0 %v6689
        %v6814 = vpop.f32.mrf.mxu0
        %v6815 = vadd.f32 0.0, %v6814
        %v6816 = vpop.f32.mrf.mxu0
        %v6817 = vadd.f32 0.0, %v6816
        %6818 = vmatmul.bf16.gmra.mxu0 %v6691
        %v6819 = vpop.f32.mrf.mxu0
        %v6820 = vadd.f32 0.0, %v6819
        %v6821 = vpop.f32.mrf.mxu0
        %v6822 = vadd.f32 0.0, %v6821
        %6823 = vmatmul.bf16.gmra.mxu0 %v6693
        %v6824 = vpop.f32.mrf.mxu0
        %v6825 = vadd.f32 0.0, %v6824
        %v6826 = vpop.f32.mrf.mxu0
        %v6827 = vadd.f32 0.0, %v6826
        %6828 = vmatmul.bf16.gmra.mxu0 %v6695
        %v6829 = vpop.f32.mrf.mxu0
        %v6830 = vadd.f32 0.0, %v6829
        %v6831 = vpop.f32.mrf.mxu0
        %v6832 = vadd.f32 0.0, %v6831
        %6833 = vmatmul.bf16.gmra.mxu0 %v6697
        %v6834 = vpop.f32.mrf.mxu0
        %v6835 = vadd.f32 0.0, %v6834
        %v6836 = vpop.f32.mrf.mxu0
        %v6837 = vadd.f32 0.0, %v6836
        %6838 = vmatmul.bf16.gmra.mxu0 %v6699
        %v6839 = vpop.f32.mrf.mxu0
        %v6840 = vadd.f32 0.0, %v6839
        %v6841 = vpop.f32.mrf.mxu0
        %v6842 = vadd.f32 0.0, %v6841
        %6843 = vmatmul.bf16.gmra.mxu0 %v6701
        %v6844 = vpop.f32.mrf.mxu0
        %v6845 = vadd.f32 0.0, %v6844
        %v6846 = vpop.f32.mrf.mxu0
        %v6847 = vadd.f32 0.0, %v6846
        %6848 = vmatmul.bf16.gmra.mxu0 %v6703
        %v6849 = vpop.f32.mrf.mxu0
        %v6850 = vadd.f32 0.0, %v6849
        %v6851 = vpop.f32.mrf.mxu0
        %v6852 = vadd.f32 0.0, %v6851
        %6853 = vmatmul.bf16.gmra.mxu0 %v6705
        %v6854 = vpop.f32.mrf.mxu0
        %v6855 = vadd.f32 0.0, %v6854
        %v6856 = vpop.f32.mrf.mxu0
        %v6857 = vadd.f32 0.0, %v6856
        %6858 = vmatmul.bf16.gmra.mxu0 %v6707
        %v6859 = vpop.f32.mrf.mxu0
        %v6860 = vadd.f32 0.0, %v6859
        %v6861 = vpop.f32.mrf.mxu0
        %v6862 = vadd.f32 0.0, %v6861
        %6863 = vmatmul.bf16.gmra.mxu0 %v6709
        %v6864 = vpop.f32.mrf.mxu0
        %v6865 = vadd.f32 0.0, %v6864
        %v6866 = vpop.f32.mrf.mxu0
        %v6867 = vadd.f32 0.0, %v6866
        %6868 = vmatmul.bf16.gmra.mxu0 %v6711
        %v6869 = vpop.f32.mrf.mxu0
        %v6870 = vadd.f32 0.0, %v6869
        %v6871 = vpop.f32.mrf.mxu0
        %v6872 = vadd.f32 0.0, %v6871
        %6873 = vmatmul.bf16.gmra.mxu0 %v6713
        %v6874 = vpop.f32.mrf.mxu0
        %v6875 = vadd.f32 0.0, %v6874
        %v6876 = vpop.f32.mrf.mxu0
        %v6877 = vadd.f32 0.0, %v6876
        %6878 = vdwg.mxu0
        %v6879 = vadd.f32 %v6620, %v6790
        %v6880 = vadd.f32 %v6621, %v6792
        %v6881 = vadd.f32 %v6622, %v6795
        %v6882 = vadd.f32 %v6623, %v6797
        %v6883 = vadd.f32 %v6624, %v6800
        %v6884 = vadd.f32 %v6625, %v6802
        %v6885 = vadd.f32 %v6626, %v6805
        %v6886 = vadd.f32 %v6627, %v6807
        %v6887 = vadd.f32 %v6628, %v6810
        %v6888 = vadd.f32 %v6629, %v6812
        %v6889 = vadd.f32 %v6630, %v6815
        %v6890 = vadd.f32 %v6631, %v6817
        %v6891 = vadd.f32 %v6632, %v6820
        %v6892 = vadd.f32 %v6633, %v6822
        %v6893 = vadd.f32 %v6634, %v6825
        %v6894 = vadd.f32 %v6635, %v6827
        %v6895 = vadd.f32 %v6636, %v6830
        %v6896 = vadd.f32 %v6637, %v6832
        %v6897 = vadd.f32 %v6638, %v6835
        %v6898 = vadd.f32 %v6639, %v6837
        %v6899 = vadd.f32 %v6640, %v6840
        %v6900 = vadd.f32 %v6641, %v6842
        %v6901 = vadd.f32 %v6642, %v6845
        %v6902 = vadd.f32 %v6643, %v6847
        %v6903 = vadd.f32 %v6644, %v6850
        %v6904 = vadd.f32 %v6645, %v6852
        %v6905 = vadd.f32 %v6646, %v6855
        %v6906 = vadd.f32 %v6647, %v6857
        %v6907 = vadd.f32 %v6648, %v6860
        %v6908 = vadd.f32 %v6649, %v6862
        %v6909 = vadd.f32 %v6650, %v6865
        %v6910 = vadd.f32 %v6651, %v6867
        %v6911 = vadd.f32 %v6652, %v6870
        %v6912 = vadd.f32 %v6653, %v6872
        %v6913 = vadd.f32 %v6654, %v6875
        %v6914 = vadd.f32 %v6655, %v6877
        %v6915 = vld [vmem:[#allocation2 + $0xa4] sm:$0x7]
        %s6916 = scalar_lea.vmem [#allocation3], 512
        %v6917 = vld [vmem:[%s6916] sm:$0xf]
        %v6918 = vld [vmem:[%s6916 + $0x4] sm:$0xf]
        %v6919 = vld [vmem:[%s6916 + $0x8] sm:$0xf]
        %v6920 = vld [vmem:[%s6916 + $0xc] sm:$0xf]
        %v6921 = vld [vmem:[%s6916 + $0x10] sm:$0xf]
        %v6922 = vld [vmem:[%s6916 + $0x14] sm:$0xf]
        %v6923 = vld [vmem:[%s6916 + $0x18] sm:$0xf]
        %v6924 = vld [vmem:[%s6916 + $0x1c] sm:$0xf]
        %v6925 = vld [vmem:[%s6916 + $0x20] sm:$0xf]
        %v6926 = vld [vmem:[%s6916 + $0x24] sm:$0xf]
        %v6927 = vld [vmem:[%s6916 + $0x28] sm:$0xf]
        %v6928 = vld [vmem:[%s6916 + $0x2c] sm:$0xf]
        %v6929 = vld [vmem:[%s6916 + $0x30] sm:$0xf]
        %v6930 = vld [vmem:[%s6916 + $0x34] sm:$0xf]
        %v6931 = vld [vmem:[%s6916 + $0x38] sm:$0xf]
        %v6932 = vld [vmem:[%s6916 + $0x3c] sm:$0xf]
        %v6934 = vunpack.c.l.b16 %v6915
        %v6935 = vpack.c.b16 %v6934, %v6934
        %v6937 = vshrl.u32 %v6676, 16
        %v6939 = vrot.slane %v6937, 2
        %v6940 = vshll.u32 %v6676, 16
        %v6942 = vrot.slane %v6940, 3
        %v6943 = vor.u32 %v6939, %v6942
        %v6944 = vrot.slane %v6294, 2
        %v6945 = vrot.slane %v6297, 3
        %v6946 = vor.u32 %v6944, %v6945
        %v6947 = vsel %vm3004, %v6943, %v6946
        %v6948 = vrot.slane %v6303, 2
        %v6949 = vrot.slane %v6306, 3
        %v6950 = vor.u32 %v6948, %v6949
        %v6951 = vsel %vm3004, %v6946, %v6950
        %v6952 = vrot.slane %v6312, 2
        %v6953 = vrot.slane %v6315, 3
        %v6954 = vor.u32 %v6952, %v6953
        %v6955 = vsel %vm3004, %v6950, %v6954
        %v6956 = vrot.slane %v6321, 2
        %v6957 = vrot.slane %v6324, 3
        %v6958 = vor.u32 %v6956, %v6957
        %v6959 = vsel %vm3004, %v6954, %v6958
        %v6960 = vrot.slane %v6330, 2
        %v6961 = vrot.slane %v6333, 3
        %v6962 = vor.u32 %v6960, %v6961
        %v6963 = vsel %vm3004, %v6958, %v6962
        %v6964 = vrot.slane %v6339, 2
        %v6965 = vrot.slane %v6342, 3
        %v6966 = vor.u32 %v6964, %v6965
        %v6967 = vsel %vm3004, %v6962, %v6966
        %v6968 = vrot.slane %v6348, 2
        %v6969 = vrot.slane %v6351, 3
        %v6970 = vor.u32 %v6968, %v6969
        %v6971 = vsel %vm3004, %v6966, %v6970
        %v6972 = vrot.slane %v6357, 2
        %v6973 = vrot.slane %v6360, 3
        %v6974 = vor.u32 %v6972, %v6973
        %v6975 = vsel %vm3004, %v6970, %v6974
        %v6976 = vrot.slane %v6366, 2
        %v6977 = vrot.slane %v6369, 3
        %v6978 = vor.u32 %v6976, %v6977
        %v6979 = vsel %vm3004, %v6974, %v6978
        %v6980 = vrot.slane %v6375, 2
        %v6981 = vrot.slane %v6378, 3
        %v6982 = vor.u32 %v6980, %v6981
        %v6983 = vsel %vm3004, %v6978, %v6982
        %v6984 = vrot.slane %v6384, 2
        %v6985 = vrot.slane %v6387, 3
        %v6986 = vor.u32 %v6984, %v6985
        %v6987 = vsel %vm3004, %v6982, %v6986
        %v6988 = vrot.slane %v6393, 2
        %v6989 = vrot.slane %v6396, 3
        %v6990 = vor.u32 %v6988, %v6989
        %v6991 = vsel %vm3004, %v6986, %v6990
        %v6992 = vrot.slane %v6402, 2
        %v6993 = vrot.slane %v6405, 3
        %v6994 = vor.u32 %v6992, %v6993
        %v6995 = vsel %vm3004, %v6990, %v6994
        %v6996 = vrot.slane %v6411, 2
        %v6997 = vrot.slane %v6414, 3
        %v6998 = vor.u32 %v6996, %v6997
        %v6999 = vsel %vm3004, %v6994, %v6998
        %v7000 = vrot.slane %v6420, 2
        %v7001 = vrot.slane %v6423, 3
        %v7002 = vor.u32 %v7000, %v7001
        %v7003 = vsel %vm3004, %v6998, %v7002
        %v7004 = vrot.slane %v6429, 2
        %v7005 = vrot.slane %v6432, 3
        %v7006 = vor.u32 %v7004, %v7005
        %v7007 = vsel %vm3004, %v7002, %v7006
        %v7008 = vrot.slane %v6438, 2
        %v7009 = vrot.slane %v6441, 3
        %v7010 = vor.u32 %v7008, %v7009
        %v7011 = vsel %vm3004, %v7006, %v7010
        %v7013 = vshrl.u32 %v6935, 16
        %v7015 = vrot.slane %v7013, 2
        %v7016 = vshll.u32 %v6935, 16
        %v7018 = vrot.slane %v7016, 3
        %v7019 = vor.u32 %v7015, %v7018
        %v7020 = vsel %vm3004, %v7010, %v7019
        %v7055 = vunpack.c.l.b16 %v6917
        %v7056 = vunpack.c.l.b16 %v6918
        %v7057 = vunpack.c.l.b16 %v6919
        %v7058 = vunpack.c.l.b16 %v6920
        %v7059 = vunpack.c.l.b16 %v6921
        %v7060 = vunpack.c.l.b16 %v6922
        %v7061 = vunpack.c.l.b16 %v6923
        %v7062 = vunpack.c.l.b16 %v6924
        %v7063 = vunpack.c.l.b16 %v6925
        %v7064 = vunpack.c.l.b16 %v6926
        %v7065 = vunpack.c.l.b16 %v6927
        %v7066 = vunpack.c.l.b16 %v6928
        %v7067 = vunpack.c.l.b16 %v6929
        %v7068 = vunpack.c.l.b16 %v6930
        %v7069 = vunpack.c.l.b16 %v6931
        %v7070 = vunpack.c.l.b16 %v6932
        %v7071 = vpack.c.b16 %v7056, %v7055
        %v7072 = vpack.c.b16 %v7058, %v7057
        %v7073 = vpack.c.b16 %v7060, %v7059
        %v7074 = vpack.c.b16 %v7062, %v7061
        %v7075 = vpack.c.b16 %v7064, %v7063
        %v7076 = vpack.c.b16 %v7066, %v7065
        %v7077 = vpack.c.b16 %v7068, %v7067
        %v7078 = vpack.c.b16 %v7070, %v7069
        %7087 = vmatpush.bf16.msra.mxu0 %v7078
        %7088 = vmatpush.bf16.msra.mxu0 %v7077
        %7089 = vmatpush.bf16.msra.mxu0 %v7076
        %7090 = vmatpush.bf16.msra.mxu0 %v7075
        %7091 = vmatpush.bf16.msra.mxu0 %v7074
        %7092 = vmatpush.bf16.msra.mxu0 %v7073
        %7093 = vmatpush.bf16.msra.mxu0 %v7072
        %7094 = vmatpush.bf16.msra.mxu0 %v7071
        %7095 = vmatmul.bf16.gmra.mxu0 %v6947
        %v7096 = vpop.f32.mrf.mxu0
        %v7097 = vadd.f32 0.0, %v7096
        %v7098 = vpop.f32.mrf.mxu0
        %v7099 = vadd.f32 0.0, %v7098
        %7100 = vmatmul.bf16.gmra.mxu0 %v6951
        %v7101 = vpop.f32.mrf.mxu0
        %v7102 = vadd.f32 0.0, %v7101
        %v7103 = vpop.f32.mrf.mxu0
        %v7104 = vadd.f32 0.0, %v7103
        %7105 = vmatmul.bf16.gmra.mxu0 %v6955
        %v7106 = vpop.f32.mrf.mxu0
        %v7107 = vadd.f32 0.0, %v7106
        %v7108 = vpop.f32.mrf.mxu0
        %v7109 = vadd.f32 0.0, %v7108
        %7110 = vmatmul.bf16.gmra.mxu0 %v6959
        %v7111 = vpop.f32.mrf.mxu0
        %v7112 = vadd.f32 0.0, %v7111
        %v7113 = vpop.f32.mrf.mxu0
        %v7114 = vadd.f32 0.0, %v7113
        %7115 = vmatmul.bf16.gmra.mxu0 %v6963
        %v7116 = vpop.f32.mrf.mxu0
        %v7117 = vadd.f32 0.0, %v7116
        %v7118 = vpop.f32.mrf.mxu0
        %v7119 = vadd.f32 0.0, %v7118
        %7120 = vmatmul.bf16.gmra.mxu0 %v6967
        %v7121 = vpop.f32.mrf.mxu0
        %v7122 = vadd.f32 0.0, %v7121
        %v7123 = vpop.f32.mrf.mxu0
        %v7124 = vadd.f32 0.0, %v7123
        %7125 = vmatmul.bf16.gmra.mxu0 %v6971
        %v7126 = vpop.f32.mrf.mxu0
        %v7127 = vadd.f32 0.0, %v7126
        %v7128 = vpop.f32.mrf.mxu0
        %v7129 = vadd.f32 0.0, %v7128
        %7130 = vmatmul.bf16.gmra.mxu0 %v6975
        %v7131 = vpop.f32.mrf.mxu0
        %v7132 = vadd.f32 0.0, %v7131
        %v7133 = vpop.f32.mrf.mxu0
        %v7134 = vadd.f32 0.0, %v7133
        %7135 = vmatmul.bf16.gmra.mxu0 %v6979
        %v7136 = vpop.f32.mrf.mxu0
        %v7137 = vadd.f32 0.0, %v7136
        %v7138 = vpop.f32.mrf.mxu0
        %v7139 = vadd.f32 0.0, %v7138
        %7140 = vmatmul.bf16.gmra.mxu0 %v6983
        %v7141 = vpop.f32.mrf.mxu0
        %v7142 = vadd.f32 0.0, %v7141
        %v7143 = vpop.f32.mrf.mxu0
        %v7144 = vadd.f32 0.0, %v7143
        %7145 = vmatmul.bf16.gmra.mxu0 %v6987
        %v7146 = vpop.f32.mrf.mxu0
        %v7147 = vadd.f32 0.0, %v7146
        %v7148 = vpop.f32.mrf.mxu0
        %v7149 = vadd.f32 0.0, %v7148
        %7150 = vmatmul.bf16.gmra.mxu0 %v6991
        %v7151 = vpop.f32.mrf.mxu0
        %v7152 = vadd.f32 0.0, %v7151
        %v7153 = vpop.f32.mrf.mxu0
        %v7154 = vadd.f32 0.0, %v7153
        %7155 = vmatmul.bf16.gmra.mxu0 %v6995
        %v7156 = vpop.f32.mrf.mxu0
        %v7157 = vadd.f32 0.0, %v7156
        %v7158 = vpop.f32.mrf.mxu0
        %v7159 = vadd.f32 0.0, %v7158
        %7160 = vmatmul.bf16.gmra.mxu0 %v6999
        %v7161 = vpop.f32.mrf.mxu0
        %v7162 = vadd.f32 0.0, %v7161
        %v7163 = vpop.f32.mrf.mxu0
        %v7164 = vadd.f32 0.0, %v7163
        %7165 = vmatmul.bf16.gmra.mxu0 %v7003
        %v7166 = vpop.f32.mrf.mxu0
        %v7167 = vadd.f32 0.0, %v7166
        %v7168 = vpop.f32.mrf.mxu0
        %v7169 = vadd.f32 0.0, %v7168
        %7170 = vmatmul.bf16.gmra.mxu0 %v7007
        %v7171 = vpop.f32.mrf.mxu0
        %v7172 = vadd.f32 0.0, %v7171
        %v7173 = vpop.f32.mrf.mxu0
        %v7174 = vadd.f32 0.0, %v7173
        %7175 = vmatmul.bf16.gmra.mxu0 %v7011
        %v7176 = vpop.f32.mrf.mxu0
        %v7177 = vadd.f32 0.0, %v7176
        %v7178 = vpop.f32.mrf.mxu0
        %v7179 = vadd.f32 0.0, %v7178
        %7180 = vmatmul.bf16.gmra.mxu0 %v7020
        %v7181 = vpop.f32.mrf.mxu0
        %v7182 = vadd.f32 0.0, %v7181
        %v7183 = vpop.f32.mrf.mxu0
        %v7184 = vadd.f32 0.0, %v7183
        %7185 = vdwg.mxu0
        %v7186 = vadd.f32 %v6879, %v7097
        %v7187 = vadd.f32 %v6880, %v7099
        %v7188 = vadd.f32 %v6881, %v7102
        %v7189 = vadd.f32 %v6882, %v7104
        %v7190 = vadd.f32 %v6883, %v7107
        %v7191 = vadd.f32 %v6884, %v7109
        %v7192 = vadd.f32 %v6885, %v7112
        %v7193 = vadd.f32 %v6886, %v7114
        %v7194 = vadd.f32 %v6887, %v7117
        %v7195 = vadd.f32 %v6888, %v7119
        %v7196 = vadd.f32 %v6889, %v7122
        %v7197 = vadd.f32 %v6890, %v7124
        %v7198 = vadd.f32 %v6891, %v7127
        %v7199 = vadd.f32 %v6892, %v7129
        %v7200 = vadd.f32 %v6893, %v7132
        %v7201 = vadd.f32 %v6894, %v7134
        %v7202 = vadd.f32 %v6895, %v7137
        %v7203 = vadd.f32 %v6896, %v7139
        %v7204 = vadd.f32 %v6897, %v7142
        %v7205 = vadd.f32 %v6898, %v7144
        %v7206 = vadd.f32 %v6899, %v7147
        %v7207 = vadd.f32 %v6900, %v7149
        %v7208 = vadd.f32 %v6901, %v7152
        %v7209 = vadd.f32 %v6902, %v7154
        %v7210 = vadd.f32 %v6903, %v7157
        %v7211 = vadd.f32 %v6904, %v7159
        %v7212 = vadd.f32 %v6905, %v7162
        %v7213 = vadd.f32 %v6906, %v7164
        %v7214 = vadd.f32 %v6907, %v7167
        %v7215 = vadd.f32 %v6908, %v7169
        %v7216 = vadd.f32 %v6909, %v7172
        %v7217 = vadd.f32 %v6910, %v7174
        %v7218 = vadd.f32 %v6911, %v7177
        %v7219 = vadd.f32 %v6912, %v7179
        %v7220 = vadd.f32 %v6913, %v7182
        %v7221 = vadd.f32 %v6914, %v7184
        %v7222 = vld [vmem:[%s4] sm:$0x1]
        %v7224 = vperm.slane %v7222, 0
        %v7226 = vadd.f32 %v7186, %v7224
        %v7227 = vadd.f32 %v7187, %v7224
        %v7228 = vadd.f32 %v7188, %v7224
        %v7229 = vadd.f32 %v7189, %v7224
        %v7230 = vadd.f32 %v7190, %v7224
        %v7231 = vadd.f32 %v7191, %v7224
        %v7232 = vadd.f32 %v7192, %v7224
        %v7233 = vadd.f32 %v7193, %v7224
        %v7234 = vadd.f32 %v7194, %v7224
        %v7235 = vadd.f32 %v7195, %v7224
        %v7236 = vadd.f32 %v7196, %v7224
        %v7237 = vadd.f32 %v7197, %v7224
        %v7238 = vadd.f32 %v7198, %v7224
        %v7239 = vadd.f32 %v7199, %v7224
        %v7240 = vadd.f32 %v7200, %v7224
        %v7241 = vadd.f32 %v7201, %v7224
        %v7242 = vadd.f32 %v7202, %v7224
        %v7243 = vadd.f32 %v7203, %v7224
        %v7244 = vadd.f32 %v7204, %v7224
        %v7245 = vadd.f32 %v7205, %v7224
        %v7246 = vadd.f32 %v7206, %v7224
        %v7247 = vadd.f32 %v7207, %v7224
        %v7248 = vadd.f32 %v7208, %v7224
        %v7249 = vadd.f32 %v7209, %v7224
        %v7250 = vadd.f32 %v7210, %v7224
        %v7251 = vadd.f32 %v7211, %v7224
        %v7252 = vadd.f32 %v7212, %v7224
        %v7253 = vadd.f32 %v7213, %v7224
        %v7254 = vadd.f32 %v7214, %v7224
        %v7255 = vadd.f32 %v7215, %v7224
        %v7256 = vadd.f32 %v7216, %v7224
        %v7257 = vadd.f32 %v7217, %v7224
        %v7258 = vadd.f32 %v7218, %v7224
        %v7259 = vadd.f32 %v7219, %v7224
        %v7260 = vadd.f32 %v7220, %v7224
        %v7261 = vadd.f32 %v7221, %v7224
        %v7262 = vld [vmem:[%s267 + $0x10] sm:$0xc]
        %v7263 = vld [vmem:[%s267 + $0x14] sm:$0xf]
        %v7264 = vld [vmem:[%s267 + $0x18] sm:$0xf]
        %v7265 = vld [vmem:[%s267 + $0x1c] sm:$0xf]
        %v7266 = vld [vmem:[%s267 + $0x20] sm:$0xf]
        %v7267 = vld [vmem:[%s267 + $0x24] sm:$0xf]
        %v7268 = vld [vmem:[%s267 + $0x28] sm:$0xf]
        %v7269 = vld [vmem:[%s267 + $0x2c] sm:$0xf]
        %v7270 = vld [vmem:[%s267 + $0x30] sm:$0xf]
        %v7271 = vld [vmem:[%s267 + $0x34] sm:$0xf]
        %v7272 = vld [vmem:[%s267 + $0x38] sm:$0xf]
        %v7273 = vld [vmem:[%s267 + $0x3c] sm:$0xf]
        %v7274 = vld [vmem:[%s267 + $0x40] sm:$0xf]
        %v7275 = vld [vmem:[%s267 + $0x44] sm:$0xf]
        %v7276 = vld [vmem:[%s267 + $0x48] sm:$0xf]
        %v7277 = vld [vmem:[%s267 + $0x4c] sm:$0xf]
        %v7278 = vld [vmem:[%s267 + $0x50] sm:$0xf]
        %v7279 = vld [vmem:[%s267 + $0x54] sm:$0xf]
        %v7280 = vld [vmem:[%s267 + $0x58] sm:$0xf]
        %v7281 = vld [vmem:[%s267 + $0x5c] sm:$0xf]
        %v7282 = vld [vmem:[%s267 + $0x60] sm:$0xf]
        %v7283 = vld [vmem:[%s267 + $0x64] sm:$0xf]
        %v7284 = vld [vmem:[%s267 + $0x68] sm:$0xf]
        %v7285 = vld [vmem:[%s267 + $0x6c] sm:$0xf]
        %v7286 = vld [vmem:[%s267 + $0x70] sm:$0xf]
        %v7287 = vld [vmem:[%s267 + $0x74] sm:$0xf]
        %v7288 = vld [vmem:[%s267 + $0x78] sm:$0xf]
        %v7289 = vld [vmem:[%s267 + $0x7c] sm:$0xf]
        %v7290 = vld [vmem:[%s267 + $0x80] sm:$0xf]
        %v7291 = vld [vmem:[%s267 + $0x84] sm:$0xf]
        %v7292 = vld [vmem:[%s267 + $0x88] sm:$0xf]
        %v7293 = vld [vmem:[%s267 + $0x8c] sm:$0xf]
        %v7294 = vld [vmem:[%s267 + $0x90] sm:$0xf]
        %v7295 = vld [vmem:[%s267 + $0x94] sm:$0xf]
        %v7296 = vld [vmem:[%s267 + $0x98] sm:$0xf]
        %v7297 = vld [vmem:[%s267 + $0x9c] sm:$0xf]
        %v7298 = vld [vmem:[%s267 + $0xa0] sm:$0x7]
        %v7299 = vunpack.c.l.bf16 %v7262
        %v7300 = vunpack.c.l.bf16 %v7263
        %v7301 = vunpack.c.l.bf16 %v7264
        %v7302 = vunpack.c.l.bf16 %v7265
        %v7303 = vunpack.c.l.bf16 %v7266
        %v7304 = vunpack.c.l.bf16 %v7267
        %v7305 = vunpack.c.l.bf16 %v7268
        %v7306 = vunpack.c.l.bf16 %v7269
        %v7307 = vunpack.c.l.bf16 %v7270
        %v7308 = vunpack.c.l.bf16 %v7271
        %v7309 = vunpack.c.l.bf16 %v7272
        %v7310 = vunpack.c.l.bf16 %v7273
        %v7311 = vunpack.c.l.bf16 %v7274
        %v7312 = vunpack.c.l.bf16 %v7275
        %v7313 = vunpack.c.l.bf16 %v7276
        %v7314 = vunpack.c.l.bf16 %v7277
        %v7315 = vunpack.c.l.bf16 %v7278
        %v7316 = vunpack.c.l.bf16 %v7279
        %v7317 = vunpack.c.l.bf16 %v7280
        %v7318 = vunpack.c.l.bf16 %v7281
        %v7319 = vunpack.c.l.bf16 %v7282
        %v7320 = vunpack.c.l.bf16 %v7283
        %v7321 = vunpack.c.l.bf16 %v7284
        %v7322 = vunpack.c.l.bf16 %v7285
        %v7323 = vunpack.c.l.bf16 %v7286
        %v7324 = vunpack.c.l.bf16 %v7287
        %v7325 = vunpack.c.l.bf16 %v7288
        %v7326 = vunpack.c.l.bf16 %v7289
        %v7327 = vunpack.c.l.bf16 %v7290
        %v7328 = vunpack.c.l.bf16 %v7291
        %v7329 = vunpack.c.l.bf16 %v7292
        %v7330 = vunpack.c.l.bf16 %v7293
        %v7331 = vunpack.c.l.bf16 %v7294
        %v7332 = vunpack.c.l.bf16 %v7295
        %v7333 = vunpack.c.l.bf16 %v7296
        %v7334 = vunpack.c.l.bf16 %v7297
        %v7335 = vunpack.c.l.bf16 %v7298
        %vm7373 = vcmask 1042432
        %v7374 = vrot.slane %v7299, 5
        %v7375 = vrot.slane %v7300, 5
        %v7376 = vsel %vm7373, %v7374, %v7375
        %v7377 = vrot.slane %v7301, 5
        %v7378 = vsel %vm7373, %v7375, %v7377
        %v7379 = vrot.slane %v7302, 5
        %v7380 = vsel %vm7373, %v7377, %v7379
        %v7381 = vrot.slane %v7303, 5
        %v7382 = vsel %vm7373, %v7379, %v7381
        %v7383 = vrot.slane %v7304, 5
        %v7384 = vsel %vm7373, %v7381, %v7383
        %v7385 = vrot.slane %v7305, 5
        %v7386 = vsel %vm7373, %v7383, %v7385
        %v7387 = vrot.slane %v7306, 5
        %v7388 = vsel %vm7373, %v7385, %v7387
        %v7389 = vrot.slane %v7307, 5
        %v7390 = vsel %vm7373, %v7387, %v7389
        %v7391 = vrot.slane %v7308, 5
        %v7392 = vsel %vm7373, %v7389, %v7391
        %v7393 = vrot.slane %v7309, 5
        %v7394 = vsel %vm7373, %v7391, %v7393
        %v7395 = vrot.slane %v7310, 5
        %v7396 = vsel %vm7373, %v7393, %v7395
        %v7397 = vrot.slane %v7311, 5
        %v7398 = vsel %vm7373, %v7395, %v7397
        %v7399 = vrot.slane %v7312, 5
        %v7400 = vsel %vm7373, %v7397, %v7399
        %v7401 = vrot.slane %v7313, 5
        %v7402 = vsel %vm7373, %v7399, %v7401
        %v7403 = vrot.slane %v7314, 5
        %v7404 = vsel %vm7373, %v7401, %v7403
        %v7405 = vrot.slane %v7315, 5
        %v7406 = vsel %vm7373, %v7403, %v7405
        %v7407 = vrot.slane %v7316, 5
        %v7408 = vsel %vm7373, %v7405, %v7407
        %v7409 = vrot.slane %v7317, 5
        %v7410 = vsel %vm7373, %v7407, %v7409
        %v7411 = vrot.slane %v7318, 5
        %v7412 = vsel %vm7373, %v7409, %v7411
        %v7413 = vrot.slane %v7319, 5
        %v7414 = vsel %vm7373, %v7411, %v7413
        %v7415 = vrot.slane %v7320, 5
        %v7416 = vsel %vm7373, %v7413, %v7415
        %v7417 = vrot.slane %v7321, 5
        %v7418 = vsel %vm7373, %v7415, %v7417
        %v7419 = vrot.slane %v7322, 5
        %v7420 = vsel %vm7373, %v7417, %v7419
        %v7421 = vrot.slane %v7323, 5
        %v7422 = vsel %vm7373, %v7419, %v7421
        %v7423 = vrot.slane %v7324, 5
        %v7424 = vsel %vm7373, %v7421, %v7423
        %v7425 = vrot.slane %v7325, 5
        %v7426 = vsel %vm7373, %v7423, %v7425
        %v7427 = vrot.slane %v7326, 5
        %v7428 = vsel %vm7373, %v7425, %v7427
        %v7429 = vrot.slane %v7327, 5
        %v7430 = vsel %vm7373, %v7427, %v7429
        %v7431 = vrot.slane %v7328, 5
        %v7432 = vsel %vm7373, %v7429, %v7431
        %v7433 = vrot.slane %v7329, 5
        %v7434 = vsel %vm7373, %v7431, %v7433
        %v7435 = vrot.slane %v7330, 5
        %v7436 = vsel %vm7373, %v7433, %v7435
        %v7437 = vrot.slane %v7331, 5
        %v7438 = vsel %vm7373, %v7435, %v7437
        %v7439 = vrot.slane %v7332, 5
        %v7440 = vsel %vm7373, %v7437, %v7439
        %v7441 = vrot.slane %v7333, 5
        %v7442 = vsel %vm7373, %v7439, %v7441
        %v7443 = vrot.slane %v7334, 5
        %v7444 = vsel %vm7373, %v7441, %v7443
        %v7445 = vrot.slane %v7335, 5
        %v7446 = vsel %vm7373, %v7443, %v7445
        %v7483 = vadd.f32 %v7226, %v7376
        %v7484 = vadd.f32 %v7227, %v7378
        %v7485 = vadd.f32 %v7228, %v7380
        %v7486 = vadd.f32 %v7229, %v7382
        %v7487 = vadd.f32 %v7230, %v7384
        %v7488 = vadd.f32 %v7231, %v7386
        %v7489 = vadd.f32 %v7232, %v7388
        %v7490 = vadd.f32 %v7233, %v7390
        %v7491 = vadd.f32 %v7234, %v7392
        %v7492 = vadd.f32 %v7235, %v7394
        %v7493 = vadd.f32 %v7236, %v7396
        %v7494 = vadd.f32 %v7237, %v7398
        %v7495 = vadd.f32 %v7238, %v7400
        %v7496 = vadd.f32 %v7239, %v7402
        %v7497 = vadd.f32 %v7240, %v7404
        %v7498 = vadd.f32 %v7241, %v7406
        %v7499 = vadd.f32 %v7242, %v7408
        %v7500 = vadd.f32 %v7243, %v7410
        %v7501 = vadd.f32 %v7244, %v7412
        %v7502 = vadd.f32 %v7245, %v7414
        %v7503 = vadd.f32 %v7246, %v7416
        %v7504 = vadd.f32 %v7247, %v7418
        %v7505 = vadd.f32 %v7248, %v7420
        %v7506 = vadd.f32 %v7249, %v7422
        %v7507 = vadd.f32 %v7250, %v7424
        %v7508 = vadd.f32 %v7251, %v7426
        %v7509 = vadd.f32 %v7252, %v7428
        %v7510 = vadd.f32 %v7253, %v7430
        %v7511 = vadd.f32 %v7254, %v7432
        %v7512 = vadd.f32 %v7255, %v7434
        %v7513 = vadd.f32 %v7256, %v7436
        %v7514 = vadd.f32 %v7257, %v7438
        %v7515 = vadd.f32 %v7258, %v7440
        %v7516 = vadd.f32 %v7259, %v7442
        %v7517 = vadd.f32 %v7260, %v7444
        %v7518 = vadd.f32 %v7261, %v7446
        %v7519 = vmax.f32 %v7483, 0.0
        %v7520 = vmax.f32 %v7484, 0.0
        %v7521 = vmax.f32 %v7485, 0.0
        %v7522 = vmax.f32 %v7486, 0.0
        %v7523 = vmax.f32 %v7487, 0.0
        %v7524 = vmax.f32 %v7488, 0.0
        %v7525 = vmax.f32 %v7489, 0.0
        %v7526 = vmax.f32 %v7490, 0.0
        %v7527 = vmax.f32 %v7491, 0.0
        %v7528 = vmax.f32 %v7492, 0.0
        %v7529 = vmax.f32 %v7493, 0.0
        %v7530 = vmax.f32 %v7494, 0.0
        %v7531 = vmax.f32 %v7495, 0.0
        %v7532 = vmax.f32 %v7496, 0.0
        %v7533 = vmax.f32 %v7497, 0.0
        %v7534 = vmax.f32 %v7498, 0.0
        %v7535 = vmax.f32 %v7499, 0.0
        %v7536 = vmax.f32 %v7500, 0.0
        %v7537 = vmax.f32 %v7501, 0.0
        %v7538 = vmax.f32 %v7502, 0.0
        %v7539 = vmax.f32 %v7503, 0.0
        %v7540 = vmax.f32 %v7504, 0.0
        %v7541 = vmax.f32 %v7505, 0.0
        %v7542 = vmax.f32 %v7506, 0.0
        %v7543 = vmax.f32 %v7507, 0.0
        %v7544 = vmax.f32 %v7508, 0.0
        %v7545 = vmax.f32 %v7509, 0.0
        %v7546 = vmax.f32 %v7510, 0.0
        %v7547 = vmax.f32 %v7511, 0.0
        %v7548 = vmax.f32 %v7512, 0.0
        %v7549 = vmax.f32 %v7513, 0.0
        %v7550 = vmax.f32 %v7514, 0.0
        %v7551 = vmax.f32 %v7515, 0.0
        %v7552 = vmax.f32 %v7516, 0.0
        %v7553 = vmax.f32 %v7517, 0.0
        %v7554 = vmax.f32 %v7518, 0.0
        %v7555 = vpack.c.bf16 %v7519, %v7519
        %v7556 = vpack.c.bf16 %v7520, %v7520
        %v7557 = vpack.c.bf16 %v7521, %v7521
        %v7558 = vpack.c.bf16 %v7522, %v7522
        %v7559 = vpack.c.bf16 %v7523, %v7523
        %v7560 = vpack.c.bf16 %v7524, %v7524
        %v7561 = vpack.c.bf16 %v7525, %v7525
        %v7562 = vpack.c.bf16 %v7526, %v7526
        %v7563 = vpack.c.bf16 %v7527, %v7527
        %v7564 = vpack.c.bf16 %v7528, %v7528
        %v7565 = vpack.c.bf16 %v7529, %v7529
        %v7566 = vpack.c.bf16 %v7530, %v7530
        %v7567 = vpack.c.bf16 %v7531, %v7531
        %v7568 = vpack.c.bf16 %v7532, %v7532
        %v7569 = vpack.c.bf16 %v7533, %v7533
        %v7570 = vpack.c.bf16 %v7534, %v7534
        %v7571 = vpack.c.bf16 %v7535, %v7535
        %v7572 = vpack.c.bf16 %v7536, %v7536
        %v7573 = vpack.c.bf16 %v7537, %v7537
        %v7574 = vpack.c.bf16 %v7538, %v7538
        %v7575 = vpack.c.bf16 %v7539, %v7539
        %v7576 = vpack.c.bf16 %v7540, %v7540
        %v7577 = vpack.c.bf16 %v7541, %v7541
        %v7578 = vpack.c.bf16 %v7542, %v7542
        %v7579 = vpack.c.bf16 %v7543, %v7543
        %v7580 = vpack.c.bf16 %v7544, %v7544
        %v7581 = vpack.c.bf16 %v7545, %v7545
        %v7582 = vpack.c.bf16 %v7546, %v7546
        %v7583 = vpack.c.bf16 %v7547, %v7547
        %v7584 = vpack.c.bf16 %v7548, %v7548
        %v7585 = vpack.c.bf16 %v7549, %v7549
        %v7586 = vpack.c.bf16 %v7550, %v7550
        %v7587 = vpack.c.bf16 %v7551, %v7551
        %v7588 = vpack.c.bf16 %v7552, %v7552
        %v7589 = vpack.c.bf16 %v7553, %v7553
        %v7590 = vpack.c.bf16 %v7554, %v7554
        %7591 = vst [vmem:[%s258] sm:$0xf] %v7555
        %7592 = vst [vmem:[%s258 + $0x4] sm:$0xf] %v7556
        %7593 = vst [vmem:[%s258 + $0x8] sm:$0xf] %v7557
        %7594 = vst [vmem:[%s258 + $0xc] sm:$0xf] %v7558
        %7595 = vst [vmem:[%s258 + $0x10] sm:$0xf] %v7559
        %7596 = vst [vmem:[%s258 + $0x14] sm:$0xf] %v7560
        %7597 = vst [vmem:[%s258 + $0x18] sm:$0xf] %v7561
        %7598 = vst [vmem:[%s258 + $0x1c] sm:$0xf] %v7562
        %7599 = vst [vmem:[%s258 + $0x20] sm:$0xf] %v7563
        %7600 = vst [vmem:[%s258 + $0x24] sm:$0xf] %v7564
        %7601 = vst [vmem:[%s258 + $0x28] sm:$0xf] %v7565
        %7602 = vst [vmem:[%s258 + $0x2c] sm:$0xf] %v7566
        %7603 = vst [vmem:[%s258 + $0x30] sm:$0xf] %v7567
        %7604 = vst [vmem:[%s258 + $0x34] sm:$0xf] %v7568
        %7605 = vst [vmem:[%s258 + $0x38] sm:$0xf] %v7569
        %7606 = vst [vmem:[%s258 + $0x3c] sm:$0xf] %v7570
        %7607 = vst [vmem:[%s258 + $0x40] sm:$0xf] %v7571
        %7608 = vst [vmem:[%s258 + $0x44] sm:$0xf] %v7572
        %7609 = vst [vmem:[%s258 + $0x48] sm:$0xf] %v7573
        %7610 = vst [vmem:[%s258 + $0x4c] sm:$0xf] %v7574
        %7611 = vst [vmem:[%s258 + $0x50] sm:$0xf] %v7575
        %7612 = vst [vmem:[%s258 + $0x54] sm:$0xf] %v7576
        %7613 = vst [vmem:[%s258 + $0x58] sm:$0xf] %v7577
        %7614 = vst [vmem:[%s258 + $0x5c] sm:$0xf] %v7578
        %7615 = vst [vmem:[%s258 + $0x60] sm:$0xf] %v7579
        %7616 = vst [vmem:[%s258 + $0x64] sm:$0xf] %v7580
        %7617 = vst [vmem:[%s258 + $0x68] sm:$0xf] %v7581
        %7618 = vst [vmem:[%s258 + $0x6c] sm:$0xf] %v7582
        %7619 = vst [vmem:[%s258 + $0x70] sm:$0xf] %v7583
        %7620 = vst [vmem:[%s258 + $0x74] sm:$0xf] %v7584
        %7621 = vst [vmem:[%s258 + $0x78] sm:$0xf] %v7585
        %7622 = vst [vmem:[%s258 + $0x7c] sm:$0xf] %v7586
        %7623 = vst [vmem:[%s258 + $0x80] sm:$0xf] %v7587
        %7624 = vst [vmem:[%s258 + $0x84] sm:$0xf] %v7588
        %7625 = vst [vmem:[%s258 + $0x88] sm:$0xf] %v7589
        %7626 = vst [vmem:[%s258 + $0x8c] sm:$0xf] %v7590
        %s7627 = sand.u32 %s154, 1
        %s7628 = scalar_lea.sflag [#allocation5], %s7627
        %s7629 = sand.u32 %s154, 1
        %s7630 = smul.addr %s7629, 144
        %s7631 = scalar_lea.vmem [#allocation6], %s7630
        // Predicated region
        $region49: #{tpu_custom_call.1} parent=39 // pred_check
          %p7632 = pneg %p164
        $region50: #{tpu_custom_call.1} parent=39 // pred_check_branch
          %7634 = sbr.rel (%p7632) target = $region52
        $region51: #{tpu_custom_call.1} parent=39 // pred_region
          %7636 = vsyncadd %s7628, 0
          %s7637 = smul.addr %s25, 36
          %s7638 = smul.addr %s24, 36
          %s7639 = sadd.s32 %s7637, %s7638
          %s7640 = smul.addr %s7639, 4
          %s7641 = scalar_lea.hbm %s5, %s7640
          %s7642 = sshll.u32 %s7631, 4
          %s7643 = int_to_ptr.vmem [resolvable:$true] %s7642
          %s7644 = sshll.u32 %s7641, 4
          %s7645 = int_to_ptr.hbm [resolvable:$true] %s7644
          %7650 = dma.vmem_to_hbm [thread:$0]  %s7643, 2304, %s7645, %s7628, 64, 64, 4
        $region52: #{tpu_custom_call.1} parent=39 // pred_fallthru
          _
      $region40: #{tpu_custom_call.1} parent=5 // pred_fallthru
        _
      %p7651 = scmp.le.s32.totalorder 2, %s15
      // Predicated region
      $region53: #{tpu_custom_call.1} parent=5 // pred_check
        %p7652 = pneg %p7651
      $region54: #{tpu_custom_call.1} parent=5 // pred_check_branch
        %7654 = sbr.rel (%p7652) target = $region56
      $region55: #{tpu_custom_call.1} parent=5 // pred_region
        %s7655 = ssub.s32 %s15, 2
        // Predicated region
        $region57: #{tpu_custom_call.1} parent=55 // pred_check
          %p7656 = pneg %p170
        $region58: #{tpu_custom_call.1} parent=55 // pred_check_branch
          %7658 = sbr.rel (%p7656) target = $region60
        $region59: #{tpu_custom_call.1} parent=55 // pred_region
          %s7659 = sand.u32 %s155, 1
          %s7660 = scalar_lea.sflag [#allocation5], %s7659
          %s7661 = sand.u32 %s155, 1
          %s7662 = smul.addr %s7661, 144
          %s7663 = scalar_lea.vmem [#allocation6], %s7662
          %7665 = dma.done %s7660, 2304
        $region60: #{tpu_custom_call.1} parent=55 // pred_fallthru
          _
      $region56: #{tpu_custom_call.1} parent=5 // pred_fallthru
        _
    $region6: #{tpu_custom_call.1} parent=1 // loop_footer
      %s19 = sadd.s32 1, %s15
    $region7: #{tpu_custom_call.1} parent=1 // loop_footer_branch
      %14 = sbr.rel target = $region3
    $region8: #{tpu_custom_call.1} parent=1 // loop_exit
      _
    %7666 = vsyncpa [#allocation4], 1
    %s7667 = scalar_lea.sflag [#allocation4], 1
    %7668 = vsyncpa %s7667, 1
    %7669 = vsyncpa [#allocation5], 1
    %s7670 = scalar_lea.sflag [#allocation5], 1
    %7671 = vsyncpa %s7670, 1

</llo_original>
